<compile_context>
chip_gen: v7x
topology: tpu7x:2x2x1
jax: 0.10.0
libtpu: 0.0.40
codegen_flags: <defaults>
</compile_context>

<pallas_src>
import functools

import jax
import jax.numpy as jnp
from jax import lax
from jax.experimental import pallas as pl
from jax.experimental.pallas import tpu as pltpu


def _round_up(v, m):
    return ((v + m - 1) // m) * m


# ----------------------------------------------------------------------------
# Fused inception kernel (one batch block per grid step)
# ----------------------------------------------------------------------------
def _inception_kernel(x_ref, w1_ref, b1_ref, w2_ref, b2_ref, w3_ref, b3_ref,
                      w4_ref, b4_ref, o_ref, r2_ref, r3_ref, xp_ref, *,
                      H, W, Wp8, n1x1, n3x3red, n5x5red):
    bb, Cin = x_ref.shape[0], x_ref.shape[-1]
    c1a = n1x1
    c1b = n1x1 + n3x3red
    c1 = c1b + n5x5red
    cdt = r2_ref.dtype

    # --- refresh ONLY the halo strips of the persistent scratches -----------
    # INVARIANT: everything below writes only inside [pad:pad+H, pad:pad+W] of
    # r2/r3/xp, so the zero / -inf halos written here stay intact for the
    # whole step.  (Strips are tiny; no full-scratch zeroing per step.)
    def init_halo(ref, pad, val):
        Ht, Wt, C = ref.shape
        ref[:pad, :, :] = jnp.full((pad, Wt, C), val, ref.dtype)
        ref[pad + H:, :, :] = jnp.full((Ht - pad - H, Wt, C), val, ref.dtype)
        ref[:, :pad, :] = jnp.full((Ht, pad, C), val, ref.dtype)
        ref[:, pad + W:, :] = jnp.full((Ht, Wt - pad - W, C), val, ref.dtype)

    init_halo(r2_ref, 1, 0.0)            # zero halo for the 3x3 conv
    init_halo(r3_ref, 2, 0.0)            # zero halo for the 5x5 conv
    init_halo(xp_ref, 1, -jnp.inf)       # -inf halo for the 3x3 maxpool

    b1cat = b1_ref[...]                  # (1, c1) f32 fused bias

    # KxK "same" conv: both kh and kw folded into ONE deep MXU contraction.
    # Contraction index = kh*(K*C) + kw*C + c, matching the weight re-layout.
    def conv_same(src, w_ref, K):
        C = src.shape[-1]
        # kw taps: K sublane-axis slices of aligned width Wp8.
        cols = jnp.concatenate([src[:, kw:kw + Wp8, :] for kw in range(K)],
                               axis=-1)                  # (H+K-1, Wp8, K*C)
        # kh taps: free leading-axis slices.
        wide = jnp.concatenate([cols[kh:kh + H] for kh in range(K)],
                               axis=-1)                  # (H, Wp8, K*K*C)
        out = jnp.dot(wide.reshape(H * Wp8, K * K * C), w_ref[...],
                      preferred_element_type=jnp.float32)
        return out.reshape(H, Wp8, w_ref.shape[-1])

    for bi in range(bb):                                 # static unroll
        xi = x_ref[bi]                                   # (H, W, Cin)

        # ---- fused 1x1 convs (b1, b2-reduce, b3-reduce), interior only -----
        lin = jnp.dot(xi.reshape(H * W, Cin), w1_ref[...],
                      preferred_element_type=jnp.float32).reshape(H, W, c1)

        # branch 1: 1x1 conv + ReLU
        y1 = jnp.maximum(lin[:, :, :c1a] + b1cat[:, :c1a], 0.0)

        # reduce branches: ReLU'd output goes into the zero-haloed scratches
        r2_ref[1:1 + H, 1:1 + W, :] = jnp.maximum(
            lin[:, :, c1a:c1b] + b1cat[:, c1a:c1b], 0.0).astype(cdt)
        r3_ref[2:2 + H, 2:2 + W, :] = jnp.maximum(
            lin[:, :, c1b:] + b1cat[:, c1b:], 0.0).astype(cdt)

        # ---- 3x3 / 5x5 branches (single deep matmul each) -------------------
        y2 = jnp.maximum(conv_same(r2_ref[...], w2_ref, 3) + b2_ref[...],
                         0.0)[:, :W, :]
        y3 = jnp.maximum(conv_same(r3_ref[...], w3_ref, 5) + b3_ref[...],
                         0.0)[:, :W, :]

        # ---- branch 4: 3x3/s1 maxpool (-inf halo) + 1x1 conv + ReLU ---------
        xp_ref[1:1 + H, 1:1 + W, :] = xi
        xp = xp_ref[...]                                 # (H+2, Wp8+2, Cin)
        tmp = jnp.maximum(jnp.maximum(xp[:, 0:Wp8, :], xp[:, 1:1 + Wp8, :]),
                          xp[:, 2:2 + Wp8, :])           # (H+2, Wp8, Cin)
        pooled = jnp.maximum(jnp.maximum(tmp[0:H], tmp[1:1 + H]),
                             tmp[2:2 + H])               # (H, Wp8, Cin)
        y4 = jnp.maximum(
            jnp.dot(pooled.reshape(H * Wp8, Cin), w4_ref[...],
                    preferred_element_type=jnp.float32) + b4_ref[...],
            0.0).reshape(H, Wp8, w4_ref.shape[-1])[:, :W, :]

        # ---- channel-concatenated, single lane-dense store per image --------
        o_ref[bi] = jnp.concatenate([y1, y2, y3, y4],
                                    axis=-1).astype(o_ref.dtype)


# ----------------------------------------------------------------------------
# Wrapper: weight re-layout + pallas_call plumbing
# ----------------------------------------------------------------------------
def _full_spec(a):
    return pl.BlockSpec(a.shape, lambda i: (0,) * a.ndim)


def _pick_batch_block(batch, max_bb=8):
    divs = [d for d in range(1, min(batch, max_bb) + 1) if batch % d == 0]
    deep = [d for d in divs if batch // d >= 2]   # keep grid length >= 2
    return max(deep) if deep else max(divs)


def inception_v1_forward(params, x_nchw, *, compute_dtype=jnp.float32,
                         out_dtype=None, batch_block=None):
    """Matches PyTorch InceptionV1.forward: NCHW in, NCHW out (channel concat)."""
    x = jnp.transpose(x_nchw, (0, 2, 3, 1)).astype(compute_dtype)  # NCHW->NHWC
    B, H, W, Cin = x.shape
    out_dtype = compute_dtype if out_dtype is None else out_dtype

    w1, b1 = params["b1"]
    w2a, b2a = params["b2a"]
    w2b, b2b = params["b2b"]
    w3a, b3a = params["b3a"]
    w3b, b3b = params["b3b"]
    w4, b4 = params["b4"]

    n1x1, n3x3red, n3x3 = w1.shape[0], w2a.shape[0], w2b.shape[0]
    n5x5red, n5x5, pool_planes = w3a.shape[0], w3b.shape[0], w4.shape[0]
    c1 = n1x1 + n3x3red + n5x5red
    ctot = n1x1 + n3x3 + n5x5 + pool_planes

    Wp8 = _round_up(W, 8)                    # matmul-M width alignment
    bb = _pick_batch_block(B) if batch_block is None else batch_block
    assert B % bb == 0, (B, bb)

    # fused 1x1 weights: (Cin, n1x1 + n3x3red + n5x5red), fused bias (1, c1)
    w1cat = jnp.concatenate(
        [w1.reshape(n1x1, Cin).T, w2a.reshape(n3x3red, Cin).T,
         w3a.reshape(n5x5red, Cin).T], axis=-1).astype(compute_dtype)
    b1cat = jnp.concatenate([b1, b2a, b3a]).reshape(1, c1).astype(jnp.float32)

    def kfold(w_oihw, K):
        # (Cout, Cin, K, K) -> (K*K*Cin, Cout); contraction idx = kh*K*Cin + kw*Cin + c
        cout, cin = w_oihw.shape[0], w_oihw.shape[1]
        return jnp.transpose(w_oihw, (2, 3, 1, 0)).reshape(K * K * cin, cout)

    w2t = kfold(w2b, 3).astype(compute_dtype)
    w3t = kfold(w3b, 5).astype(compute_dtype)
    w4t = w4.reshape(pool_planes, Cin).T.astype(compute_dtype)
    b2r = b2b.reshape(1, n3x3).astype(jnp.float32)
    b3r = b3b.reshape(1, n5x5).astype(jnp.float32)
    b4r = b4.reshape(1, pool_planes).astype(jnp.float32)

    flops = 2 * B * H * W * (Cin * c1 + 9 * n3x3red * n3x3 +
                             25 * n5x5red * n5x5 + Cin * pool_planes)
    bytes_accessed = (
        B * H * W * Cin * jnp.dtype(compute_dtype).itemsize +
        B * H * W * ctot * jnp.dtype(out_dtype).itemsize +
        sum(int(a.size) * a.dtype.itemsize
            for a in (w1cat, b1cat, w2t, b2r, w3t, b3r, w4t, b4r)))

    kernel = functools.partial(
        _inception_kernel, H=H, W=W, Wp8=Wp8,
        n1x1=n1x1, n3x3red=n3x3red, n5x5red=n5x5red)

    out_nhwc = pl.pallas_call(
        kernel,
        out_shape=jax.ShapeDtypeStruct((B, H, W, ctot), out_dtype),
        grid=(B // bb,),
        in_specs=[pl.BlockSpec((bb, H, W, Cin), lambda i: (i, 0, 0, 0)),
                  _full_spec(w1cat), _full_spec(b1cat),
                  _full_spec(w2t), _full_spec(b2r),
                  _full_spec(w3t), _full_spec(b3r),
                  _full_spec(w4t), _full_spec(b4r)],
        out_specs=pl.BlockSpec((bb, H, W, ctot), lambda i: (i, 0, 0, 0)),
        scratch_shapes=[
            pltpu.VMEM((H + 2, Wp8 + 2, n3x3red), compute_dtype),  # r2 (zero halo)
            pltpu.VMEM((H + 4, Wp8 + 4, n5x5red), compute_dtype),  # r3 (zero halo)
            pltpu.VMEM((H + 2, Wp8 + 2, Cin), compute_dtype),      # pool (-inf halo)
        ],
        compiler_params=pltpu.CompilerParams(
            dimension_semantics=("parallel",),
            # 32 MiB is safe on v7x (64 MiB physical); raise to 64-96 MiB on
            # v5e/v6e together with larger batch blocks.
            vmem_limit_bytes=32 * 1024 * 1024),
        cost_estimate=pl.CostEstimate(flops=flops, transcendentals=0,
                                      bytes_accessed=bytes_accessed),
    )(x, w1cat, b1cat, w2t, b2r, w3t, b3r, w4t, b4r)

    return jnp.transpose(out_nhwc, (0, 3, 1, 2))  # NHWC -> NCHW (module API)


# ----------------------------------------------------------------------------
# Parameters
# ----------------------------------------------------------------------------
def init_inception_params(key, in_channels, n1x1, n3x3red, n3x3,
                          n5x5red, n5x5, pool_planes):
    ks = jax.random.split(key, 12)

    def conv_p(kw, kb, cout, cin, k):
        w = 0.1 * jax.random.normal(kw, (cout, cin, k, k), jnp.float32)
        b = 0.1 * jax.random.normal(kb, (cout,), jnp.float32)
        return w, b

    return {
        "b1": conv_p(ks[0], ks[1], n1x1, in_channels, 1),
        "b2a": conv_p(ks[2], ks[3], n3x3red, in_channels, 1),
        "b2b": conv_p(ks[4], ks[5], n3x3, n3x3red, 3),
        "b3a": conv_p(ks[6], ks[7], n5x5red, in_channels, 1),
        "b3b": conv_p(ks[8], ks[9], n5x5, n5x5red, 5),
        "b4": conv_p(ks[10], ks[11], pool_planes, in_channels, 1),
    }


# ----------------------------------------------------------------------------
# Pure-JAX reference (for correctness check)
# ----------------------------------------------------------------------------
def _ref_conv_relu(x_nhwc, w_oihw, b, k):
    w_hwio = jnp.transpose(w_oihw, (2, 3, 1, 0))
    pad = (k - 1) // 2
    y = lax.conv_general_dilated(
        x_nhwc, w_hwio, window_strides=(1, 1),
        padding=((pad, pad), (pad, pad)),
        dimension_numbers=("NHWC", "HWIO", "NHWC"))
    return jnp.maximum(y + b.reshape(1, 1, 1, -1), 0.0)


def _ref_maxpool3(x_nhwc):
    return lax.reduce_window(
        x_nhwc, -jnp.inf, lax.max,
        window_dimensions=(1, 3, 3, 1), window_strides=(1, 1, 1, 1),
        padding=((0, 0), (1, 1), (1, 1), (0, 0)))


def inception_v1_reference(params, x_nchw):
    x = jnp.transpose(x_nchw, (0, 2, 3, 1))
    y1 = _ref_conv_relu(x, *params["b1"], k=1)
    y2 = _ref_conv_relu(_ref_conv_relu(x, *params["b2a"], k=1), *params["b2b"], k=3)
    y3 = _ref_conv_relu(_ref_conv_relu(x, *params["b3a"], k=1), *params["b3b"], k=5)
    y4 = _ref_conv_relu(_ref_maxpool3(x), *params["b4"], k=1)
    y = jnp.concatenate([y1, y2, y3, y4], axis=-1)
    return jnp.transpose(y, (0, 3, 1, 2))


# ----------------------------------------------------------------------------
if __name__ == "__main__":
    key = jax.random.PRNGKey(0)
    k_param, k_x = jax.random.split(key)

    # Small, forward-consistent shapes (B=4 exercises batch-blocking: bb=2, grid=(2,)).
    in_channels, n1x1, n3x3red, n3x3, n5x5red, n5x5, pool_planes = 4, 8, 4, 8, 4, 8, 8
    B, H, W = 4, 16, 16

    params = init_inception_params(k_param, in_channels, n1x1, n3x3red, n3x3,
                                   n5x5red, n5x5, pool_planes)
    x = jax.random.normal(k_x, (B, in_channels, H, W), jnp.float32)  # NCHW

    out = jax.jit(inception_v1_forward)(params, x)
    out = jax.block_until_ready(out)

    expected_c = n1x1 + n3x3 + n5x5 + pool_planes
    assert out.shape == (B, expected_c, H, W), out.shape

    ref = jax.block_until_ready(inception_v1_reference(params, x))
    assert jnp.allclose(out, ref, atol=1e-4, rtol=1e-4), \
        float(jnp.max(jnp.abs(out - ref)))

    print("KERNEL_OK")
</pallas_src>

<mosaic_0001>
module attributes {stable_mosaic.version = 11 : i64} {
  func.func @_inception_kernel(%arg0: i32, %arg1: memref<2x16x16x4xf32, #tpu.memory_space<vmem>>, %arg2: memref<4x16xf32, #tpu.memory_space<vmem>>, %arg3: memref<1x16xf32, #tpu.memory_space<vmem>>, %arg4: memref<36x8xf32, #tpu.memory_space<vmem>>, %arg5: memref<1x8xf32, #tpu.memory_space<vmem>>, %arg6: memref<100x8xf32, #tpu.memory_space<vmem>>, %arg7: memref<1x8xf32, #tpu.memory_space<vmem>>, %arg8: memref<4x8xf32, #tpu.memory_space<vmem>>, %arg9: memref<1x8xf32, #tpu.memory_space<vmem>>, %arg10: memref<2x16x16x32xf32, #tpu.memory_space<vmem>>, %arg11: memref<18x18x4xf32, #tpu.memory_space<vmem>>, %arg12: memref<20x20x4xf32, #tpu.memory_space<vmem>>, %arg13: memref<18x18x4xf32, #tpu.memory_space<vmem>>) attributes {dimension_semantics = [#tpu.dimension_semantics<parallel>], iteration_bounds = array<i64: 2>, scalar_prefetch = 0 : i64, scratch_operands = 3 : i64, tpu.core_type = #tpu.core_type<tc>, window_params = [{transform_indices = @transform_0, window_bounds = array<i64: 2, 16, 16, 4>}, {pipeline_mode = #tpu.pipeline_mode<synchronous>, transform_indices = @transform_1, window_bounds = array<i64: 4, 16>}, {pipeline_mode = #tpu.pipeline_mode<synchronous>, transform_indices = @transform_2, window_bounds = array<i64: 1, 16>}, {pipeline_mode = #tpu.pipeline_mode<synchronous>, transform_indices = @transform_3, window_bounds = array<i64: 36, 8>}, {pipeline_mode = #tpu.pipeline_mode<synchronous>, transform_indices = @transform_4, window_bounds = array<i64: 1, 8>}, {pipeline_mode = #tpu.pipeline_mode<synchronous>, transform_indices = @transform_5, window_bounds = array<i64: 100, 8>}, {pipeline_mode = #tpu.pipeline_mode<synchronous>, transform_indices = @transform_6, window_bounds = array<i64: 1, 8>}, {pipeline_mode = #tpu.pipeline_mode<synchronous>, transform_indices = @transform_7, window_bounds = array<i64: 4, 8>}, {pipeline_mode = #tpu.pipeline_mode<synchronous>, transform_indices = @transform_8, window_bounds = array<i64: 1, 8>}, {transform_indices = @transform_9, window_bounds = array<i64: 2, 16, 16, 32>}]} {
    %cst = arith.constant 0.000000e+00 : f32
    %0 = vector.broadcast %cst : f32 to vector<1x18x4xf32>
    %c0 = arith.constant 0 : index
    %c0_0 = arith.constant 0 : index
    %c0_1 = arith.constant 0 : index
    %1 = vector.load %arg11[%c0, %c0_0, %c0_1] : memref<18x18x4xf32, #tpu.memory_space<vmem>>, vector<1x18x4xf32>
    tpu.vector_store %arg11[%c0, %c0_0, %c0_1], %0 {strides = array<i32>} : memref<18x18x4xf32, #tpu.memory_space<vmem>>, vector<1x18x4xf32>,
    %cst_2 = arith.constant 0.000000e+00 : f32
    %2 = vector.broadcast %cst_2 : f32 to vector<1x18x4xf32>
    %c17 = arith.constant 17 : index
    %c0_3 = arith.constant 0 : index
    %c0_4 = arith.constant 0 : index
    %3 = vector.load %arg11[%c17, %c0_3, %c0_4] : memref<18x18x4xf32, #tpu.memory_space<vmem>>, vector<1x18x4xf32>
    tpu.vector_store %arg11[%c17, %c0_3, %c0_4], %2 {strides = array<i32>} : memref<18x18x4xf32, #tpu.memory_space<vmem>>, vector<1x18x4xf32>,
    %cst_5 = arith.constant 0.000000e+00 : f32
    %4 = vector.broadcast %cst_5 : f32 to vector<18x1x4xf32>
    %c0_6 = arith.constant 0 : index
    %c0_7 = arith.constant 0 : index
    %c0_8 = arith.constant 0 : index
    %5 = vector.load %arg11[%c0_6, %c0_7, %c0_8] : memref<18x18x4xf32, #tpu.memory_space<vmem>>, vector<18x1x4xf32>
    tpu.vector_store %arg11[%c0_6, %c0_7, %c0_8], %4 {strides = array<i32>} : memref<18x18x4xf32, #tpu.memory_space<vmem>>, vector<18x1x4xf32>,
    %cst_9 = arith.constant 0.000000e+00 : f32
    %6 = vector.broadcast %cst_9 : f32 to vector<18x1x4xf32>
    %c0_10 = arith.constant 0 : index
    %c17_11 = arith.constant 17 : index
    %c0_12 = arith.constant 0 : index
    %7 = vector.load %arg11[%c0_10, %c17_11, %c0_12] : memref<18x18x4xf32, #tpu.memory_space<vmem>>, vector<18x1x4xf32>
    tpu.vector_store %arg11[%c0_10, %c17_11, %c0_12], %6 {strides = array<i32>} : memref<18x18x4xf32, #tpu.memory_space<vmem>>, vector<18x1x4xf32>,
    %cst_13 = arith.constant 0.000000e+00 : f32
    %8 = vector.broadcast %cst_13 : f32 to vector<2x20x4xf32>
    %c0_14 = arith.constant 0 : index
    %c0_15 = arith.constant 0 : index
    %c0_16 = arith.constant 0 : index
    %9 = vector.load %arg12[%c0_14, %c0_15, %c0_16] : memref<20x20x4xf32, #tpu.memory_space<vmem>>, vector<2x20x4xf32>
    tpu.vector_store %arg12[%c0_14, %c0_15, %c0_16], %8 {strides = array<i32>} : memref<20x20x4xf32, #tpu.memory_space<vmem>>, vector<2x20x4xf32>,
    %cst_17 = arith.constant 0.000000e+00 : f32
    %10 = vector.broadcast %cst_17 : f32 to vector<2x20x4xf32>
    %c18 = arith.constant 18 : index
    %c0_18 = arith.constant 0 : index
    %c0_19 = arith.constant 0 : index
    %11 = vector.load %arg12[%c18, %c0_18, %c0_19] : memref<20x20x4xf32, #tpu.memory_space<vmem>>, vector<2x20x4xf32>
    tpu.vector_store %arg12[%c18, %c0_18, %c0_19], %10 {strides = array<i32>} : memref<20x20x4xf32, #tpu.memory_space<vmem>>, vector<2x20x4xf32>,
    %cst_20 = arith.constant 0.000000e+00 : f32
    %12 = vector.broadcast %cst_20 : f32 to vector<20x2x4xf32>
    %c0_21 = arith.constant 0 : index
    %c0_22 = arith.constant 0 : index
    %c0_23 = arith.constant 0 : index
    %13 = vector.load %arg12[%c0_21, %c0_22, %c0_23] : memref<20x20x4xf32, #tpu.memory_space<vmem>>, vector<20x2x4xf32>
    tpu.vector_store %arg12[%c0_21, %c0_22, %c0_23], %12 {strides = array<i32>} : memref<20x20x4xf32, #tpu.memory_space<vmem>>, vector<20x2x4xf32>,
    %cst_24 = arith.constant 0.000000e+00 : f32
    %14 = vector.broadcast %cst_24 : f32 to vector<20x2x4xf32>
    %c0_25 = arith.constant 0 : index
    %c18_26 = arith.constant 18 : index
    %c0_27 = arith.constant 0 : index
    %15 = vector.load %arg12[%c0_25, %c18_26, %c0_27] : memref<20x20x4xf32, #tpu.memory_space<vmem>>, vector<20x2x4xf32>
    tpu.vector_store %arg12[%c0_25, %c18_26, %c0_27], %14 {strides = array<i32>} : memref<20x20x4xf32, #tpu.memory_space<vmem>>, vector<20x2x4xf32>,
    %cst_28 = arith.constant 0xFF800000 : f32
    %16 = vector.broadcast %cst_28 : f32 to vector<1x18x4xf32>
    %c0_29 = arith.constant 0 : index
    %c0_30 = arith.constant 0 : index
    %c0_31 = arith.constant 0 : index
    %17 = vector.load %arg13[%c0_29, %c0_30, %c0_31] : memref<18x18x4xf32, #tpu.memory_space<vmem>>, vector<1x18x4xf32>
    tpu.vector_store %arg13[%c0_29, %c0_30, %c0_31], %16 {strides = array<i32>} : memref<18x18x4xf32, #tpu.memory_space<vmem>>, vector<1x18x4xf32>,
    %cst_32 = arith.constant 0xFF800000 : f32
    %18 = vector.broadcast %cst_32 : f32 to vector<1x18x4xf32>
    %c17_33 = arith.constant 17 : index
    %c0_34 = arith.constant 0 : index
    %c0_35 = arith.constant 0 : index
    %19 = vector.load %arg13[%c17_33, %c0_34, %c0_35] : memref<18x18x4xf32, #tpu.memory_space<vmem>>, vector<1x18x4xf32>
    tpu.vector_store %arg13[%c17_33, %c0_34, %c0_35], %18 {strides = array<i32>} : memref<18x18x4xf32, #tpu.memory_space<vmem>>, vector<1x18x4xf32>,
    %cst_36 = arith.constant 0xFF800000 : f32
    %20 = vector.broadcast %cst_36 : f32 to vector<18x1x4xf32>
    %c0_37 = arith.constant 0 : index
    %c0_38 = arith.constant 0 : index
    %c0_39 = arith.constant 0 : index
    %21 = vector.load %arg13[%c0_37, %c0_38, %c0_39] : memref<18x18x4xf32, #tpu.memory_space<vmem>>, vector<18x1x4xf32>
    tpu.vector_store %arg13[%c0_37, %c0_38, %c0_39], %20 {strides = array<i32>} : memref<18x18x4xf32, #tpu.memory_space<vmem>>, vector<18x1x4xf32>,
    %cst_40 = arith.constant 0xFF800000 : f32
    %22 = vector.broadcast %cst_40 : f32 to vector<18x1x4xf32>
    %c0_41 = arith.constant 0 : index
    %c17_42 = arith.constant 17 : index
    %c0_43 = arith.constant 0 : index
    %23 = vector.load %arg13[%c0_41, %c17_42, %c0_43] : memref<18x18x4xf32, #tpu.memory_space<vmem>>, vector<18x1x4xf32>
    tpu.vector_store %arg13[%c0_41, %c17_42, %c0_43], %22 {strides = array<i32>} : memref<18x18x4xf32, #tpu.memory_space<vmem>>, vector<18x1x4xf32>,
    %c0_44 = arith.constant 0 : index
    %c0_45 = arith.constant 0 : index
    %24 = vector.load %arg3[%c0_44, %c0_45] : memref<1x16xf32, #tpu.memory_space<vmem>>, vector<1x16xf32>
    %c0_46 = arith.constant 0 : index
    %c0_47 = arith.constant 0 : index
    %c0_48 = arith.constant 0 : index
    %c0_49 = arith.constant 0 : index
    %25 = vector.load %arg1[%c0_46, %c0_47, %c0_48, %c0_49] : memref<2x16x16x4xf32, #tpu.memory_space<vmem>>, vector<1x16x16x4xf32>
    %26 = vector.shape_cast %25 : vector<1x16x16x4xf32> to vector<16x16x4xf32>
    %27 = vector.shape_cast %26 : vector<16x16x4xf32> to vector<256x4xf32>
    %c0_50 = arith.constant 0 : index
    %c0_51 = arith.constant 0 : index
    %28 = vector.load %arg2[%c0_50, %c0_51] : memref<4x16xf32, #tpu.memory_space<vmem>>, vector<4x16xf32>
    %cst_52 = arith.constant dense<0.000000e+00> : vector<256x16xf32>
    %29 = tpu.matmul %27, %28, %cst_52 {dimension_numbers = #tpu.dot_dimension_numbers<[1], [0], [0], [1], [0, 0, 1, 1], [], []>} : vector<256x4xf32>, vector<4x16xf32>, vector<256x16xf32> -> vector<256x16xf32>
    %30 = vector.shape_cast %29 : vector<256x16xf32> to vector<16x16x16xf32>
    %31 = vector.extract_strided_slice %30 {offsets = [0, 0, 0], sizes = [16, 16, 8], strides = [1, 1, 1]} : vector<16x16x16xf32> to vector<16x16x8xf32>
    %32 = vector.extract_strided_slice %24 {offsets = [0, 0], sizes = [1, 8], strides = [1, 1]} : vector<1x16xf32> to vector<1x8xf32>
    %33 = vector.shape_cast %32 : vector<1x8xf32> to vector<1x1x8xf32>
    %34 = vector.broadcast %33 : vector<1x1x8xf32> to vector<16x16x8xf32>
    %35 = arith.addf %31, %34 : vector<16x16x8xf32>
    %cst_53 = arith.constant 0.000000e+00 : f32
    %36 = vector.broadcast %cst_53 : f32 to vector<16x16x8xf32>
    %37 = arith.maximumf %35, %36 : vector<16x16x8xf32>
    %38 = vector.extract_strided_slice %30 {offsets = [0, 0, 8], sizes = [16, 16, 4], strides = [1, 1, 1]} : vector<16x16x16xf32> to vector<16x16x4xf32>
    %39 = vector.extract_strided_slice %24 {offsets = [0, 8], sizes = [1, 4], strides = [1, 1]} : vector<1x16xf32> to vector<1x4xf32>
    %40 = vector.shape_cast %39 : vector<1x4xf32> to vector<1x1x4xf32>
    %41 = vector.broadcast %40 : vector<1x1x4xf32> to vector<16x16x4xf32>
    %42 = arith.addf %38, %41 : vector<16x16x4xf32>
    %cst_54 = arith.constant 0.000000e+00 : f32
    %43 = vector.broadcast %cst_54 : f32 to vector<16x16x4xf32>
    %44 = arith.maximumf %42, %43 : vector<16x16x4xf32>
    %c1 = arith.constant 1 : index
    %c1_55 = arith.constant 1 : index
    %c0_56 = arith.constant 0 : index
    %45 = vector.load %arg11[%c1, %c1_55, %c0_56] : memref<18x18x4xf32, #tpu.memory_space<vmem>>, vector<16x16x4xf32>
    tpu.vector_store %arg11[%c1, %c1_55, %c0_56], %44 {strides = array<i32>} : memref<18x18x4xf32, #tpu.memory_space<vmem>>, vector<16x16x4xf32>,
    %46 = vector.extract_strided_slice %30 {offsets = [0, 0, 12], sizes = [16, 16, 4], strides = [1, 1, 1]} : vector<16x16x16xf32> to vector<16x16x4xf32>
    %47 = vector.extract_strided_slice %24 {offsets = [0, 12], sizes = [1, 4], strides = [1, 1]} : vector<1x16xf32> to vector<1x4xf32>
    %48 = vector.shape_cast %47 : vector<1x4xf32> to vector<1x1x4xf32>
    %49 = vector.broadcast %48 : vector<1x1x4xf32> to vector<16x16x4xf32>
    %50 = arith.addf %46, %49 : vector<16x16x4xf32>
    %cst_57 = arith.constant 0.000000e+00 : f32
    %51 = vector.broadcast %cst_57 : f32 to vector<16x16x4xf32>
    %52 = arith.maximumf %50, %51 : vector<16x16x4xf32>
    %c2 = arith.constant 2 : index
    %c2_58 = arith.constant 2 : index
    %c0_59 = arith.constant 0 : index
    %53 = vector.load %arg12[%c2, %c2_58, %c0_59] : memref<20x20x4xf32, #tpu.memory_space<vmem>>, vector<16x16x4xf32>
    tpu.vector_store %arg12[%c2, %c2_58, %c0_59], %52 {strides = array<i32>} : memref<20x20x4xf32, #tpu.memory_space<vmem>>, vector<16x16x4xf32>,
    %c0_60 = arith.constant 0 : index
    %c0_61 = arith.constant 0 : index
    %c0_62 = arith.constant 0 : index
    %54 = vector.load %arg11[%c0_60, %c0_61, %c0_62] : memref<18x18x4xf32, #tpu.memory_space<vmem>>, vector<18x18x4xf32>
    %55 = vector.extract_strided_slice %54 {offsets = [0, 0, 0], sizes = [18, 16, 4], strides = [1, 1, 1]} : vector<18x18x4xf32> to vector<18x16x4xf32>
    %56 = vector.extract_strided_slice %54 {offsets = [0, 1, 0], sizes = [18, 16, 4], strides = [1, 1, 1]} : vector<18x18x4xf32> to vector<18x16x4xf32>
    %57 = vector.extract_strided_slice %54 {offsets = [0, 2, 0], sizes = [18, 16, 4], strides = [1, 1, 1]} : vector<18x18x4xf32> to vector<18x16x4xf32>
    %58 = tpu.concatenate %55, %56, %57 in 2 : vector<18x16x4xf32>, vector<18x16x4xf32>, vector<18x16x4xf32> -> vector<18x16x12xf32>
    %59 = vector.extract_strided_slice %58 {offsets = [0, 0, 0], sizes = [16, 16, 12], strides = [1, 1, 1]} : vector<18x16x12xf32> to vector<16x16x12xf32>
    %60 = vector.extract_strided_slice %58 {offsets = [1, 0, 0], sizes = [16, 16, 12], strides = [1, 1, 1]} : vector<18x16x12xf32> to vector<16x16x12xf32>
    %61 = vector.extract_strided_slice %58 {offsets = [2, 0, 0], sizes = [16, 16, 12], strides = [1, 1, 1]} : vector<18x16x12xf32> to vector<16x16x12xf32>
    %62 = tpu.concatenate %59, %60, %61 in 2 : vector<16x16x12xf32>, vector<16x16x12xf32>, vector<16x16x12xf32> -> vector<16x16x36xf32>
    %63 = vector.shape_cast %62 : vector<16x16x36xf32> to vector<256x36xf32>
    %c0_63 = arith.constant 0 : index
    %c0_64 = arith.constant 0 : index
    %64 = vector.load %arg4[%c0_63, %c0_64] : memref<36x8xf32, #tpu.memory_space<vmem>>, vector<36x8xf32>
    %cst_65 = arith.constant dense<0.000000e+00> : vector<256x8xf32>
    %65 = tpu.matmul %63, %64, %cst_65 {dimension_numbers = #tpu.dot_dimension_numbers<[1], [0], [0], [1], [0, 0, 1, 1], [], []>} : vector<256x36xf32>, vector<36x8xf32>, vector<256x8xf32> -> vector<256x8xf32>
    %66 = vector.shape_cast %65 : vector<256x8xf32> to vector<16x16x8xf32>
    %c0_66 = arith.constant 0 : index
    %c0_67 = arith.constant 0 : index
    %67 = vector.load %arg5[%c0_66, %c0_67] : memref<1x8xf32, #tpu.memory_space<vmem>>, vector<1x8xf32>
    %68 = vector.shape_cast %67 : vector<1x8xf32> to vector<1x1x8xf32>
    %69 = vector.broadcast %68 : vector<1x1x8xf32> to vector<16x16x8xf32>
    %70 = arith.addf %66, %69 : vector<16x16x8xf32>
    %cst_68 = arith.constant 0.000000e+00 : f32
    %71 = vector.broadcast %cst_68 : f32 to vector<16x16x8xf32>
    %72 = arith.maximumf %70, %71 : vector<16x16x8xf32>
    %c0_69 = arith.constant 0 : index
    %c0_70 = arith.constant 0 : index
    %c0_71 = arith.constant 0 : index
    %73 = vector.load %arg12[%c0_69, %c0_70, %c0_71] : memref<20x20x4xf32, #tpu.memory_space<vmem>>, vector<20x20x4xf32>
    %74 = vector.extract_strided_slice %73 {offsets = [0, 0, 0], sizes = [20, 16, 4], strides = [1, 1, 1]} : vector<20x20x4xf32> to vector<20x16x4xf32>
    %75 = vector.extract_strided_slice %73 {offsets = [0, 1, 0], sizes = [20, 16, 4], strides = [1, 1, 1]} : vector<20x20x4xf32> to vector<20x16x4xf32>
    %76 = vector.extract_strided_slice %73 {offsets = [0, 2, 0], sizes = [20, 16, 4], strides = [1, 1, 1]} : vector<20x20x4xf32> to vector<20x16x4xf32>
    %77 = vector.extract_strided_slice %73 {offsets = [0, 3, 0], sizes = [20, 16, 4], strides = [1, 1, 1]} : vector<20x20x4xf32> to vector<20x16x4xf32>
    %78 = vector.extract_strided_slice %73 {offsets = [0, 4, 0], sizes = [20, 16, 4], strides = [1, 1, 1]} : vector<20x20x4xf32> to vector<20x16x4xf32>
    %79 = tpu.concatenate %74, %75, %76, %77, %78 in 2 : vector<20x16x4xf32>, vector<20x16x4xf32>, vector<20x16x4xf32>, vector<20x16x4xf32>, vector<20x16x4xf32> -> vector<20x16x20xf32>
    %80 = vector.extract_strided_slice %79 {offsets = [0, 0, 0], sizes = [16, 16, 20], strides = [1, 1, 1]} : vector<20x16x20xf32> to vector<16x16x20xf32>
    %81 = vector.extract_strided_slice %79 {offsets = [1, 0, 0], sizes = [16, 16, 20], strides = [1, 1, 1]} : vector<20x16x20xf32> to vector<16x16x20xf32>
    %82 = vector.extract_strided_slice %79 {offsets = [2, 0, 0], sizes = [16, 16, 20], strides = [1, 1, 1]} : vector<20x16x20xf32> to vector<16x16x20xf32>
    %83 = vector.extract_strided_slice %79 {offsets = [3, 0, 0], sizes = [16, 16, 20], strides = [1, 1, 1]} : vector<20x16x20xf32> to vector<16x16x20xf32>
    %84 = vector.extract_strided_slice %79 {offsets = [4, 0, 0], sizes = [16, 16, 20], strides = [1, 1, 1]} : vector<20x16x20xf32> to vector<16x16x20xf32>
    %85 = tpu.concatenate %80, %81, %82, %83, %84 in 2 : vector<16x16x20xf32>, vector<16x16x20xf32>, vector<16x16x20xf32>, vector<16x16x20xf32>, vector<16x16x20xf32> -> vector<16x16x100xf32>
    %86 = vector.shape_cast %85 : vector<16x16x100xf32> to vector<256x100xf32>
    %c0_72 = arith.constant 0 : index
    %c0_73 = arith.constant 0 : index
    %87 = vector.load %arg6[%c0_72, %c0_73] : memref<100x8xf32, #tpu.memory_space<vmem>>, vector<100x8xf32>
    %cst_74 = arith.constant dense<0.000000e+00> : vector<256x8xf32>
    %88 = tpu.matmul %86, %87, %cst_74 {dimension_numbers = #tpu.dot_dimension_numbers<[1], [0], [0], [1], [0, 0, 1, 1], [], []>} : vector<256x100xf32>, vector<100x8xf32>, vector<256x8xf32> -> vector<256x8xf32>
    %89 = vector.shape_cast %88 : vector<256x8xf32> to vector<16x16x8xf32>
    %c0_75 = arith.constant 0 : index
    %c0_76 = arith.constant 0 : index
    %90 = vector.load %arg7[%c0_75, %c0_76] : memref<1x8xf32, #tpu.memory_space<vmem>>, vector<1x8xf32>
    %91 = vector.shape_cast %90 : vector<1x8xf32> to vector<1x1x8xf32>
    %92 = vector.broadcast %91 : vector<1x1x8xf32> to vector<16x16x8xf32>
    %93 = arith.addf %89, %92 : vector<16x16x8xf32>
    %cst_77 = arith.constant 0.000000e+00 : f32
    %94 = vector.broadcast %cst_77 : f32 to vector<16x16x8xf32>
    %95 = arith.maximumf %93, %94 : vector<16x16x8xf32>
    %c1_78 = arith.constant 1 : index
    %c1_79 = arith.constant 1 : index
    %c0_80 = arith.constant 0 : index
    %96 = vector.load %arg13[%c1_78, %c1_79, %c0_80] : memref<18x18x4xf32, #tpu.memory_space<vmem>>, vector<16x16x4xf32>
    tpu.vector_store %arg13[%c1_78, %c1_79, %c0_80], %26 {strides = array<i32>} : memref<18x18x4xf32, #tpu.memory_space<vmem>>, vector<16x16x4xf32>,
    %c0_81 = arith.constant 0 : index
    %c0_82 = arith.constant 0 : index
    %c0_83 = arith.constant 0 : index
    %97 = vector.load %arg13[%c0_81, %c0_82, %c0_83] : memref<18x18x4xf32, #tpu.memory_space<vmem>>, vector<18x18x4xf32>
    %98 = vector.extract_strided_slice %97 {offsets = [0, 0, 0], sizes = [18, 16, 4], strides = [1, 1, 1]} : vector<18x18x4xf32> to vector<18x16x4xf32>
    %99 = vector.extract_strided_slice %97 {offsets = [0, 1, 0], sizes = [18, 16, 4], strides = [1, 1, 1]} : vector<18x18x4xf32> to vector<18x16x4xf32>
    %100 = arith.maximumf %98, %99 : vector<18x16x4xf32>
    %101 = vector.extract_strided_slice %97 {offsets = [0, 2, 0], sizes = [18, 16, 4], strides = [1, 1, 1]} : vector<18x18x4xf32> to vector<18x16x4xf32>
    %102 = arith.maximumf %100, %101 : vector<18x16x4xf32>
    %103 = vector.extract_strided_slice %102 {offsets = [0, 0, 0], sizes = [16, 16, 4], strides = [1, 1, 1]} : vector<18x16x4xf32> to vector<16x16x4xf32>
    %104 = vector.extract_strided_slice %102 {offsets = [1, 0, 0], sizes = [16, 16, 4], strides = [1, 1, 1]} : vector<18x16x4xf32> to vector<16x16x4xf32>
    %105 = arith.maximumf %103, %104 : vector<16x16x4xf32>
    %106 = vector.extract_strided_slice %102 {offsets = [2, 0, 0], sizes = [16, 16, 4], strides = [1, 1, 1]} : vector<18x16x4xf32> to vector<16x16x4xf32>
    %107 = arith.maximumf %105, %106 : vector<16x16x4xf32>
    %108 = vector.shape_cast %107 : vector<16x16x4xf32> to vector<256x4xf32>
    %c0_84 = arith.constant 0 : index
    %c0_85 = arith.constant 0 : index
    %109 = vector.load %arg8[%c0_84, %c0_85] : memref<4x8xf32, #tpu.memory_space<vmem>>, vector<4x8xf32>
    %cst_86 = arith.constant dense<0.000000e+00> : vector<256x8xf32>
    %110 = tpu.matmul %108, %109, %cst_86 {dimension_numbers = #tpu.dot_dimension_numbers<[1], [0], [0], [1], [0, 0, 1, 1], [], []>} : vector<256x4xf32>, vector<4x8xf32>, vector<256x8xf32> -> vector<256x8xf32>
    %c0_87 = arith.constant 0 : index
    %c0_88 = arith.constant 0 : index
    %111 = vector.load %arg9[%c0_87, %c0_88] : memref<1x8xf32, #tpu.memory_space<vmem>>, vector<1x8xf32>
    %112 = vector.broadcast %111 : vector<1x8xf32> to vector<256x8xf32>
    %113 = arith.addf %110, %112 : vector<256x8xf32>
    %cst_89 = arith.constant 0.000000e+00 : f32
    %114 = vector.broadcast %cst_89 : f32 to vector<256x8xf32>
    %115 = arith.maximumf %113, %114 : vector<256x8xf32>
    %116 = vector.shape_cast %115 : vector<256x8xf32> to vector<16x16x8xf32>
    %117 = tpu.concatenate %37, %72, %95, %116 in 2 : vector<16x16x8xf32>, vector<16x16x8xf32>, vector<16x16x8xf32>, vector<16x16x8xf32> -> vector<16x16x32xf32>
    %c0_90 = arith.constant 0 : index
    %c0_91 = arith.constant 0 : index
    %c0_92 = arith.constant 0 : index
    %c0_93 = arith.constant 0 : index
    %118 = vector.load %arg10[%c0_90, %c0_91, %c0_92, %c0_93] : memref<2x16x16x32xf32, #tpu.memory_space<vmem>>, vector<1x16x16x32xf32>
    %119 = vector.shape_cast %118 : vector<1x16x16x32xf32> to vector<16x16x32xf32>
    %120 = vector.shape_cast %117 : vector<16x16x32xf32> to vector<1x16x16x32xf32>
    tpu.vector_store %arg10[%c0_90, %c0_91, %c0_92, %c0_93], %120 {strides = array<i32>} : memref<2x16x16x32xf32, #tpu.memory_space<vmem>>, vector<1x16x16x32xf32>,
    %c1_94 = arith.constant 1 : index
    %c0_95 = arith.constant 0 : index
    %c0_96 = arith.constant 0 : index
    %c0_97 = arith.constant 0 : index
    %121 = vector.load %arg1[%c1_94, %c0_95, %c0_96, %c0_97] : memref<2x16x16x4xf32, #tpu.memory_space<vmem>>, vector<1x16x16x4xf32>
    %122 = vector.shape_cast %121 : vector<1x16x16x4xf32> to vector<16x16x4xf32>
    %123 = vector.shape_cast %122 : vector<16x16x4xf32> to vector<256x4xf32>
    %c0_98 = arith.constant 0 : index
    %c0_99 = arith.constant 0 : index
    %124 = vector.load %arg2[%c0_98, %c0_99] : memref<4x16xf32, #tpu.memory_space<vmem>>, vector<4x16xf32>
    %cst_100 = arith.constant dense<0.000000e+00> : vector<256x16xf32>
    %125 = tpu.matmul %123, %124, %cst_100 {dimension_numbers = #tpu.dot_dimension_numbers<[1], [0], [0], [1], [0, 0, 1, 1], [], []>} : vector<256x4xf32>, vector<4x16xf32>, vector<256x16xf32> -> vector<256x16xf32>
    %126 = vector.shape_cast %125 : vector<256x16xf32> to vector<16x16x16xf32>
    %127 = vector.extract_strided_slice %126 {offsets = [0, 0, 0], sizes = [16, 16, 8], strides = [1, 1, 1]} : vector<16x16x16xf32> to vector<16x16x8xf32>
    %128 = vector.extract_strided_slice %24 {offsets = [0, 0], sizes = [1, 8], strides = [1, 1]} : vector<1x16xf32> to vector<1x8xf32>
    %129 = vector.shape_cast %128 : vector<1x8xf32> to vector<1x1x8xf32>
    %130 = vector.broadcast %129 : vector<1x1x8xf32> to vector<16x16x8xf32>
    %131 = arith.addf %127, %130 : vector<16x16x8xf32>
    %cst_101 = arith.constant 0.000000e+00 : f32
    %132 = vector.broadcast %cst_101 : f32 to vector<16x16x8xf32>
    %133 = arith.maximumf %131, %132 : vector<16x16x8xf32>
    %134 = vector.extract_strided_slice %126 {offsets = [0, 0, 8], sizes = [16, 16, 4], strides = [1, 1, 1]} : vector<16x16x16xf32> to vector<16x16x4xf32>
    %135 = vector.extract_strided_slice %24 {offsets = [0, 8], sizes = [1, 4], strides = [1, 1]} : vector<1x16xf32> to vector<1x4xf32>
    %136 = vector.shape_cast %135 : vector<1x4xf32> to vector<1x1x4xf32>
    %137 = vector.broadcast %136 : vector<1x1x4xf32> to vector<16x16x4xf32>
    %138 = arith.addf %134, %137 : vector<16x16x4xf32>
    %cst_102 = arith.constant 0.000000e+00 : f32
    %139 = vector.broadcast %cst_102 : f32 to vector<16x16x4xf32>
    %140 = arith.maximumf %138, %139 : vector<16x16x4xf32>
    %c1_103 = arith.constant 1 : index
    %c1_104 = arith.constant 1 : index
    %c0_105 = arith.constant 0 : index
    %141 = vector.load %arg11[%c1_103, %c1_104, %c0_105] : memref<18x18x4xf32, #tpu.memory_space<vmem>>, vector<16x16x4xf32>
    tpu.vector_store %arg11[%c1_103, %c1_104, %c0_105], %140 {strides = array<i32>} : memref<18x18x4xf32, #tpu.memory_space<vmem>>, vector<16x16x4xf32>,
    %142 = vector.extract_strided_slice %126 {offsets = [0, 0, 12], sizes = [16, 16, 4], strides = [1, 1, 1]} : vector<16x16x16xf32> to vector<16x16x4xf32>
    %143 = vector.extract_strided_slice %24 {offsets = [0, 12], sizes = [1, 4], strides = [1, 1]} : vector<1x16xf32> to vector<1x4xf32>
    %144 = vector.shape_cast %143 : vector<1x4xf32> to vector<1x1x4xf32>
    %145 = vector.broadcast %144 : vector<1x1x4xf32> to vector<16x16x4xf32>
    %146 = arith.addf %142, %145 : vector<16x16x4xf32>
    %cst_106 = arith.constant 0.000000e+00 : f32
    %147 = vector.broadcast %cst_106 : f32 to vector<16x16x4xf32>
    %148 = arith.maximumf %146, %147 : vector<16x16x4xf32>
    %c2_107 = arith.constant 2 : index
    %c2_108 = arith.constant 2 : index
    %c0_109 = arith.constant 0 : index
    %149 = vector.load %arg12[%c2_107, %c2_108, %c0_109] : memref<20x20x4xf32, #tpu.memory_space<vmem>>, vector<16x16x4xf32>
    tpu.vector_store %arg12[%c2_107, %c2_108, %c0_109], %148 {strides = array<i32>} : memref<20x20x4xf32, #tpu.memory_space<vmem>>, vector<16x16x4xf32>,
    %c0_110 = arith.constant 0 : index
    %c0_111 = arith.constant 0 : index
    %c0_112 = arith.constant 0 : index
    %150 = vector.load %arg11[%c0_110, %c0_111, %c0_112] : memref<18x18x4xf32, #tpu.memory_space<vmem>>, vector<18x18x4xf32>
    %151 = vector.extract_strided_slice %150 {offsets = [0, 0, 0], sizes = [18, 16, 4], strides = [1, 1, 1]} : vector<18x18x4xf32> to vector<18x16x4xf32>
    %152 = vector.extract_strided_slice %150 {offsets = [0, 1, 0], sizes = [18, 16, 4], strides = [1, 1, 1]} : vector<18x18x4xf32> to vector<18x16x4xf32>
    %153 = vector.extract_strided_slice %150 {offsets = [0, 2, 0], sizes = [18, 16, 4], strides = [1, 1, 1]} : vector<18x18x4xf32> to vector<18x16x4xf32>
    %154 = tpu.concatenate %151, %152, %153 in 2 : vector<18x16x4xf32>, vector<18x16x4xf32>, vector<18x16x4xf32> -> vector<18x16x12xf32>
    %155 = vector.extract_strided_slice %154 {offsets = [0, 0, 0], sizes = [16, 16, 12], strides = [1, 1, 1]} : vector<18x16x12xf32> to vector<16x16x12xf32>
    %156 = vector.extract_strided_slice %154 {offsets = [1, 0, 0], sizes = [16, 16, 12], strides = [1, 1, 1]} : vector<18x16x12xf32> to vector<16x16x12xf32>
    %157 = vector.extract_strided_slice %154 {offsets = [2, 0, 0], sizes = [16, 16, 12], strides = [1, 1, 1]} : vector<18x16x12xf32> to vector<16x16x12xf32>
    %158 = tpu.concatenate %155, %156, %157 in 2 : vector<16x16x12xf32>, vector<16x16x12xf32>, vector<16x16x12xf32> -> vector<16x16x36xf32>
    %159 = vector.shape_cast %158 : vector<16x16x36xf32> to vector<256x36xf32>
    %c0_113 = arith.constant 0 : index
    %c0_114 = arith.constant 0 : index
    %160 = vector.load %arg4[%c0_113, %c0_114] : memref<36x8xf32, #tpu.memory_space<vmem>>, vector<36x8xf32>
    %cst_115 = arith.constant dense<0.000000e+00> : vector<256x8xf32>
    %161 = tpu.matmul %159, %160, %cst_115 {dimension_numbers = #tpu.dot_dimension_numbers<[1], [0], [0], [1], [0, 0, 1, 1], [], []>} : vector<256x36xf32>, vector<36x8xf32>, vector<256x8xf32> -> vector<256x8xf32>
    %162 = vector.shape_cast %161 : vector<256x8xf32> to vector<16x16x8xf32>
    %c0_116 = arith.constant 0 : index
    %c0_117 = arith.constant 0 : index
    %163 = vector.load %arg5[%c0_116, %c0_117] : memref<1x8xf32, #tpu.memory_space<vmem>>, vector<1x8xf32>
    %164 = vector.shape_cast %163 : vector<1x8xf32> to vector<1x1x8xf32>
    %165 = vector.broadcast %164 : vector<1x1x8xf32> to vector<16x16x8xf32>
    %166 = arith.addf %162, %165 : vector<16x16x8xf32>
    %cst_118 = arith.constant 0.000000e+00 : f32
    %167 = vector.broadcast %cst_118 : f32 to vector<16x16x8xf32>
    %168 = arith.maximumf %166, %167 : vector<16x16x8xf32>
    %c0_119 = arith.constant 0 : index
    %c0_120 = arith.constant 0 : index
    %c0_121 = arith.constant 0 : index
    %169 = vector.load %arg12[%c0_119, %c0_120, %c0_121] : memref<20x20x4xf32, #tpu.memory_space<vmem>>, vector<20x20x4xf32>
    %170 = vector.extract_strided_slice %169 {offsets = [0, 0, 0], sizes = [20, 16, 4], strides = [1, 1, 1]} : vector<20x20x4xf32> to vector<20x16x4xf32>
    %171 = vector.extract_strided_slice %169 {offsets = [0, 1, 0], sizes = [20, 16, 4], strides = [1, 1, 1]} : vector<20x20x4xf32> to vector<20x16x4xf32>
    %172 = vector.extract_strided_slice %169 {offsets = [0, 2, 0], sizes = [20, 16, 4], strides = [1, 1, 1]} : vector<20x20x4xf32> to vector<20x16x4xf32>
    %173 = vector.extract_strided_slice %169 {offsets = [0, 3, 0], sizes = [20, 16, 4], strides = [1, 1, 1]} : vector<20x20x4xf32> to vector<20x16x4xf32>
    %174 = vector.extract_strided_slice %169 {offsets = [0, 4, 0], sizes = [20, 16, 4], strides = [1, 1, 1]} : vector<20x20x4xf32> to vector<20x16x4xf32>
    %175 = tpu.concatenate %170, %171, %172, %173, %174 in 2 : vector<20x16x4xf32>, vector<20x16x4xf32>, vector<20x16x4xf32>, vector<20x16x4xf32>, vector<20x16x4xf32> -> vector<20x16x20xf32>
    %176 = vector.extract_strided_slice %175 {offsets = [0, 0, 0], sizes = [16, 16, 20], strides = [1, 1, 1]} : vector<20x16x20xf32> to vector<16x16x20xf32>
    %177 = vector.extract_strided_slice %175 {offsets = [1, 0, 0], sizes = [16, 16, 20], strides = [1, 1, 1]} : vector<20x16x20xf32> to vector<16x16x20xf32>
    %178 = vector.extract_strided_slice %175 {offsets = [2, 0, 0], sizes = [16, 16, 20], strides = [1, 1, 1]} : vector<20x16x20xf32> to vector<16x16x20xf32>
    %179 = vector.extract_strided_slice %175 {offsets = [3, 0, 0], sizes = [16, 16, 20], strides = [1, 1, 1]} : vector<20x16x20xf32> to vector<16x16x20xf32>
    %180 = vector.extract_strided_slice %175 {offsets = [4, 0, 0], sizes = [16, 16, 20], strides = [1, 1, 1]} : vector<20x16x20xf32> to vector<16x16x20xf32>
    %181 = tpu.concatenate %176, %177, %178, %179, %180 in 2 : vector<16x16x20xf32>, vector<16x16x20xf32>, vector<16x16x20xf32>, vector<16x16x20xf32>, vector<16x16x20xf32> -> vector<16x16x100xf32>
    %182 = vector.shape_cast %181 : vector<16x16x100xf32> to vector<256x100xf32>
    %c0_122 = arith.constant 0 : index
    %c0_123 = arith.constant 0 : index
    %183 = vector.load %arg6[%c0_122, %c0_123] : memref<100x8xf32, #tpu.memory_space<vmem>>, vector<100x8xf32>
    %cst_124 = arith.constant dense<0.000000e+00> : vector<256x8xf32>
    %184 = tpu.matmul %182, %183, %cst_124 {dimension_numbers = #tpu.dot_dimension_numbers<[1], [0], [0], [1], [0, 0, 1, 1], [], []>} : vector<256x100xf32>, vector<100x8xf32>, vector<256x8xf32> -> vector<256x8xf32>
    %185 = vector.shape_cast %184 : vector<256x8xf32> to vector<16x16x8xf32>
    %c0_125 = arith.constant 0 : index
    %c0_126 = arith.constant 0 : index
    %186 = vector.load %arg7[%c0_125, %c0_126] : memref<1x8xf32, #tpu.memory_space<vmem>>, vector<1x8xf32>
    %187 = vector.shape_cast %186 : vector<1x8xf32> to vector<1x1x8xf32>
    %188 = vector.broadcast %187 : vector<1x1x8xf32> to vector<16x16x8xf32>
    %189 = arith.addf %185, %188 : vector<16x16x8xf32>
    %cst_127 = arith.constant 0.000000e+00 : f32
    %190 = vector.broadcast %cst_127 : f32 to vector<16x16x8xf32>
    %191 = arith.maximumf %189, %190 : vector<16x16x8xf32>
    %c1_128 = arith.constant 1 : index
    %c1_129 = arith.constant 1 : index
    %c0_130 = arith.constant 0 : index
    %192 = vector.load %arg13[%c1_128, %c1_129, %c0_130] : memref<18x18x4xf32, #tpu.memory_space<vmem>>, vector<16x16x4xf32>
    tpu.vector_store %arg13[%c1_128, %c1_129, %c0_130], %122 {strides = array<i32>} : memref<18x18x4xf32, #tpu.memory_space<vmem>>, vector<16x16x4xf32>,
    %c0_131 = arith.constant 0 : index
    %c0_132 = arith.constant 0 : index
    %c0_133 = arith.constant 0 : index
    %193 = vector.load %arg13[%c0_131, %c0_132, %c0_133] : memref<18x18x4xf32, #tpu.memory_space<vmem>>, vector<18x18x4xf32>
    %194 = vector.extract_strided_slice %193 {offsets = [0, 0, 0], sizes = [18, 16, 4], strides = [1, 1, 1]} : vector<18x18x4xf32> to vector<18x16x4xf32>
    %195 = vector.extract_strided_slice %193 {offsets = [0, 1, 0], sizes = [18, 16, 4], strides = [1, 1, 1]} : vector<18x18x4xf32> to vector<18x16x4xf32>
    %196 = arith.maximumf %194, %195 : vector<18x16x4xf32>
    %197 = vector.extract_strided_slice %193 {offsets = [0, 2, 0], sizes = [18, 16, 4], strides = [1, 1, 1]} : vector<18x18x4xf32> to vector<18x16x4xf32>
    %198 = arith.maximumf %196, %197 : vector<18x16x4xf32>
    %199 = vector.extract_strided_slice %198 {offsets = [0, 0, 0], sizes = [16, 16, 4], strides = [1, 1, 1]} : vector<18x16x4xf32> to vector<16x16x4xf32>
    %200 = vector.extract_strided_slice %198 {offsets = [1, 0, 0], sizes = [16, 16, 4], strides = [1, 1, 1]} : vector<18x16x4xf32> to vector<16x16x4xf32>
    %201 = arith.maximumf %199, %200 : vector<16x16x4xf32>
    %202 = vector.extract_strided_slice %198 {offsets = [2, 0, 0], sizes = [16, 16, 4], strides = [1, 1, 1]} : vector<18x16x4xf32> to vector<16x16x4xf32>
    %203 = arith.maximumf %201, %202 : vector<16x16x4xf32>
    %204 = vector.shape_cast %203 : vector<16x16x4xf32> to vector<256x4xf32>
    %c0_134 = arith.constant 0 : index
    %c0_135 = arith.constant 0 : index
    %205 = vector.load %arg8[%c0_134, %c0_135] : memref<4x8xf32, #tpu.memory_space<vmem>>, vector<4x8xf32>
    %cst_136 = arith.constant dense<0.000000e+00> : vector<256x8xf32>
    %206 = tpu.matmul %204, %205, %cst_136 {dimension_numbers = #tpu.dot_dimension_numbers<[1], [0], [0], [1], [0, 0, 1, 1], [], []>} : vector<256x4xf32>, vector<4x8xf32>, vector<256x8xf32> -> vector<256x8xf32>
    %c0_137 = arith.constant 0 : index
    %c0_138 = arith.constant 0 : index
    %207 = vector.load %arg9[%c0_137, %c0_138] : memref<1x8xf32, #tpu.memory_space<vmem>>, vector<1x8xf32>
    %208 = vector.broadcast %207 : vector<1x8xf32> to vector<256x8xf32>
    %209 = arith.addf %206, %208 : vector<256x8xf32>
    %cst_139 = arith.constant 0.000000e+00 : f32
    %210 = vector.broadcast %cst_139 : f32 to vector<256x8xf32>
    %211 = arith.maximumf %209, %210 : vector<256x8xf32>
    %212 = vector.shape_cast %211 : vector<256x8xf32> to vector<16x16x8xf32>
    %213 = tpu.concatenate %133, %168, %191, %212 in 2 : vector<16x16x8xf32>, vector<16x16x8xf32>, vector<16x16x8xf32>, vector<16x16x8xf32> -> vector<16x16x32xf32>
    %c1_140 = arith.constant 1 : index
    %c0_141 = arith.constant 0 : index
    %c0_142 = arith.constant 0 : index
    %c0_143 = arith.constant 0 : index
    %214 = vector.load %arg10[%c1_140, %c0_141, %c0_142, %c0_143] : memref<2x16x16x32xf32, #tpu.memory_space<vmem>>, vector<1x16x16x32xf32>
    %215 = vector.shape_cast %214 : vector<1x16x16x32xf32> to vector<16x16x32xf32>
    %216 = vector.shape_cast %213 : vector<16x16x32xf32> to vector<1x16x16x32xf32>
    tpu.vector_store %arg10[%c1_140, %c0_141, %c0_142, %c0_143], %216 {strides = array<i32>} : memref<2x16x16x32xf32, #tpu.memory_space<vmem>>, vector<1x16x16x32xf32>,
    return
  }
  func.func @transform_0(%arg0: i32) -> (i32, i32, i32, i32) {
    %c0_i32 = arith.constant 0 : i32
    %c0_i32_0 = arith.constant 0 : i32
    %c0_i32_1 = arith.constant 0 : i32
    %c0_i32_2 = arith.constant 0 : i32
    return %arg0, %c0_i32, %c0_i32_0, %c0_i32_1 : i32, i32, i32, i32
  }
  func.func @transform_1(%arg0: i32) -> (i32, i32) {
    %c0_i32 = arith.constant 0 : i32
    %c0_i32_0 = arith.constant 0 : i32
    %c0_i32_1 = arith.constant 0 : i32
    return %c0_i32, %c0_i32_0 : i32, i32
  }
  func.func @transform_2(%arg0: i32) -> (i32, i32) {
    %c0_i32 = arith.constant 0 : i32
    %c0_i32_0 = arith.constant 0 : i32
    %c0_i32_1 = arith.constant 0 : i32
    return %c0_i32, %c0_i32_0 : i32, i32
  }
  func.func @transform_3(%arg0: i32) -> (i32, i32) {
    %c0_i32 = arith.constant 0 : i32
    %c0_i32_0 = arith.constant 0 : i32
    %c0_i32_1 = arith.constant 0 : i32
    return %c0_i32, %c0_i32_0 : i32, i32
  }
  func.func @transform_4(%arg0: i32) -> (i32, i32) {
    %c0_i32 = arith.constant 0 : i32
    %c0_i32_0 = arith.constant 0 : i32
    %c0_i32_1 = arith.constant 0 : i32
    return %c0_i32, %c0_i32_0 : i32, i32
  }
  func.func @transform_5(%arg0: i32) -> (i32, i32) {
    %c0_i32 = arith.constant 0 : i32
    %c0_i32_0 = arith.constant 0 : i32
    %c0_i32_1 = arith.constant 0 : i32
    return %c0_i32, %c0_i32_0 : i32, i32
  }
  func.func @transform_6(%arg0: i32) -> (i32, i32) {
    %c0_i32 = arith.constant 0 : i32
    %c0_i32_0 = arith.constant 0 : i32
    %c0_i32_1 = arith.constant 0 : i32
    return %c0_i32, %c0_i32_0 : i32, i32
  }
  func.func @transform_7(%arg0: i32) -> (i32, i32) {
    %c0_i32 = arith.constant 0 : i32
    %c0_i32_0 = arith.constant 0 : i32
    %c0_i32_1 = arith.constant 0 : i32
    return %c0_i32, %c0_i32_0 : i32, i32
  }
  func.func @transform_8(%arg0: i32) -> (i32, i32) {
    %c0_i32 = arith.constant 0 : i32
    %c0_i32_0 = arith.constant 0 : i32
    %c0_i32_1 = arith.constant 0 : i32
    return %c0_i32, %c0_i32_0 : i32, i32
  }
  func.func @transform_9(%arg0: i32) -> (i32, i32, i32, i32) {
    %c0_i32 = arith.constant 0 : i32
    %c0_i32_0 = arith.constant 0 : i32
    %c0_i32_1 = arith.constant 0 : i32
    %c0_i32_2 = arith.constant 0 : i32
    return %arg0, %c0_i32, %c0_i32_0, %c0_i32_1 : i32, i32, i32, i32
  }
}

</mosaic_0001>

<llo_original>
// kernel: inception_v1_forward.1
$region0: #{inception_v1_forward.1}
  #allocation0 [shape = 'u32[]', space=smem, size = 0x4, offset = 0x4, fixed_abs, tag = 'smem constant byte address 0x4 - core index']
  #allocation1 [shape = 'u32[144,128]{1,0:T(1,128)}', space=vmem, size = 0x12000, scoped, tag = 'internal scratch']
  #allocation2 [shape = 'f32[18,18,4]{2,1,0:T(8,128)}', space=vmem, size = 0x36000, scoped, tag = 'scratch operand']
  #allocation3 [shape = 'f32[20,20,4]{2,1,0:T(8,128)}', space=vmem, size = 0x3c000, scoped, tag = 'scratch operand']
  #allocation4 [shape = 'f32[18,18,4]{2,1,0:T(8,128)}', space=vmem, size = 0x36000, scoped, tag = 'scratch operand']
  %s0 = inlined_call_operand.vmem [shape: f32[4,16,16,4], index: 0, kind: input, shape index: {}]
  %s1 = inlined_call_operand.vmem [shape: f32[4,16], index: 1, kind: input, shape index: {}]
  %s2 = inlined_call_operand.vmem [shape: f32[1,16], index: 2, kind: input, shape index: {}]
  %s3 = inlined_call_operand.vmem [shape: f32[36,8], index: 3, kind: input, shape index: {}]
  %s4 = inlined_call_operand.vmem [shape: f32[1,8], index: 4, kind: input, shape index: {}]
  %s5 = inlined_call_operand.vmem [shape: f32[100,8], index: 5, kind: input, shape index: {}]
  %s6 = inlined_call_operand.vmem [shape: f32[1,8], index: 6, kind: input, shape index: {}]
  %s7 = inlined_call_operand.vmem [shape: f32[4,8], index: 7, kind: input, shape index: {}]
  %s8 = inlined_call_operand.vmem [shape: f32[1,8], index: 8, kind: input, shape index: {}]
  %s9 = inlined_call_operand.hbm [shape: f32[4,16,16,32], index: 9, kind: output, shape index: {}]
  %s10 = sld [smem:[#allocation0]]
  $region69: #{inception_v1_forward.1} parent=0
    _
  %s12 = ssub.s32 1, %s10
  %s13 = scalar_select 0, %s12, %s10
  $region1: #{inception_v1_forward.1} parent=0
    #allocation5 [shape = 'u8[524288]{0}', space=vmem, size = 0x80000, scoped, tag = 'output window, operand 0']
    #allocation6 [shape = 's32[2]{0}', space=sflag, size = 0x8, scoped, tag = 'scoped memory for inception_v1_forward.1']
    %14 = vsyncpa [#allocation6], 0
    %s15 = scalar_lea.sflag [#allocation6], 1
    %16 = vsyncpa %s15, 0
    loop: start=0, step=1, limit=4
    $region2: #{inception_v1_forward.1} parent=1 // loop_pre_header
      _
    $region3: #{inception_v1_forward.1} parent=1 // loop_header
      %s18 = sphi 0, %s22
      %p19 = scmp.ge.s32.totalorder %s18, 4
      %s28 = sphi 0, %s30
      %s31 = sphi 0, %s28
      %s32 = sphi 0, %s31
      %s48 = sphi 0, %s32
      %s52 = sphi 0, %s52
      %s54 = sphi 0, %s52
      %s55 = sphi 0, %s54
      %s69 = sphi 0, %s55
      %s73 = sphi 0, %s73
      %s75 = sphi 0, %s73
      %s76 = sphi 0, %s75
      %s90 = sphi 0, %s76
      %s94 = sphi 0, %s94
      %s96 = sphi 0, %s94
      %s97 = sphi 0, %s96
      %s111 = sphi 0, %s97
      %s115 = sphi 0, %s115
      %s117 = sphi 0, %s115
      %s118 = sphi 0, %s117
      %s132 = sphi 0, %s118
      %s136 = sphi 0, %s136
      %s138 = sphi 0, %s136
      %s139 = sphi 0, %s138
      %s153 = sphi 0, %s139
      %s157 = sphi 0, %s157
      %s159 = sphi 0, %s157
      %s160 = sphi 0, %s159
      %s174 = sphi 0, %s160
      %s178 = sphi 0, %s178
      %s180 = sphi 0, %s178
      %s181 = sphi 0, %s180
      %s195 = sphi 0, %s181
      %s199 = sphi 0, %s199
      %s201 = sphi 0, %s199
      %s202 = sphi 0, %s201
      %s216 = sphi 0, %s202
      %s222 = sphi 0, %s224
      %s225 = sphi 0, %s222
      %s226 = sphi 0, %s225
      %s242 = sphi 0, %s226
    $region4: #{inception_v1_forward.1} parent=1 // loop_header_branch
      %21 = sbr.rel (%p19) target = $region8
    $region5: #{inception_v1_forward.1} parent=1 // loop_body
      %s23 = ssub.s32 %s18, 1
      %s24 = ssub.s32 %s18, 2
      %s25 = sadd.s32 %s18, 1
      %s26 = ssub.s32 %s18, %s25
      %p27 = scmp.eq.s32.totalorder %s26, 0
      %s29 = sadd.s32 %s28, 1
      %s30 = scalar_select %p27, %s28, %s29
      %p33 = pneg %p27
      %p34 = scmp.eq.s32.totalorder %s18, 1
      %p35 = por %p33, %p34
      %p36 = scmp.ne.s32.totalorder %s28, %s31
      %p37 = scmp.eq.s32.totalorder %s18, 0
      %p38 = por %p36, %p37
      %p39 = scmp.ne.s32.totalorder %s28, %s31
      %p40 = scmp.eq.s32.totalorder %s23, 1
      %p41 = por %p39, %p40
      %p42 = scmp.ne.s32.totalorder %s31, %s32
      %p43 = scmp.eq.s32.totalorder %s23, 0
      %p44 = por %p42, %p43
      %p45 = scmp.ne.s32.totalorder %s31, %s32
      %p46 = scmp.eq.s32.totalorder %s24, 1
      %p47 = por %p45, %p46
      %p49 = scmp.ne.s32.totalorder %s32, %s48
      %p50 = scmp.eq.s32.totalorder %s24, 0
      %p51 = por %p49, %p50
      %s53 = sadd.s32 %s52, 1
      %p56 = scmp.eq.s32.totalorder %s18, 1
      %p57 = scmp.ne.s32.totalorder %s52, %s54
      %p58 = scmp.eq.s32.totalorder %s18, 0
      %p59 = por %p57, %p58
      %p60 = scmp.ne.s32.totalorder %s52, %s54
      %p61 = scmp.eq.s32.totalorder %s23, 1
      %p62 = por %p60, %p61
      %p63 = scmp.ne.s32.totalorder %s54, %s55
      %p64 = scmp.eq.s32.totalorder %s23, 0
      %p65 = por %p63, %p64
      %p66 = scmp.ne.s32.totalorder %s54, %s55
      %p67 = scmp.eq.s32.totalorder %s24, 1
      %p68 = por %p66, %p67
      %p70 = scmp.ne.s32.totalorder %s55, %s69
      %p71 = scmp.eq.s32.totalorder %s24, 0
      %p72 = por %p70, %p71
      %s74 = sadd.s32 %s73, 1
      %p77 = scmp.eq.s32.totalorder %s18, 1
      %p78 = scmp.ne.s32.totalorder %s73, %s75
      %p79 = scmp.eq.s32.totalorder %s18, 0
      %p80 = por %p78, %p79
      %p81 = scmp.ne.s32.totalorder %s73, %s75
      %p82 = scmp.eq.s32.totalorder %s23, 1
      %p83 = por %p81, %p82
      %p84 = scmp.ne.s32.totalorder %s75, %s76
      %p85 = scmp.eq.s32.totalorder %s23, 0
      %p86 = por %p84, %p85
      %p87 = scmp.ne.s32.totalorder %s75, %s76
      %p88 = scmp.eq.s32.totalorder %s24, 1
      %p89 = por %p87, %p88
      %p91 = scmp.ne.s32.totalorder %s76, %s90
      %p92 = scmp.eq.s32.totalorder %s24, 0
      %p93 = por %p91, %p92
      %s95 = sadd.s32 %s94, 1
      %p98 = scmp.eq.s32.totalorder %s18, 1
      %p99 = scmp.ne.s32.totalorder %s94, %s96
      %p100 = scmp.eq.s32.totalorder %s18, 0
      %p101 = por %p99, %p100
      %p102 = scmp.ne.s32.totalorder %s94, %s96
      %p103 = scmp.eq.s32.totalorder %s23, 1
      %p104 = por %p102, %p103
      %p105 = scmp.ne.s32.totalorder %s96, %s97
      %p106 = scmp.eq.s32.totalorder %s23, 0
      %p107 = por %p105, %p106
      %p108 = scmp.ne.s32.totalorder %s96, %s97
      %p109 = scmp.eq.s32.totalorder %s24, 1
      %p110 = por %p108, %p109
      %p112 = scmp.ne.s32.totalorder %s97, %s111
      %p113 = scmp.eq.s32.totalorder %s24, 0
      %p114 = por %p112, %p113
      %s116 = sadd.s32 %s115, 1
      %p119 = scmp.eq.s32.totalorder %s18, 1
      %p120 = scmp.ne.s32.totalorder %s115, %s117
      %p121 = scmp.eq.s32.totalorder %s18, 0
      %p122 = por %p120, %p121
      %p123 = scmp.ne.s32.totalorder %s115, %s117
      %p124 = scmp.eq.s32.totalorder %s23, 1
      %p125 = por %p123, %p124
      %p126 = scmp.ne.s32.totalorder %s117, %s118
      %p127 = scmp.eq.s32.totalorder %s23, 0
      %p128 = por %p126, %p127
      %p129 = scmp.ne.s32.totalorder %s117, %s118
      %p130 = scmp.eq.s32.totalorder %s24, 1
      %p131 = por %p129, %p130
      %p133 = scmp.ne.s32.totalorder %s118, %s132
      %p134 = scmp.eq.s32.totalorder %s24, 0
      %p135 = por %p133, %p134
      %s137 = sadd.s32 %s136, 1
      %p140 = scmp.eq.s32.totalorder %s18, 1
      %p141 = scmp.ne.s32.totalorder %s136, %s138
      %p142 = scmp.eq.s32.totalorder %s18, 0
      %p143 = por %p141, %p142
      %p144 = scmp.ne.s32.totalorder %s136, %s138
      %p145 = scmp.eq.s32.totalorder %s23, 1
      %p146 = por %p144, %p145
      %p147 = scmp.ne.s32.totalorder %s138, %s139
      %p148 = scmp.eq.s32.totalorder %s23, 0
      %p149 = por %p147, %p148
      %p150 = scmp.ne.s32.totalorder %s138, %s139
      %p151 = scmp.eq.s32.totalorder %s24, 1
      %p152 = por %p150, %p151
      %p154 = scmp.ne.s32.totalorder %s139, %s153
      %p155 = scmp.eq.s32.totalorder %s24, 0
      %p156 = por %p154, %p155
      %s158 = sadd.s32 %s157, 1
      %p161 = scmp.eq.s32.totalorder %s18, 1
      %p162 = scmp.ne.s32.totalorder %s157, %s159
      %p163 = scmp.eq.s32.totalorder %s18, 0
      %p164 = por %p162, %p163
      %p165 = scmp.ne.s32.totalorder %s157, %s159
      %p166 = scmp.eq.s32.totalorder %s23, 1
      %p167 = por %p165, %p166
      %p168 = scmp.ne.s32.totalorder %s159, %s160
      %p169 = scmp.eq.s32.totalorder %s23, 0
      %p170 = por %p168, %p169
      %p171 = scmp.ne.s32.totalorder %s159, %s160
      %p172 = scmp.eq.s32.totalorder %s24, 1
      %p173 = por %p171, %p172
      %p175 = scmp.ne.s32.totalorder %s160, %s174
      %p176 = scmp.eq.s32.totalorder %s24, 0
      %p177 = por %p175, %p176
      %s179 = sadd.s32 %s178, 1
      %p182 = scmp.eq.s32.totalorder %s18, 1
      %p183 = scmp.ne.s32.totalorder %s178, %s180
      %p184 = scmp.eq.s32.totalorder %s18, 0
      %p185 = por %p183, %p184
      %p186 = scmp.ne.s32.totalorder %s178, %s180
      %p187 = scmp.eq.s32.totalorder %s23, 1
      %p188 = por %p186, %p187
      %p189 = scmp.ne.s32.totalorder %s180, %s181
      %p190 = scmp.eq.s32.totalorder %s23, 0
      %p191 = por %p189, %p190
      %p192 = scmp.ne.s32.totalorder %s180, %s181
      %p193 = scmp.eq.s32.totalorder %s24, 1
      %p194 = por %p192, %p193
      %p196 = scmp.ne.s32.totalorder %s181, %s195
      %p197 = scmp.eq.s32.totalorder %s24, 0
      %p198 = por %p196, %p197
      %s200 = sadd.s32 %s199, 1
      %p203 = scmp.eq.s32.totalorder %s18, 1
      %p204 = scmp.ne.s32.totalorder %s199, %s201
      %p205 = scmp.eq.s32.totalorder %s18, 0
      %p206 = por %p204, %p205
      %p207 = scmp.ne.s32.totalorder %s199, %s201
      %p208 = scmp.eq.s32.totalorder %s23, 1
      %p209 = por %p207, %p208
      %p210 = scmp.ne.s32.totalorder %s201, %s202
      %p211 = scmp.eq.s32.totalorder %s23, 0
      %p212 = por %p210, %p211
      %p213 = scmp.ne.s32.totalorder %s201, %s202
      %p214 = scmp.eq.s32.totalorder %s24, 1
      %p215 = por %p213, %p214
      %p217 = scmp.ne.s32.totalorder %s202, %s216
      %p218 = scmp.eq.s32.totalorder %s24, 0
      %p219 = por %p217, %p218
      %s220 = ssub.s32 %s18, %s25
      %p221 = scmp.eq.s32.totalorder %s220, 0
      %s223 = sadd.s32 %s222, 1
      %s224 = scalar_select %p221, %s222, %s223
      %p227 = pneg %p221
      %p228 = scmp.eq.s32.totalorder %s18, 1
      %p229 = por %p227, %p228
      %p230 = scmp.ne.s32.totalorder %s222, %s225
      %p231 = scmp.eq.s32.totalorder %s18, 0
      %p232 = por %p230, %p231
      %p233 = scmp.ne.s32.totalorder %s222, %s225
      %p234 = scmp.eq.s32.totalorder %s23, 1
      %p235 = por %p233, %p234
      %p236 = scmp.ne.s32.totalorder %s225, %s226
      %p237 = scmp.eq.s32.totalorder %s23, 0
      %p238 = por %p236, %p237
      %p239 = scmp.ne.s32.totalorder %s225, %s226
      %p240 = scmp.eq.s32.totalorder %s24, 1
      %p241 = por %p239, %p240
      %p243 = scmp.ne.s32.totalorder %s226, %s242
      %p244 = scmp.eq.s32.totalorder %s24, 0
      %p245 = por %p243, %p244
      %p246 = scmp.le.s32.totalorder 1, %s18
      %p247 = scmp.lt.s32.totalorder %s18, 3
      %p248 = pnand %p246, %p247
      %p249 = pneg %p248
      // Predicated region
      $region9: #{inception_v1_forward.1} parent=5 // pred_check
        _
      $region10: #{inception_v1_forward.1} parent=5 // pred_check_branch
        %251 = sbr.rel (%p248) target = $region12
      $region11: #{inception_v1_forward.1} parent=5 // pred_region
        %s252 = ssub.s32 %s18, 1
        // Predicated region
        $region13: #{inception_v1_forward.1} parent=11 // pred_check
          %p253 = pneg %p65
        $region14: #{inception_v1_forward.1} parent=11 // pred_check_branch
          %255 = sbr.rel (%p253) target = $region16
        $region15: #{inception_v1_forward.1} parent=11 // pred_region
          _
        $region16: #{inception_v1_forward.1} parent=11 // pred_fallthru
          _
        // Predicated region
        $region17: #{inception_v1_forward.1} parent=11 // pred_check
          %p256 = pneg %p86
        $region18: #{inception_v1_forward.1} parent=11 // pred_check_branch
          %258 = sbr.rel (%p256) target = $region20
        $region19: #{inception_v1_forward.1} parent=11 // pred_region
          _
        $region20: #{inception_v1_forward.1} parent=11 // pred_fallthru
          _
        // Predicated region
        $region21: #{inception_v1_forward.1} parent=11 // pred_check
          %p259 = pneg %p107
        $region22: #{inception_v1_forward.1} parent=11 // pred_check_branch
          %261 = sbr.rel (%p259) target = $region24
        $region23: #{inception_v1_forward.1} parent=11 // pred_region
          _
        $region24: #{inception_v1_forward.1} parent=11 // pred_fallthru
          _
        // Predicated region
        $region25: #{inception_v1_forward.1} parent=11 // pred_check
          %p262 = pneg %p128
        $region26: #{inception_v1_forward.1} parent=11 // pred_check_branch
          %264 = sbr.rel (%p262) target = $region28
        $region27: #{inception_v1_forward.1} parent=11 // pred_region
          _
        $region28: #{inception_v1_forward.1} parent=11 // pred_fallthru
          _
        // Predicated region
        $region29: #{inception_v1_forward.1} parent=11 // pred_check
          %p265 = pneg %p149
        $region30: #{inception_v1_forward.1} parent=11 // pred_check_branch
          %267 = sbr.rel (%p265) target = $region32
        $region31: #{inception_v1_forward.1} parent=11 // pred_region
          _
        $region32: #{inception_v1_forward.1} parent=11 // pred_fallthru
          _
        // Predicated region
        $region33: #{inception_v1_forward.1} parent=11 // pred_check
          %p268 = pneg %p170
        $region34: #{inception_v1_forward.1} parent=11 // pred_check_branch
          %270 = sbr.rel (%p268) target = $region36
        $region35: #{inception_v1_forward.1} parent=11 // pred_region
          _
        $region36: #{inception_v1_forward.1} parent=11 // pred_fallthru
          _
        // Predicated region
        $region37: #{inception_v1_forward.1} parent=11 // pred_check
          %p271 = pneg %p191
        $region38: #{inception_v1_forward.1} parent=11 // pred_check_branch
          %273 = sbr.rel (%p271) target = $region40
        $region39: #{inception_v1_forward.1} parent=11 // pred_region
          _
        $region40: #{inception_v1_forward.1} parent=11 // pred_fallthru
          _
        // Predicated region
        $region41: #{inception_v1_forward.1} parent=11 // pred_check
          %p274 = pneg %p212
        $region42: #{inception_v1_forward.1} parent=11 // pred_check_branch
          %276 = sbr.rel (%p274) target = $region44
        $region43: #{inception_v1_forward.1} parent=11 // pred_region
          _
        $region44: #{inception_v1_forward.1} parent=11 // pred_fallthru
          _
      $region12: #{inception_v1_forward.1} parent=5 // pred_fallthru
        _
      %p277 = scmp.lt.s32.totalorder %s18, 2
      // Predicated region
      $region45: #{inception_v1_forward.1} parent=5 // pred_check
        %p278 = pneg %p277
      $region46: #{inception_v1_forward.1} parent=5 // pred_check_branch
        %280 = sbr.rel (%p278) target = $region48
      $region47: #{inception_v1_forward.1} parent=5 // pred_region
        // Predicated region
        $region49: #{inception_v1_forward.1} parent=47 // pred_check
          %p281 = pneg %p38
        $region50: #{inception_v1_forward.1} parent=47 // pred_check_branch
          %283 = sbr.rel (%p281) target = $region52
        $region51: #{inception_v1_forward.1} parent=47 // pred_region
          %s284 = smul.u32 2, %s18
          %p285 = scmp.lt.s32.totalorder %s284, 3
          %s286 = scalar_select %p285, %s284, 3
          %s287 = smul.addr %s286, 32
          %s288 = smul.addr %s287, 8
          %s289 = scalar_lea.vmem %s0, %s288
          %s290 = smul.u32 2, %s18
        $region52: #{inception_v1_forward.1} parent=47 // pred_fallthru
          _
      $region48: #{inception_v1_forward.1} parent=5 // pred_fallthru
        _
      %p291 = scmp.le.s32.totalorder 1, %s18
      %p292 = scmp.lt.s32.totalorder %s18, 3
      %p293 = pnand %p291, %p292
      %p294 = pneg %p293
      // Predicated region
      $region53: #{inception_v1_forward.1} parent=5 // pred_check
        _
      $region54: #{inception_v1_forward.1} parent=5 // pred_check_branch
        %296 = sbr.rel (%p293) target = $region56
      $region55: #{inception_v1_forward.1} parent=5 // pred_region
        %s297 = ssub.s32 %s18, 1
        %s298 = smul.u32 2, %s23
        %p299 = scmp.lt.s32.totalorder %s298, 3
        %s300 = scalar_select %p299, %s298, 3
        %s301 = smul.addr %s300, 32
        %s302 = smul.addr %s301, 8
        %s303 = scalar_lea.vmem %s0, %s302
        %p304 = pneg %p44
        %p305 = pneg %p41
        %p306 = pneg %p65
        %p307 = pneg %p62
        %p308 = pneg %p86
        %p309 = pneg %p83
        %p310 = pneg %p107
        %p311 = pneg %p104
        %p312 = pneg %p128
        %p313 = pneg %p125
        %p314 = pneg %p149
        %p315 = pneg %p146
        %p316 = pneg %p170
        %p317 = pneg %p167
        %p318 = pneg %p191
        %p319 = pneg %p188
        %p320 = pneg %p212
        %p321 = pneg %p209
        %p322 = pneg %p238
        %p323 = pneg %p235
        %s324 = sand.u32 %s225, 1
        %s325 = scalar_lea.sflag [#allocation6], %s324
        %s326 = sand.u32 %s225, 1
        %s327 = smul.addr %s326, 512
        %s328 = scalar_lea.vmem [#allocation5], %s327
        %s329 = smul.u32 2, %s23
        %p330 = scmp.lt.s32.totalorder %s329, 3
        %s331 = scalar_select %p330, %s329, 3
        %s332 = smul.addr %s331, 32
        %s333 = smul.addr %s332, 8
        %s334 = scalar_lea.vmem %s0, %s333
        %s335 = smul.u32 2, %s23
        %s336 = smul.u32 2, %s23
        %vm337 = vcmask 31744
        %338 = vst.msk [vmem:[#allocation2] sm:$0xff] %vm337, 0.0
        %339 = vst.msk [vmem:[#allocation2 + $0x8] sm:$0xff] %vm337, 0.0
        %vm340 = vcmask 25600
        %341 = vst.msk [vmem:[#allocation2 + $0x10] sm:$0x3] %vm340, 0.0
        %s342 = scalar_lea.vmem [#allocation2], 408
        %343 = vst.msk [vmem:[%s342] sm:$0xff] %vm337, 0.0
        %344 = vst.msk [vmem:[%s342 + $0x8] sm:$0xff] %vm337, 0.0
        %345 = vst.msk [vmem:[%s342 + $0x10] sm:$0x3] %vm340, 0.0
        %vm346 = vcmask 24576
        %347 = vst.msk [vmem:[#allocation2] sm:$0x1] %vm346, 0.0
        %348 = vst.msk [vmem:[#allocation2 + $0x18] sm:$0x1] %vm346, 0.0
        %349 = vst.msk [vmem:[#allocation2 + $0x30] sm:$0x1] %vm346, 0.0
        %350 = vst.msk [vmem:[#allocation2 + $0x48] sm:$0x1] %vm346, 0.0
        %351 = vst.msk [vmem:[#allocation2 + $0x60] sm:$0x1] %vm346, 0.0
        %352 = vst.msk [vmem:[#allocation2 + $0x78] sm:$0x1] %vm346, 0.0
        %353 = vst.msk [vmem:[#allocation2 + $0x90] sm:$0x1] %vm346, 0.0
        %354 = vst.msk [vmem:[#allocation2 + $0xa8] sm:$0x1] %vm346, 0.0
        %355 = vst.msk [vmem:[#allocation2 + $0xc0] sm:$0x1] %vm346, 0.0
        %356 = vst.msk [vmem:[#allocation2 + $0xd8] sm:$0x1] %vm346, 0.0
        %357 = vst.msk [vmem:[#allocation2 + $0xf0] sm:$0x1] %vm346, 0.0
        %358 = vst.msk [vmem:[#allocation2 + $0x108] sm:$0x1] %vm346, 0.0
        %359 = vst.msk [vmem:[#allocation2 + $0x120] sm:$0x1] %vm346, 0.0
        %360 = vst.msk [vmem:[#allocation2 + $0x138] sm:$0x1] %vm346, 0.0
        %361 = vst.msk [vmem:[#allocation2 + $0x150] sm:$0x1] %vm346, 0.0
        %362 = vst.msk [vmem:[#allocation2 + $0x168] sm:$0x1] %vm346, 0.0
        %363 = vst.msk [vmem:[#allocation2 + $0x180] sm:$0x1] %vm346, 0.0
        %364 = vst.msk [vmem:[#allocation2 + $0x198] sm:$0x1] %vm346, 0.0
        %365 = vst.msk [vmem:[#allocation2 + $0x11] sm:$0x1] %vm346, 0.0
        %366 = vst.msk [vmem:[#allocation2 + $0x29] sm:$0x1] %vm346, 0.0
        %367 = vst.msk [vmem:[#allocation2 + $0x41] sm:$0x1] %vm346, 0.0
        %368 = vst.msk [vmem:[#allocation2 + $0x59] sm:$0x1] %vm346, 0.0
        %369 = vst.msk [vmem:[#allocation2 + $0x71] sm:$0x1] %vm346, 0.0
        %370 = vst.msk [vmem:[#allocation2 + $0x89] sm:$0x1] %vm346, 0.0
        %371 = vst.msk [vmem:[#allocation2 + $0xa1] sm:$0x1] %vm346, 0.0
        %372 = vst.msk [vmem:[#allocation2 + $0xb9] sm:$0x1] %vm346, 0.0
        %373 = vst.msk [vmem:[#allocation2 + $0xd1] sm:$0x1] %vm346, 0.0
        %374 = vst.msk [vmem:[#allocation2 + $0xe9] sm:$0x1] %vm346, 0.0
        %375 = vst.msk [vmem:[#allocation2 + $0x101] sm:$0x1] %vm346, 0.0
        %376 = vst.msk [vmem:[#allocation2 + $0x119] sm:$0x1] %vm346, 0.0
        %377 = vst.msk [vmem:[#allocation2 + $0x131] sm:$0x1] %vm346, 0.0
        %378 = vst.msk [vmem:[#allocation2 + $0x149] sm:$0x1] %vm346, 0.0
        %379 = vst.msk [vmem:[#allocation2 + $0x161] sm:$0x1] %vm346, 0.0
        %380 = vst.msk [vmem:[#allocation2 + $0x179] sm:$0x1] %vm346, 0.0
        %381 = vst.msk [vmem:[#allocation2 + $0x191] sm:$0x1] %vm346, 0.0
        %382 = vst.msk [vmem:[#allocation2 + $0x1a9] sm:$0x1] %vm346, 0.0
        %383 = vst.msk [vmem:[#allocation3] sm:$0xff] %vm337, 0.0
        %384 = vst.msk [vmem:[#allocation3 + $0x8] sm:$0xff] %vm337, 0.0
        %vm385 = vcmask 27648
        %386 = vst.msk [vmem:[#allocation3 + $0x10] sm:$0xf] %vm385, 0.0
        %387 = vst.msk [vmem:[#allocation3 + $0x18] sm:$0xff] %vm337, 0.0
        %388 = vst.msk [vmem:[#allocation3 + $0x20] sm:$0xff] %vm337, 0.0
        %389 = vst.msk [vmem:[#allocation3 + $0x28] sm:$0xf] %vm385, 0.0
        %s390 = scalar_lea.vmem [#allocation3], 432
        %391 = vst.msk [vmem:[%s390] sm:$0xff] %vm337, 0.0
        %392 = vst.msk [vmem:[%s390 + $0x8] sm:$0xff] %vm337, 0.0
        %393 = vst.msk [vmem:[%s390 + $0x10] sm:$0xf] %vm385, 0.0
        %394 = vst.msk [vmem:[%s390 + $0x18] sm:$0xff] %vm337, 0.0
        %395 = vst.msk [vmem:[%s390 + $0x20] sm:$0xff] %vm337, 0.0
        %396 = vst.msk [vmem:[%s390 + $0x28] sm:$0xf] %vm385, 0.0
        %397 = vst.msk [vmem:[#allocation3] sm:$0x3] %vm340, 0.0
        %398 = vst.msk [vmem:[#allocation3 + $0x18] sm:$0x3] %vm340, 0.0
        %399 = vst.msk [vmem:[#allocation3 + $0x30] sm:$0x3] %vm340, 0.0
        %400 = vst.msk [vmem:[#allocation3 + $0x48] sm:$0x3] %vm340, 0.0
        %401 = vst.msk [vmem:[#allocation3 + $0x60] sm:$0x3] %vm340, 0.0
        %402 = vst.msk [vmem:[#allocation3 + $0x78] sm:$0x3] %vm340, 0.0
        %403 = vst.msk [vmem:[#allocation3 + $0x90] sm:$0x3] %vm340, 0.0
        %404 = vst.msk [vmem:[#allocation3 + $0xa8] sm:$0x3] %vm340, 0.0
        %405 = vst.msk [vmem:[#allocation3 + $0xc0] sm:$0x3] %vm340, 0.0
        %406 = vst.msk [vmem:[#allocation3 + $0xd8] sm:$0x3] %vm340, 0.0
        %407 = vst.msk [vmem:[#allocation3 + $0xf0] sm:$0x3] %vm340, 0.0
        %408 = vst.msk [vmem:[#allocation3 + $0x108] sm:$0x3] %vm340, 0.0
        %409 = vst.msk [vmem:[#allocation3 + $0x120] sm:$0x3] %vm340, 0.0
        %410 = vst.msk [vmem:[#allocation3 + $0x138] sm:$0x3] %vm340, 0.0
        %411 = vst.msk [vmem:[#allocation3 + $0x150] sm:$0x3] %vm340, 0.0
        %412 = vst.msk [vmem:[#allocation3 + $0x168] sm:$0x3] %vm340, 0.0
        %413 = vst.msk [vmem:[#allocation3 + $0x180] sm:$0x3] %vm340, 0.0
        %414 = vst.msk [vmem:[#allocation3 + $0x198] sm:$0x3] %vm340, 0.0
        %415 = vst.msk [vmem:[#allocation3 + $0x1b0] sm:$0x3] %vm340, 0.0
        %416 = vst.msk [vmem:[#allocation3 + $0x1c8] sm:$0x3] %vm340, 0.0
        %417 = vst.msk [vmem:[#allocation3 + $0x12] sm:$0x3] %vm340, 0.0
        %418 = vst.msk [vmem:[#allocation3 + $0x2a] sm:$0x3] %vm340, 0.0
        %419 = vst.msk [vmem:[#allocation3 + $0x42] sm:$0x3] %vm340, 0.0
        %420 = vst.msk [vmem:[#allocation3 + $0x5a] sm:$0x3] %vm340, 0.0
        %421 = vst.msk [vmem:[#allocation3 + $0x72] sm:$0x3] %vm340, 0.0
        %422 = vst.msk [vmem:[#allocation3 + $0x8a] sm:$0x3] %vm340, 0.0
        %423 = vst.msk [vmem:[#allocation3 + $0xa2] sm:$0x3] %vm340, 0.0
        %424 = vst.msk [vmem:[#allocation3 + $0xba] sm:$0x3] %vm340, 0.0
        %425 = vst.msk [vmem:[#allocation3 + $0xd2] sm:$0x3] %vm340, 0.0
        %426 = vst.msk [vmem:[#allocation3 + $0xea] sm:$0x3] %vm340, 0.0
        %427 = vst.msk [vmem:[#allocation3 + $0x102] sm:$0x3] %vm340, 0.0
        %428 = vst.msk [vmem:[#allocation3 + $0x11a] sm:$0x3] %vm340, 0.0
        %429 = vst.msk [vmem:[#allocation3 + $0x132] sm:$0x3] %vm340, 0.0
        %430 = vst.msk [vmem:[#allocation3 + $0x14a] sm:$0x3] %vm340, 0.0
        %431 = vst.msk [vmem:[#allocation3 + $0x162] sm:$0x3] %vm340, 0.0
        %432 = vst.msk [vmem:[#allocation3 + $0x17a] sm:$0x3] %vm340, 0.0
        %433 = vst.msk [vmem:[#allocation3 + $0x192] sm:$0x3] %vm340, 0.0
        %434 = vst.msk [vmem:[#allocation3 + $0x1aa] sm:$0x3] %vm340, 0.0
        %435 = vst.msk [vmem:[#allocation3 + $0x1c2] sm:$0x3] %vm340, 0.0
        %436 = vst.msk [vmem:[#allocation3 + $0x1da] sm:$0x3] %vm340, 0.0
        %437 = vst.msk [vmem:[#allocation4] sm:$0xff] %vm337, -inf
        %438 = vst.msk [vmem:[#allocation4 + $0x8] sm:$0xff] %vm337, -inf
        %439 = vst.msk [vmem:[#allocation4 + $0x10] sm:$0x3] %vm340, -inf
        %s440 = scalar_lea.vmem [#allocation4], 408
        %441 = vst.msk [vmem:[%s440] sm:$0xff] %vm337, -inf
        %442 = vst.msk [vmem:[%s440 + $0x8] sm:$0xff] %vm337, -inf
        %443 = vst.msk [vmem:[%s440 + $0x10] sm:$0x3] %vm340, -inf
        %444 = vst.msk [vmem:[#allocation4] sm:$0x1] %vm346, -inf
        %445 = vst.msk [vmem:[#allocation4 + $0x18] sm:$0x1] %vm346, -inf
        %446 = vst.msk [vmem:[#allocation4 + $0x30] sm:$0x1] %vm346, -inf
        %447 = vst.msk [vmem:[#allocation4 + $0x48] sm:$0x1] %vm346, -inf
        %448 = vst.msk [vmem:[#allocation4 + $0x60] sm:$0x1] %vm346, -inf
        %449 = vst.msk [vmem:[#allocation4 + $0x78] sm:$0x1] %vm346, -inf
        %450 = vst.msk [vmem:[#allocation4 + $0x90] sm:$0x1] %vm346, -inf
        %451 = vst.msk [vmem:[#allocation4 + $0xa8] sm:$0x1] %vm346, -inf
        %452 = vst.msk [vmem:[#allocation4 + $0xc0] sm:$0x1] %vm346, -inf
        %453 = vst.msk [vmem:[#allocation4 + $0xd8] sm:$0x1] %vm346, -inf
        %454 = vst.msk [vmem:[#allocation4 + $0xf0] sm:$0x1] %vm346, -inf
        %455 = vst.msk [vmem:[#allocation4 + $0x108] sm:$0x1] %vm346, -inf
        %456 = vst.msk [vmem:[#allocation4 + $0x120] sm:$0x1] %vm346, -inf
        %457 = vst.msk [vmem:[#allocation4 + $0x138] sm:$0x1] %vm346, -inf
        %458 = vst.msk [vmem:[#allocation4 + $0x150] sm:$0x1] %vm346, -inf
        %459 = vst.msk [vmem:[#allocation4 + $0x168] sm:$0x1] %vm346, -inf
        %460 = vst.msk [vmem:[#allocation4 + $0x180] sm:$0x1] %vm346, -inf
        %461 = vst.msk [vmem:[#allocation4 + $0x198] sm:$0x1] %vm346, -inf
        %462 = vst.msk [vmem:[#allocation4 + $0x11] sm:$0x1] %vm346, -inf
        %463 = vst.msk [vmem:[#allocation4 + $0x29] sm:$0x1] %vm346, -inf
        %464 = vst.msk [vmem:[#allocation4 + $0x41] sm:$0x1] %vm346, -inf
        %465 = vst.msk [vmem:[#allocation4 + $0x59] sm:$0x1] %vm346, -inf
        %466 = vst.msk [vmem:[#allocation4 + $0x71] sm:$0x1] %vm346, -inf
        %467 = vst.msk [vmem:[#allocation4 + $0x89] sm:$0x1] %vm346, -inf
        %468 = vst.msk [vmem:[#allocation4 + $0xa1] sm:$0x1] %vm346, -inf
        %469 = vst.msk [vmem:[#allocation4 + $0xb9] sm:$0x1] %vm346, -inf
        %470 = vst.msk [vmem:[#allocation4 + $0xd1] sm:$0x1] %vm346, -inf
        %471 = vst.msk [vmem:[#allocation4 + $0xe9] sm:$0x1] %vm346, -inf
        %472 = vst.msk [vmem:[#allocation4 + $0x101] sm:$0x1] %vm346, -inf
        %473 = vst.msk [vmem:[#allocation4 + $0x119] sm:$0x1] %vm346, -inf
        %474 = vst.msk [vmem:[#allocation4 + $0x131] sm:$0x1] %vm346, -inf
        %475 = vst.msk [vmem:[#allocation4 + $0x149] sm:$0x1] %vm346, -inf
        %476 = vst.msk [vmem:[#allocation4 + $0x161] sm:$0x1] %vm346, -inf
        %477 = vst.msk [vmem:[#allocation4 + $0x179] sm:$0x1] %vm346, -inf
        %478 = vst.msk [vmem:[#allocation4 + $0x191] sm:$0x1] %vm346, -inf
        %479 = vst.msk [vmem:[#allocation4 + $0x1a9] sm:$0x1] %vm346, -inf
        %v480 = vld [vmem:[%s2] sm:$0x1]
        %v481 = vld [vmem:[%s334] sm:$0xff]
        %v482 = vld [vmem:[%s334 + $0x8] sm:$0xff]
        %v483 = vld [vmem:[%s334 + $0x10] sm:$0xff]
        %v484 = vld [vmem:[%s334 + $0x18] sm:$0xff]
        %v485 = vld [vmem:[%s334 + $0x20] sm:$0xff]
        %v486 = vld [vmem:[%s334 + $0x28] sm:$0xff]
        %v487 = vld [vmem:[%s334 + $0x30] sm:$0xff]
        %v488 = vld [vmem:[%s334 + $0x38] sm:$0xff]
        %v489 = vld [vmem:[%s334 + $0x40] sm:$0xff]
        %v490 = vld [vmem:[%s334 + $0x48] sm:$0xff]
        %v491 = vld [vmem:[%s334 + $0x50] sm:$0xff]
        %v492 = vld [vmem:[%s334 + $0x58] sm:$0xff]
        %v493 = vld [vmem:[%s334 + $0x60] sm:$0xff]
        %v494 = vld [vmem:[%s334 + $0x68] sm:$0xff]
        %v495 = vld [vmem:[%s334 + $0x70] sm:$0xff]
        %v496 = vld [vmem:[%s334 + $0x78] sm:$0xff]
        %v497 = vld [vmem:[%s334 + $0x80] sm:$0xff]
        %v498 = vld [vmem:[%s334 + $0x88] sm:$0xff]
        %v499 = vld [vmem:[%s334 + $0x90] sm:$0xff]
        %v500 = vld [vmem:[%s334 + $0x98] sm:$0xff]
        %v501 = vld [vmem:[%s334 + $0xa0] sm:$0xff]
        %v502 = vld [vmem:[%s334 + $0xa8] sm:$0xff]
        %v503 = vld [vmem:[%s334 + $0xb0] sm:$0xff]
        %v504 = vld [vmem:[%s334 + $0xb8] sm:$0xff]
        %v505 = vld [vmem:[%s334 + $0xc0] sm:$0xff]
        %v506 = vld [vmem:[%s334 + $0xc8] sm:$0xff]
        %v507 = vld [vmem:[%s334 + $0xd0] sm:$0xff]
        %v508 = vld [vmem:[%s334 + $0xd8] sm:$0xff]
        %v509 = vld [vmem:[%s334 + $0xe0] sm:$0xff]
        %v510 = vld [vmem:[%s334 + $0xe8] sm:$0xff]
        %v511 = vld [vmem:[%s334 + $0xf0] sm:$0xff]
        %v512 = vld [vmem:[%s334 + $0xf8] sm:$0xff]
        %v513 = vld [vmem:[%s1] sm:$0xf]
        %v515 = vsel %vm337, %v481, 0
        %v518 = vsel %vm337, %v482, 0
        %v521 = vsel %vm337, %v483, 0
        %v524 = vsel %vm337, %v484, 0
        %v527 = vsel %vm337, %v485, 0
        %v530 = vsel %vm337, %v486, 0
        %v533 = vsel %vm337, %v487, 0
        %v536 = vsel %vm337, %v488, 0
        %v539 = vsel %vm337, %v489, 0
        %v542 = vsel %vm337, %v490, 0
        %v545 = vsel %vm337, %v491, 0
        %v548 = vsel %vm337, %v492, 0
        %v551 = vsel %vm337, %v493, 0
        %v554 = vsel %vm337, %v494, 0
        %v557 = vsel %vm337, %v495, 0
        %v560 = vsel %vm337, %v496, 0
        %v563 = vsel %vm337, %v497, 0
        %v566 = vsel %vm337, %v498, 0
        %v569 = vsel %vm337, %v499, 0
        %v572 = vsel %vm337, %v500, 0
        %v575 = vsel %vm337, %v501, 0
        %v578 = vsel %vm337, %v502, 0
        %v581 = vsel %vm337, %v503, 0
        %v584 = vsel %vm337, %v504, 0
        %v587 = vsel %vm337, %v505, 0
        %v590 = vsel %vm337, %v506, 0
        %v593 = vsel %vm337, %v507, 0
        %v596 = vsel %vm337, %v508, 0
        %v599 = vsel %vm337, %v509, 0
        %v602 = vsel %vm337, %v510, 0
        %v605 = vsel %vm337, %v511, 0
        %v608 = vsel %vm337, %v512, 0
        %vm610 = vcmask 1043456
        %v612 = vsel %vm610, %v513, 0
        %614 = vmatprep.subr.mxu0 0.0
        %615 = vmatpush1.msra.mxu0 %v612
        %616 = vmatprep.subr.mxu0 0.0
        %617 = vmatpush1.msra.mxu0 0.0
        %618 = vmatprep.subr.mxu0 0.0
        %619 = vmatpush1.msra.mxu0 0.0
        %620 = vmatprep.subr.mxu0 0.0
        %621 = vmatpush1.msra.mxu0 0.0
        %622 = vmatprep.subr.mxu0 0.0
        %623 = vmatpush1.msra.mxu0 0.0
        %624 = vmatprep.subr.mxu0 0.0
        %625 = vmatpush1.msra.mxu0 0.0
        %626 = vmatprep.subr.mxu0 0.0
        %627 = vmatpush1.msra.mxu0 0.0
        %628 = vmatprep.subr.mxu0 0.0
        %629 = vmatpush1.msra.mxu0 0.0
        %630 = vmatprep.subr.mxu0 0.0
        %631 = vmatpush1.msra.mxu0 0.0
        %632 = vmatprep.subr.mxu0 0.0
        %633 = vmatpush1.msra.mxu0 0.0
        %634 = vmatprep.subr.mxu0 0.0
        %635 = vmatpush1.msra.mxu0 0.0
        %636 = vmatprep.subr.mxu0 0.0
        %637 = vmatpush1.msra.mxu0 0.0
        %638 = vmatprep.subr.mxu0 0.0
        %639 = vmatpush1.msra.mxu0 0.0
        %640 = vmatprep.subr.mxu0 0.0
        %641 = vmatpush1.msra.mxu0 0.0
        %642 = vmatprep.subr.mxu0 0.0
        %643 = vmatpush1.msra.mxu0 0.0
        %644 = vmatprep.subr.mxu0 0.0
        %645 = vmatpush1.msra.mxu0 0.0
        %646 = vmatprep.subr.mxu0 0.0
        %647 = vmatpush1.msra.mxu0 0.0
        %648 = vmatprep.subr.mxu0 0.0
        %649 = vmatpush1.msra.mxu0 0.0
        %650 = vmatprep.subr.mxu0 0.0
        %651 = vmatpush1.msra.mxu0 0.0
        %652 = vmatprep.subr.mxu0 0.0
        %653 = vmatpush1.msra.mxu0 0.0
        %654 = vmatprep.subr.mxu0 0.0
        %655 = vmatpush1.msra.mxu0 0.0
        %656 = vmatprep.subr.mxu0 0.0
        %657 = vmatpush1.msra.mxu0 0.0
        %658 = vmatprep.subr.mxu0 0.0
        %659 = vmatpush1.msra.mxu0 0.0
        %660 = vmatprep.subr.mxu0 0.0
        %661 = vmatpush1.msra.mxu0 0.0
        %662 = vmatprep.subr.mxu0 0.0
        %663 = vmatpush1.msra.mxu0 0.0
        %664 = vmatprep.subr.mxu0 0.0
        %665 = vmatpush1.msra.mxu0 0.0
        %666 = vmatprep.subr.mxu0 0.0
        %667 = vmatpush1.msra.mxu0 0.0
        %668 = vmatprep.subr.mxu0 0.0
        %669 = vmatpush1.msra.mxu0 0.0
        %670 = vmatprep.subr.mxu0 0.0
        %671 = vmatpush1.msra.mxu0 0.0
        %672 = vmatprep.subr.mxu0 0.0
        %673 = vmatpush1.msra.mxu0 0.0
        %674 = vmatprep.subr.mxu0 0.0
        %675 = vmatpush1.msra.mxu0 0.0
        %676 = vmatprep.subr.mxu0 0.0
        %677 = vmatpush1.msra.mxu0 0.0
        %678 = vmatprep.mubr.f32.mxu0 0.0
        %679 = vmatmul.mubr.f32.gmra.mrb[0].mxu0 %v515
        %v680 = vpop.f32.mrb[0].mxu0
        %v681 = vadd.f32 0.0, %v680
        %v682 = vpop.f32.mrb[0].mxu0
        %683 = vmatprep.mubr.f32.mxu0 0.0
        %684 = vmatmul.mubr.f32.gmra.mrb[0].mxu0 %v518
        %v685 = vpop.f32.mrb[0].mxu0
        %v686 = vadd.f32 0.0, %v685
        %v687 = vpop.f32.mrb[0].mxu0
        %688 = vmatprep.mubr.f32.mxu0 0.0
        %689 = vmatmul.mubr.f32.gmra.mrb[0].mxu0 %v521
        %v690 = vpop.f32.mrb[0].mxu0
        %v691 = vadd.f32 0.0, %v690
        %v692 = vpop.f32.mrb[0].mxu0
        %693 = vmatprep.mubr.f32.mxu0 0.0
        %694 = vmatmul.mubr.f32.gmra.mrb[0].mxu0 %v524
        %v695 = vpop.f32.mrb[0].mxu0
        %v696 = vadd.f32 0.0, %v695
        %v697 = vpop.f32.mrb[0].mxu0
        %698 = vmatprep.mubr.f32.mxu0 0.0
        %699 = vmatmul.mubr.f32.gmra.mrb[0].mxu0 %v527
        %v700 = vpop.f32.mrb[0].mxu0
        %v701 = vadd.f32 0.0, %v700
        %v702 = vpop.f32.mrb[0].mxu0
        %703 = vmatprep.mubr.f32.mxu0 0.0
        %704 = vmatmul.mubr.f32.gmra.mrb[0].mxu0 %v530
        %v705 = vpop.f32.mrb[0].mxu0
        %v706 = vadd.f32 0.0, %v705
        %v707 = vpop.f32.mrb[0].mxu0
        %708 = vmatprep.mubr.f32.mxu0 0.0
        %709 = vmatmul.mubr.f32.gmra.mrb[0].mxu0 %v533
        %v710 = vpop.f32.mrb[0].mxu0
        %v711 = vadd.f32 0.0, %v710
        %v712 = vpop.f32.mrb[0].mxu0
        %713 = vmatprep.mubr.f32.mxu0 0.0
        %714 = vmatmul.mubr.f32.gmra.mrb[0].mxu0 %v536
        %v715 = vpop.f32.mrb[0].mxu0
        %v716 = vadd.f32 0.0, %v715
        %v717 = vpop.f32.mrb[0].mxu0
        %718 = vmatprep.mubr.f32.mxu0 0.0
        %719 = vmatmul.mubr.f32.gmra.mrb[0].mxu0 %v539
        %v720 = vpop.f32.mrb[0].mxu0
        %v721 = vadd.f32 0.0, %v720
        %v722 = vpop.f32.mrb[0].mxu0
        %723 = vmatprep.mubr.f32.mxu0 0.0
        %724 = vmatmul.mubr.f32.gmra.mrb[0].mxu0 %v542
        %v725 = vpop.f32.mrb[0].mxu0
        %v726 = vadd.f32 0.0, %v725
        %v727 = vpop.f32.mrb[0].mxu0
        %728 = vmatprep.mubr.f32.mxu0 0.0
        %729 = vmatmul.mubr.f32.gmra.mrb[0].mxu0 %v545
        %v730 = vpop.f32.mrb[0].mxu0
        %v731 = vadd.f32 0.0, %v730
        %v732 = vpop.f32.mrb[0].mxu0
        %733 = vmatprep.mubr.f32.mxu0 0.0
        %734 = vmatmul.mubr.f32.gmra.mrb[0].mxu0 %v548
        %v735 = vpop.f32.mrb[0].mxu0
        %v736 = vadd.f32 0.0, %v735
        %v737 = vpop.f32.mrb[0].mxu0
        %738 = vmatprep.mubr.f32.mxu0 0.0
        %739 = vmatmul.mubr.f32.gmra.mrb[0].mxu0 %v551
        %v740 = vpop.f32.mrb[0].mxu0
        %v741 = vadd.f32 0.0, %v740
        %v742 = vpop.f32.mrb[0].mxu0
        %743 = vmatprep.mubr.f32.mxu0 0.0
        %744 = vmatmul.mubr.f32.gmra.mrb[0].mxu0 %v554
        %v745 = vpop.f32.mrb[0].mxu0
        %v746 = vadd.f32 0.0, %v745
        %v747 = vpop.f32.mrb[0].mxu0
        %748 = vmatprep.mubr.f32.mxu0 0.0
        %749 = vmatmul.mubr.f32.gmra.mrb[0].mxu0 %v557
        %v750 = vpop.f32.mrb[0].mxu0
        %v751 = vadd.f32 0.0, %v750
        %v752 = vpop.f32.mrb[0].mxu0
        %753 = vmatprep.mubr.f32.mxu0 0.0
        %754 = vmatmul.mubr.f32.gmra.mrb[0].mxu0 %v560
        %v755 = vpop.f32.mrb[0].mxu0
        %v756 = vadd.f32 0.0, %v755
        %v757 = vpop.f32.mrb[0].mxu0
        %758 = vmatprep.mubr.f32.mxu0 0.0
        %759 = vmatmul.mubr.f32.gmra.mrb[0].mxu0 %v563
        %v760 = vpop.f32.mrb[0].mxu0
        %v761 = vadd.f32 0.0, %v760
        %v762 = vpop.f32.mrb[0].mxu0
        %763 = vmatprep.mubr.f32.mxu0 0.0
        %764 = vmatmul.mubr.f32.gmra.mrb[0].mxu0 %v566
        %v765 = vpop.f32.mrb[0].mxu0
        %v766 = vadd.f32 0.0, %v765
        %v767 = vpop.f32.mrb[0].mxu0
        %768 = vmatprep.mubr.f32.mxu0 0.0
        %769 = vmatmul.mubr.f32.gmra.mrb[0].mxu0 %v569
        %v770 = vpop.f32.mrb[0].mxu0
        %v771 = vadd.f32 0.0, %v770
        %v772 = vpop.f32.mrb[0].mxu0
        %773 = vmatprep.mubr.f32.mxu0 0.0
        %774 = vmatmul.mubr.f32.gmra.mrb[0].mxu0 %v572
        %v775 = vpop.f32.mrb[0].mxu0
        %v776 = vadd.f32 0.0, %v775
        %v777 = vpop.f32.mrb[0].mxu0
        %778 = vmatprep.mubr.f32.mxu0 0.0
        %779 = vmatmul.mubr.f32.gmra.mrb[0].mxu0 %v575
        %v780 = vpop.f32.mrb[0].mxu0
        %v781 = vadd.f32 0.0, %v780
        %v782 = vpop.f32.mrb[0].mxu0
        %783 = vmatprep.mubr.f32.mxu0 0.0
        %784 = vmatmul.mubr.f32.gmra.mrb[0].mxu0 %v578
        %v785 = vpop.f32.mrb[0].mxu0
        %v786 = vadd.f32 0.0, %v785
        %v787 = vpop.f32.mrb[0].mxu0
        %788 = vmatprep.mubr.f32.mxu0 0.0
        %789 = vmatmul.mubr.f32.gmra.mrb[0].mxu0 %v581
        %v790 = vpop.f32.mrb[0].mxu0
        %v791 = vadd.f32 0.0, %v790
        %v792 = vpop.f32.mrb[0].mxu0
        %793 = vmatprep.mubr.f32.mxu0 0.0
        %794 = vmatmul.mubr.f32.gmra.mrb[0].mxu0 %v584
        %v795 = vpop.f32.mrb[0].mxu0
        %v796 = vadd.f32 0.0, %v795
        %v797 = vpop.f32.mrb[0].mxu0
        %798 = vmatprep.mubr.f32.mxu0 0.0
        %799 = vmatmul.mubr.f32.gmra.mrb[0].mxu0 %v587
        %v800 = vpop.f32.mrb[0].mxu0
        %v801 = vadd.f32 0.0, %v800
        %v802 = vpop.f32.mrb[0].mxu0
        %803 = vmatprep.mubr.f32.mxu0 0.0
        %804 = vmatmul.mubr.f32.gmra.mrb[0].mxu0 %v590
        %v805 = vpop.f32.mrb[0].mxu0
        %v806 = vadd.f32 0.0, %v805
        %v807 = vpop.f32.mrb[0].mxu0
        %808 = vmatprep.mubr.f32.mxu0 0.0
        %809 = vmatmul.mubr.f32.gmra.mrb[0].mxu0 %v593
        %v810 = vpop.f32.mrb[0].mxu0
        %v811 = vadd.f32 0.0, %v810
        %v812 = vpop.f32.mrb[0].mxu0
        %813 = vmatprep.mubr.f32.mxu0 0.0
        %814 = vmatmul.mubr.f32.gmra.mrb[0].mxu0 %v596
        %v815 = vpop.f32.mrb[0].mxu0
        %v816 = vadd.f32 0.0, %v815
        %v817 = vpop.f32.mrb[0].mxu0
        %818 = vmatprep.mubr.f32.mxu0 0.0
        %819 = vmatmul.mubr.f32.gmra.mrb[0].mxu0 %v599
        %v820 = vpop.f32.mrb[0].mxu0
        %v821 = vadd.f32 0.0, %v820
        %v822 = vpop.f32.mrb[0].mxu0
        %823 = vmatprep.mubr.f32.mxu0 0.0
        %824 = vmatmul.mubr.f32.gmra.mrb[0].mxu0 %v602
        %v825 = vpop.f32.mrb[0].mxu0
        %v826 = vadd.f32 0.0, %v825
        %v827 = vpop.f32.mrb[0].mxu0
        %828 = vmatprep.mubr.f32.mxu0 0.0
        %829 = vmatmul.mubr.f32.gmra.mrb[0].mxu0 %v605
        %v830 = vpop.f32.mrb[0].mxu0
        %v831 = vadd.f32 0.0, %v830
        %v832 = vpop.f32.mrb[0].mxu0
        %833 = vmatprep.mubr.f32.mxu0 0.0
        %834 = vmatmul.mubr.f32.gmra.mrb[0].mxu0 %v608
        %v835 = vpop.f32.mrb[0].mxu0
        %v836 = vadd.f32 0.0, %v835
        %v837 = vpop.f32.mrb[0].mxu0
        %838 = vdwg.mxu0
        %v840 = vlaneseq
        %v841 = vshrl.u32 %v840, 7
        %v842 = vsub.s32 0, %v841
        %v843 = vrot.slane %v480, %v842
        %v845 = vadd.f32 %v681, %v843
        %v846 = vadd.f32 %v686, %v843
        %v847 = vadd.f32 %v691, %v843
        %v848 = vadd.f32 %v696, %v843
        %v849 = vadd.f32 %v701, %v843
        %v850 = vadd.f32 %v706, %v843
        %v851 = vadd.f32 %v711, %v843
        %v852 = vadd.f32 %v716, %v843
        %v853 = vadd.f32 %v721, %v843
        %v854 = vadd.f32 %v726, %v843
        %v855 = vadd.f32 %v731, %v843
        %v856 = vadd.f32 %v736, %v843
        %v857 = vadd.f32 %v741, %v843
        %v858 = vadd.f32 %v746, %v843
        %v859 = vadd.f32 %v751, %v843
        %v860 = vadd.f32 %v756, %v843
        %v861 = vadd.f32 %v761, %v843
        %v862 = vadd.f32 %v766, %v843
        %v863 = vadd.f32 %v771, %v843
        %v864 = vadd.f32 %v776, %v843
        %v865 = vadd.f32 %v781, %v843
        %v866 = vadd.f32 %v786, %v843
        %v867 = vadd.f32 %v791, %v843
        %v868 = vadd.f32 %v796, %v843
        %v869 = vadd.f32 %v801, %v843
        %v870 = vadd.f32 %v806, %v843
        %v871 = vadd.f32 %v811, %v843
        %v872 = vadd.f32 %v816, %v843
        %v873 = vadd.f32 %v821, %v843
        %v874 = vadd.f32 %v826, %v843
        %v875 = vadd.f32 %v831, %v843
        %v876 = vadd.f32 %v836, %v843
        %v877 = vmax.f32 %v845, 0.0
        %v878 = vmax.f32 %v846, 0.0
        %v879 = vmax.f32 %v847, 0.0
        %v880 = vmax.f32 %v848, 0.0
        %v881 = vmax.f32 %v849, 0.0
        %v882 = vmax.f32 %v850, 0.0
        %v883 = vmax.f32 %v851, 0.0
        %v884 = vmax.f32 %v852, 0.0
        %v885 = vmax.f32 %v853, 0.0
        %v886 = vmax.f32 %v854, 0.0
        %v887 = vmax.f32 %v855, 0.0
        %v888 = vmax.f32 %v856, 0.0
        %v889 = vmax.f32 %v857, 0.0
        %v890 = vmax.f32 %v858, 0.0
        %v891 = vmax.f32 %v859, 0.0
        %v892 = vmax.f32 %v860, 0.0
        %v893 = vmax.f32 %v861, 0.0
        %v894 = vmax.f32 %v862, 0.0
        %v895 = vmax.f32 %v863, 0.0
        %v896 = vmax.f32 %v864, 0.0
        %v897 = vmax.f32 %v865, 0.0
        %v898 = vmax.f32 %v866, 0.0
        %v899 = vmax.f32 %v867, 0.0
        %v900 = vmax.f32 %v868, 0.0
        %v901 = vmax.f32 %v869, 0.0
        %v902 = vmax.f32 %v870, 0.0
        %v903 = vmax.f32 %v871, 0.0
        %v904 = vmax.f32 %v872, 0.0
        %v905 = vmax.f32 %v873, 0.0
        %v906 = vmax.f32 %v874, 0.0
        %v907 = vmax.f32 %v875, 0.0
        %v908 = vmax.f32 %v876, 0.0
        %941 = vrot.lane.b32.xlu0 %v877, 120
        %v942 = vpop.permute.xlu0 %941
        %943 = vrot.lane.b32.xlu0 %v878, 120
        %v944 = vpop.permute.xlu0 %943
        %945 = vrot.lane.b32.xlu0 %v879, 120
        %v946 = vpop.permute.xlu0 %945
        %947 = vrot.lane.b32.xlu0 %v880, 120
        %v948 = vpop.permute.xlu0 %947
        %949 = vrot.lane.b32.xlu0 %v881, 120
        %v950 = vpop.permute.xlu0 %949
        %951 = vrot.lane.b32.xlu0 %v882, 120
        %v952 = vpop.permute.xlu0 %951
        %953 = vrot.lane.b32.xlu0 %v883, 120
        %v954 = vpop.permute.xlu0 %953
        %955 = vrot.lane.b32.xlu0 %v884, 120
        %v956 = vpop.permute.xlu0 %955
        %957 = vrot.lane.b32.xlu0 %v885, 120
        %v958 = vpop.permute.xlu0 %957
        %959 = vrot.lane.b32.xlu0 %v886, 120
        %v960 = vpop.permute.xlu0 %959
        %961 = vrot.lane.b32.xlu0 %v887, 120
        %v962 = vpop.permute.xlu0 %961
        %963 = vrot.lane.b32.xlu0 %v888, 120
        %v964 = vpop.permute.xlu0 %963
        %965 = vrot.lane.b32.xlu0 %v889, 120
        %v966 = vpop.permute.xlu0 %965
        %967 = vrot.lane.b32.xlu0 %v890, 120
        %v968 = vpop.permute.xlu0 %967
        %969 = vrot.lane.b32.xlu0 %v891, 120
        %v970 = vpop.permute.xlu0 %969
        %971 = vrot.lane.b32.xlu0 %v892, 120
        %v972 = vpop.permute.xlu0 %971
        %973 = vrot.lane.b32.xlu0 %v893, 120
        %v974 = vpop.permute.xlu0 %973
        %975 = vrot.lane.b32.xlu0 %v894, 120
        %v976 = vpop.permute.xlu0 %975
        %977 = vrot.lane.b32.xlu0 %v895, 120
        %v978 = vpop.permute.xlu0 %977
        %979 = vrot.lane.b32.xlu0 %v896, 120
        %v980 = vpop.permute.xlu0 %979
        %981 = vrot.lane.b32.xlu0 %v897, 120
        %v982 = vpop.permute.xlu0 %981
        %983 = vrot.lane.b32.xlu0 %v898, 120
        %v984 = vpop.permute.xlu0 %983
        %985 = vrot.lane.b32.xlu0 %v899, 120
        %v986 = vpop.permute.xlu0 %985
        %987 = vrot.lane.b32.xlu0 %v900, 120
        %v988 = vpop.permute.xlu0 %987
        %989 = vrot.lane.b32.xlu0 %v901, 120
        %v990 = vpop.permute.xlu0 %989
        %991 = vrot.lane.b32.xlu0 %v902, 120
        %v992 = vpop.permute.xlu0 %991
        %993 = vrot.lane.b32.xlu0 %v903, 120
        %v994 = vpop.permute.xlu0 %993
        %995 = vrot.lane.b32.xlu0 %v904, 120
        %v996 = vpop.permute.xlu0 %995
        %997 = vrot.lane.b32.xlu0 %v905, 120
        %v998 = vpop.permute.xlu0 %997
        %999 = vrot.lane.b32.xlu0 %v906, 120
        %v1000 = vpop.permute.xlu0 %999
        %1001 = vrot.lane.b32.xlu0 %v907, 120
        %v1002 = vpop.permute.xlu0 %1001
        %1003 = vrot.lane.b32.xlu0 %v908, 120
        %v1004 = vpop.permute.xlu0 %1003
        %s1037 = scalar_lea.vmem [#allocation2], 24
        %1038 = vst.msk [vmem:[%s1037 + $0x1] sm:$0xff] %vm337, %v942
        %1039 = vst.msk [vmem:[%s1037 + $0x9] sm:$0xff] %vm337, %v944
        %1040 = vst.msk [vmem:[%s1037 + $0x19] sm:$0xff] %vm337, %v946
        %1041 = vst.msk [vmem:[%s1037 + $0x21] sm:$0xff] %vm337, %v948
        %1042 = vst.msk [vmem:[%s1037 + $0x31] sm:$0xff] %vm337, %v950
        %1043 = vst.msk [vmem:[%s1037 + $0x39] sm:$0xff] %vm337, %v952
        %1044 = vst.msk [vmem:[%s1037 + $0x49] sm:$0xff] %vm337, %v954
        %1045 = vst.msk [vmem:[%s1037 + $0x51] sm:$0xff] %vm337, %v956
        %1046 = vst.msk [vmem:[%s1037 + $0x61] sm:$0xff] %vm337, %v958
        %1047 = vst.msk [vmem:[%s1037 + $0x69] sm:$0xff] %vm337, %v960
        %1048 = vst.msk [vmem:[%s1037 + $0x79] sm:$0xff] %vm337, %v962
        %1049 = vst.msk [vmem:[%s1037 + $0x81] sm:$0xff] %vm337, %v964
        %1050 = vst.msk [vmem:[%s1037 + $0x91] sm:$0xff] %vm337, %v966
        %1051 = vst.msk [vmem:[%s1037 + $0x99] sm:$0xff] %vm337, %v968
        %1052 = vst.msk [vmem:[%s1037 + $0xa9] sm:$0xff] %vm337, %v970
        %1053 = vst.msk [vmem:[%s1037 + $0xb1] sm:$0xff] %vm337, %v972
        %1054 = vst.msk [vmem:[%s1037 + $0xc1] sm:$0xff] %vm337, %v974
        %1055 = vst.msk [vmem:[%s1037 + $0xc9] sm:$0xff] %vm337, %v976
        %1056 = vst.msk [vmem:[%s1037 + $0xd9] sm:$0xff] %vm337, %v978
        %1057 = vst.msk [vmem:[%s1037 + $0xe1] sm:$0xff] %vm337, %v980
        %1058 = vst.msk [vmem:[%s1037 + $0xf1] sm:$0xff] %vm337, %v982
        %1059 = vst.msk [vmem:[%s1037 + $0xf9] sm:$0xff] %vm337, %v984
        %1060 = vst.msk [vmem:[%s1037 + $0x109] sm:$0xff] %vm337, %v986
        %1061 = vst.msk [vmem:[%s1037 + $0x111] sm:$0xff] %vm337, %v988
        %1062 = vst.msk [vmem:[%s1037 + $0x121] sm:$0xff] %vm337, %v990
        %1063 = vst.msk [vmem:[%s1037 + $0x129] sm:$0xff] %vm337, %v992
        %1064 = vst.msk [vmem:[%s1037 + $0x139] sm:$0xff] %vm337, %v994
        %1065 = vst.msk [vmem:[%s1037 + $0x141] sm:$0xff] %vm337, %v996
        %1066 = vst.msk [vmem:[%s1037 + $0x151] sm:$0xff] %vm337, %v998
        %1067 = vst.msk [vmem:[%s1037 + $0x159] sm:$0xff] %vm337, %v1000
        %1068 = vst.msk [vmem:[%s1037 + $0x169] sm:$0xff] %vm337, %v1002
        %1069 = vst.msk [vmem:[%s1037 + $0x171] sm:$0xff] %vm337, %v1004
        %1070 = vrot.lane.b32.xlu0 %v877, 116
        %v1071 = vpop.permute.xlu0 %1070
        %1072 = vrot.lane.b32.xlu0 %v878, 116
        %v1073 = vpop.permute.xlu0 %1072
        %1074 = vrot.lane.b32.xlu0 %v879, 116
        %v1075 = vpop.permute.xlu0 %1074
        %1076 = vrot.lane.b32.xlu0 %v880, 116
        %v1077 = vpop.permute.xlu0 %1076
        %1078 = vrot.lane.b32.xlu0 %v881, 116
        %v1079 = vpop.permute.xlu0 %1078
        %1080 = vrot.lane.b32.xlu0 %v882, 116
        %v1081 = vpop.permute.xlu0 %1080
        %1082 = vrot.lane.b32.xlu0 %v883, 116
        %v1083 = vpop.permute.xlu0 %1082
        %1084 = vrot.lane.b32.xlu0 %v884, 116
        %v1085 = vpop.permute.xlu0 %1084
        %1086 = vrot.lane.b32.xlu0 %v885, 116
        %v1087 = vpop.permute.xlu0 %1086
        %1088 = vrot.lane.b32.xlu0 %v886, 116
        %v1089 = vpop.permute.xlu0 %1088
        %1090 = vrot.lane.b32.xlu0 %v887, 116
        %v1091 = vpop.permute.xlu0 %1090
        %1092 = vrot.lane.b32.xlu0 %v888, 116
        %v1093 = vpop.permute.xlu0 %1092
        %1094 = vrot.lane.b32.xlu0 %v889, 116
        %v1095 = vpop.permute.xlu0 %1094
        %1096 = vrot.lane.b32.xlu0 %v890, 116
        %v1097 = vpop.permute.xlu0 %1096
        %1098 = vrot.lane.b32.xlu0 %v891, 116
        %v1099 = vpop.permute.xlu0 %1098
        %1100 = vrot.lane.b32.xlu0 %v892, 116
        %v1101 = vpop.permute.xlu0 %1100
        %1102 = vrot.lane.b32.xlu0 %v893, 116
        %v1103 = vpop.permute.xlu0 %1102
        %1104 = vrot.lane.b32.xlu0 %v894, 116
        %v1105 = vpop.permute.xlu0 %1104
        %1106 = vrot.lane.b32.xlu0 %v895, 116
        %v1107 = vpop.permute.xlu0 %1106
        %1108 = vrot.lane.b32.xlu0 %v896, 116
        %v1109 = vpop.permute.xlu0 %1108
        %1110 = vrot.lane.b32.xlu0 %v897, 116
        %v1111 = vpop.permute.xlu0 %1110
        %1112 = vrot.lane.b32.xlu0 %v898, 116
        %v1113 = vpop.permute.xlu0 %1112
        %1114 = vrot.lane.b32.xlu0 %v899, 116
        %v1115 = vpop.permute.xlu0 %1114
        %1116 = vrot.lane.b32.xlu0 %v900, 116
        %v1117 = vpop.permute.xlu0 %1116
        %1118 = vrot.lane.b32.xlu0 %v901, 116
        %v1119 = vpop.permute.xlu0 %1118
        %1120 = vrot.lane.b32.xlu0 %v902, 116
        %v1121 = vpop.permute.xlu0 %1120
        %1122 = vrot.lane.b32.xlu0 %v903, 116
        %v1123 = vpop.permute.xlu0 %1122
        %1124 = vrot.lane.b32.xlu0 %v904, 116
        %v1125 = vpop.permute.xlu0 %1124
        %1126 = vrot.lane.b32.xlu0 %v905, 116
        %v1127 = vpop.permute.xlu0 %1126
        %1128 = vrot.lane.b32.xlu0 %v906, 116
        %v1129 = vpop.permute.xlu0 %1128
        %1130 = vrot.lane.b32.xlu0 %v907, 116
        %v1131 = vpop.permute.xlu0 %1130
        %1132 = vrot.lane.b32.xlu0 %v908, 116
        %v1133 = vpop.permute.xlu0 %1132
        %s1166 = scalar_lea.vmem [#allocation3], 48
        %1167 = vst.msk [vmem:[%s1166 + $0x2] sm:$0xff] %vm337, %v1071
        %1168 = vst.msk [vmem:[%s1166 + $0xa] sm:$0xff] %vm337, %v1073
        %1169 = vst.msk [vmem:[%s1166 + $0x1a] sm:$0xff] %vm337, %v1075
        %1170 = vst.msk [vmem:[%s1166 + $0x22] sm:$0xff] %vm337, %v1077
        %1171 = vst.msk [vmem:[%s1166 + $0x32] sm:$0xff] %vm337, %v1079
        %1172 = vst.msk [vmem:[%s1166 + $0x3a] sm:$0xff] %vm337, %v1081
        %1173 = vst.msk [vmem:[%s1166 + $0x4a] sm:$0xff] %vm337, %v1083
        %1174 = vst.msk [vmem:[%s1166 + $0x52] sm:$0xff] %vm337, %v1085
        %1175 = vst.msk [vmem:[%s1166 + $0x62] sm:$0xff] %vm337, %v1087
        %1176 = vst.msk [vmem:[%s1166 + $0x6a] sm:$0xff] %vm337, %v1089
        %1177 = vst.msk [vmem:[%s1166 + $0x7a] sm:$0xff] %vm337, %v1091
        %1178 = vst.msk [vmem:[%s1166 + $0x82] sm:$0xff] %vm337, %v1093
        %1179 = vst.msk [vmem:[%s1166 + $0x92] sm:$0xff] %vm337, %v1095
        %1180 = vst.msk [vmem:[%s1166 + $0x9a] sm:$0xff] %vm337, %v1097
        %1181 = vst.msk [vmem:[%s1166 + $0xaa] sm:$0xff] %vm337, %v1099
        %1182 = vst.msk [vmem:[%s1166 + $0xb2] sm:$0xff] %vm337, %v1101
        %1183 = vst.msk [vmem:[%s1166 + $0xc2] sm:$0xff] %vm337, %v1103
        %1184 = vst.msk [vmem:[%s1166 + $0xca] sm:$0xff] %vm337, %v1105
        %1185 = vst.msk [vmem:[%s1166 + $0xda] sm:$0xff] %vm337, %v1107
        %1186 = vst.msk [vmem:[%s1166 + $0xe2] sm:$0xff] %vm337, %v1109
        %1187 = vst.msk [vmem:[%s1166 + $0xf2] sm:$0xff] %vm337, %v1111
        %1188 = vst.msk [vmem:[%s1166 + $0xfa] sm:$0xff] %vm337, %v1113
        %1189 = vst.msk [vmem:[%s1166 + $0x10a] sm:$0xff] %vm337, %v1115
        %1190 = vst.msk [vmem:[%s1166 + $0x112] sm:$0xff] %vm337, %v1117
        %1191 = vst.msk [vmem:[%s1166 + $0x122] sm:$0xff] %vm337, %v1119
        %1192 = vst.msk [vmem:[%s1166 + $0x12a] sm:$0xff] %vm337, %v1121
        %1193 = vst.msk [vmem:[%s1166 + $0x13a] sm:$0xff] %vm337, %v1123
        %1194 = vst.msk [vmem:[%s1166 + $0x142] sm:$0xff] %vm337, %v1125
        %1195 = vst.msk [vmem:[%s1166 + $0x152] sm:$0xff] %vm337, %v1127
        %1196 = vst.msk [vmem:[%s1166 + $0x15a] sm:$0xff] %vm337, %v1129
        %1197 = vst.msk [vmem:[%s1166 + $0x16a] sm:$0xff] %vm337, %v1131
        %1198 = vst.msk [vmem:[%s1166 + $0x172] sm:$0xff] %vm337, %v1133
        %v1199 = vld [vmem:[#allocation2] sm:$0xff]
        %v1200 = vld [vmem:[#allocation2 + $0x8] sm:$0xff]
        %v1201 = vld [vmem:[#allocation2 + $0x10] sm:$0x3]
        %v1202 = vld [vmem:[#allocation2 + $0x18] sm:$0xff]
        %v1203 = vld [vmem:[#allocation2 + $0x20] sm:$0xff]
        %v1204 = vld [vmem:[#allocation2 + $0x28] sm:$0x3]
        %v1205 = vld [vmem:[#allocation2 + $0x30] sm:$0xff]
        %v1206 = vld [vmem:[#allocation2 + $0x38] sm:$0xff]
        %v1207 = vld [vmem:[#allocation2 + $0x40] sm:$0x3]
        %v1208 = vld [vmem:[#allocation2 + $0x48] sm:$0xff]
        %v1209 = vld [vmem:[#allocation2 + $0x50] sm:$0xff]
        %v1210 = vld [vmem:[#allocation2 + $0x58] sm:$0x3]
        %v1211 = vld [vmem:[#allocation2 + $0x60] sm:$0xff]
        %v1212 = vld [vmem:[#allocation2 + $0x68] sm:$0xff]
        %v1213 = vld [vmem:[#allocation2 + $0x70] sm:$0x3]
        %v1214 = vld [vmem:[#allocation2 + $0x78] sm:$0xff]
        %v1215 = vld [vmem:[#allocation2 + $0x80] sm:$0xff]
        %v1216 = vld [vmem:[#allocation2 + $0x88] sm:$0x3]
        %v1217 = vld [vmem:[#allocation2 + $0x90] sm:$0xff]
        %v1218 = vld [vmem:[#allocation2 + $0x98] sm:$0xff]
        %v1219 = vld [vmem:[#allocation2 + $0xa0] sm:$0x3]
        %v1220 = vld [vmem:[#allocation2 + $0xa8] sm:$0xff]
        %v1221 = vld [vmem:[#allocation2 + $0xb0] sm:$0xff]
        %v1222 = vld [vmem:[#allocation2 + $0xb8] sm:$0x3]
        %v1223 = vld [vmem:[#allocation2 + $0xc0] sm:$0xff]
        %v1224 = vld [vmem:[#allocation2 + $0xc8] sm:$0xff]
        %v1225 = vld [vmem:[#allocation2 + $0xd0] sm:$0x3]
        %v1226 = vld [vmem:[#allocation2 + $0xd8] sm:$0xff]
        %v1227 = vld [vmem:[#allocation2 + $0xe0] sm:$0xff]
        %v1228 = vld [vmem:[#allocation2 + $0xe8] sm:$0x3]
        %v1229 = vld [vmem:[#allocation2 + $0xf0] sm:$0xff]
        %v1230 = vld [vmem:[#allocation2 + $0xf8] sm:$0xff]
        %v1231 = vld [vmem:[#allocation2 + $0x100] sm:$0x3]
        %v1232 = vld [vmem:[#allocation2 + $0x108] sm:$0xff]
        %v1233 = vld [vmem:[#allocation2 + $0x110] sm:$0xff]
        %v1234 = vld [vmem:[#allocation2 + $0x118] sm:$0x3]
        %v1235 = vld [vmem:[#allocation2 + $0x120] sm:$0xff]
        %v1236 = vld [vmem:[#allocation2 + $0x128] sm:$0xff]
        %v1237 = vld [vmem:[#allocation2 + $0x130] sm:$0x3]
        %v1238 = vld [vmem:[#allocation2 + $0x138] sm:$0xff]
        %v1239 = vld [vmem:[#allocation2 + $0x140] sm:$0xff]
        %v1240 = vld [vmem:[#allocation2 + $0x148] sm:$0x3]
        %v1241 = vld [vmem:[#allocation2 + $0x150] sm:$0xff]
        %v1242 = vld [vmem:[#allocation2 + $0x158] sm:$0xff]
        %v1243 = vld [vmem:[#allocation2 + $0x160] sm:$0x3]
        %v1244 = vld [vmem:[#allocation2 + $0x168] sm:$0xff]
        %v1245 = vld [vmem:[#allocation2 + $0x170] sm:$0xff]
        %v1246 = vld [vmem:[#allocation2 + $0x178] sm:$0x3]
        %v1247 = vld [vmem:[#allocation2 + $0x180] sm:$0xff]
        %v1248 = vld [vmem:[#allocation2 + $0x188] sm:$0xff]
        %v1249 = vld [vmem:[#allocation2 + $0x190] sm:$0x3]
        %v1250 = vld [vmem:[#allocation2 + $0x198] sm:$0xff]
        %v1251 = vld [vmem:[#allocation2 + $0x1a0] sm:$0xff]
        %v1252 = vld [vmem:[#allocation2 + $0x1a8] sm:$0x3]
        %vm1307 = vcmask 1046528
        %v1308 = vrot.slane %v1199, 1
        %v1309 = vrot.slane %v1200, 1
        %v1310 = vsel %vm1307, %v1308, %v1309
        %v1311 = vrot.slane %v1201, 1
        %v1312 = vsel %vm1307, %v1309, %v1311
        %v1313 = vrot.slane %v1202, 1
        %v1314 = vrot.slane %v1203, 1
        %v1315 = vsel %vm1307, %v1313, %v1314
        %v1316 = vrot.slane %v1204, 1
        %v1317 = vsel %vm1307, %v1314, %v1316
        %v1318 = vrot.slane %v1205, 1
        %v1319 = vrot.slane %v1206, 1
        %v1320 = vsel %vm1307, %v1318, %v1319
        %v1321 = vrot.slane %v1207, 1
        %v1322 = vsel %vm1307, %v1319, %v1321
        %v1323 = vrot.slane %v1208, 1
        %v1324 = vrot.slane %v1209, 1
        %v1325 = vsel %vm1307, %v1323, %v1324
        %v1326 = vrot.slane %v1210, 1
        %v1327 = vsel %vm1307, %v1324, %v1326
        %v1328 = vrot.slane %v1211, 1
        %v1329 = vrot.slane %v1212, 1
        %v1330 = vsel %vm1307, %v1328, %v1329
        %v1331 = vrot.slane %v1213, 1
        %v1332 = vsel %vm1307, %v1329, %v1331
        %v1333 = vrot.slane %v1214, 1
        %v1334 = vrot.slane %v1215, 1
        %v1335 = vsel %vm1307, %v1333, %v1334
        %v1336 = vrot.slane %v1216, 1
        %v1337 = vsel %vm1307, %v1334, %v1336
        %v1338 = vrot.slane %v1217, 1
        %v1339 = vrot.slane %v1218, 1
        %v1340 = vsel %vm1307, %v1338, %v1339
        %v1341 = vrot.slane %v1219, 1
        %v1342 = vsel %vm1307, %v1339, %v1341
        %v1343 = vrot.slane %v1220, 1
        %v1344 = vrot.slane %v1221, 1
        %v1345 = vsel %vm1307, %v1343, %v1344
        %v1346 = vrot.slane %v1222, 1
        %v1347 = vsel %vm1307, %v1344, %v1346
        %v1348 = vrot.slane %v1223, 1
        %v1349 = vrot.slane %v1224, 1
        %v1350 = vsel %vm1307, %v1348, %v1349
        %v1351 = vrot.slane %v1225, 1
        %v1352 = vsel %vm1307, %v1349, %v1351
        %v1353 = vrot.slane %v1226, 1
        %v1354 = vrot.slane %v1227, 1
        %v1355 = vsel %vm1307, %v1353, %v1354
        %v1356 = vrot.slane %v1228, 1
        %v1357 = vsel %vm1307, %v1354, %v1356
        %v1358 = vrot.slane %v1229, 1
        %v1359 = vrot.slane %v1230, 1
        %v1360 = vsel %vm1307, %v1358, %v1359
        %v1361 = vrot.slane %v1231, 1
        %v1362 = vsel %vm1307, %v1359, %v1361
        %v1363 = vrot.slane %v1232, 1
        %v1364 = vrot.slane %v1233, 1
        %v1365 = vsel %vm1307, %v1363, %v1364
        %v1366 = vrot.slane %v1234, 1
        %v1367 = vsel %vm1307, %v1364, %v1366
        %v1368 = vrot.slane %v1235, 1
        %v1369 = vrot.slane %v1236, 1
        %v1370 = vsel %vm1307, %v1368, %v1369
        %v1371 = vrot.slane %v1237, 1
        %v1372 = vsel %vm1307, %v1369, %v1371
        %v1373 = vrot.slane %v1238, 1
        %v1374 = vrot.slane %v1239, 1
        %v1375 = vsel %vm1307, %v1373, %v1374
        %v1376 = vrot.slane %v1240, 1
        %v1377 = vsel %vm1307, %v1374, %v1376
        %v1378 = vrot.slane %v1241, 1
        %v1379 = vrot.slane %v1242, 1
        %v1380 = vsel %vm1307, %v1378, %v1379
        %v1381 = vrot.slane %v1243, 1
        %v1382 = vsel %vm1307, %v1379, %v1381
        %v1383 = vrot.slane %v1244, 1
        %v1384 = vrot.slane %v1245, 1
        %v1385 = vsel %vm1307, %v1383, %v1384
        %v1386 = vrot.slane %v1246, 1
        %v1387 = vsel %vm1307, %v1384, %v1386
        %v1388 = vrot.slane %v1247, 1
        %v1389 = vrot.slane %v1248, 1
        %v1390 = vsel %vm1307, %v1388, %v1389
        %v1391 = vrot.slane %v1249, 1
        %v1392 = vsel %vm1307, %v1389, %v1391
        %v1393 = vrot.slane %v1250, 1
        %v1394 = vrot.slane %v1251, 1
        %v1395 = vsel %vm1307, %v1393, %v1394
        %v1396 = vrot.slane %v1252, 1
        %v1397 = vsel %vm1307, %v1394, %v1396
        %1398 = vrot.lane.b32.xlu0 %v1310, 4
        %v1399 = vpop.permute.xlu0 %1398
        %1400 = vrot.lane.b32.xlu0 %v1312, 4
        %v1401 = vpop.permute.xlu0 %1400
        %1402 = vrot.lane.b32.xlu0 %v1315, 4
        %v1403 = vpop.permute.xlu0 %1402
        %1404 = vrot.lane.b32.xlu0 %v1317, 4
        %v1405 = vpop.permute.xlu0 %1404
        %1406 = vrot.lane.b32.xlu0 %v1320, 4
        %v1407 = vpop.permute.xlu0 %1406
        %1408 = vrot.lane.b32.xlu0 %v1322, 4
        %v1409 = vpop.permute.xlu0 %1408
        %1410 = vrot.lane.b32.xlu0 %v1325, 4
        %v1411 = vpop.permute.xlu0 %1410
        %1412 = vrot.lane.b32.xlu0 %v1327, 4
        %v1413 = vpop.permute.xlu0 %1412
        %1414 = vrot.lane.b32.xlu0 %v1330, 4
        %v1415 = vpop.permute.xlu0 %1414
        %1416 = vrot.lane.b32.xlu0 %v1332, 4
        %v1417 = vpop.permute.xlu0 %1416
        %1418 = vrot.lane.b32.xlu0 %v1335, 4
        %v1419 = vpop.permute.xlu0 %1418
        %1420 = vrot.lane.b32.xlu0 %v1337, 4
        %v1421 = vpop.permute.xlu0 %1420
        %1422 = vrot.lane.b32.xlu0 %v1340, 4
        %v1423 = vpop.permute.xlu0 %1422
        %1424 = vrot.lane.b32.xlu0 %v1342, 4
        %v1425 = vpop.permute.xlu0 %1424
        %1426 = vrot.lane.b32.xlu0 %v1345, 4
        %v1427 = vpop.permute.xlu0 %1426
        %1428 = vrot.lane.b32.xlu0 %v1347, 4
        %v1429 = vpop.permute.xlu0 %1428
        %1430 = vrot.lane.b32.xlu0 %v1350, 4
        %v1431 = vpop.permute.xlu0 %1430
        %1432 = vrot.lane.b32.xlu0 %v1352, 4
        %v1433 = vpop.permute.xlu0 %1432
        %1434 = vrot.lane.b32.xlu0 %v1355, 4
        %v1435 = vpop.permute.xlu0 %1434
        %1436 = vrot.lane.b32.xlu0 %v1357, 4
        %v1437 = vpop.permute.xlu0 %1436
        %1438 = vrot.lane.b32.xlu0 %v1360, 4
        %v1439 = vpop.permute.xlu0 %1438
        %1440 = vrot.lane.b32.xlu0 %v1362, 4
        %v1441 = vpop.permute.xlu0 %1440
        %1442 = vrot.lane.b32.xlu0 %v1365, 4
        %v1443 = vpop.permute.xlu0 %1442
        %1444 = vrot.lane.b32.xlu0 %v1367, 4
        %v1445 = vpop.permute.xlu0 %1444
        %1446 = vrot.lane.b32.xlu0 %v1370, 4
        %v1447 = vpop.permute.xlu0 %1446
        %1448 = vrot.lane.b32.xlu0 %v1372, 4
        %v1449 = vpop.permute.xlu0 %1448
        %1450 = vrot.lane.b32.xlu0 %v1375, 4
        %v1451 = vpop.permute.xlu0 %1450
        %1452 = vrot.lane.b32.xlu0 %v1377, 4
        %v1453 = vpop.permute.xlu0 %1452
        %1454 = vrot.lane.b32.xlu0 %v1380, 4
        %v1455 = vpop.permute.xlu0 %1454
        %1456 = vrot.lane.b32.xlu0 %v1382, 4
        %v1457 = vpop.permute.xlu0 %1456
        %1458 = vrot.lane.b32.xlu0 %v1385, 4
        %v1459 = vpop.permute.xlu0 %1458
        %1460 = vrot.lane.b32.xlu0 %v1387, 4
        %v1461 = vpop.permute.xlu0 %1460
        %1462 = vrot.lane.b32.xlu0 %v1390, 4
        %v1463 = vpop.permute.xlu0 %1462
        %1464 = vrot.lane.b32.xlu0 %v1392, 4
        %v1465 = vpop.permute.xlu0 %1464
        %1466 = vrot.lane.b32.xlu0 %v1395, 4
        %v1467 = vpop.permute.xlu0 %1466
        %1468 = vrot.lane.b32.xlu0 %v1397, 4
        %v1469 = vpop.permute.xlu0 %1468
        %vm1506 = vcmask 1045504
        %v1507 = vrot.slane %v1199, 2
        %v1508 = vrot.slane %v1200, 2
        %v1509 = vsel %vm1506, %v1507, %v1508
        %v1510 = vrot.slane %v1201, 2
        %v1511 = vsel %vm1506, %v1508, %v1510
        %v1512 = vrot.slane %v1202, 2
        %v1513 = vrot.slane %v1203, 2
        %v1514 = vsel %vm1506, %v1512, %v1513
        %v1515 = vrot.slane %v1204, 2
        %v1516 = vsel %vm1506, %v1513, %v1515
        %v1517 = vrot.slane %v1205, 2
        %v1518 = vrot.slane %v1206, 2
        %v1519 = vsel %vm1506, %v1517, %v1518
        %v1520 = vrot.slane %v1207, 2
        %v1521 = vsel %vm1506, %v1518, %v1520
        %v1522 = vrot.slane %v1208, 2
        %v1523 = vrot.slane %v1209, 2
        %v1524 = vsel %vm1506, %v1522, %v1523
        %v1525 = vrot.slane %v1210, 2
        %v1526 = vsel %vm1506, %v1523, %v1525
        %v1527 = vrot.slane %v1211, 2
        %v1528 = vrot.slane %v1212, 2
        %v1529 = vsel %vm1506, %v1527, %v1528
        %v1530 = vrot.slane %v1213, 2
        %v1531 = vsel %vm1506, %v1528, %v1530
        %v1532 = vrot.slane %v1214, 2
        %v1533 = vrot.slane %v1215, 2
        %v1534 = vsel %vm1506, %v1532, %v1533
        %v1535 = vrot.slane %v1216, 2
        %v1536 = vsel %vm1506, %v1533, %v1535
        %v1537 = vrot.slane %v1217, 2
        %v1538 = vrot.slane %v1218, 2
        %v1539 = vsel %vm1506, %v1537, %v1538
        %v1540 = vrot.slane %v1219, 2
        %v1541 = vsel %vm1506, %v1538, %v1540
        %v1542 = vrot.slane %v1220, 2
        %v1543 = vrot.slane %v1221, 2
        %v1544 = vsel %vm1506, %v1542, %v1543
        %v1545 = vrot.slane %v1222, 2
        %v1546 = vsel %vm1506, %v1543, %v1545
        %v1547 = vrot.slane %v1223, 2
        %v1548 = vrot.slane %v1224, 2
        %v1549 = vsel %vm1506, %v1547, %v1548
        %v1550 = vrot.slane %v1225, 2
        %v1551 = vsel %vm1506, %v1548, %v1550
        %v1552 = vrot.slane %v1226, 2
        %v1553 = vrot.slane %v1227, 2
        %v1554 = vsel %vm1506, %v1552, %v1553
        %v1555 = vrot.slane %v1228, 2
        %v1556 = vsel %vm1506, %v1553, %v1555
        %v1557 = vrot.slane %v1229, 2
        %v1558 = vrot.slane %v1230, 2
        %v1559 = vsel %vm1506, %v1557, %v1558
        %v1560 = vrot.slane %v1231, 2
        %v1561 = vsel %vm1506, %v1558, %v1560
        %v1562 = vrot.slane %v1232, 2
        %v1563 = vrot.slane %v1233, 2
        %v1564 = vsel %vm1506, %v1562, %v1563
        %v1565 = vrot.slane %v1234, 2
        %v1566 = vsel %vm1506, %v1563, %v1565
        %v1567 = vrot.slane %v1235, 2
        %v1568 = vrot.slane %v1236, 2
        %v1569 = vsel %vm1506, %v1567, %v1568
        %v1570 = vrot.slane %v1237, 2
        %v1571 = vsel %vm1506, %v1568, %v1570
        %v1572 = vrot.slane %v1238, 2
        %v1573 = vrot.slane %v1239, 2
        %v1574 = vsel %vm1506, %v1572, %v1573
        %v1575 = vrot.slane %v1240, 2
        %v1576 = vsel %vm1506, %v1573, %v1575
        %v1577 = vrot.slane %v1241, 2
        %v1578 = vrot.slane %v1242, 2
        %v1579 = vsel %vm1506, %v1577, %v1578
        %v1580 = vrot.slane %v1243, 2
        %v1581 = vsel %vm1506, %v1578, %v1580
        %v1582 = vrot.slane %v1244, 2
        %v1583 = vrot.slane %v1245, 2
        %v1584 = vsel %vm1506, %v1582, %v1583
        %v1585 = vrot.slane %v1246, 2
        %v1586 = vsel %vm1506, %v1583, %v1585
        %v1587 = vrot.slane %v1247, 2
        %v1588 = vrot.slane %v1248, 2
        %v1589 = vsel %vm1506, %v1587, %v1588
        %v1590 = vrot.slane %v1249, 2
        %v1591 = vsel %vm1506, %v1588, %v1590
        %v1592 = vrot.slane %v1250, 2
        %v1593 = vrot.slane %v1251, 2
        %v1594 = vsel %vm1506, %v1592, %v1593
        %v1595 = vrot.slane %v1252, 2
        %v1596 = vsel %vm1506, %v1593, %v1595
        %1597 = vrot.lane.b32.xlu0 %v1509, 8
        %v1598 = vpop.permute.xlu0 %1597
        %1599 = vrot.lane.b32.xlu0 %v1511, 8
        %v1600 = vpop.permute.xlu0 %1599
        %1601 = vrot.lane.b32.xlu0 %v1514, 8
        %v1602 = vpop.permute.xlu0 %1601
        %1603 = vrot.lane.b32.xlu0 %v1516, 8
        %v1604 = vpop.permute.xlu0 %1603
        %1605 = vrot.lane.b32.xlu0 %v1519, 8
        %v1606 = vpop.permute.xlu0 %1605
        %1607 = vrot.lane.b32.xlu0 %v1521, 8
        %v1608 = vpop.permute.xlu0 %1607
        %1609 = vrot.lane.b32.xlu0 %v1524, 8
        %v1610 = vpop.permute.xlu0 %1609
        %1611 = vrot.lane.b32.xlu0 %v1526, 8
        %v1612 = vpop.permute.xlu0 %1611
        %1613 = vrot.lane.b32.xlu0 %v1529, 8
        %v1614 = vpop.permute.xlu0 %1613
        %1615 = vrot.lane.b32.xlu0 %v1531, 8
        %v1616 = vpop.permute.xlu0 %1615
        %1617 = vrot.lane.b32.xlu0 %v1534, 8
        %v1618 = vpop.permute.xlu0 %1617
        %1619 = vrot.lane.b32.xlu0 %v1536, 8
        %v1620 = vpop.permute.xlu0 %1619
        %1621 = vrot.lane.b32.xlu0 %v1539, 8
        %v1622 = vpop.permute.xlu0 %1621
        %1623 = vrot.lane.b32.xlu0 %v1541, 8
        %v1624 = vpop.permute.xlu0 %1623
        %1625 = vrot.lane.b32.xlu0 %v1544, 8
        %v1626 = vpop.permute.xlu0 %1625
        %1627 = vrot.lane.b32.xlu0 %v1546, 8
        %v1628 = vpop.permute.xlu0 %1627
        %1629 = vrot.lane.b32.xlu0 %v1549, 8
        %v1630 = vpop.permute.xlu0 %1629
        %1631 = vrot.lane.b32.xlu0 %v1551, 8
        %v1632 = vpop.permute.xlu0 %1631
        %1633 = vrot.lane.b32.xlu0 %v1554, 8
        %v1634 = vpop.permute.xlu0 %1633
        %1635 = vrot.lane.b32.xlu0 %v1556, 8
        %v1636 = vpop.permute.xlu0 %1635
        %1637 = vrot.lane.b32.xlu0 %v1559, 8
        %v1638 = vpop.permute.xlu0 %1637
        %1639 = vrot.lane.b32.xlu0 %v1561, 8
        %v1640 = vpop.permute.xlu0 %1639
        %1641 = vrot.lane.b32.xlu0 %v1564, 8
        %v1642 = vpop.permute.xlu0 %1641
        %1643 = vrot.lane.b32.xlu0 %v1566, 8
        %v1644 = vpop.permute.xlu0 %1643
        %1645 = vrot.lane.b32.xlu0 %v1569, 8
        %v1646 = vpop.permute.xlu0 %1645
        %1647 = vrot.lane.b32.xlu0 %v1571, 8
        %v1648 = vpop.permute.xlu0 %1647
        %1649 = vrot.lane.b32.xlu0 %v1574, 8
        %v1650 = vpop.permute.xlu0 %1649
        %1651 = vrot.lane.b32.xlu0 %v1576, 8
        %v1652 = vpop.permute.xlu0 %1651
        %1653 = vrot.lane.b32.xlu0 %v1579, 8
        %v1654 = vpop.permute.xlu0 %1653
        %1655 = vrot.lane.b32.xlu0 %v1581, 8
        %v1656 = vpop.permute.xlu0 %1655
        %1657 = vrot.lane.b32.xlu0 %v1584, 8
        %v1658 = vpop.permute.xlu0 %1657
        %1659 = vrot.lane.b32.xlu0 %v1586, 8
        %v1660 = vpop.permute.xlu0 %1659
        %1661 = vrot.lane.b32.xlu0 %v1589, 8
        %v1662 = vpop.permute.xlu0 %1661
        %1663 = vrot.lane.b32.xlu0 %v1591, 8
        %v1664 = vpop.permute.xlu0 %1663
        %1665 = vrot.lane.b32.xlu0 %v1594, 8
        %v1666 = vpop.permute.xlu0 %1665
        %1667 = vrot.lane.b32.xlu0 %v1596, 8
        %v1668 = vpop.permute.xlu0 %1667
        %v1705 = vsel %vm337, %v1199, %v1399
        %v1706 = vsel %vm337, %v1200, %v1401
        %v1707 = vsel %vm337, %v1202, %v1403
        %v1708 = vsel %vm337, %v1203, %v1405
        %v1709 = vsel %vm337, %v1205, %v1407
        %v1710 = vsel %vm337, %v1206, %v1409
        %v1711 = vsel %vm337, %v1208, %v1411
        %v1712 = vsel %vm337, %v1209, %v1413
        %v1713 = vsel %vm337, %v1211, %v1415
        %v1714 = vsel %vm337, %v1212, %v1417
        %v1715 = vsel %vm337, %v1214, %v1419
        %v1716 = vsel %vm337, %v1215, %v1421
        %v1717 = vsel %vm337, %v1217, %v1423
        %v1718 = vsel %vm337, %v1218, %v1425
        %v1719 = vsel %vm337, %v1220, %v1427
        %v1720 = vsel %vm337, %v1221, %v1429
        %v1721 = vsel %vm337, %v1223, %v1431
        %v1722 = vsel %vm337, %v1224, %v1433
        %v1723 = vsel %vm337, %v1226, %v1435
        %v1724 = vsel %vm337, %v1227, %v1437
        %v1725 = vsel %vm337, %v1229, %v1439
        %v1726 = vsel %vm337, %v1230, %v1441
        %v1727 = vsel %vm337, %v1232, %v1443
        %v1728 = vsel %vm337, %v1233, %v1445
        %v1729 = vsel %vm337, %v1235, %v1447
        %v1730 = vsel %vm337, %v1236, %v1449
        %v1731 = vsel %vm337, %v1238, %v1451
        %v1732 = vsel %vm337, %v1239, %v1453
        %v1733 = vsel %vm337, %v1241, %v1455
        %v1734 = vsel %vm337, %v1242, %v1457
        %v1735 = vsel %vm337, %v1244, %v1459
        %v1736 = vsel %vm337, %v1245, %v1461
        %v1737 = vsel %vm337, %v1247, %v1463
        %v1738 = vsel %vm337, %v1248, %v1465
        %v1739 = vsel %vm337, %v1250, %v1467
        %v1740 = vsel %vm337, %v1251, %v1469
        %vm1741 = vcmask 64512
        %v1742 = vsel %vm1741, %v1705, %v1598
        %v1743 = vsel %vm1741, %v1706, %v1600
        %v1744 = vsel %vm1741, %v1707, %v1602
        %v1745 = vsel %vm1741, %v1708, %v1604
        %v1746 = vsel %vm1741, %v1709, %v1606
        %v1747 = vsel %vm1741, %v1710, %v1608
        %v1748 = vsel %vm1741, %v1711, %v1610
        %v1749 = vsel %vm1741, %v1712, %v1612
        %v1750 = vsel %vm1741, %v1713, %v1614
        %v1751 = vsel %vm1741, %v1714, %v1616
        %v1752 = vsel %vm1741, %v1715, %v1618
        %v1753 = vsel %vm1741, %v1716, %v1620
        %v1754 = vsel %vm1741, %v1717, %v1622
        %v1755 = vsel %vm1741, %v1718, %v1624
        %v1756 = vsel %vm1741, %v1719, %v1626
        %v1757 = vsel %vm1741, %v1720, %v1628
        %v1758 = vsel %vm1741, %v1721, %v1630
        %v1759 = vsel %vm1741, %v1722, %v1632
        %v1760 = vsel %vm1741, %v1723, %v1634
        %v1761 = vsel %vm1741, %v1724, %v1636
        %v1762 = vsel %vm1741, %v1725, %v1638
        %v1763 = vsel %vm1741, %v1726, %v1640
        %v1764 = vsel %vm1741, %v1727, %v1642
        %v1765 = vsel %vm1741, %v1728, %v1644
        %v1766 = vsel %vm1741, %v1729, %v1646
        %v1767 = vsel %vm1741, %v1730, %v1648
        %v1768 = vsel %vm1741, %v1731, %v1650
        %v1769 = vsel %vm1741, %v1732, %v1652
        %v1770 = vsel %vm1741, %v1733, %v1654
        %v1771 = vsel %vm1741, %v1734, %v1656
        %v1772 = vsel %vm1741, %v1735, %v1658
        %v1773 = vsel %vm1741, %v1736, %v1660
        %v1774 = vsel %vm1741, %v1737, %v1662
        %v1775 = vsel %vm1741, %v1738, %v1664
        %v1776 = vsel %vm1741, %v1739, %v1666
        %v1777 = vsel %vm1741, %v1740, %v1668
        %1810 = vrot.lane.b32.xlu0 %v1744, 12
        %v1811 = vpop.permute.xlu0 %1810
        %1812 = vrot.lane.b32.xlu0 %v1745, 12
        %v1813 = vpop.permute.xlu0 %1812
        %1814 = vrot.lane.b32.xlu0 %v1746, 12
        %v1815 = vpop.permute.xlu0 %1814
        %1816 = vrot.lane.b32.xlu0 %v1747, 12
        %v1817 = vpop.permute.xlu0 %1816
        %1818 = vrot.lane.b32.xlu0 %v1748, 12
        %v1819 = vpop.permute.xlu0 %1818
        %1820 = vrot.lane.b32.xlu0 %v1749, 12
        %v1821 = vpop.permute.xlu0 %1820
        %1822 = vrot.lane.b32.xlu0 %v1750, 12
        %v1823 = vpop.permute.xlu0 %1822
        %1824 = vrot.lane.b32.xlu0 %v1751, 12
        %v1825 = vpop.permute.xlu0 %1824
        %1826 = vrot.lane.b32.xlu0 %v1752, 12
        %v1827 = vpop.permute.xlu0 %1826
        %1828 = vrot.lane.b32.xlu0 %v1753, 12
        %v1829 = vpop.permute.xlu0 %1828
        %1830 = vrot.lane.b32.xlu0 %v1754, 12
        %v1831 = vpop.permute.xlu0 %1830
        %1832 = vrot.lane.b32.xlu0 %v1755, 12
        %v1833 = vpop.permute.xlu0 %1832
        %1834 = vrot.lane.b32.xlu0 %v1756, 12
        %v1835 = vpop.permute.xlu0 %1834
        %1836 = vrot.lane.b32.xlu0 %v1757, 12
        %v1837 = vpop.permute.xlu0 %1836
        %1838 = vrot.lane.b32.xlu0 %v1758, 12
        %v1839 = vpop.permute.xlu0 %1838
        %1840 = vrot.lane.b32.xlu0 %v1759, 12
        %v1841 = vpop.permute.xlu0 %1840
        %1842 = vrot.lane.b32.xlu0 %v1760, 12
        %v1843 = vpop.permute.xlu0 %1842
        %1844 = vrot.lane.b32.xlu0 %v1761, 12
        %v1845 = vpop.permute.xlu0 %1844
        %1846 = vrot.lane.b32.xlu0 %v1762, 12
        %v1847 = vpop.permute.xlu0 %1846
        %1848 = vrot.lane.b32.xlu0 %v1763, 12
        %v1849 = vpop.permute.xlu0 %1848
        %1850 = vrot.lane.b32.xlu0 %v1764, 12
        %v1851 = vpop.permute.xlu0 %1850
        %1852 = vrot.lane.b32.xlu0 %v1765, 12
        %v1853 = vpop.permute.xlu0 %1852
        %1854 = vrot.lane.b32.xlu0 %v1766, 12
        %v1855 = vpop.permute.xlu0 %1854
        %1856 = vrot.lane.b32.xlu0 %v1767, 12
        %v1857 = vpop.permute.xlu0 %1856
        %1858 = vrot.lane.b32.xlu0 %v1768, 12
        %v1859 = vpop.permute.xlu0 %1858
        %1860 = vrot.lane.b32.xlu0 %v1769, 12
        %v1861 = vpop.permute.xlu0 %1860
        %1862 = vrot.lane.b32.xlu0 %v1770, 12
        %v1863 = vpop.permute.xlu0 %1862
        %1864 = vrot.lane.b32.xlu0 %v1771, 12
        %v1865 = vpop.permute.xlu0 %1864
        %1866 = vrot.lane.b32.xlu0 %v1772, 12
        %v1867 = vpop.permute.xlu0 %1866
        %1868 = vrot.lane.b32.xlu0 %v1773, 12
        %v1869 = vpop.permute.xlu0 %1868
        %1870 = vrot.lane.b32.xlu0 %v1774, 12
        %v1871 = vpop.permute.xlu0 %1870
        %1872 = vrot.lane.b32.xlu0 %v1775, 12
        %v1873 = vpop.permute.xlu0 %1872
        %1908 = vrot.lane.b32.xlu0 %v1746, 24
        %v1909 = vpop.permute.xlu0 %1908
        %1910 = vrot.lane.b32.xlu0 %v1747, 24
        %v1911 = vpop.permute.xlu0 %1910
        %1912 = vrot.lane.b32.xlu0 %v1748, 24
        %v1913 = vpop.permute.xlu0 %1912
        %1914 = vrot.lane.b32.xlu0 %v1749, 24
        %v1915 = vpop.permute.xlu0 %1914
        %1916 = vrot.lane.b32.xlu0 %v1750, 24
        %v1917 = vpop.permute.xlu0 %1916
        %1918 = vrot.lane.b32.xlu0 %v1751, 24
        %v1919 = vpop.permute.xlu0 %1918
        %1920 = vrot.lane.b32.xlu0 %v1752, 24
        %v1921 = vpop.permute.xlu0 %1920
        %1922 = vrot.lane.b32.xlu0 %v1753, 24
        %v1923 = vpop.permute.xlu0 %1922
        %1924 = vrot.lane.b32.xlu0 %v1754, 24
        %v1925 = vpop.permute.xlu0 %1924
        %1926 = vrot.lane.b32.xlu0 %v1755, 24
        %v1927 = vpop.permute.xlu0 %1926
        %1928 = vrot.lane.b32.xlu0 %v1756, 24
        %v1929 = vpop.permute.xlu0 %1928
        %1930 = vrot.lane.b32.xlu0 %v1757, 24
        %v1931 = vpop.permute.xlu0 %1930
        %1932 = vrot.lane.b32.xlu0 %v1758, 24
        %v1933 = vpop.permute.xlu0 %1932
        %1934 = vrot.lane.b32.xlu0 %v1759, 24
        %v1935 = vpop.permute.xlu0 %1934
        %1936 = vrot.lane.b32.xlu0 %v1760, 24
        %v1937 = vpop.permute.xlu0 %1936
        %1938 = vrot.lane.b32.xlu0 %v1761, 24
        %v1939 = vpop.permute.xlu0 %1938
        %1940 = vrot.lane.b32.xlu0 %v1762, 24
        %v1941 = vpop.permute.xlu0 %1940
        %1942 = vrot.lane.b32.xlu0 %v1763, 24
        %v1943 = vpop.permute.xlu0 %1942
        %1944 = vrot.lane.b32.xlu0 %v1764, 24
        %v1945 = vpop.permute.xlu0 %1944
        %1946 = vrot.lane.b32.xlu0 %v1765, 24
        %v1947 = vpop.permute.xlu0 %1946
        %1948 = vrot.lane.b32.xlu0 %v1766, 24
        %v1949 = vpop.permute.xlu0 %1948
        %1950 = vrot.lane.b32.xlu0 %v1767, 24
        %v1951 = vpop.permute.xlu0 %1950
        %1952 = vrot.lane.b32.xlu0 %v1768, 24
        %v1953 = vpop.permute.xlu0 %1952
        %1954 = vrot.lane.b32.xlu0 %v1769, 24
        %v1955 = vpop.permute.xlu0 %1954
        %1956 = vrot.lane.b32.xlu0 %v1770, 24
        %v1957 = vpop.permute.xlu0 %1956
        %1958 = vrot.lane.b32.xlu0 %v1771, 24
        %v1959 = vpop.permute.xlu0 %1958
        %1960 = vrot.lane.b32.xlu0 %v1772, 24
        %v1961 = vpop.permute.xlu0 %1960
        %1962 = vrot.lane.b32.xlu0 %v1773, 24
        %v1963 = vpop.permute.xlu0 %1962
        %1964 = vrot.lane.b32.xlu0 %v1774, 24
        %v1965 = vpop.permute.xlu0 %1964
        %1966 = vrot.lane.b32.xlu0 %v1775, 24
        %v1967 = vpop.permute.xlu0 %1966
        %1968 = vrot.lane.b32.xlu0 %v1776, 24
        %v1969 = vpop.permute.xlu0 %1968
        %1970 = vrot.lane.b32.xlu0 %v1777, 24
        %v1971 = vpop.permute.xlu0 %1970
        %vm2004 = vcmask 97280
        %v2005 = vsel %vm2004, %v1742, %v1811
        %v2006 = vsel %vm2004, %v1743, %v1813
        %v2007 = vsel %vm2004, %v1744, %v1815
        %v2008 = vsel %vm2004, %v1745, %v1817
        %v2009 = vsel %vm2004, %v1746, %v1819
        %v2010 = vsel %vm2004, %v1747, %v1821
        %v2011 = vsel %vm2004, %v1748, %v1823
        %v2012 = vsel %vm2004, %v1749, %v1825
        %v2013 = vsel %vm2004, %v1750, %v1827
        %v2014 = vsel %vm2004, %v1751, %v1829
        %v2015 = vsel %vm2004, %v1752, %v1831
        %v2016 = vsel %vm2004, %v1753, %v1833
        %v2017 = vsel %vm2004, %v1754, %v1835
        %v2018 = vsel %vm2004, %v1755, %v1837
        %v2019 = vsel %vm2004, %v1756, %v1839
        %v2020 = vsel %vm2004, %v1757, %v1841
        %v2021 = vsel %vm2004, %v1758, %v1843
        %v2022 = vsel %vm2004, %v1759, %v1845
        %v2023 = vsel %vm2004, %v1760, %v1847
        %v2024 = vsel %vm2004, %v1761, %v1849
        %v2025 = vsel %vm2004, %v1762, %v1851
        %v2026 = vsel %vm2004, %v1763, %v1853
        %v2027 = vsel %vm2004, %v1764, %v1855
        %v2028 = vsel %vm2004, %v1765, %v1857
        %v2029 = vsel %vm2004, %v1766, %v1859
        %v2030 = vsel %vm2004, %v1767, %v1861
        %v2031 = vsel %vm2004, %v1768, %v1863
        %v2032 = vsel %vm2004, %v1769, %v1865
        %v2033 = vsel %vm2004, %v1770, %v1867
        %v2034 = vsel %vm2004, %v1771, %v1869
        %v2035 = vsel %vm2004, %v1772, %v1871
        %v2036 = vsel %vm2004, %v1773, %v1873
        %vm2037 = vcmask 195584
        %v2038 = vsel %vm2037, %v2005, %v1909
        %v2039 = vsel %vm2037, %v2006, %v1911
        %v2040 = vsel %vm2037, %v2007, %v1913
        %v2041 = vsel %vm2037, %v2008, %v1915
        %v2042 = vsel %vm2037, %v2009, %v1917
        %v2043 = vsel %vm2037, %v2010, %v1919
        %v2044 = vsel %vm2037, %v2011, %v1921
        %v2045 = vsel %vm2037, %v2012, %v1923
        %v2046 = vsel %vm2037, %v2013, %v1925
        %v2047 = vsel %vm2037, %v2014, %v1927
        %v2048 = vsel %vm2037, %v2015, %v1929
        %v2049 = vsel %vm2037, %v2016, %v1931
        %v2050 = vsel %vm2037, %v2017, %v1933
        %v2051 = vsel %vm2037, %v2018, %v1935
        %v2052 = vsel %vm2037, %v2019, %v1937
        %v2053 = vsel %vm2037, %v2020, %v1939
        %v2054 = vsel %vm2037, %v2021, %v1941
        %v2055 = vsel %vm2037, %v2022, %v1943
        %v2056 = vsel %vm2037, %v2023, %v1945
        %v2057 = vsel %vm2037, %v2024, %v1947
        %v2058 = vsel %vm2037, %v2025, %v1949
        %v2059 = vsel %vm2037, %v2026, %v1951
        %v2060 = vsel %vm2037, %v2027, %v1953
        %v2061 = vsel %vm2037, %v2028, %v1955
        %v2062 = vsel %vm2037, %v2029, %v1957
        %v2063 = vsel %vm2037, %v2030, %v1959
        %v2064 = vsel %vm2037, %v2031, %v1961
        %v2065 = vsel %vm2037, %v2032, %v1963
        %v2066 = vsel %vm2037, %v2033, %v1965
        %v2067 = vsel %vm2037, %v2034, %v1967
        %v2068 = vsel %vm2037, %v2035, %v1969
        %v2069 = vsel %vm2037, %v2036, %v1971
        %v2070 = vld [vmem:[%s3] sm:$0xff]
        %v2071 = vld [vmem:[%s3 + $0x8] sm:$0xff]
        %v2072 = vld [vmem:[%s3 + $0x10] sm:$0xff]
        %v2073 = vld [vmem:[%s3 + $0x18] sm:$0xff]
        %v2074 = vld [vmem:[%s3 + $0x20] sm:$0xf]
        %vm2075 = vcmask 293888
        %v2077 = vsel %vm2075, %v2038, 0
        %v2080 = vsel %vm2075, %v2039, 0
        %v2083 = vsel %vm2075, %v2040, 0
        %v2086 = vsel %vm2075, %v2041, 0
        %v2089 = vsel %vm2075, %v2042, 0
        %v2092 = vsel %vm2075, %v2043, 0
        %v2095 = vsel %vm2075, %v2044, 0
        %v2098 = vsel %vm2075, %v2045, 0
        %v2101 = vsel %vm2075, %v2046, 0
        %v2104 = vsel %vm2075, %v2047, 0
        %v2107 = vsel %vm2075, %v2048, 0
        %v2110 = vsel %vm2075, %v2049, 0
        %v2113 = vsel %vm2075, %v2050, 0
        %v2116 = vsel %vm2075, %v2051, 0
        %v2119 = vsel %vm2075, %v2052, 0
        %v2122 = vsel %vm2075, %v2053, 0
        %v2125 = vsel %vm2075, %v2054, 0
        %v2128 = vsel %vm2075, %v2055, 0
        %v2131 = vsel %vm2075, %v2056, 0
        %v2134 = vsel %vm2075, %v2057, 0
        %v2137 = vsel %vm2075, %v2058, 0
        %v2140 = vsel %vm2075, %v2059, 0
        %v2143 = vsel %vm2075, %v2060, 0
        %v2146 = vsel %vm2075, %v2061, 0
        %v2149 = vsel %vm2075, %v2062, 0
        %v2152 = vsel %vm2075, %v2063, 0
        %v2155 = vsel %vm2075, %v2064, 0
        %v2158 = vsel %vm2075, %v2065, 0
        %v2161 = vsel %vm2075, %v2066, 0
        %v2164 = vsel %vm2075, %v2067, 0
        %v2167 = vsel %vm2075, %v2068, 0
        %v2170 = vsel %vm2075, %v2069, 0
        %v2173 = vsel %vm610, %v2074, 0
        %2175 = vmatprep.subr.mxu0 0.0
        %2176 = vmatpush1.msra.mxu0 %v2070
        %2177 = vmatprep.subr.mxu0 0.0
        %2178 = vmatpush1.msra.mxu0 %v2071
        %2179 = vmatprep.subr.mxu0 0.0
        %2180 = vmatpush1.msra.mxu0 %v2072
        %2181 = vmatprep.subr.mxu0 0.0
        %2182 = vmatpush1.msra.mxu0 %v2073
        %2183 = vmatprep.subr.mxu0 0.0
        %2184 = vmatpush1.msra.mxu0 %v2173
        %2185 = vmatprep.subr.mxu0 0.0
        %2186 = vmatpush1.msra.mxu0 0.0
        %2187 = vmatprep.subr.mxu0 0.0
        %2188 = vmatpush1.msra.mxu0 0.0
        %2189 = vmatprep.subr.mxu0 0.0
        %2190 = vmatpush1.msra.mxu0 0.0
        %2191 = vmatprep.subr.mxu0 0.0
        %2192 = vmatpush1.msra.mxu0 0.0
        %2193 = vmatprep.subr.mxu0 0.0
        %2194 = vmatpush1.msra.mxu0 0.0
        %2195 = vmatprep.subr.mxu0 0.0
        %2196 = vmatpush1.msra.mxu0 0.0
        %2197 = vmatprep.subr.mxu0 0.0
        %2198 = vmatpush1.msra.mxu0 0.0
        %2199 = vmatprep.subr.mxu0 0.0
        %2200 = vmatpush1.msra.mxu0 0.0
        %2201 = vmatprep.subr.mxu0 0.0
        %2202 = vmatpush1.msra.mxu0 0.0
        %2203 = vmatprep.subr.mxu0 0.0
        %2204 = vmatpush1.msra.mxu0 0.0
        %2205 = vmatprep.subr.mxu0 0.0
        %2206 = vmatpush1.msra.mxu0 0.0
        %2207 = vmatprep.subr.mxu0 0.0
        %2208 = vmatpush1.msra.mxu0 0.0
        %2209 = vmatprep.subr.mxu0 0.0
        %2210 = vmatpush1.msra.mxu0 0.0
        %2211 = vmatprep.subr.mxu0 0.0
        %2212 = vmatpush1.msra.mxu0 0.0
        %2213 = vmatprep.subr.mxu0 0.0
        %2214 = vmatpush1.msra.mxu0 0.0
        %2215 = vmatprep.subr.mxu0 0.0
        %2216 = vmatpush1.msra.mxu0 0.0
        %2217 = vmatprep.subr.mxu0 0.0
        %2218 = vmatpush1.msra.mxu0 0.0
        %2219 = vmatprep.subr.mxu0 0.0
        %2220 = vmatpush1.msra.mxu0 0.0
        %2221 = vmatprep.subr.mxu0 0.0
        %2222 = vmatpush1.msra.mxu0 0.0
        %2223 = vmatprep.subr.mxu0 0.0
        %2224 = vmatpush1.msra.mxu0 0.0
        %2225 = vmatprep.subr.mxu0 0.0
        %2226 = vmatpush1.msra.mxu0 0.0
        %2227 = vmatprep.subr.mxu0 0.0
        %2228 = vmatpush1.msra.mxu0 0.0
        %2229 = vmatprep.subr.mxu0 0.0
        %2230 = vmatpush1.msra.mxu0 0.0
        %2231 = vmatprep.subr.mxu0 0.0
        %2232 = vmatpush1.msra.mxu0 0.0
        %2233 = vmatprep.subr.mxu0 0.0
        %2234 = vmatpush1.msra.mxu0 0.0
        %2235 = vmatprep.subr.mxu0 0.0
        %2236 = vmatpush1.msra.mxu0 0.0
        %2237 = vmatprep.subr.mxu0 0.0
        %2238 = vmatpush1.msra.mxu0 0.0
        %2239 = vmatprep.mubr.f32.mxu0 0.0
        %2240 = vmatmul.mubr.f32.gmra.mrb[0].mxu0 %v2077
        %v2241 = vpop.f32.mrb[0].mxu0
        %v2242 = vadd.f32 0.0, %v2241
        %v2243 = vpop.f32.mrb[0].mxu0
        %2244 = vmatprep.mubr.f32.mxu0 0.0
        %2245 = vmatmul.mubr.f32.gmra.mrb[0].mxu0 %v2080
        %v2246 = vpop.f32.mrb[0].mxu0
        %v2247 = vadd.f32 0.0, %v2246
        %v2248 = vpop.f32.mrb[0].mxu0
        %2249 = vmatprep.mubr.f32.mxu0 0.0
        %2250 = vmatmul.mubr.f32.gmra.mrb[0].mxu0 %v2083
        %v2251 = vpop.f32.mrb[0].mxu0
        %v2252 = vadd.f32 0.0, %v2251
        %v2253 = vpop.f32.mrb[0].mxu0
        %2254 = vmatprep.mubr.f32.mxu0 0.0
        %2255 = vmatmul.mubr.f32.gmra.mrb[0].mxu0 %v2086
        %v2256 = vpop.f32.mrb[0].mxu0
        %v2257 = vadd.f32 0.0, %v2256
        %v2258 = vpop.f32.mrb[0].mxu0
        %2259 = vmatprep.mubr.f32.mxu0 0.0
        %2260 = vmatmul.mubr.f32.gmra.mrb[0].mxu0 %v2089
        %v2261 = vpop.f32.mrb[0].mxu0
        %v2262 = vadd.f32 0.0, %v2261
        %v2263 = vpop.f32.mrb[0].mxu0
        %2264 = vmatprep.mubr.f32.mxu0 0.0
        %2265 = vmatmul.mubr.f32.gmra.mrb[0].mxu0 %v2092
        %v2266 = vpop.f32.mrb[0].mxu0
        %v2267 = vadd.f32 0.0, %v2266
        %v2268 = vpop.f32.mrb[0].mxu0
        %2269 = vmatprep.mubr.f32.mxu0 0.0
        %2270 = vmatmul.mubr.f32.gmra.mrb[0].mxu0 %v2095
        %v2271 = vpop.f32.mrb[0].mxu0
        %v2272 = vadd.f32 0.0, %v2271
        %v2273 = vpop.f32.mrb[0].mxu0
        %2274 = vmatprep.mubr.f32.mxu0 0.0
        %2275 = vmatmul.mubr.f32.gmra.mrb[0].mxu0 %v2098
        %v2276 = vpop.f32.mrb[0].mxu0
        %v2277 = vadd.f32 0.0, %v2276
        %v2278 = vpop.f32.mrb[0].mxu0
        %2279 = vmatprep.mubr.f32.mxu0 0.0
        %2280 = vmatmul.mubr.f32.gmra.mrb[0].mxu0 %v2101
        %v2281 = vpop.f32.mrb[0].mxu0
        %v2282 = vadd.f32 0.0, %v2281
        %v2283 = vpop.f32.mrb[0].mxu0
        %2284 = vmatprep.mubr.f32.mxu0 0.0
        %2285 = vmatmul.mubr.f32.gmra.mrb[0].mxu0 %v2104
        %v2286 = vpop.f32.mrb[0].mxu0
        %v2287 = vadd.f32 0.0, %v2286
        %v2288 = vpop.f32.mrb[0].mxu0
        %2289 = vmatprep.mubr.f32.mxu0 0.0
        %2290 = vmatmul.mubr.f32.gmra.mrb[0].mxu0 %v2107
        %v2291 = vpop.f32.mrb[0].mxu0
        %v2292 = vadd.f32 0.0, %v2291
        %v2293 = vpop.f32.mrb[0].mxu0
        %2294 = vmatprep.mubr.f32.mxu0 0.0
        %2295 = vmatmul.mubr.f32.gmra.mrb[0].mxu0 %v2110
        %v2296 = vpop.f32.mrb[0].mxu0
        %v2297 = vadd.f32 0.0, %v2296
        %v2298 = vpop.f32.mrb[0].mxu0
        %2299 = vmatprep.mubr.f32.mxu0 0.0
        %2300 = vmatmul.mubr.f32.gmra.mrb[0].mxu0 %v2113
        %v2301 = vpop.f32.mrb[0].mxu0
        %v2302 = vadd.f32 0.0, %v2301
        %v2303 = vpop.f32.mrb[0].mxu0
        %2304 = vmatprep.mubr.f32.mxu0 0.0
        %2305 = vmatmul.mubr.f32.gmra.mrb[0].mxu0 %v2116
        %v2306 = vpop.f32.mrb[0].mxu0
        %v2307 = vadd.f32 0.0, %v2306
        %v2308 = vpop.f32.mrb[0].mxu0
        %2309 = vmatprep.mubr.f32.mxu0 0.0
        %2310 = vmatmul.mubr.f32.gmra.mrb[0].mxu0 %v2119
        %v2311 = vpop.f32.mrb[0].mxu0
        %v2312 = vadd.f32 0.0, %v2311
        %v2313 = vpop.f32.mrb[0].mxu0
        %2314 = vmatprep.mubr.f32.mxu0 0.0
        %2315 = vmatmul.mubr.f32.gmra.mrb[0].mxu0 %v2122
        %v2316 = vpop.f32.mrb[0].mxu0
        %v2317 = vadd.f32 0.0, %v2316
        %v2318 = vpop.f32.mrb[0].mxu0
        %2319 = vmatprep.mubr.f32.mxu0 0.0
        %2320 = vmatmul.mubr.f32.gmra.mrb[0].mxu0 %v2125
        %v2321 = vpop.f32.mrb[0].mxu0
        %v2322 = vadd.f32 0.0, %v2321
        %v2323 = vpop.f32.mrb[0].mxu0
        %2324 = vmatprep.mubr.f32.mxu0 0.0
        %2325 = vmatmul.mubr.f32.gmra.mrb[0].mxu0 %v2128
        %v2326 = vpop.f32.mrb[0].mxu0
        %v2327 = vadd.f32 0.0, %v2326
        %v2328 = vpop.f32.mrb[0].mxu0
        %2329 = vmatprep.mubr.f32.mxu0 0.0
        %2330 = vmatmul.mubr.f32.gmra.mrb[0].mxu0 %v2131
        %v2331 = vpop.f32.mrb[0].mxu0
        %v2332 = vadd.f32 0.0, %v2331
        %v2333 = vpop.f32.mrb[0].mxu0
        %2334 = vmatprep.mubr.f32.mxu0 0.0
        %2335 = vmatmul.mubr.f32.gmra.mrb[0].mxu0 %v2134
        %v2336 = vpop.f32.mrb[0].mxu0
        %v2337 = vadd.f32 0.0, %v2336
        %v2338 = vpop.f32.mrb[0].mxu0
        %2339 = vmatprep.mubr.f32.mxu0 0.0
        %2340 = vmatmul.mubr.f32.gmra.mrb[0].mxu0 %v2137
        %v2341 = vpop.f32.mrb[0].mxu0
        %v2342 = vadd.f32 0.0, %v2341
        %v2343 = vpop.f32.mrb[0].mxu0
        %2344 = vmatprep.mubr.f32.mxu0 0.0
        %2345 = vmatmul.mubr.f32.gmra.mrb[0].mxu0 %v2140
        %v2346 = vpop.f32.mrb[0].mxu0
        %v2347 = vadd.f32 0.0, %v2346
        %v2348 = vpop.f32.mrb[0].mxu0
        %2349 = vmatprep.mubr.f32.mxu0 0.0
        %2350 = vmatmul.mubr.f32.gmra.mrb[0].mxu0 %v2143
        %v2351 = vpop.f32.mrb[0].mxu0
        %v2352 = vadd.f32 0.0, %v2351
        %v2353 = vpop.f32.mrb[0].mxu0
        %2354 = vmatprep.mubr.f32.mxu0 0.0
        %2355 = vmatmul.mubr.f32.gmra.mrb[0].mxu0 %v2146
        %v2356 = vpop.f32.mrb[0].mxu0
        %v2357 = vadd.f32 0.0, %v2356
        %v2358 = vpop.f32.mrb[0].mxu0
        %2359 = vmatprep.mubr.f32.mxu0 0.0
        %2360 = vmatmul.mubr.f32.gmra.mrb[0].mxu0 %v2149
        %v2361 = vpop.f32.mrb[0].mxu0
        %v2362 = vadd.f32 0.0, %v2361
        %v2363 = vpop.f32.mrb[0].mxu0
        %2364 = vmatprep.mubr.f32.mxu0 0.0
        %2365 = vmatmul.mubr.f32.gmra.mrb[0].mxu0 %v2152
        %v2366 = vpop.f32.mrb[0].mxu0
        %v2367 = vadd.f32 0.0, %v2366
        %v2368 = vpop.f32.mrb[0].mxu0
        %2369 = vmatprep.mubr.f32.mxu0 0.0
        %2370 = vmatmul.mubr.f32.gmra.mrb[0].mxu0 %v2155
        %v2371 = vpop.f32.mrb[0].mxu0
        %v2372 = vadd.f32 0.0, %v2371
        %v2373 = vpop.f32.mrb[0].mxu0
        %2374 = vmatprep.mubr.f32.mxu0 0.0
        %2375 = vmatmul.mubr.f32.gmra.mrb[0].mxu0 %v2158
        %v2376 = vpop.f32.mrb[0].mxu0
        %v2377 = vadd.f32 0.0, %v2376
        %v2378 = vpop.f32.mrb[0].mxu0
        %2379 = vmatprep.mubr.f32.mxu0 0.0
        %2380 = vmatmul.mubr.f32.gmra.mrb[0].mxu0 %v2161
        %v2381 = vpop.f32.mrb[0].mxu0
        %v2382 = vadd.f32 0.0, %v2381
        %v2383 = vpop.f32.mrb[0].mxu0
        %2384 = vmatprep.mubr.f32.mxu0 0.0
        %2385 = vmatmul.mubr.f32.gmra.mrb[0].mxu0 %v2164
        %v2386 = vpop.f32.mrb[0].mxu0
        %v2387 = vadd.f32 0.0, %v2386
        %v2388 = vpop.f32.mrb[0].mxu0
        %2389 = vmatprep.mubr.f32.mxu0 0.0
        %2390 = vmatmul.mubr.f32.gmra.mrb[0].mxu0 %v2167
        %v2391 = vpop.f32.mrb[0].mxu0
        %v2392 = vadd.f32 0.0, %v2391
        %v2393 = vpop.f32.mrb[0].mxu0
        %2394 = vmatprep.mubr.f32.mxu0 0.0
        %2395 = vmatmul.mubr.f32.gmra.mrb[0].mxu0 %v2170
        %v2396 = vpop.f32.mrb[0].mxu0
        %v2397 = vadd.f32 0.0, %v2396
        %v2398 = vpop.f32.mrb[0].mxu0
        %2399 = vdwg.mxu0
        %v2400 = vld [vmem:[%s4] sm:$0x1]
        %v2402 = vlaneseq
        %v2403 = vshrl.u32 %v2402, 7
        %v2404 = vsub.s32 0, %v2403
        %v2405 = vrot.slane %v2400, %v2404
        %v2407 = vadd.f32 %v2242, %v2405
        %v2408 = vadd.f32 %v2247, %v2405
        %v2409 = vadd.f32 %v2252, %v2405
        %v2410 = vadd.f32 %v2257, %v2405
        %v2411 = vadd.f32 %v2262, %v2405
        %v2412 = vadd.f32 %v2267, %v2405
        %v2413 = vadd.f32 %v2272, %v2405
        %v2414 = vadd.f32 %v2277, %v2405
        %v2415 = vadd.f32 %v2282, %v2405
        %v2416 = vadd.f32 %v2287, %v2405
        %v2417 = vadd.f32 %v2292, %v2405
        %v2418 = vadd.f32 %v2297, %v2405
        %v2419 = vadd.f32 %v2302, %v2405
        %v2420 = vadd.f32 %v2307, %v2405
        %v2421 = vadd.f32 %v2312, %v2405
        %v2422 = vadd.f32 %v2317, %v2405
        %v2423 = vadd.f32 %v2322, %v2405
        %v2424 = vadd.f32 %v2327, %v2405
        %v2425 = vadd.f32 %v2332, %v2405
        %v2426 = vadd.f32 %v2337, %v2405
        %v2427 = vadd.f32 %v2342, %v2405
        %v2428 = vadd.f32 %v2347, %v2405
        %v2429 = vadd.f32 %v2352, %v2405
        %v2430 = vadd.f32 %v2357, %v2405
        %v2431 = vadd.f32 %v2362, %v2405
        %v2432 = vadd.f32 %v2367, %v2405
        %v2433 = vadd.f32 %v2372, %v2405
        %v2434 = vadd.f32 %v2377, %v2405
        %v2435 = vadd.f32 %v2382, %v2405
        %v2436 = vadd.f32 %v2387, %v2405
        %v2437 = vadd.f32 %v2392, %v2405
        %v2438 = vadd.f32 %v2397, %v2405
        %v2439 = vmax.f32 %v2407, 0.0
        %v2440 = vmax.f32 %v2408, 0.0
        %v2441 = vmax.f32 %v2409, 0.0
        %v2442 = vmax.f32 %v2410, 0.0
        %v2443 = vmax.f32 %v2411, 0.0
        %v2444 = vmax.f32 %v2412, 0.0
        %v2445 = vmax.f32 %v2413, 0.0
        %v2446 = vmax.f32 %v2414, 0.0
        %v2447 = vmax.f32 %v2415, 0.0
        %v2448 = vmax.f32 %v2416, 0.0
        %v2449 = vmax.f32 %v2417, 0.0
        %v2450 = vmax.f32 %v2418, 0.0
        %v2451 = vmax.f32 %v2419, 0.0
        %v2452 = vmax.f32 %v2420, 0.0
        %v2453 = vmax.f32 %v2421, 0.0
        %v2454 = vmax.f32 %v2422, 0.0
        %v2455 = vmax.f32 %v2423, 0.0
        %v2456 = vmax.f32 %v2424, 0.0
        %v2457 = vmax.f32 %v2425, 0.0
        %v2458 = vmax.f32 %v2426, 0.0
        %v2459 = vmax.f32 %v2427, 0.0
        %v2460 = vmax.f32 %v2428, 0.0
        %v2461 = vmax.f32 %v2429, 0.0
        %v2462 = vmax.f32 %v2430, 0.0
        %v2463 = vmax.f32 %v2431, 0.0
        %v2464 = vmax.f32 %v2432, 0.0
        %v2465 = vmax.f32 %v2433, 0.0
        %v2466 = vmax.f32 %v2434, 0.0
        %v2467 = vmax.f32 %v2435, 0.0
        %v2468 = vmax.f32 %v2436, 0.0
        %v2469 = vmax.f32 %v2437, 0.0
        %v2470 = vmax.f32 %v2438, 0.0
        %v2471 = vld [vmem:[#allocation3] sm:$0xff]
        %v2472 = vld [vmem:[#allocation3 + $0x8] sm:$0xff]
        %v2473 = vld [vmem:[#allocation3 + $0x10] sm:$0xf]
        %v2474 = vld [vmem:[#allocation3 + $0x18] sm:$0xff]
        %v2475 = vld [vmem:[#allocation3 + $0x20] sm:$0xff]
        %v2476 = vld [vmem:[#allocation3 + $0x28] sm:$0xf]
        %v2477 = vld [vmem:[#allocation3 + $0x30] sm:$0xff]
        %v2478 = vld [vmem:[#allocation3 + $0x38] sm:$0xff]
        %v2479 = vld [vmem:[#allocation3 + $0x40] sm:$0xf]
        %v2480 = vld [vmem:[#allocation3 + $0x48] sm:$0xff]
        %v2481 = vld [vmem:[#allocation3 + $0x50] sm:$0xff]
        %v2482 = vld [vmem:[#allocation3 + $0x58] sm:$0xf]
        %v2483 = vld [vmem:[#allocation3 + $0x60] sm:$0xff]
        %v2484 = vld [vmem:[#allocation3 + $0x68] sm:$0xff]
        %v2485 = vld [vmem:[#allocation3 + $0x70] sm:$0xf]
        %v2486 = vld [vmem:[#allocation3 + $0x78] sm:$0xff]
        %v2487 = vld [vmem:[#allocation3 + $0x80] sm:$0xff]
        %v2488 = vld [vmem:[#allocation3 + $0x88] sm:$0xf]
        %v2489 = vld [vmem:[#allocation3 + $0x90] sm:$0xff]
        %v2490 = vld [vmem:[#allocation3 + $0x98] sm:$0xff]
        %v2491 = vld [vmem:[#allocation3 + $0xa0] sm:$0xf]
        %v2492 = vld [vmem:[#allocation3 + $0xa8] sm:$0xff]
        %v2493 = vld [vmem:[#allocation3 + $0xb0] sm:$0xff]
        %v2494 = vld [vmem:[#allocation3 + $0xb8] sm:$0xf]
        %v2495 = vld [vmem:[#allocation3 + $0xc0] sm:$0xff]
        %v2496 = vld [vmem:[#allocation3 + $0xc8] sm:$0xff]
        %v2497 = vld [vmem:[#allocation3 + $0xd0] sm:$0xf]
        %v2498 = vld [vmem:[#allocation3 + $0xd8] sm:$0xff]
        %v2499 = vld [vmem:[#allocation3 + $0xe0] sm:$0xff]
        %v2500 = vld [vmem:[#allocation3 + $0xe8] sm:$0xf]
        %v2501 = vld [vmem:[#allocation3 + $0xf0] sm:$0xff]
        %v2502 = vld [vmem:[#allocation3 + $0xf8] sm:$0xff]
        %v2503 = vld [vmem:[#allocation3 + $0x100] sm:$0xf]
        %v2504 = vld [vmem:[#allocation3 + $0x108] sm:$0xff]
        %v2505 = vld [vmem:[#allocation3 + $0x110] sm:$0xff]
        %v2506 = vld [vmem:[#allocation3 + $0x118] sm:$0xf]
        %v2507 = vld [vmem:[#allocation3 + $0x120] sm:$0xff]
        %v2508 = vld [vmem:[#allocation3 + $0x128] sm:$0xff]
        %v2509 = vld [vmem:[#allocation3 + $0x130] sm:$0xf]
        %v2510 = vld [vmem:[#allocation3 + $0x138] sm:$0xff]
        %v2511 = vld [vmem:[#allocation3 + $0x140] sm:$0xff]
        %v2512 = vld [vmem:[#allocation3 + $0x148] sm:$0xf]
        %v2513 = vld [vmem:[#allocation3 + $0x150] sm:$0xff]
        %v2514 = vld [vmem:[#allocation3 + $0x158] sm:$0xff]
        %v2515 = vld [vmem:[#allocation3 + $0x160] sm:$0xf]
        %v2516 = vld [vmem:[#allocation3 + $0x168] sm:$0xff]
        %v2517 = vld [vmem:[#allocation3 + $0x170] sm:$0xff]
        %v2518 = vld [vmem:[#allocation3 + $0x178] sm:$0xf]
        %v2519 = vld [vmem:[#allocation3 + $0x180] sm:$0xff]
        %v2520 = vld [vmem:[#allocation3 + $0x188] sm:$0xff]
        %v2521 = vld [vmem:[#allocation3 + $0x190] sm:$0xf]
        %v2522 = vld [vmem:[#allocation3 + $0x198] sm:$0xff]
        %v2523 = vld [vmem:[#allocation3 + $0x1a0] sm:$0xff]
        %v2524 = vld [vmem:[#allocation3 + $0x1a8] sm:$0xf]
        %v2525 = vld [vmem:[#allocation3 + $0x1b0] sm:$0xff]
        %v2526 = vld [vmem:[#allocation3 + $0x1b8] sm:$0xff]
        %v2527 = vld [vmem:[#allocation3 + $0x1c0] sm:$0xf]
        %v2528 = vld [vmem:[#allocation3 + $0x1c8] sm:$0xff]
        %v2529 = vld [vmem:[#allocation3 + $0x1d0] sm:$0xff]
        %v2530 = vld [vmem:[#allocation3 + $0x1d8] sm:$0xf]
        %v2591 = vrot.slane %v2471, 1
        %v2592 = vrot.slane %v2472, 1
        %v2593 = vsel %vm1307, %v2591, %v2592
        %v2594 = vrot.slane %v2473, 1
        %v2595 = vsel %vm1307, %v2592, %v2594
        %v2596 = vrot.slane %v2474, 1
        %v2597 = vrot.slane %v2475, 1
        %v2598 = vsel %vm1307, %v2596, %v2597
        %v2599 = vrot.slane %v2476, 1
        %v2600 = vsel %vm1307, %v2597, %v2599
        %v2601 = vrot.slane %v2477, 1
        %v2602 = vrot.slane %v2478, 1
        %v2603 = vsel %vm1307, %v2601, %v2602
        %v2604 = vrot.slane %v2479, 1
        %v2605 = vsel %vm1307, %v2602, %v2604
        %v2606 = vrot.slane %v2480, 1
        %v2607 = vrot.slane %v2481, 1
        %v2608 = vsel %vm1307, %v2606, %v2607
        %v2609 = vrot.slane %v2482, 1
        %v2610 = vsel %vm1307, %v2607, %v2609
        %v2611 = vrot.slane %v2483, 1
        %v2612 = vrot.slane %v2484, 1
        %v2613 = vsel %vm1307, %v2611, %v2612
        %v2614 = vrot.slane %v2485, 1
        %v2615 = vsel %vm1307, %v2612, %v2614
        %v2616 = vrot.slane %v2486, 1
        %v2617 = vrot.slane %v2487, 1
        %v2618 = vsel %vm1307, %v2616, %v2617
        %v2619 = vrot.slane %v2488, 1
        %v2620 = vsel %vm1307, %v2617, %v2619
        %v2621 = vrot.slane %v2489, 1
        %v2622 = vrot.slane %v2490, 1
        %v2623 = vsel %vm1307, %v2621, %v2622
        %v2624 = vrot.slane %v2491, 1
        %v2625 = vsel %vm1307, %v2622, %v2624
        %v2626 = vrot.slane %v2492, 1
        %v2627 = vrot.slane %v2493, 1
        %v2628 = vsel %vm1307, %v2626, %v2627
        %v2629 = vrot.slane %v2494, 1
        %v2630 = vsel %vm1307, %v2627, %v2629
        %v2631 = vrot.slane %v2495, 1
        %v2632 = vrot.slane %v2496, 1
        %v2633 = vsel %vm1307, %v2631, %v2632
        %v2634 = vrot.slane %v2497, 1
        %v2635 = vsel %vm1307, %v2632, %v2634
        %v2636 = vrot.slane %v2498, 1
        %v2637 = vrot.slane %v2499, 1
        %v2638 = vsel %vm1307, %v2636, %v2637
        %v2639 = vrot.slane %v2500, 1
        %v2640 = vsel %vm1307, %v2637, %v2639
        %v2641 = vrot.slane %v2501, 1
        %v2642 = vrot.slane %v2502, 1
        %v2643 = vsel %vm1307, %v2641, %v2642
        %v2644 = vrot.slane %v2503, 1
        %v2645 = vsel %vm1307, %v2642, %v2644
        %v2646 = vrot.slane %v2504, 1
        %v2647 = vrot.slane %v2505, 1
        %v2648 = vsel %vm1307, %v2646, %v2647
        %v2649 = vrot.slane %v2506, 1
        %v2650 = vsel %vm1307, %v2647, %v2649
        %v2651 = vrot.slane %v2507, 1
        %v2652 = vrot.slane %v2508, 1
        %v2653 = vsel %vm1307, %v2651, %v2652
        %v2654 = vrot.slane %v2509, 1
        %v2655 = vsel %vm1307, %v2652, %v2654
        %v2656 = vrot.slane %v2510, 1
        %v2657 = vrot.slane %v2511, 1
        %v2658 = vsel %vm1307, %v2656, %v2657
        %v2659 = vrot.slane %v2512, 1
        %v2660 = vsel %vm1307, %v2657, %v2659
        %v2661 = vrot.slane %v2513, 1
        %v2662 = vrot.slane %v2514, 1
        %v2663 = vsel %vm1307, %v2661, %v2662
        %v2664 = vrot.slane %v2515, 1
        %v2665 = vsel %vm1307, %v2662, %v2664
        %v2666 = vrot.slane %v2516, 1
        %v2667 = vrot.slane %v2517, 1
        %v2668 = vsel %vm1307, %v2666, %v2667
        %v2669 = vrot.slane %v2518, 1
        %v2670 = vsel %vm1307, %v2667, %v2669
        %v2671 = vrot.slane %v2519, 1
        %v2672 = vrot.slane %v2520, 1
        %v2673 = vsel %vm1307, %v2671, %v2672
        %v2674 = vrot.slane %v2521, 1
        %v2675 = vsel %vm1307, %v2672, %v2674
        %v2676 = vrot.slane %v2522, 1
        %v2677 = vrot.slane %v2523, 1
        %v2678 = vsel %vm1307, %v2676, %v2677
        %v2679 = vrot.slane %v2524, 1
        %v2680 = vsel %vm1307, %v2677, %v2679
        %v2681 = vrot.slane %v2525, 1
        %v2682 = vrot.slane %v2526, 1
        %v2683 = vsel %vm1307, %v2681, %v2682
        %v2684 = vrot.slane %v2527, 1
        %v2685 = vsel %vm1307, %v2682, %v2684
        %v2686 = vrot.slane %v2528, 1
        %v2687 = vrot.slane %v2529, 1
        %v2688 = vsel %vm1307, %v2686, %v2687
        %v2689 = vrot.slane %v2530, 1
        %v2690 = vsel %vm1307, %v2687, %v2689
        %2691 = vrot.lane.b32.xlu0 %v2593, 4
        %v2692 = vpop.permute.xlu0 %2691
        %2693 = vrot.lane.b32.xlu0 %v2595, 4
        %v2694 = vpop.permute.xlu0 %2693
        %2695 = vrot.lane.b32.xlu0 %v2598, 4
        %v2696 = vpop.permute.xlu0 %2695
        %2697 = vrot.lane.b32.xlu0 %v2600, 4
        %v2698 = vpop.permute.xlu0 %2697
        %2699 = vrot.lane.b32.xlu0 %v2603, 4
        %v2700 = vpop.permute.xlu0 %2699
        %2701 = vrot.lane.b32.xlu0 %v2605, 4
        %v2702 = vpop.permute.xlu0 %2701
        %2703 = vrot.lane.b32.xlu0 %v2608, 4
        %v2704 = vpop.permute.xlu0 %2703
        %2705 = vrot.lane.b32.xlu0 %v2610, 4
        %v2706 = vpop.permute.xlu0 %2705
        %2707 = vrot.lane.b32.xlu0 %v2613, 4
        %v2708 = vpop.permute.xlu0 %2707
        %2709 = vrot.lane.b32.xlu0 %v2615, 4
        %v2710 = vpop.permute.xlu0 %2709
        %2711 = vrot.lane.b32.xlu0 %v2618, 4
        %v2712 = vpop.permute.xlu0 %2711
        %2713 = vrot.lane.b32.xlu0 %v2620, 4
        %v2714 = vpop.permute.xlu0 %2713
        %2715 = vrot.lane.b32.xlu0 %v2623, 4
        %v2716 = vpop.permute.xlu0 %2715
        %2717 = vrot.lane.b32.xlu0 %v2625, 4
        %v2718 = vpop.permute.xlu0 %2717
        %2719 = vrot.lane.b32.xlu0 %v2628, 4
        %v2720 = vpop.permute.xlu0 %2719
        %2721 = vrot.lane.b32.xlu0 %v2630, 4
        %v2722 = vpop.permute.xlu0 %2721
        %2723 = vrot.lane.b32.xlu0 %v2633, 4
        %v2724 = vpop.permute.xlu0 %2723
        %2725 = vrot.lane.b32.xlu0 %v2635, 4
        %v2726 = vpop.permute.xlu0 %2725
        %2727 = vrot.lane.b32.xlu0 %v2638, 4
        %v2728 = vpop.permute.xlu0 %2727
        %2729 = vrot.lane.b32.xlu0 %v2640, 4
        %v2730 = vpop.permute.xlu0 %2729
        %2731 = vrot.lane.b32.xlu0 %v2643, 4
        %v2732 = vpop.permute.xlu0 %2731
        %2733 = vrot.lane.b32.xlu0 %v2645, 4
        %v2734 = vpop.permute.xlu0 %2733
        %2735 = vrot.lane.b32.xlu0 %v2648, 4
        %v2736 = vpop.permute.xlu0 %2735
        %2737 = vrot.lane.b32.xlu0 %v2650, 4
        %v2738 = vpop.permute.xlu0 %2737
        %2739 = vrot.lane.b32.xlu0 %v2653, 4
        %v2740 = vpop.permute.xlu0 %2739
        %2741 = vrot.lane.b32.xlu0 %v2655, 4
        %v2742 = vpop.permute.xlu0 %2741
        %2743 = vrot.lane.b32.xlu0 %v2658, 4
        %v2744 = vpop.permute.xlu0 %2743
        %2745 = vrot.lane.b32.xlu0 %v2660, 4
        %v2746 = vpop.permute.xlu0 %2745
        %2747 = vrot.lane.b32.xlu0 %v2663, 4
        %v2748 = vpop.permute.xlu0 %2747
        %2749 = vrot.lane.b32.xlu0 %v2665, 4
        %v2750 = vpop.permute.xlu0 %2749
        %2751 = vrot.lane.b32.xlu0 %v2668, 4
        %v2752 = vpop.permute.xlu0 %2751
        %2753 = vrot.lane.b32.xlu0 %v2670, 4
        %v2754 = vpop.permute.xlu0 %2753
        %2755 = vrot.lane.b32.xlu0 %v2673, 4
        %v2756 = vpop.permute.xlu0 %2755
        %2757 = vrot.lane.b32.xlu0 %v2675, 4
        %v2758 = vpop.permute.xlu0 %2757
        %2759 = vrot.lane.b32.xlu0 %v2678, 4
        %v2760 = vpop.permute.xlu0 %2759
        %2761 = vrot.lane.b32.xlu0 %v2680, 4
        %v2762 = vpop.permute.xlu0 %2761
        %2763 = vrot.lane.b32.xlu0 %v2683, 4
        %v2764 = vpop.permute.xlu0 %2763
        %2765 = vrot.lane.b32.xlu0 %v2685, 4
        %v2766 = vpop.permute.xlu0 %2765
        %2767 = vrot.lane.b32.xlu0 %v2688, 4
        %v2768 = vpop.permute.xlu0 %2767
        %2769 = vrot.lane.b32.xlu0 %v2690, 4
        %v2770 = vpop.permute.xlu0 %2769
        %v2811 = vrot.slane %v2471, 2
        %v2812 = vrot.slane %v2472, 2
        %v2813 = vsel %vm1506, %v2811, %v2812
        %v2814 = vrot.slane %v2473, 2
        %v2815 = vsel %vm1506, %v2812, %v2814
        %v2816 = vrot.slane %v2474, 2
        %v2817 = vrot.slane %v2475, 2
        %v2818 = vsel %vm1506, %v2816, %v2817
        %v2819 = vrot.slane %v2476, 2
        %v2820 = vsel %vm1506, %v2817, %v2819
        %v2821 = vrot.slane %v2477, 2
        %v2822 = vrot.slane %v2478, 2
        %v2823 = vsel %vm1506, %v2821, %v2822
        %v2824 = vrot.slane %v2479, 2
        %v2825 = vsel %vm1506, %v2822, %v2824
        %v2826 = vrot.slane %v2480, 2
        %v2827 = vrot.slane %v2481, 2
        %v2828 = vsel %vm1506, %v2826, %v2827
        %v2829 = vrot.slane %v2482, 2
        %v2830 = vsel %vm1506, %v2827, %v2829
        %v2831 = vrot.slane %v2483, 2
        %v2832 = vrot.slane %v2484, 2
        %v2833 = vsel %vm1506, %v2831, %v2832
        %v2834 = vrot.slane %v2485, 2
        %v2835 = vsel %vm1506, %v2832, %v2834
        %v2836 = vrot.slane %v2486, 2
        %v2837 = vrot.slane %v2487, 2
        %v2838 = vsel %vm1506, %v2836, %v2837
        %v2839 = vrot.slane %v2488, 2
        %v2840 = vsel %vm1506, %v2837, %v2839
        %v2841 = vrot.slane %v2489, 2
        %v2842 = vrot.slane %v2490, 2
        %v2843 = vsel %vm1506, %v2841, %v2842
        %v2844 = vrot.slane %v2491, 2
        %v2845 = vsel %vm1506, %v2842, %v2844
        %v2846 = vrot.slane %v2492, 2
        %v2847 = vrot.slane %v2493, 2
        %v2848 = vsel %vm1506, %v2846, %v2847
        %v2849 = vrot.slane %v2494, 2
        %v2850 = vsel %vm1506, %v2847, %v2849
        %v2851 = vrot.slane %v2495, 2
        %v2852 = vrot.slane %v2496, 2
        %v2853 = vsel %vm1506, %v2851, %v2852
        %v2854 = vrot.slane %v2497, 2
        %v2855 = vsel %vm1506, %v2852, %v2854
        %v2856 = vrot.slane %v2498, 2
        %v2857 = vrot.slane %v2499, 2
        %v2858 = vsel %vm1506, %v2856, %v2857
        %v2859 = vrot.slane %v2500, 2
        %v2860 = vsel %vm1506, %v2857, %v2859
        %v2861 = vrot.slane %v2501, 2
        %v2862 = vrot.slane %v2502, 2
        %v2863 = vsel %vm1506, %v2861, %v2862
        %v2864 = vrot.slane %v2503, 2
        %v2865 = vsel %vm1506, %v2862, %v2864
        %v2866 = vrot.slane %v2504, 2
        %v2867 = vrot.slane %v2505, 2
        %v2868 = vsel %vm1506, %v2866, %v2867
        %v2869 = vrot.slane %v2506, 2
        %v2870 = vsel %vm1506, %v2867, %v2869
        %v2871 = vrot.slane %v2507, 2
        %v2872 = vrot.slane %v2508, 2
        %v2873 = vsel %vm1506, %v2871, %v2872
        %v2874 = vrot.slane %v2509, 2
        %v2875 = vsel %vm1506, %v2872, %v2874
        %v2876 = vrot.slane %v2510, 2
        %v2877 = vrot.slane %v2511, 2
        %v2878 = vsel %vm1506, %v2876, %v2877
        %v2879 = vrot.slane %v2512, 2
        %v2880 = vsel %vm1506, %v2877, %v2879
        %v2881 = vrot.slane %v2513, 2
        %v2882 = vrot.slane %v2514, 2
        %v2883 = vsel %vm1506, %v2881, %v2882
        %v2884 = vrot.slane %v2515, 2
        %v2885 = vsel %vm1506, %v2882, %v2884
        %v2886 = vrot.slane %v2516, 2
        %v2887 = vrot.slane %v2517, 2
        %v2888 = vsel %vm1506, %v2886, %v2887
        %v2889 = vrot.slane %v2518, 2
        %v2890 = vsel %vm1506, %v2887, %v2889
        %v2891 = vrot.slane %v2519, 2
        %v2892 = vrot.slane %v2520, 2
        %v2893 = vsel %vm1506, %v2891, %v2892
        %v2894 = vrot.slane %v2521, 2
        %v2895 = vsel %vm1506, %v2892, %v2894
        %v2896 = vrot.slane %v2522, 2
        %v2897 = vrot.slane %v2523, 2
        %v2898 = vsel %vm1506, %v2896, %v2897
        %v2899 = vrot.slane %v2524, 2
        %v2900 = vsel %vm1506, %v2897, %v2899
        %v2901 = vrot.slane %v2525, 2
        %v2902 = vrot.slane %v2526, 2
        %v2903 = vsel %vm1506, %v2901, %v2902
        %v2904 = vrot.slane %v2527, 2
        %v2905 = vsel %vm1506, %v2902, %v2904
        %v2906 = vrot.slane %v2528, 2
        %v2907 = vrot.slane %v2529, 2
        %v2908 = vsel %vm1506, %v2906, %v2907
        %v2909 = vrot.slane %v2530, 2
        %v2910 = vsel %vm1506, %v2907, %v2909
        %2911 = vrot.lane.b32.xlu0 %v2813, 8
        %v2912 = vpop.permute.xlu0 %2911
        %2913 = vrot.lane.b32.xlu0 %v2815, 8
        %v2914 = vpop.permute.xlu0 %2913
        %2915 = vrot.lane.b32.xlu0 %v2818, 8
        %v2916 = vpop.permute.xlu0 %2915
        %2917 = vrot.lane.b32.xlu0 %v2820, 8
        %v2918 = vpop.permute.xlu0 %2917
        %2919 = vrot.lane.b32.xlu0 %v2823, 8
        %v2920 = vpop.permute.xlu0 %2919
        %2921 = vrot.lane.b32.xlu0 %v2825, 8
        %v2922 = vpop.permute.xlu0 %2921
        %2923 = vrot.lane.b32.xlu0 %v2828, 8
        %v2924 = vpop.permute.xlu0 %2923
        %2925 = vrot.lane.b32.xlu0 %v2830, 8
        %v2926 = vpop.permute.xlu0 %2925
        %2927 = vrot.lane.b32.xlu0 %v2833, 8
        %v2928 = vpop.permute.xlu0 %2927
        %2929 = vrot.lane.b32.xlu0 %v2835, 8
        %v2930 = vpop.permute.xlu0 %2929
        %2931 = vrot.lane.b32.xlu0 %v2838, 8
        %v2932 = vpop.permute.xlu0 %2931
        %2933 = vrot.lane.b32.xlu0 %v2840, 8
        %v2934 = vpop.permute.xlu0 %2933
        %2935 = vrot.lane.b32.xlu0 %v2843, 8
        %v2936 = vpop.permute.xlu0 %2935
        %2937 = vrot.lane.b32.xlu0 %v2845, 8
        %v2938 = vpop.permute.xlu0 %2937
        %2939 = vrot.lane.b32.xlu0 %v2848, 8
        %v2940 = vpop.permute.xlu0 %2939
        %2941 = vrot.lane.b32.xlu0 %v2850, 8
        %v2942 = vpop.permute.xlu0 %2941
        %2943 = vrot.lane.b32.xlu0 %v2853, 8
        %v2944 = vpop.permute.xlu0 %2943
        %2945 = vrot.lane.b32.xlu0 %v2855, 8
        %v2946 = vpop.permute.xlu0 %2945
        %2947 = vrot.lane.b32.xlu0 %v2858, 8
        %v2948 = vpop.permute.xlu0 %2947
        %2949 = vrot.lane.b32.xlu0 %v2860, 8
        %v2950 = vpop.permute.xlu0 %2949
        %2951 = vrot.lane.b32.xlu0 %v2863, 8
        %v2952 = vpop.permute.xlu0 %2951
        %2953 = vrot.lane.b32.xlu0 %v2865, 8
        %v2954 = vpop.permute.xlu0 %2953
        %2955 = vrot.lane.b32.xlu0 %v2868, 8
        %v2956 = vpop.permute.xlu0 %2955
        %2957 = vrot.lane.b32.xlu0 %v2870, 8
        %v2958 = vpop.permute.xlu0 %2957
        %2959 = vrot.lane.b32.xlu0 %v2873, 8
        %v2960 = vpop.permute.xlu0 %2959
        %2961 = vrot.lane.b32.xlu0 %v2875, 8
        %v2962 = vpop.permute.xlu0 %2961
        %2963 = vrot.lane.b32.xlu0 %v2878, 8
        %v2964 = vpop.permute.xlu0 %2963
        %2965 = vrot.lane.b32.xlu0 %v2880, 8
        %v2966 = vpop.permute.xlu0 %2965
        %2967 = vrot.lane.b32.xlu0 %v2883, 8
        %v2968 = vpop.permute.xlu0 %2967
        %2969 = vrot.lane.b32.xlu0 %v2885, 8
        %v2970 = vpop.permute.xlu0 %2969
        %2971 = vrot.lane.b32.xlu0 %v2888, 8
        %v2972 = vpop.permute.xlu0 %2971
        %2973 = vrot.lane.b32.xlu0 %v2890, 8
        %v2974 = vpop.permute.xlu0 %2973
        %2975 = vrot.lane.b32.xlu0 %v2893, 8
        %v2976 = vpop.permute.xlu0 %2975
        %2977 = vrot.lane.b32.xlu0 %v2895, 8
        %v2978 = vpop.permute.xlu0 %2977
        %2979 = vrot.lane.b32.xlu0 %v2898, 8
        %v2980 = vpop.permute.xlu0 %2979
        %2981 = vrot.lane.b32.xlu0 %v2900, 8
        %v2982 = vpop.permute.xlu0 %2981
        %2983 = vrot.lane.b32.xlu0 %v2903, 8
        %v2984 = vpop.permute.xlu0 %2983
        %2985 = vrot.lane.b32.xlu0 %v2905, 8
        %v2986 = vpop.permute.xlu0 %2985
        %2987 = vrot.lane.b32.xlu0 %v2908, 8
        %v2988 = vpop.permute.xlu0 %2987
        %2989 = vrot.lane.b32.xlu0 %v2910, 8
        %v2990 = vpop.permute.xlu0 %2989
        %vm3031 = vcmask 1044480
        %v3032 = vrot.slane %v2471, 3
        %v3033 = vrot.slane %v2472, 3
        %v3034 = vsel %vm3031, %v3032, %v3033
        %v3035 = vrot.slane %v2473, 3
        %v3036 = vsel %vm3031, %v3033, %v3035
        %v3037 = vrot.slane %v2474, 3
        %v3038 = vrot.slane %v2475, 3
        %v3039 = vsel %vm3031, %v3037, %v3038
        %v3040 = vrot.slane %v2476, 3
        %v3041 = vsel %vm3031, %v3038, %v3040
        %v3042 = vrot.slane %v2477, 3
        %v3043 = vrot.slane %v2478, 3
        %v3044 = vsel %vm3031, %v3042, %v3043
        %v3045 = vrot.slane %v2479, 3
        %v3046 = vsel %vm3031, %v3043, %v3045
        %v3047 = vrot.slane %v2480, 3
        %v3048 = vrot.slane %v2481, 3
        %v3049 = vsel %vm3031, %v3047, %v3048
        %v3050 = vrot.slane %v2482, 3
        %v3051 = vsel %vm3031, %v3048, %v3050
        %v3052 = vrot.slane %v2483, 3
        %v3053 = vrot.slane %v2484, 3
        %v3054 = vsel %vm3031, %v3052, %v3053
        %v3055 = vrot.slane %v2485, 3
        %v3056 = vsel %vm3031, %v3053, %v3055
        %v3057 = vrot.slane %v2486, 3
        %v3058 = vrot.slane %v2487, 3
        %v3059 = vsel %vm3031, %v3057, %v3058
        %v3060 = vrot.slane %v2488, 3
        %v3061 = vsel %vm3031, %v3058, %v3060
        %v3062 = vrot.slane %v2489, 3
        %v3063 = vrot.slane %v2490, 3
        %v3064 = vsel %vm3031, %v3062, %v3063
        %v3065 = vrot.slane %v2491, 3
        %v3066 = vsel %vm3031, %v3063, %v3065
        %v3067 = vrot.slane %v2492, 3
        %v3068 = vrot.slane %v2493, 3
        %v3069 = vsel %vm3031, %v3067, %v3068
        %v3070 = vrot.slane %v2494, 3
        %v3071 = vsel %vm3031, %v3068, %v3070
        %v3072 = vrot.slane %v2495, 3
        %v3073 = vrot.slane %v2496, 3
        %v3074 = vsel %vm3031, %v3072, %v3073
        %v3075 = vrot.slane %v2497, 3
        %v3076 = vsel %vm3031, %v3073, %v3075
        %v3077 = vrot.slane %v2498, 3
        %v3078 = vrot.slane %v2499, 3
        %v3079 = vsel %vm3031, %v3077, %v3078
        %v3080 = vrot.slane %v2500, 3
        %v3081 = vsel %vm3031, %v3078, %v3080
        %v3082 = vrot.slane %v2501, 3
        %v3083 = vrot.slane %v2502, 3
        %v3084 = vsel %vm3031, %v3082, %v3083
        %v3085 = vrot.slane %v2503, 3
        %v3086 = vsel %vm3031, %v3083, %v3085
        %v3087 = vrot.slane %v2504, 3
        %v3088 = vrot.slane %v2505, 3
        %v3089 = vsel %vm3031, %v3087, %v3088
        %v3090 = vrot.slane %v2506, 3
        %v3091 = vsel %vm3031, %v3088, %v3090
        %v3092 = vrot.slane %v2507, 3
        %v3093 = vrot.slane %v2508, 3
        %v3094 = vsel %vm3031, %v3092, %v3093
        %v3095 = vrot.slane %v2509, 3
        %v3096 = vsel %vm3031, %v3093, %v3095
        %v3097 = vrot.slane %v2510, 3
        %v3098 = vrot.slane %v2511, 3
        %v3099 = vsel %vm3031, %v3097, %v3098
        %v3100 = vrot.slane %v2512, 3
        %v3101 = vsel %vm3031, %v3098, %v3100
        %v3102 = vrot.slane %v2513, 3
        %v3103 = vrot.slane %v2514, 3
        %v3104 = vsel %vm3031, %v3102, %v3103
        %v3105 = vrot.slane %v2515, 3
        %v3106 = vsel %vm3031, %v3103, %v3105
        %v3107 = vrot.slane %v2516, 3
        %v3108 = vrot.slane %v2517, 3
        %v3109 = vsel %vm3031, %v3107, %v3108
        %v3110 = vrot.slane %v2518, 3
        %v3111 = vsel %vm3031, %v3108, %v3110
        %v3112 = vrot.slane %v2519, 3
        %v3113 = vrot.slane %v2520, 3
        %v3114 = vsel %vm3031, %v3112, %v3113
        %v3115 = vrot.slane %v2521, 3
        %v3116 = vsel %vm3031, %v3113, %v3115
        %v3117 = vrot.slane %v2522, 3
        %v3118 = vrot.slane %v2523, 3
        %v3119 = vsel %vm3031, %v3117, %v3118
        %v3120 = vrot.slane %v2524, 3
        %v3121 = vsel %vm3031, %v3118, %v3120
        %v3122 = vrot.slane %v2525, 3
        %v3123 = vrot.slane %v2526, 3
        %v3124 = vsel %vm3031, %v3122, %v3123
        %v3125 = vrot.slane %v2527, 3
        %v3126 = vsel %vm3031, %v3123, %v3125
        %v3127 = vrot.slane %v2528, 3
        %v3128 = vrot.slane %v2529, 3
        %v3129 = vsel %vm3031, %v3127, %v3128
        %v3130 = vrot.slane %v2530, 3
        %v3131 = vsel %vm3031, %v3128, %v3130
        %3132 = vrot.lane.b32.xlu0 %v3034, 12
        %v3133 = vpop.permute.xlu0 %3132
        %3134 = vrot.lane.b32.xlu0 %v3036, 12
        %v3135 = vpop.permute.xlu0 %3134
        %3136 = vrot.lane.b32.xlu0 %v3039, 12
        %v3137 = vpop.permute.xlu0 %3136
        %3138 = vrot.lane.b32.xlu0 %v3041, 12
        %v3139 = vpop.permute.xlu0 %3138
        %3140 = vrot.lane.b32.xlu0 %v3044, 12
        %v3141 = vpop.permute.xlu0 %3140
        %3142 = vrot.lane.b32.xlu0 %v3046, 12
        %v3143 = vpop.permute.xlu0 %3142
        %3144 = vrot.lane.b32.xlu0 %v3049, 12
        %v3145 = vpop.permute.xlu0 %3144
        %3146 = vrot.lane.b32.xlu0 %v3051, 12
        %v3147 = vpop.permute.xlu0 %3146
        %3148 = vrot.lane.b32.xlu0 %v3054, 12
        %v3149 = vpop.permute.xlu0 %3148
        %3150 = vrot.lane.b32.xlu0 %v3056, 12
        %v3151 = vpop.permute.xlu0 %3150
        %3152 = vrot.lane.b32.xlu0 %v3059, 12
        %v3153 = vpop.permute.xlu0 %3152
        %3154 = vrot.lane.b32.xlu0 %v3061, 12
        %v3155 = vpop.permute.xlu0 %3154
        %3156 = vrot.lane.b32.xlu0 %v3064, 12
        %v3157 = vpop.permute.xlu0 %3156
        %3158 = vrot.lane.b32.xlu0 %v3066, 12
        %v3159 = vpop.permute.xlu0 %3158
        %3160 = vrot.lane.b32.xlu0 %v3069, 12
        %v3161 = vpop.permute.xlu0 %3160
        %3162 = vrot.lane.b32.xlu0 %v3071, 12
        %v3163 = vpop.permute.xlu0 %3162
        %3164 = vrot.lane.b32.xlu0 %v3074, 12
        %v3165 = vpop.permute.xlu0 %3164
        %3166 = vrot.lane.b32.xlu0 %v3076, 12
        %v3167 = vpop.permute.xlu0 %3166
        %3168 = vrot.lane.b32.xlu0 %v3079, 12
        %v3169 = vpop.permute.xlu0 %3168
        %3170 = vrot.lane.b32.xlu0 %v3081, 12
        %v3171 = vpop.permute.xlu0 %3170
        %3172 = vrot.lane.b32.xlu0 %v3084, 12
        %v3173 = vpop.permute.xlu0 %3172
        %3174 = vrot.lane.b32.xlu0 %v3086, 12
        %v3175 = vpop.permute.xlu0 %3174
        %3176 = vrot.lane.b32.xlu0 %v3089, 12
        %v3177 = vpop.permute.xlu0 %3176
        %3178 = vrot.lane.b32.xlu0 %v3091, 12
        %v3179 = vpop.permute.xlu0 %3178
        %3180 = vrot.lane.b32.xlu0 %v3094, 12
        %v3181 = vpop.permute.xlu0 %3180
        %3182 = vrot.lane.b32.xlu0 %v3096, 12
        %v3183 = vpop.permute.xlu0 %3182
        %3184 = vrot.lane.b32.xlu0 %v3099, 12
        %v3185 = vpop.permute.xlu0 %3184
        %3186 = vrot.lane.b32.xlu0 %v3101, 12
        %v3187 = vpop.permute.xlu0 %3186
        %3188 = vrot.lane.b32.xlu0 %v3104, 12
        %v3189 = vpop.permute.xlu0 %3188
        %3190 = vrot.lane.b32.xlu0 %v3106, 12
        %v3191 = vpop.permute.xlu0 %3190
        %3192 = vrot.lane.b32.xlu0 %v3109, 12
        %v3193 = vpop.permute.xlu0 %3192
        %3194 = vrot.lane.b32.xlu0 %v3111, 12
        %v3195 = vpop.permute.xlu0 %3194
        %3196 = vrot.lane.b32.xlu0 %v3114, 12
        %v3197 = vpop.permute.xlu0 %3196
        %3198 = vrot.lane.b32.xlu0 %v3116, 12
        %v3199 = vpop.permute.xlu0 %3198
        %3200 = vrot.lane.b32.xlu0 %v3119, 12
        %v3201 = vpop.permute.xlu0 %3200
        %3202 = vrot.lane.b32.xlu0 %v3121, 12
        %v3203 = vpop.permute.xlu0 %3202
        %3204 = vrot.lane.b32.xlu0 %v3124, 12
        %v3205 = vpop.permute.xlu0 %3204
        %3206 = vrot.lane.b32.xlu0 %v3126, 12
        %v3207 = vpop.permute.xlu0 %3206
        %3208 = vrot.lane.b32.xlu0 %v3129, 12
        %v3209 = vpop.permute.xlu0 %3208
        %3210 = vrot.lane.b32.xlu0 %v3131, 12
        %v3211 = vpop.permute.xlu0 %3210
        %v3252 = vrot.slane %v2471, 4
        %v3253 = vrot.slane %v2472, 4
        %v3254 = vsel %vm610, %v3252, %v3253
        %v3255 = vrot.slane %v2473, 4
        %v3256 = vsel %vm610, %v3253, %v3255
        %v3257 = vrot.slane %v2474, 4
        %v3258 = vrot.slane %v2475, 4
        %v3259 = vsel %vm610, %v3257, %v3258
        %v3260 = vrot.slane %v2476, 4
        %v3261 = vsel %vm610, %v3258, %v3260
        %v3262 = vrot.slane %v2477, 4
        %v3263 = vrot.slane %v2478, 4
        %v3264 = vsel %vm610, %v3262, %v3263
        %v3265 = vrot.slane %v2479, 4
        %v3266 = vsel %vm610, %v3263, %v3265
        %v3267 = vrot.slane %v2480, 4
        %v3268 = vrot.slane %v2481, 4
        %v3269 = vsel %vm610, %v3267, %v3268
        %v3270 = vrot.slane %v2482, 4
        %v3271 = vsel %vm610, %v3268, %v3270
        %v3272 = vrot.slane %v2483, 4
        %v3273 = vrot.slane %v2484, 4
        %v3274 = vsel %vm610, %v3272, %v3273
        %v3275 = vrot.slane %v2485, 4
        %v3276 = vsel %vm610, %v3273, %v3275
        %v3277 = vrot.slane %v2486, 4
        %v3278 = vrot.slane %v2487, 4
        %v3279 = vsel %vm610, %v3277, %v3278
        %v3280 = vrot.slane %v2488, 4
        %v3281 = vsel %vm610, %v3278, %v3280
        %v3282 = vrot.slane %v2489, 4
        %v3283 = vrot.slane %v2490, 4
        %v3284 = vsel %vm610, %v3282, %v3283
        %v3285 = vrot.slane %v2491, 4
        %v3286 = vsel %vm610, %v3283, %v3285
        %v3287 = vrot.slane %v2492, 4
        %v3288 = vrot.slane %v2493, 4
        %v3289 = vsel %vm610, %v3287, %v3288
        %v3290 = vrot.slane %v2494, 4
        %v3291 = vsel %vm610, %v3288, %v3290
        %v3292 = vrot.slane %v2495, 4
        %v3293 = vrot.slane %v2496, 4
        %v3294 = vsel %vm610, %v3292, %v3293
        %v3295 = vrot.slane %v2497, 4
        %v3296 = vsel %vm610, %v3293, %v3295
        %v3297 = vrot.slane %v2498, 4
        %v3298 = vrot.slane %v2499, 4
        %v3299 = vsel %vm610, %v3297, %v3298
        %v3300 = vrot.slane %v2500, 4
        %v3301 = vsel %vm610, %v3298, %v3300
        %v3302 = vrot.slane %v2501, 4
        %v3303 = vrot.slane %v2502, 4
        %v3304 = vsel %vm610, %v3302, %v3303
        %v3305 = vrot.slane %v2503, 4
        %v3306 = vsel %vm610, %v3303, %v3305
        %v3307 = vrot.slane %v2504, 4
        %v3308 = vrot.slane %v2505, 4
        %v3309 = vsel %vm610, %v3307, %v3308
        %v3310 = vrot.slane %v2506, 4
        %v3311 = vsel %vm610, %v3308, %v3310
        %v3312 = vrot.slane %v2507, 4
        %v3313 = vrot.slane %v2508, 4
        %v3314 = vsel %vm610, %v3312, %v3313
        %v3315 = vrot.slane %v2509, 4
        %v3316 = vsel %vm610, %v3313, %v3315
        %v3317 = vrot.slane %v2510, 4
        %v3318 = vrot.slane %v2511, 4
        %v3319 = vsel %vm610, %v3317, %v3318
        %v3320 = vrot.slane %v2512, 4
        %v3321 = vsel %vm610, %v3318, %v3320
        %v3322 = vrot.slane %v2513, 4
        %v3323 = vrot.slane %v2514, 4
        %v3324 = vsel %vm610, %v3322, %v3323
        %v3325 = vrot.slane %v2515, 4
        %v3326 = vsel %vm610, %v3323, %v3325
        %v3327 = vrot.slane %v2516, 4
        %v3328 = vrot.slane %v2517, 4
        %v3329 = vsel %vm610, %v3327, %v3328
        %v3330 = vrot.slane %v2518, 4
        %v3331 = vsel %vm610, %v3328, %v3330
        %v3332 = vrot.slane %v2519, 4
        %v3333 = vrot.slane %v2520, 4
        %v3334 = vsel %vm610, %v3332, %v3333
        %v3335 = vrot.slane %v2521, 4
        %v3336 = vsel %vm610, %v3333, %v3335
        %v3337 = vrot.slane %v2522, 4
        %v3338 = vrot.slane %v2523, 4
        %v3339 = vsel %vm610, %v3337, %v3338
        %v3340 = vrot.slane %v2524, 4
        %v3341 = vsel %vm610, %v3338, %v3340
        %v3342 = vrot.slane %v2525, 4
        %v3343 = vrot.slane %v2526, 4
        %v3344 = vsel %vm610, %v3342, %v3343
        %v3345 = vrot.slane %v2527, 4
        %v3346 = vsel %vm610, %v3343, %v3345
        %v3347 = vrot.slane %v2528, 4
        %v3348 = vrot.slane %v2529, 4
        %v3349 = vsel %vm610, %v3347, %v3348
        %v3350 = vrot.slane %v2530, 4
        %v3351 = vsel %vm610, %v3348, %v3350
        %3352 = vrot.lane.b32.xlu0 %v3254, 16
        %v3353 = vpop.permute.xlu0 %3352
        %3354 = vrot.lane.b32.xlu0 %v3256, 16
        %v3355 = vpop.permute.xlu0 %3354
        %3356 = vrot.lane.b32.xlu0 %v3259, 16
        %v3357 = vpop.permute.xlu0 %3356
        %3358 = vrot.lane.b32.xlu0 %v3261, 16
        %v3359 = vpop.permute.xlu0 %3358
        %3360 = vrot.lane.b32.xlu0 %v3264, 16
        %v3361 = vpop.permute.xlu0 %3360
        %3362 = vrot.lane.b32.xlu0 %v3266, 16
        %v3363 = vpop.permute.xlu0 %3362
        %3364 = vrot.lane.b32.xlu0 %v3269, 16
        %v3365 = vpop.permute.xlu0 %3364
        %3366 = vrot.lane.b32.xlu0 %v3271, 16
        %v3367 = vpop.permute.xlu0 %3366
        %3368 = vrot.lane.b32.xlu0 %v3274, 16
        %v3369 = vpop.permute.xlu0 %3368
        %3370 = vrot.lane.b32.xlu0 %v3276, 16
        %v3371 = vpop.permute.xlu0 %3370
        %3372 = vrot.lane.b32.xlu0 %v3279, 16
        %v3373 = vpop.permute.xlu0 %3372
        %3374 = vrot.lane.b32.xlu0 %v3281, 16
        %v3375 = vpop.permute.xlu0 %3374
        %3376 = vrot.lane.b32.xlu0 %v3284, 16
        %v3377 = vpop.permute.xlu0 %3376
        %3378 = vrot.lane.b32.xlu0 %v3286, 16
        %v3379 = vpop.permute.xlu0 %3378
        %3380 = vrot.lane.b32.xlu0 %v3289, 16
        %v3381 = vpop.permute.xlu0 %3380
        %3382 = vrot.lane.b32.xlu0 %v3291, 16
        %v3383 = vpop.permute.xlu0 %3382
        %3384 = vrot.lane.b32.xlu0 %v3294, 16
        %v3385 = vpop.permute.xlu0 %3384
        %3386 = vrot.lane.b32.xlu0 %v3296, 16
        %v3387 = vpop.permute.xlu0 %3386
        %3388 = vrot.lane.b32.xlu0 %v3299, 16
        %v3389 = vpop.permute.xlu0 %3388
        %3390 = vrot.lane.b32.xlu0 %v3301, 16
        %v3391 = vpop.permute.xlu0 %3390
        %3392 = vrot.lane.b32.xlu0 %v3304, 16
        %v3393 = vpop.permute.xlu0 %3392
        %3394 = vrot.lane.b32.xlu0 %v3306, 16
        %v3395 = vpop.permute.xlu0 %3394
        %3396 = vrot.lane.b32.xlu0 %v3309, 16
        %v3397 = vpop.permute.xlu0 %3396
        %3398 = vrot.lane.b32.xlu0 %v3311, 16
        %v3399 = vpop.permute.xlu0 %3398
        %3400 = vrot.lane.b32.xlu0 %v3314, 16
        %v3401 = vpop.permute.xlu0 %3400
        %3402 = vrot.lane.b32.xlu0 %v3316, 16
        %v3403 = vpop.permute.xlu0 %3402
        %3404 = vrot.lane.b32.xlu0 %v3319, 16
        %v3405 = vpop.permute.xlu0 %3404
        %3406 = vrot.lane.b32.xlu0 %v3321, 16
        %v3407 = vpop.permute.xlu0 %3406
        %3408 = vrot.lane.b32.xlu0 %v3324, 16
        %v3409 = vpop.permute.xlu0 %3408
        %3410 = vrot.lane.b32.xlu0 %v3326, 16
        %v3411 = vpop.permute.xlu0 %3410
        %3412 = vrot.lane.b32.xlu0 %v3329, 16
        %v3413 = vpop.permute.xlu0 %3412
        %3414 = vrot.lane.b32.xlu0 %v3331, 16
        %v3415 = vpop.permute.xlu0 %3414
        %3416 = vrot.lane.b32.xlu0 %v3334, 16
        %v3417 = vpop.permute.xlu0 %3416
        %3418 = vrot.lane.b32.xlu0 %v3336, 16
        %v3419 = vpop.permute.xlu0 %3418
        %3420 = vrot.lane.b32.xlu0 %v3339, 16
        %v3421 = vpop.permute.xlu0 %3420
        %3422 = vrot.lane.b32.xlu0 %v3341, 16
        %v3423 = vpop.permute.xlu0 %3422
        %3424 = vrot.lane.b32.xlu0 %v3344, 16
        %v3425 = vpop.permute.xlu0 %3424
        %3426 = vrot.lane.b32.xlu0 %v3346, 16
        %v3427 = vpop.permute.xlu0 %3426
        %3428 = vrot.lane.b32.xlu0 %v3349, 16
        %v3429 = vpop.permute.xlu0 %3428
        %3430 = vrot.lane.b32.xlu0 %v3351, 16
        %v3431 = vpop.permute.xlu0 %3430
        %v3472 = vsel %vm337, %v2471, %v2692
        %v3473 = vsel %vm337, %v2472, %v2694
        %v3474 = vsel %vm337, %v2474, %v2696
        %v3475 = vsel %vm337, %v2475, %v2698
        %v3476 = vsel %vm337, %v2477, %v2700
        %v3477 = vsel %vm337, %v2478, %v2702
        %v3478 = vsel %vm337, %v2480, %v2704
        %v3479 = vsel %vm337, %v2481, %v2706
        %v3480 = vsel %vm337, %v2483, %v2708
        %v3481 = vsel %vm337, %v2484, %v2710
        %v3482 = vsel %vm337, %v2486, %v2712
        %v3483 = vsel %vm337, %v2487, %v2714
        %v3484 = vsel %vm337, %v2489, %v2716
        %v3485 = vsel %vm337, %v2490, %v2718
        %v3486 = vsel %vm337, %v2492, %v2720
        %v3487 = vsel %vm337, %v2493, %v2722
        %v3488 = vsel %vm337, %v2495, %v2724
        %v3489 = vsel %vm337, %v2496, %v2726
        %v3490 = vsel %vm337, %v2498, %v2728
        %v3491 = vsel %vm337, %v2499, %v2730
        %v3492 = vsel %vm337, %v2501, %v2732
        %v3493 = vsel %vm337, %v2502, %v2734
        %v3494 = vsel %vm337, %v2504, %v2736
        %v3495 = vsel %vm337, %v2505, %v2738
        %v3496 = vsel %vm337, %v2507, %v2740
        %v3497 = vsel %vm337, %v2508, %v2742
        %v3498 = vsel %vm337, %v2510, %v2744
        %v3499 = vsel %vm337, %v2511, %v2746
        %v3500 = vsel %vm337, %v2513, %v2748
        %v3501 = vsel %vm337, %v2514, %v2750
        %v3502 = vsel %vm337, %v2516, %v2752
        %v3503 = vsel %vm337, %v2517, %v2754
        %v3504 = vsel %vm337, %v2519, %v2756
        %v3505 = vsel %vm337, %v2520, %v2758
        %v3506 = vsel %vm337, %v2522, %v2760
        %v3507 = vsel %vm337, %v2523, %v2762
        %v3508 = vsel %vm337, %v2525, %v2764
        %v3509 = vsel %vm337, %v2526, %v2766
        %v3510 = vsel %vm337, %v2528, %v2768
        %v3511 = vsel %vm337, %v2529, %v2770
        %v3512 = vsel %vm1741, %v3472, %v2912
        %v3513 = vsel %vm1741, %v3473, %v2914
        %v3514 = vsel %vm1741, %v3474, %v2916
        %v3515 = vsel %vm1741, %v3475, %v2918
        %v3516 = vsel %vm1741, %v3476, %v2920
        %v3517 = vsel %vm1741, %v3477, %v2922
        %v3518 = vsel %vm1741, %v3478, %v2924
        %v3519 = vsel %vm1741, %v3479, %v2926
        %v3520 = vsel %vm1741, %v3480, %v2928
        %v3521 = vsel %vm1741, %v3481, %v2930
        %v3522 = vsel %vm1741, %v3482, %v2932
        %v3523 = vsel %vm1741, %v3483, %v2934
        %v3524 = vsel %vm1741, %v3484, %v2936
        %v3525 = vsel %vm1741, %v3485, %v2938
        %v3526 = vsel %vm1741, %v3486, %v2940
        %v3527 = vsel %vm1741, %v3487, %v2942
        %v3528 = vsel %vm1741, %v3488, %v2944
        %v3529 = vsel %vm1741, %v3489, %v2946
        %v3530 = vsel %vm1741, %v3490, %v2948
        %v3531 = vsel %vm1741, %v3491, %v2950
        %v3532 = vsel %vm1741, %v3492, %v2952
        %v3533 = vsel %vm1741, %v3493, %v2954
        %v3534 = vsel %vm1741, %v3494, %v2956
        %v3535 = vsel %vm1741, %v3495, %v2958
        %v3536 = vsel %vm1741, %v3496, %v2960
        %v3537 = vsel %vm1741, %v3497, %v2962
        %v3538 = vsel %vm1741, %v3498, %v2964
        %v3539 = vsel %vm1741, %v3499, %v2966
        %v3540 = vsel %vm1741, %v3500, %v2968
        %v3541 = vsel %vm1741, %v3501, %v2970
        %v3542 = vsel %vm1741, %v3502, %v2972
        %v3543 = vsel %vm1741, %v3503, %v2974
        %v3544 = vsel %vm1741, %v3504, %v2976
        %v3545 = vsel %vm1741, %v3505, %v2978
        %v3546 = vsel %vm1741, %v3506, %v2980
        %v3547 = vsel %vm1741, %v3507, %v2982
        %v3548 = vsel %vm1741, %v3508, %v2984
        %v3549 = vsel %vm1741, %v3509, %v2986
        %v3550 = vsel %vm1741, %v3510, %v2988
        %v3551 = vsel %vm1741, %v3511, %v2990
        %v3552 = vsel %vm2004, %v3512, %v3133
        %v3553 = vsel %vm2004, %v3513, %v3135
        %v3554 = vsel %vm2004, %v3514, %v3137
        %v3555 = vsel %vm2004, %v3515, %v3139
        %v3556 = vsel %vm2004, %v3516, %v3141
        %v3557 = vsel %vm2004, %v3517, %v3143
        %v3558 = vsel %vm2004, %v3518, %v3145
        %v3559 = vsel %vm2004, %v3519, %v3147
        %v3560 = vsel %vm2004, %v3520, %v3149
        %v3561 = vsel %vm2004, %v3521, %v3151
        %v3562 = vsel %vm2004, %v3522, %v3153
        %v3563 = vsel %vm2004, %v3523, %v3155
        %v3564 = vsel %vm2004, %v3524, %v3157
        %v3565 = vsel %vm2004, %v3525, %v3159
        %v3566 = vsel %vm2004, %v3526, %v3161
        %v3567 = vsel %vm2004, %v3527, %v3163
        %v3568 = vsel %vm2004, %v3528, %v3165
        %v3569 = vsel %vm2004, %v3529, %v3167
        %v3570 = vsel %vm2004, %v3530, %v3169
        %v3571 = vsel %vm2004, %v3531, %v3171
        %v3572 = vsel %vm2004, %v3532, %v3173
        %v3573 = vsel %vm2004, %v3533, %v3175
        %v3574 = vsel %vm2004, %v3534, %v3177
        %v3575 = vsel %vm2004, %v3535, %v3179
        %v3576 = vsel %vm2004, %v3536, %v3181
        %v3577 = vsel %vm2004, %v3537, %v3183
        %v3578 = vsel %vm2004, %v3538, %v3185
        %v3579 = vsel %vm2004, %v3539, %v3187
        %v3580 = vsel %vm2004, %v3540, %v3189
        %v3581 = vsel %vm2004, %v3541, %v3191
        %v3582 = vsel %vm2004, %v3542, %v3193
        %v3583 = vsel %vm2004, %v3543, %v3195
        %v3584 = vsel %vm2004, %v3544, %v3197
        %v3585 = vsel %vm2004, %v3545, %v3199
        %v3586 = vsel %vm2004, %v3546, %v3201
        %v3587 = vsel %vm2004, %v3547, %v3203
        %v3588 = vsel %vm2004, %v3548, %v3205
        %v3589 = vsel %vm2004, %v3549, %v3207
        %v3590 = vsel %vm2004, %v3550, %v3209
        %v3591 = vsel %vm2004, %v3551, %v3211
        %vm3592 = vcmask 130048
        %v3593 = vsel %vm3592, %v3552, %v3353
        %v3594 = vsel %vm3592, %v3553, %v3355
        %v3595 = vsel %vm3592, %v3554, %v3357
        %v3596 = vsel %vm3592, %v3555, %v3359
        %v3597 = vsel %vm3592, %v3556, %v3361
        %v3598 = vsel %vm3592, %v3557, %v3363
        %v3599 = vsel %vm3592, %v3558, %v3365
        %v3600 = vsel %vm3592, %v3559, %v3367
        %v3601 = vsel %vm3592, %v3560, %v3369
        %v3602 = vsel %vm3592, %v3561, %v3371
        %v3603 = vsel %vm3592, %v3562, %v3373
        %v3604 = vsel %vm3592, %v3563, %v3375
        %v3605 = vsel %vm3592, %v3564, %v3377
        %v3606 = vsel %vm3592, %v3565, %v3379
        %v3607 = vsel %vm3592, %v3566, %v3381
        %v3608 = vsel %vm3592, %v3567, %v3383
        %v3609 = vsel %vm3592, %v3568, %v3385
        %v3610 = vsel %vm3592, %v3569, %v3387
        %v3611 = vsel %vm3592, %v3570, %v3389
        %v3612 = vsel %vm3592, %v3571, %v3391
        %v3613 = vsel %vm3592, %v3572, %v3393
        %v3614 = vsel %vm3592, %v3573, %v3395
        %v3615 = vsel %vm3592, %v3574, %v3397
        %v3616 = vsel %vm3592, %v3575, %v3399
        %v3617 = vsel %vm3592, %v3576, %v3401
        %v3618 = vsel %vm3592, %v3577, %v3403
        %v3619 = vsel %vm3592, %v3578, %v3405
        %v3620 = vsel %vm3592, %v3579, %v3407
        %v3621 = vsel %vm3592, %v3580, %v3409
        %v3622 = vsel %vm3592, %v3581, %v3411
        %v3623 = vsel %vm3592, %v3582, %v3413
        %v3624 = vsel %vm3592, %v3583, %v3415
        %v3625 = vsel %vm3592, %v3584, %v3417
        %v3626 = vsel %vm3592, %v3585, %v3419
        %v3627 = vsel %vm3592, %v3586, %v3421
        %v3628 = vsel %vm3592, %v3587, %v3423
        %v3629 = vsel %vm3592, %v3588, %v3425
        %v3630 = vsel %vm3592, %v3589, %v3427
        %v3631 = vsel %vm3592, %v3590, %v3429
        %v3632 = vsel %vm3592, %v3591, %v3431
        %3665 = vrot.lane.b32.xlu0 %v3595, 20
        %v3666 = vpop.permute.xlu0 %3665
        %3667 = vrot.lane.b32.xlu0 %v3596, 20
        %v3668 = vpop.permute.xlu0 %3667
        %3669 = vrot.lane.b32.xlu0 %v3597, 20
        %v3670 = vpop.permute.xlu0 %3669
        %3671 = vrot.lane.b32.xlu0 %v3598, 20
        %v3672 = vpop.permute.xlu0 %3671
        %3673 = vrot.lane.b32.xlu0 %v3599, 20
        %v3674 = vpop.permute.xlu0 %3673
        %3675 = vrot.lane.b32.xlu0 %v3600, 20
        %v3676 = vpop.permute.xlu0 %3675
        %3677 = vrot.lane.b32.xlu0 %v3601, 20
        %v3678 = vpop.permute.xlu0 %3677
        %3679 = vrot.lane.b32.xlu0 %v3602, 20
        %v3680 = vpop.permute.xlu0 %3679
        %3681 = vrot.lane.b32.xlu0 %v3603, 20
        %v3682 = vpop.permute.xlu0 %3681
        %3683 = vrot.lane.b32.xlu0 %v3604, 20
        %v3684 = vpop.permute.xlu0 %3683
        %3685 = vrot.lane.b32.xlu0 %v3605, 20
        %v3686 = vpop.permute.xlu0 %3685
        %3687 = vrot.lane.b32.xlu0 %v3606, 20
        %v3688 = vpop.permute.xlu0 %3687
        %3689 = vrot.lane.b32.xlu0 %v3607, 20
        %v3690 = vpop.permute.xlu0 %3689
        %3691 = vrot.lane.b32.xlu0 %v3608, 20
        %v3692 = vpop.permute.xlu0 %3691
        %3693 = vrot.lane.b32.xlu0 %v3609, 20
        %v3694 = vpop.permute.xlu0 %3693
        %3695 = vrot.lane.b32.xlu0 %v3610, 20
        %v3696 = vpop.permute.xlu0 %3695
        %3697 = vrot.lane.b32.xlu0 %v3611, 20
        %v3698 = vpop.permute.xlu0 %3697
        %3699 = vrot.lane.b32.xlu0 %v3612, 20
        %v3700 = vpop.permute.xlu0 %3699
        %3701 = vrot.lane.b32.xlu0 %v3613, 20
        %v3702 = vpop.permute.xlu0 %3701
        %3703 = vrot.lane.b32.xlu0 %v3614, 20
        %v3704 = vpop.permute.xlu0 %3703
        %3705 = vrot.lane.b32.xlu0 %v3615, 20
        %v3706 = vpop.permute.xlu0 %3705
        %3707 = vrot.lane.b32.xlu0 %v3616, 20
        %v3708 = vpop.permute.xlu0 %3707
        %3709 = vrot.lane.b32.xlu0 %v3617, 20
        %v3710 = vpop.permute.xlu0 %3709
        %3711 = vrot.lane.b32.xlu0 %v3618, 20
        %v3712 = vpop.permute.xlu0 %3711
        %3713 = vrot.lane.b32.xlu0 %v3619, 20
        %v3714 = vpop.permute.xlu0 %3713
        %3715 = vrot.lane.b32.xlu0 %v3620, 20
        %v3716 = vpop.permute.xlu0 %3715
        %3717 = vrot.lane.b32.xlu0 %v3621, 20
        %v3718 = vpop.permute.xlu0 %3717
        %3719 = vrot.lane.b32.xlu0 %v3622, 20
        %v3720 = vpop.permute.xlu0 %3719
        %3721 = vrot.lane.b32.xlu0 %v3623, 20
        %v3722 = vpop.permute.xlu0 %3721
        %3723 = vrot.lane.b32.xlu0 %v3624, 20
        %v3724 = vpop.permute.xlu0 %3723
        %3725 = vrot.lane.b32.xlu0 %v3625, 20
        %v3726 = vpop.permute.xlu0 %3725
        %3727 = vrot.lane.b32.xlu0 %v3626, 20
        %v3728 = vpop.permute.xlu0 %3727
        %3763 = vrot.lane.b32.xlu0 %v3597, 40
        %v3764 = vpop.permute.xlu0 %3763
        %3765 = vrot.lane.b32.xlu0 %v3598, 40
        %v3766 = vpop.permute.xlu0 %3765
        %3767 = vrot.lane.b32.xlu0 %v3599, 40
        %v3768 = vpop.permute.xlu0 %3767
        %3769 = vrot.lane.b32.xlu0 %v3600, 40
        %v3770 = vpop.permute.xlu0 %3769
        %3771 = vrot.lane.b32.xlu0 %v3601, 40
        %v3772 = vpop.permute.xlu0 %3771
        %3773 = vrot.lane.b32.xlu0 %v3602, 40
        %v3774 = vpop.permute.xlu0 %3773
        %3775 = vrot.lane.b32.xlu0 %v3603, 40
        %v3776 = vpop.permute.xlu0 %3775
        %3777 = vrot.lane.b32.xlu0 %v3604, 40
        %v3778 = vpop.permute.xlu0 %3777
        %3779 = vrot.lane.b32.xlu0 %v3605, 40
        %v3780 = vpop.permute.xlu0 %3779
        %3781 = vrot.lane.b32.xlu0 %v3606, 40
        %v3782 = vpop.permute.xlu0 %3781
        %3783 = vrot.lane.b32.xlu0 %v3607, 40
        %v3784 = vpop.permute.xlu0 %3783
        %3785 = vrot.lane.b32.xlu0 %v3608, 40
        %v3786 = vpop.permute.xlu0 %3785
        %3787 = vrot.lane.b32.xlu0 %v3609, 40
        %v3788 = vpop.permute.xlu0 %3787
        %3789 = vrot.lane.b32.xlu0 %v3610, 40
        %v3790 = vpop.permute.xlu0 %3789
        %3791 = vrot.lane.b32.xlu0 %v3611, 40
        %v3792 = vpop.permute.xlu0 %3791
        %3793 = vrot.lane.b32.xlu0 %v3612, 40
        %v3794 = vpop.permute.xlu0 %3793
        %3795 = vrot.lane.b32.xlu0 %v3613, 40
        %v3796 = vpop.permute.xlu0 %3795
        %3797 = vrot.lane.b32.xlu0 %v3614, 40
        %v3798 = vpop.permute.xlu0 %3797
        %3799 = vrot.lane.b32.xlu0 %v3615, 40
        %v3800 = vpop.permute.xlu0 %3799
        %3801 = vrot.lane.b32.xlu0 %v3616, 40
        %v3802 = vpop.permute.xlu0 %3801
        %3803 = vrot.lane.b32.xlu0 %v3617, 40
        %v3804 = vpop.permute.xlu0 %3803
        %3805 = vrot.lane.b32.xlu0 %v3618, 40
        %v3806 = vpop.permute.xlu0 %3805
        %3807 = vrot.lane.b32.xlu0 %v3619, 40
        %v3808 = vpop.permute.xlu0 %3807
        %3809 = vrot.lane.b32.xlu0 %v3620, 40
        %v3810 = vpop.permute.xlu0 %3809
        %3811 = vrot.lane.b32.xlu0 %v3621, 40
        %v3812 = vpop.permute.xlu0 %3811
        %3813 = vrot.lane.b32.xlu0 %v3622, 40
        %v3814 = vpop.permute.xlu0 %3813
        %3815 = vrot.lane.b32.xlu0 %v3623, 40
        %v3816 = vpop.permute.xlu0 %3815
        %3817 = vrot.lane.b32.xlu0 %v3624, 40
        %v3818 = vpop.permute.xlu0 %3817
        %3819 = vrot.lane.b32.xlu0 %v3625, 40
        %v3820 = vpop.permute.xlu0 %3819
        %3821 = vrot.lane.b32.xlu0 %v3626, 40
        %v3822 = vpop.permute.xlu0 %3821
        %3823 = vrot.lane.b32.xlu0 %v3627, 40
        %v3824 = vpop.permute.xlu0 %3823
        %3825 = vrot.lane.b32.xlu0 %v3628, 40
        %v3826 = vpop.permute.xlu0 %3825
        %3861 = vrot.lane.b32.xlu0 %v3599, 60
        %v3862 = vpop.permute.xlu0 %3861
        %3863 = vrot.lane.b32.xlu0 %v3600, 60
        %v3864 = vpop.permute.xlu0 %3863
        %3865 = vrot.lane.b32.xlu0 %v3601, 60
        %v3866 = vpop.permute.xlu0 %3865
        %3867 = vrot.lane.b32.xlu0 %v3602, 60
        %v3868 = vpop.permute.xlu0 %3867
        %3869 = vrot.lane.b32.xlu0 %v3603, 60
        %v3870 = vpop.permute.xlu0 %3869
        %3871 = vrot.lane.b32.xlu0 %v3604, 60
        %v3872 = vpop.permute.xlu0 %3871
        %3873 = vrot.lane.b32.xlu0 %v3605, 60
        %v3874 = vpop.permute.xlu0 %3873
        %3875 = vrot.lane.b32.xlu0 %v3606, 60
        %v3876 = vpop.permute.xlu0 %3875
        %3877 = vrot.lane.b32.xlu0 %v3607, 60
        %v3878 = vpop.permute.xlu0 %3877
        %3879 = vrot.lane.b32.xlu0 %v3608, 60
        %v3880 = vpop.permute.xlu0 %3879
        %3881 = vrot.lane.b32.xlu0 %v3609, 60
        %v3882 = vpop.permute.xlu0 %3881
        %3883 = vrot.lane.b32.xlu0 %v3610, 60
        %v3884 = vpop.permute.xlu0 %3883
        %3885 = vrot.lane.b32.xlu0 %v3611, 60
        %v3886 = vpop.permute.xlu0 %3885
        %3887 = vrot.lane.b32.xlu0 %v3612, 60
        %v3888 = vpop.permute.xlu0 %3887
        %3889 = vrot.lane.b32.xlu0 %v3613, 60
        %v3890 = vpop.permute.xlu0 %3889
        %3891 = vrot.lane.b32.xlu0 %v3614, 60
        %v3892 = vpop.permute.xlu0 %3891
        %3893 = vrot.lane.b32.xlu0 %v3615, 60
        %v3894 = vpop.permute.xlu0 %3893
        %3895 = vrot.lane.b32.xlu0 %v3616, 60
        %v3896 = vpop.permute.xlu0 %3895
        %3897 = vrot.lane.b32.xlu0 %v3617, 60
        %v3898 = vpop.permute.xlu0 %3897
        %3899 = vrot.lane.b32.xlu0 %v3618, 60
        %v3900 = vpop.permute.xlu0 %3899
        %3901 = vrot.lane.b32.xlu0 %v3619, 60
        %v3902 = vpop.permute.xlu0 %3901
        %3903 = vrot.lane.b32.xlu0 %v3620, 60
        %v3904 = vpop.permute.xlu0 %3903
        %3905 = vrot.lane.b32.xlu0 %v3621, 60
        %v3906 = vpop.permute.xlu0 %3905
        %3907 = vrot.lane.b32.xlu0 %v3622, 60
        %v3908 = vpop.permute.xlu0 %3907
        %3909 = vrot.lane.b32.xlu0 %v3623, 60
        %v3910 = vpop.permute.xlu0 %3909
        %3911 = vrot.lane.b32.xlu0 %v3624, 60
        %v3912 = vpop.permute.xlu0 %3911
        %3913 = vrot.lane.b32.xlu0 %v3625, 60
        %v3914 = vpop.permute.xlu0 %3913
        %3915 = vrot.lane.b32.xlu0 %v3626, 60
        %v3916 = vpop.permute.xlu0 %3915
        %3917 = vrot.lane.b32.xlu0 %v3627, 60
        %v3918 = vpop.permute.xlu0 %3917
        %3919 = vrot.lane.b32.xlu0 %v3628, 60
        %v3920 = vpop.permute.xlu0 %3919
        %3921 = vrot.lane.b32.xlu0 %v3629, 60
        %v3922 = vpop.permute.xlu0 %3921
        %3923 = vrot.lane.b32.xlu0 %v3630, 60
        %v3924 = vpop.permute.xlu0 %3923
        %3959 = vrot.lane.b32.xlu0 %v3601, 80
        %v3960 = vpop.permute.xlu0 %3959
        %3961 = vrot.lane.b32.xlu0 %v3602, 80
        %v3962 = vpop.permute.xlu0 %3961
        %3963 = vrot.lane.b32.xlu0 %v3603, 80
        %v3964 = vpop.permute.xlu0 %3963
        %3965 = vrot.lane.b32.xlu0 %v3604, 80
        %v3966 = vpop.permute.xlu0 %3965
        %3967 = vrot.lane.b32.xlu0 %v3605, 80
        %v3968 = vpop.permute.xlu0 %3967
        %3969 = vrot.lane.b32.xlu0 %v3606, 80
        %v3970 = vpop.permute.xlu0 %3969
        %3971 = vrot.lane.b32.xlu0 %v3607, 80
        %v3972 = vpop.permute.xlu0 %3971
        %3973 = vrot.lane.b32.xlu0 %v3608, 80
        %v3974 = vpop.permute.xlu0 %3973
        %3975 = vrot.lane.b32.xlu0 %v3609, 80
        %v3976 = vpop.permute.xlu0 %3975
        %3977 = vrot.lane.b32.xlu0 %v3610, 80
        %v3978 = vpop.permute.xlu0 %3977
        %3979 = vrot.lane.b32.xlu0 %v3611, 80
        %v3980 = vpop.permute.xlu0 %3979
        %3981 = vrot.lane.b32.xlu0 %v3612, 80
        %v3982 = vpop.permute.xlu0 %3981
        %3983 = vrot.lane.b32.xlu0 %v3613, 80
        %v3984 = vpop.permute.xlu0 %3983
        %3985 = vrot.lane.b32.xlu0 %v3614, 80
        %v3986 = vpop.permute.xlu0 %3985
        %3987 = vrot.lane.b32.xlu0 %v3615, 80
        %v3988 = vpop.permute.xlu0 %3987
        %3989 = vrot.lane.b32.xlu0 %v3616, 80
        %v3990 = vpop.permute.xlu0 %3989
        %3991 = vrot.lane.b32.xlu0 %v3617, 80
        %v3992 = vpop.permute.xlu0 %3991
        %3993 = vrot.lane.b32.xlu0 %v3618, 80
        %v3994 = vpop.permute.xlu0 %3993
        %3995 = vrot.lane.b32.xlu0 %v3619, 80
        %v3996 = vpop.permute.xlu0 %3995
        %3997 = vrot.lane.b32.xlu0 %v3620, 80
        %v3998 = vpop.permute.xlu0 %3997
        %3999 = vrot.lane.b32.xlu0 %v3621, 80
        %v4000 = vpop.permute.xlu0 %3999
        %4001 = vrot.lane.b32.xlu0 %v3622, 80
        %v4002 = vpop.permute.xlu0 %4001
        %4003 = vrot.lane.b32.xlu0 %v3623, 80
        %v4004 = vpop.permute.xlu0 %4003
        %4005 = vrot.lane.b32.xlu0 %v3624, 80
        %v4006 = vpop.permute.xlu0 %4005
        %4007 = vrot.lane.b32.xlu0 %v3625, 80
        %v4008 = vpop.permute.xlu0 %4007
        %4009 = vrot.lane.b32.xlu0 %v3626, 80
        %v4010 = vpop.permute.xlu0 %4009
        %4011 = vrot.lane.b32.xlu0 %v3627, 80
        %v4012 = vpop.permute.xlu0 %4011
        %4013 = vrot.lane.b32.xlu0 %v3628, 80
        %v4014 = vpop.permute.xlu0 %4013
        %4015 = vrot.lane.b32.xlu0 %v3629, 80
        %v4016 = vpop.permute.xlu0 %4015
        %4017 = vrot.lane.b32.xlu0 %v3630, 80
        %v4018 = vpop.permute.xlu0 %4017
        %4019 = vrot.lane.b32.xlu0 %v3631, 80
        %v4020 = vpop.permute.xlu0 %4019
        %4021 = vrot.lane.b32.xlu0 %v3632, 80
        %v4022 = vpop.permute.xlu0 %4021
        %vm4055 = vcmask 162816
        %v4056 = vsel %vm4055, %v3593, %v3666
        %v4057 = vsel %vm4055, %v3594, %v3668
        %v4058 = vsel %vm4055, %v3595, %v3670
        %v4059 = vsel %vm4055, %v3596, %v3672
        %v4060 = vsel %vm4055, %v3597, %v3674
        %v4061 = vsel %vm4055, %v3598, %v3676
        %v4062 = vsel %vm4055, %v3599, %v3678
        %v4063 = vsel %vm4055, %v3600, %v3680
        %v4064 = vsel %vm4055, %v3601, %v3682
        %v4065 = vsel %vm4055, %v3602, %v3684
        %v4066 = vsel %vm4055, %v3603, %v3686
        %v4067 = vsel %vm4055, %v3604, %v3688
        %v4068 = vsel %vm4055, %v3605, %v3690
        %v4069 = vsel %vm4055, %v3606, %v3692
        %v4070 = vsel %vm4055, %v3607, %v3694
        %v4071 = vsel %vm4055, %v3608, %v3696
        %v4072 = vsel %vm4055, %v3609, %v3698
        %v4073 = vsel %vm4055, %v3610, %v3700
        %v4074 = vsel %vm4055, %v3611, %v3702
        %v4075 = vsel %vm4055, %v3612, %v3704
        %v4076 = vsel %vm4055, %v3613, %v3706
        %v4077 = vsel %vm4055, %v3614, %v3708
        %v4078 = vsel %vm4055, %v3615, %v3710
        %v4079 = vsel %vm4055, %v3616, %v3712
        %v4080 = vsel %vm4055, %v3617, %v3714
        %v4081 = vsel %vm4055, %v3618, %v3716
        %v4082 = vsel %vm4055, %v3619, %v3718
        %v4083 = vsel %vm4055, %v3620, %v3720
        %v4084 = vsel %vm4055, %v3621, %v3722
        %v4085 = vsel %vm4055, %v3622, %v3724
        %v4086 = vsel %vm4055, %v3623, %v3726
        %v4087 = vsel %vm4055, %v3624, %v3728
        %vm4088 = vcmask 326656
        %v4089 = vsel %vm4088, %v4056, %v3764
        %v4090 = vsel %vm4088, %v4057, %v3766
        %v4091 = vsel %vm4088, %v4058, %v3768
        %v4092 = vsel %vm4088, %v4059, %v3770
        %v4093 = vsel %vm4088, %v4060, %v3772
        %v4094 = vsel %vm4088, %v4061, %v3774
        %v4095 = vsel %vm4088, %v4062, %v3776
        %v4096 = vsel %vm4088, %v4063, %v3778
        %v4097 = vsel %vm4088, %v4064, %v3780
        %v4098 = vsel %vm4088, %v4065, %v3782
        %v4099 = vsel %vm4088, %v4066, %v3784
        %v4100 = vsel %vm4088, %v4067, %v3786
        %v4101 = vsel %vm4088, %v4068, %v3788
        %v4102 = vsel %vm4088, %v4069, %v3790
        %v4103 = vsel %vm4088, %v4070, %v3792
        %v4104 = vsel %vm4088, %v4071, %v3794
        %v4105 = vsel %vm4088, %v4072, %v3796
        %v4106 = vsel %vm4088, %v4073, %v3798
        %v4107 = vsel %vm4088, %v4074, %v3800
        %v4108 = vsel %vm4088, %v4075, %v3802
        %v4109 = vsel %vm4088, %v4076, %v3804
        %v4110 = vsel %vm4088, %v4077, %v3806
        %v4111 = vsel %vm4088, %v4078, %v3808
        %v4112 = vsel %vm4088, %v4079, %v3810
        %v4113 = vsel %vm4088, %v4080, %v3812
        %v4114 = vsel %vm4088, %v4081, %v3814
        %v4115 = vsel %vm4088, %v4082, %v3816
        %v4116 = vsel %vm4088, %v4083, %v3818
        %v4117 = vsel %vm4088, %v4084, %v3820
        %v4118 = vsel %vm4088, %v4085, %v3822
        %v4119 = vsel %vm4088, %v4086, %v3824
        %v4120 = vsel %vm4088, %v4087, %v3826
        %vm4121 = vcmask 490496
        %v4122 = vsel %vm4121, %v4089, %v3862
        %v4123 = vsel %vm4121, %v4090, %v3864
        %v4124 = vsel %vm4121, %v4091, %v3866
        %v4125 = vsel %vm4121, %v4092, %v3868
        %v4126 = vsel %vm4121, %v4093, %v3870
        %v4127 = vsel %vm4121, %v4094, %v3872
        %v4128 = vsel %vm4121, %v4095, %v3874
        %v4129 = vsel %vm4121, %v4096, %v3876
        %v4130 = vsel %vm4121, %v4097, %v3878
        %v4131 = vsel %vm4121, %v4098, %v3880
        %v4132 = vsel %vm4121, %v4099, %v3882
        %v4133 = vsel %vm4121, %v4100, %v3884
        %v4134 = vsel %vm4121, %v4101, %v3886
        %v4135 = vsel %vm4121, %v4102, %v3888
        %v4136 = vsel %vm4121, %v4103, %v3890
        %v4137 = vsel %vm4121, %v4104, %v3892
        %v4138 = vsel %vm4121, %v4105, %v3894
        %v4139 = vsel %vm4121, %v4106, %v3896
        %v4140 = vsel %vm4121, %v4107, %v3898
        %v4141 = vsel %vm4121, %v4108, %v3900
        %v4142 = vsel %vm4121, %v4109, %v3902
        %v4143 = vsel %vm4121, %v4110, %v3904
        %v4144 = vsel %vm4121, %v4111, %v3906
        %v4145 = vsel %vm4121, %v4112, %v3908
        %v4146 = vsel %vm4121, %v4113, %v3910
        %v4147 = vsel %vm4121, %v4114, %v3912
        %v4148 = vsel %vm4121, %v4115, %v3914
        %v4149 = vsel %vm4121, %v4116, %v3916
        %v4150 = vsel %vm4121, %v4117, %v3918
        %v4151 = vsel %vm4121, %v4118, %v3920
        %v4152 = vsel %vm4121, %v4119, %v3922
        %v4153 = vsel %vm4121, %v4120, %v3924
        %vm4154 = vcmask 654336
        %v4155 = vsel %vm4154, %v4122, %v3960
        %v4156 = vsel %vm4154, %v4123, %v3962
        %v4157 = vsel %vm4154, %v4124, %v3964
        %v4158 = vsel %vm4154, %v4125, %v3966
        %v4159 = vsel %vm4154, %v4126, %v3968
        %v4160 = vsel %vm4154, %v4127, %v3970
        %v4161 = vsel %vm4154, %v4128, %v3972
        %v4162 = vsel %vm4154, %v4129, %v3974
        %v4163 = vsel %vm4154, %v4130, %v3976
        %v4164 = vsel %vm4154, %v4131, %v3978
        %v4165 = vsel %vm4154, %v4132, %v3980
        %v4166 = vsel %vm4154, %v4133, %v3982
        %v4167 = vsel %vm4154, %v4134, %v3984
        %v4168 = vsel %vm4154, %v4135, %v3986
        %v4169 = vsel %vm4154, %v4136, %v3988
        %v4170 = vsel %vm4154, %v4137, %v3990
        %v4171 = vsel %vm4154, %v4138, %v3992
        %v4172 = vsel %vm4154, %v4139, %v3994
        %v4173 = vsel %vm4154, %v4140, %v3996
        %v4174 = vsel %vm4154, %v4141, %v3998
        %v4175 = vsel %vm4154, %v4142, %v4000
        %v4176 = vsel %vm4154, %v4143, %v4002
        %v4177 = vsel %vm4154, %v4144, %v4004
        %v4178 = vsel %vm4154, %v4145, %v4006
        %v4179 = vsel %vm4154, %v4146, %v4008
        %v4180 = vsel %vm4154, %v4147, %v4010
        %v4181 = vsel %vm4154, %v4148, %v4012
        %v4182 = vsel %vm4154, %v4149, %v4014
        %v4183 = vsel %vm4154, %v4150, %v4016
        %v4184 = vsel %vm4154, %v4151, %v4018
        %v4185 = vsel %vm4154, %v4152, %v4020
        %v4186 = vsel %vm4154, %v4153, %v4022
        %v4187 = vld [vmem:[%s5] sm:$0xff]
        %v4188 = vld [vmem:[%s5 + $0x8] sm:$0xff]
        %v4189 = vld [vmem:[%s5 + $0x10] sm:$0xff]
        %v4190 = vld [vmem:[%s5 + $0x18] sm:$0xff]
        %v4191 = vld [vmem:[%s5 + $0x20] sm:$0xff]
        %v4192 = vld [vmem:[%s5 + $0x28] sm:$0xff]
        %v4193 = vld [vmem:[%s5 + $0x30] sm:$0xff]
        %v4194 = vld [vmem:[%s5 + $0x38] sm:$0xff]
        %v4195 = vld [vmem:[%s5 + $0x40] sm:$0xff]
        %v4196 = vld [vmem:[%s5 + $0x48] sm:$0xff]
        %v4197 = vld [vmem:[%s5 + $0x50] sm:$0xff]
        %v4198 = vld [vmem:[%s5 + $0x58] sm:$0xff]
        %v4199 = vld [vmem:[%s5 + $0x60] sm:$0xf]
        %vm4200 = vcmask 818176
        %v4202 = vsel %vm4200, %v4155, 0
        %v4205 = vsel %vm4200, %v4156, 0
        %v4208 = vsel %vm4200, %v4157, 0
        %v4211 = vsel %vm4200, %v4158, 0
        %v4214 = vsel %vm4200, %v4159, 0
        %v4217 = vsel %vm4200, %v4160, 0
        %v4220 = vsel %vm4200, %v4161, 0
        %v4223 = vsel %vm4200, %v4162, 0
        %v4226 = vsel %vm4200, %v4163, 0
        %v4229 = vsel %vm4200, %v4164, 0
        %v4232 = vsel %vm4200, %v4165, 0
        %v4235 = vsel %vm4200, %v4166, 0
        %v4238 = vsel %vm4200, %v4167, 0
        %v4241 = vsel %vm4200, %v4168, 0
        %v4244 = vsel %vm4200, %v4169, 0
        %v4247 = vsel %vm4200, %v4170, 0
        %v4250 = vsel %vm4200, %v4171, 0
        %v4253 = vsel %vm4200, %v4172, 0
        %v4256 = vsel %vm4200, %v4173, 0
        %v4259 = vsel %vm4200, %v4174, 0
        %v4262 = vsel %vm4200, %v4175, 0
        %v4265 = vsel %vm4200, %v4176, 0
        %v4268 = vsel %vm4200, %v4177, 0
        %v4271 = vsel %vm4200, %v4178, 0
        %v4274 = vsel %vm4200, %v4179, 0
        %v4277 = vsel %vm4200, %v4180, 0
        %v4280 = vsel %vm4200, %v4181, 0
        %v4283 = vsel %vm4200, %v4182, 0
        %v4286 = vsel %vm4200, %v4183, 0
        %v4289 = vsel %vm4200, %v4184, 0
        %v4292 = vsel %vm4200, %v4185, 0
        %v4295 = vsel %vm4200, %v4186, 0
        %v4298 = vsel %vm610, %v4199, 0
        %4300 = vmatprep.subr.mxu0 0.0
        %4301 = vmatpush1.msra.mxu0 %v4187
        %4302 = vmatprep.subr.mxu0 0.0
        %4303 = vmatpush1.msra.mxu0 %v4188
        %4304 = vmatprep.subr.mxu0 0.0
        %4305 = vmatpush1.msra.mxu0 %v4189
        %4306 = vmatprep.subr.mxu0 0.0
        %4307 = vmatpush1.msra.mxu0 %v4190
        %4308 = vmatprep.subr.mxu0 0.0
        %4309 = vmatpush1.msra.mxu0 %v4191
        %4310 = vmatprep.subr.mxu0 0.0
        %4311 = vmatpush1.msra.mxu0 %v4192
        %4312 = vmatprep.subr.mxu0 0.0
        %4313 = vmatpush1.msra.mxu0 %v4193
        %4314 = vmatprep.subr.mxu0 0.0
        %4315 = vmatpush1.msra.mxu0 %v4194
        %4316 = vmatprep.subr.mxu0 0.0
        %4317 = vmatpush1.msra.mxu0 %v4195
        %4318 = vmatprep.subr.mxu0 0.0
        %4319 = vmatpush1.msra.mxu0 %v4196
        %4320 = vmatprep.subr.mxu0 0.0
        %4321 = vmatpush1.msra.mxu0 %v4197
        %4322 = vmatprep.subr.mxu0 0.0
        %4323 = vmatpush1.msra.mxu0 %v4198
        %4324 = vmatprep.subr.mxu0 0.0
        %4325 = vmatpush1.msra.mxu0 %v4298
        %4326 = vmatprep.subr.mxu0 0.0
        %4327 = vmatpush1.msra.mxu0 0.0
        %4328 = vmatprep.subr.mxu0 0.0
        %4329 = vmatpush1.msra.mxu0 0.0
        %4330 = vmatprep.subr.mxu0 0.0
        %4331 = vmatpush1.msra.mxu0 0.0
        %4332 = vmatprep.subr.mxu0 0.0
        %4333 = vmatpush1.msra.mxu0 0.0
        %4334 = vmatprep.subr.mxu0 0.0
        %4335 = vmatpush1.msra.mxu0 0.0
        %4336 = vmatprep.subr.mxu0 0.0
        %4337 = vmatpush1.msra.mxu0 0.0
        %4338 = vmatprep.subr.mxu0 0.0
        %4339 = vmatpush1.msra.mxu0 0.0
        %4340 = vmatprep.subr.mxu0 0.0
        %4341 = vmatpush1.msra.mxu0 0.0
        %4342 = vmatprep.subr.mxu0 0.0
        %4343 = vmatpush1.msra.mxu0 0.0
        %4344 = vmatprep.subr.mxu0 0.0
        %4345 = vmatpush1.msra.mxu0 0.0
        %4346 = vmatprep.subr.mxu0 0.0
        %4347 = vmatpush1.msra.mxu0 0.0
        %4348 = vmatprep.subr.mxu0 0.0
        %4349 = vmatpush1.msra.mxu0 0.0
        %4350 = vmatprep.subr.mxu0 0.0
        %4351 = vmatpush1.msra.mxu0 0.0
        %4352 = vmatprep.subr.mxu0 0.0
        %4353 = vmatpush1.msra.mxu0 0.0
        %4354 = vmatprep.subr.mxu0 0.0
        %4355 = vmatpush1.msra.mxu0 0.0
        %4356 = vmatprep.subr.mxu0 0.0
        %4357 = vmatpush1.msra.mxu0 0.0
        %4358 = vmatprep.subr.mxu0 0.0
        %4359 = vmatpush1.msra.mxu0 0.0
        %4360 = vmatprep.subr.mxu0 0.0
        %4361 = vmatpush1.msra.mxu0 0.0
        %4362 = vmatprep.subr.mxu0 0.0
        %4363 = vmatpush1.msra.mxu0 0.0
        %4364 = vmatprep.mubr.f32.mxu0 0.0
        %4365 = vmatmul.mubr.f32.gmra.mrb[0].mxu0 %v4202
        %v4366 = vpop.f32.mrb[0].mxu0
        %v4367 = vadd.f32 0.0, %v4366
        %v4368 = vpop.f32.mrb[0].mxu0
        %4369 = vmatprep.mubr.f32.mxu0 0.0
        %4370 = vmatmul.mubr.f32.gmra.mrb[0].mxu0 %v4205
        %v4371 = vpop.f32.mrb[0].mxu0
        %v4372 = vadd.f32 0.0, %v4371
        %v4373 = vpop.f32.mrb[0].mxu0
        %4374 = vmatprep.mubr.f32.mxu0 0.0
        %4375 = vmatmul.mubr.f32.gmra.mrb[0].mxu0 %v4208
        %v4376 = vpop.f32.mrb[0].mxu0
        %v4377 = vadd.f32 0.0, %v4376
        %v4378 = vpop.f32.mrb[0].mxu0
        %4379 = vmatprep.mubr.f32.mxu0 0.0
        %4380 = vmatmul.mubr.f32.gmra.mrb[0].mxu0 %v4211
        %v4381 = vpop.f32.mrb[0].mxu0
        %v4382 = vadd.f32 0.0, %v4381
        %v4383 = vpop.f32.mrb[0].mxu0
        %4384 = vmatprep.mubr.f32.mxu0 0.0
        %4385 = vmatmul.mubr.f32.gmra.mrb[0].mxu0 %v4214
        %v4386 = vpop.f32.mrb[0].mxu0
        %v4387 = vadd.f32 0.0, %v4386
        %v4388 = vpop.f32.mrb[0].mxu0
        %4389 = vmatprep.mubr.f32.mxu0 0.0
        %4390 = vmatmul.mubr.f32.gmra.mrb[0].mxu0 %v4217
        %v4391 = vpop.f32.mrb[0].mxu0
        %v4392 = vadd.f32 0.0, %v4391
        %v4393 = vpop.f32.mrb[0].mxu0
        %4394 = vmatprep.mubr.f32.mxu0 0.0
        %4395 = vmatmul.mubr.f32.gmra.mrb[0].mxu0 %v4220
        %v4396 = vpop.f32.mrb[0].mxu0
        %v4397 = vadd.f32 0.0, %v4396
        %v4398 = vpop.f32.mrb[0].mxu0
        %4399 = vmatprep.mubr.f32.mxu0 0.0
        %4400 = vmatmul.mubr.f32.gmra.mrb[0].mxu0 %v4223
        %v4401 = vpop.f32.mrb[0].mxu0
        %v4402 = vadd.f32 0.0, %v4401
        %v4403 = vpop.f32.mrb[0].mxu0
        %4404 = vmatprep.mubr.f32.mxu0 0.0
        %4405 = vmatmul.mubr.f32.gmra.mrb[0].mxu0 %v4226
        %v4406 = vpop.f32.mrb[0].mxu0
        %v4407 = vadd.f32 0.0, %v4406
        %v4408 = vpop.f32.mrb[0].mxu0
        %4409 = vmatprep.mubr.f32.mxu0 0.0
        %4410 = vmatmul.mubr.f32.gmra.mrb[0].mxu0 %v4229
        %v4411 = vpop.f32.mrb[0].mxu0
        %v4412 = vadd.f32 0.0, %v4411
        %v4413 = vpop.f32.mrb[0].mxu0
        %4414 = vmatprep.mubr.f32.mxu0 0.0
        %4415 = vmatmul.mubr.f32.gmra.mrb[0].mxu0 %v4232
        %v4416 = vpop.f32.mrb[0].mxu0
        %v4417 = vadd.f32 0.0, %v4416
        %v4418 = vpop.f32.mrb[0].mxu0
        %4419 = vmatprep.mubr.f32.mxu0 0.0
        %4420 = vmatmul.mubr.f32.gmra.mrb[0].mxu0 %v4235
        %v4421 = vpop.f32.mrb[0].mxu0
        %v4422 = vadd.f32 0.0, %v4421
        %v4423 = vpop.f32.mrb[0].mxu0
        %4424 = vmatprep.mubr.f32.mxu0 0.0
        %4425 = vmatmul.mubr.f32.gmra.mrb[0].mxu0 %v4238
        %v4426 = vpop.f32.mrb[0].mxu0
        %v4427 = vadd.f32 0.0, %v4426
        %v4428 = vpop.f32.mrb[0].mxu0
        %4429 = vmatprep.mubr.f32.mxu0 0.0
        %4430 = vmatmul.mubr.f32.gmra.mrb[0].mxu0 %v4241
        %v4431 = vpop.f32.mrb[0].mxu0
        %v4432 = vadd.f32 0.0, %v4431
        %v4433 = vpop.f32.mrb[0].mxu0
        %4434 = vmatprep.mubr.f32.mxu0 0.0
        %4435 = vmatmul.mubr.f32.gmra.mrb[0].mxu0 %v4244
        %v4436 = vpop.f32.mrb[0].mxu0
        %v4437 = vadd.f32 0.0, %v4436
        %v4438 = vpop.f32.mrb[0].mxu0
        %4439 = vmatprep.mubr.f32.mxu0 0.0
        %4440 = vmatmul.mubr.f32.gmra.mrb[0].mxu0 %v4247
        %v4441 = vpop.f32.mrb[0].mxu0
        %v4442 = vadd.f32 0.0, %v4441
        %v4443 = vpop.f32.mrb[0].mxu0
        %4444 = vmatprep.mubr.f32.mxu0 0.0
        %4445 = vmatmul.mubr.f32.gmra.mrb[0].mxu0 %v4250
        %v4446 = vpop.f32.mrb[0].mxu0
        %v4447 = vadd.f32 0.0, %v4446
        %v4448 = vpop.f32.mrb[0].mxu0
        %4449 = vmatprep.mubr.f32.mxu0 0.0
        %4450 = vmatmul.mubr.f32.gmra.mrb[0].mxu0 %v4253
        %v4451 = vpop.f32.mrb[0].mxu0
        %v4452 = vadd.f32 0.0, %v4451
        %v4453 = vpop.f32.mrb[0].mxu0
        %4454 = vmatprep.mubr.f32.mxu0 0.0
        %4455 = vmatmul.mubr.f32.gmra.mrb[0].mxu0 %v4256
        %v4456 = vpop.f32.mrb[0].mxu0
        %v4457 = vadd.f32 0.0, %v4456
        %v4458 = vpop.f32.mrb[0].mxu0
        %4459 = vmatprep.mubr.f32.mxu0 0.0
        %4460 = vmatmul.mubr.f32.gmra.mrb[0].mxu0 %v4259
        %v4461 = vpop.f32.mrb[0].mxu0
        %v4462 = vadd.f32 0.0, %v4461
        %v4463 = vpop.f32.mrb[0].mxu0
        %4464 = vmatprep.mubr.f32.mxu0 0.0
        %4465 = vmatmul.mubr.f32.gmra.mrb[0].mxu0 %v4262
        %v4466 = vpop.f32.mrb[0].mxu0
        %v4467 = vadd.f32 0.0, %v4466
        %v4468 = vpop.f32.mrb[0].mxu0
        %4469 = vmatprep.mubr.f32.mxu0 0.0
        %4470 = vmatmul.mubr.f32.gmra.mrb[0].mxu0 %v4265
        %v4471 = vpop.f32.mrb[0].mxu0
        %v4472 = vadd.f32 0.0, %v4471
        %v4473 = vpop.f32.mrb[0].mxu0
        %4474 = vmatprep.mubr.f32.mxu0 0.0
        %4475 = vmatmul.mubr.f32.gmra.mrb[0].mxu0 %v4268
        %v4476 = vpop.f32.mrb[0].mxu0
        %v4477 = vadd.f32 0.0, %v4476
        %v4478 = vpop.f32.mrb[0].mxu0
        %4479 = vmatprep.mubr.f32.mxu0 0.0
        %4480 = vmatmul.mubr.f32.gmra.mrb[0].mxu0 %v4271
        %v4481 = vpop.f32.mrb[0].mxu0
        %v4482 = vadd.f32 0.0, %v4481
        %v4483 = vpop.f32.mrb[0].mxu0
        %4484 = vmatprep.mubr.f32.mxu0 0.0
        %4485 = vmatmul.mubr.f32.gmra.mrb[0].mxu0 %v4274
        %v4486 = vpop.f32.mrb[0].mxu0
        %v4487 = vadd.f32 0.0, %v4486
        %v4488 = vpop.f32.mrb[0].mxu0
        %4489 = vmatprep.mubr.f32.mxu0 0.0
        %4490 = vmatmul.mubr.f32.gmra.mrb[0].mxu0 %v4277
        %v4491 = vpop.f32.mrb[0].mxu0
        %v4492 = vadd.f32 0.0, %v4491
        %v4493 = vpop.f32.mrb[0].mxu0
        %4494 = vmatprep.mubr.f32.mxu0 0.0
        %4495 = vmatmul.mubr.f32.gmra.mrb[0].mxu0 %v4280
        %v4496 = vpop.f32.mrb[0].mxu0
        %v4497 = vadd.f32 0.0, %v4496
        %v4498 = vpop.f32.mrb[0].mxu0
        %4499 = vmatprep.mubr.f32.mxu0 0.0
        %4500 = vmatmul.mubr.f32.gmra.mrb[0].mxu0 %v4283
        %v4501 = vpop.f32.mrb[0].mxu0
        %v4502 = vadd.f32 0.0, %v4501
        %v4503 = vpop.f32.mrb[0].mxu0
        %4504 = vmatprep.mubr.f32.mxu0 0.0
        %4505 = vmatmul.mubr.f32.gmra.mrb[0].mxu0 %v4286
        %v4506 = vpop.f32.mrb[0].mxu0
        %v4507 = vadd.f32 0.0, %v4506
        %v4508 = vpop.f32.mrb[0].mxu0
        %4509 = vmatprep.mubr.f32.mxu0 0.0
        %4510 = vmatmul.mubr.f32.gmra.mrb[0].mxu0 %v4289
        %v4511 = vpop.f32.mrb[0].mxu0
        %v4512 = vadd.f32 0.0, %v4511
        %v4513 = vpop.f32.mrb[0].mxu0
        %4514 = vmatprep.mubr.f32.mxu0 0.0
        %4515 = vmatmul.mubr.f32.gmra.mrb[0].mxu0 %v4292
        %v4516 = vpop.f32.mrb[0].mxu0
        %v4517 = vadd.f32 0.0, %v4516
        %v4518 = vpop.f32.mrb[0].mxu0
        %4519 = vmatprep.mubr.f32.mxu0 0.0
        %4520 = vmatmul.mubr.f32.gmra.mrb[0].mxu0 %v4295
        %v4521 = vpop.f32.mrb[0].mxu0
        %v4522 = vadd.f32 0.0, %v4521
        %v4523 = vpop.f32.mrb[0].mxu0
        %4524 = vdwg.mxu0
        %v4525 = vld [vmem:[%s6] sm:$0x1]
        %v4527 = vlaneseq
        %v4528 = vshrl.u32 %v4527, 7
        %v4529 = vsub.s32 0, %v4528
        %v4530 = vrot.slane %v4525, %v4529
        %v4532 = vadd.f32 %v4367, %v4530
        %v4533 = vadd.f32 %v4372, %v4530
        %v4534 = vadd.f32 %v4377, %v4530
        %v4535 = vadd.f32 %v4382, %v4530
        %v4536 = vadd.f32 %v4387, %v4530
        %v4537 = vadd.f32 %v4392, %v4530
        %v4538 = vadd.f32 %v4397, %v4530
        %v4539 = vadd.f32 %v4402, %v4530
        %v4540 = vadd.f32 %v4407, %v4530
        %v4541 = vadd.f32 %v4412, %v4530
        %v4542 = vadd.f32 %v4417, %v4530
        %v4543 = vadd.f32 %v4422, %v4530
        %v4544 = vadd.f32 %v4427, %v4530
        %v4545 = vadd.f32 %v4432, %v4530
        %v4546 = vadd.f32 %v4437, %v4530
        %v4547 = vadd.f32 %v4442, %v4530
        %v4548 = vadd.f32 %v4447, %v4530
        %v4549 = vadd.f32 %v4452, %v4530
        %v4550 = vadd.f32 %v4457, %v4530
        %v4551 = vadd.f32 %v4462, %v4530
        %v4552 = vadd.f32 %v4467, %v4530
        %v4553 = vadd.f32 %v4472, %v4530
        %v4554 = vadd.f32 %v4477, %v4530
        %v4555 = vadd.f32 %v4482, %v4530
        %v4556 = vadd.f32 %v4487, %v4530
        %v4557 = vadd.f32 %v4492, %v4530
        %v4558 = vadd.f32 %v4497, %v4530
        %v4559 = vadd.f32 %v4502, %v4530
        %v4560 = vadd.f32 %v4507, %v4530
        %v4561 = vadd.f32 %v4512, %v4530
        %v4562 = vadd.f32 %v4517, %v4530
        %v4563 = vadd.f32 %v4522, %v4530
        %v4564 = vmax.f32 %v4532, 0.0
        %v4565 = vmax.f32 %v4533, 0.0
        %v4566 = vmax.f32 %v4534, 0.0
        %v4567 = vmax.f32 %v4535, 0.0
        %v4568 = vmax.f32 %v4536, 0.0
        %v4569 = vmax.f32 %v4537, 0.0
        %v4570 = vmax.f32 %v4538, 0.0
        %v4571 = vmax.f32 %v4539, 0.0
        %v4572 = vmax.f32 %v4540, 0.0
        %v4573 = vmax.f32 %v4541, 0.0
        %v4574 = vmax.f32 %v4542, 0.0
        %v4575 = vmax.f32 %v4543, 0.0
        %v4576 = vmax.f32 %v4544, 0.0
        %v4577 = vmax.f32 %v4545, 0.0
        %v4578 = vmax.f32 %v4546, 0.0
        %v4579 = vmax.f32 %v4547, 0.0
        %v4580 = vmax.f32 %v4548, 0.0
        %v4581 = vmax.f32 %v4549, 0.0
        %v4582 = vmax.f32 %v4550, 0.0
        %v4583 = vmax.f32 %v4551, 0.0
        %v4584 = vmax.f32 %v4552, 0.0
        %v4585 = vmax.f32 %v4553, 0.0
        %v4586 = vmax.f32 %v4554, 0.0
        %v4587 = vmax.f32 %v4555, 0.0
        %v4588 = vmax.f32 %v4556, 0.0
        %v4589 = vmax.f32 %v4557, 0.0
        %v4590 = vmax.f32 %v4558, 0.0
        %v4591 = vmax.f32 %v4559, 0.0
        %v4592 = vmax.f32 %v4560, 0.0
        %v4593 = vmax.f32 %v4561, 0.0
        %v4594 = vmax.f32 %v4562, 0.0
        %v4595 = vmax.f32 %v4563, 0.0
        %s4596 = scalar_lea.vmem [#allocation4], 24
        %4597 = vst.msk [vmem:[%s4596 + $0x1] sm:$0xff] %vm337, %v481
        %4598 = vst.msk [vmem:[%s4596 + $0x9] sm:$0xff] %vm337, %v482
        %4599 = vst.msk [vmem:[%s4596 + $0x19] sm:$0xff] %vm337, %v483
        %4600 = vst.msk [vmem:[%s4596 + $0x21] sm:$0xff] %vm337, %v484
        %4601 = vst.msk [vmem:[%s4596 + $0x31] sm:$0xff] %vm337, %v485
        %4602 = vst.msk [vmem:[%s4596 + $0x39] sm:$0xff] %vm337, %v486
        %4603 = vst.msk [vmem:[%s4596 + $0x49] sm:$0xff] %vm337, %v487
        %4604 = vst.msk [vmem:[%s4596 + $0x51] sm:$0xff] %vm337, %v488
        %4605 = vst.msk [vmem:[%s4596 + $0x61] sm:$0xff] %vm337, %v489
        %4606 = vst.msk [vmem:[%s4596 + $0x69] sm:$0xff] %vm337, %v490
        %4607 = vst.msk [vmem:[%s4596 + $0x79] sm:$0xff] %vm337, %v491
        %4608 = vst.msk [vmem:[%s4596 + $0x81] sm:$0xff] %vm337, %v492
        %4609 = vst.msk [vmem:[%s4596 + $0x91] sm:$0xff] %vm337, %v493
        %4610 = vst.msk [vmem:[%s4596 + $0x99] sm:$0xff] %vm337, %v494
        %4611 = vst.msk [vmem:[%s4596 + $0xa9] sm:$0xff] %vm337, %v495
        %4612 = vst.msk [vmem:[%s4596 + $0xb1] sm:$0xff] %vm337, %v496
        %4613 = vst.msk [vmem:[%s4596 + $0xc1] sm:$0xff] %vm337, %v497
        %4614 = vst.msk [vmem:[%s4596 + $0xc9] sm:$0xff] %vm337, %v498
        %4615 = vst.msk [vmem:[%s4596 + $0xd9] sm:$0xff] %vm337, %v499
        %4616 = vst.msk [vmem:[%s4596 + $0xe1] sm:$0xff] %vm337, %v500
        %4617 = vst.msk [vmem:[%s4596 + $0xf1] sm:$0xff] %vm337, %v501
        %4618 = vst.msk [vmem:[%s4596 + $0xf9] sm:$0xff] %vm337, %v502
        %4619 = vst.msk [vmem:[%s4596 + $0x109] sm:$0xff] %vm337, %v503
        %4620 = vst.msk [vmem:[%s4596 + $0x111] sm:$0xff] %vm337, %v504
        %4621 = vst.msk [vmem:[%s4596 + $0x121] sm:$0xff] %vm337, %v505
        %4622 = vst.msk [vmem:[%s4596 + $0x129] sm:$0xff] %vm337, %v506
        %4623 = vst.msk [vmem:[%s4596 + $0x139] sm:$0xff] %vm337, %v507
        %4624 = vst.msk [vmem:[%s4596 + $0x141] sm:$0xff] %vm337, %v508
        %4625 = vst.msk [vmem:[%s4596 + $0x151] sm:$0xff] %vm337, %v509
        %4626 = vst.msk [vmem:[%s4596 + $0x159] sm:$0xff] %vm337, %v510
        %4627 = vst.msk [vmem:[%s4596 + $0x169] sm:$0xff] %vm337, %v511
        %4628 = vst.msk [vmem:[%s4596 + $0x171] sm:$0xff] %vm337, %v512
        %v4629 = vld [vmem:[#allocation4] sm:$0xff]
        %v4630 = vld [vmem:[#allocation4 + $0x8] sm:$0xff]
        %v4631 = vld [vmem:[#allocation4 + $0x10] sm:$0x3]
        %v4632 = vld [vmem:[#allocation4 + $0x18] sm:$0xff]
        %v4633 = vld [vmem:[#allocation4 + $0x20] sm:$0xff]
        %v4634 = vld [vmem:[#allocation4 + $0x28] sm:$0x3]
        %v4635 = vld [vmem:[#allocation4 + $0x30] sm:$0xff]
        %v4636 = vld [vmem:[#allocation4 + $0x38] sm:$0xff]
        %v4637 = vld [vmem:[#allocation4 + $0x40] sm:$0x3]
        %v4638 = vld [vmem:[#allocation4 + $0x48] sm:$0xff]
        %v4639 = vld [vmem:[#allocation4 + $0x50] sm:$0xff]
        %v4640 = vld [vmem:[#allocation4 + $0x58] sm:$0x3]
        %v4641 = vld [vmem:[#allocation4 + $0x60] sm:$0xff]
        %v4642 = vld [vmem:[#allocation4 + $0x68] sm:$0xff]
        %v4643 = vld [vmem:[#allocation4 + $0x70] sm:$0x3]
        %v4644 = vld [vmem:[#allocation4 + $0x78] sm:$0xff]
        %v4645 = vld [vmem:[#allocation4 + $0x80] sm:$0xff]
        %v4646 = vld [vmem:[#allocation4 + $0x88] sm:$0x3]
        %v4647 = vld [vmem:[#allocation4 + $0x90] sm:$0xff]
        %v4648 = vld [vmem:[#allocation4 + $0x98] sm:$0xff]
        %v4649 = vld [vmem:[#allocation4 + $0xa0] sm:$0x3]
        %v4650 = vld [vmem:[#allocation4 + $0xa8] sm:$0xff]
        %v4651 = vld [vmem:[#allocation4 + $0xb0] sm:$0xff]
        %v4652 = vld [vmem:[#allocation4 + $0xb8] sm:$0x3]
        %v4653 = vld [vmem:[#allocation4 + $0xc0] sm:$0xff]
        %v4654 = vld [vmem:[#allocation4 + $0xc8] sm:$0xff]
        %v4655 = vld [vmem:[#allocation4 + $0xd0] sm:$0x3]
        %v4656 = vld [vmem:[#allocation4 + $0xd8] sm:$0xff]
        %v4657 = vld [vmem:[#allocation4 + $0xe0] sm:$0xff]
        %v4658 = vld [vmem:[#allocation4 + $0xe8] sm:$0x3]
        %v4659 = vld [vmem:[#allocation4 + $0xf0] sm:$0xff]
        %v4660 = vld [vmem:[#allocation4 + $0xf8] sm:$0xff]
        %v4661 = vld [vmem:[#allocation4 + $0x100] sm:$0x3]
        %v4662 = vld [vmem:[#allocation4 + $0x108] sm:$0xff]
        %v4663 = vld [vmem:[#allocation4 + $0x110] sm:$0xff]
        %v4664 = vld [vmem:[#allocation4 + $0x118] sm:$0x3]
        %v4665 = vld [vmem:[#allocation4 + $0x120] sm:$0xff]
        %v4666 = vld [vmem:[#allocation4 + $0x128] sm:$0xff]
        %v4667 = vld [vmem:[#allocation4 + $0x130] sm:$0x3]
        %v4668 = vld [vmem:[#allocation4 + $0x138] sm:$0xff]
        %v4669 = vld [vmem:[#allocation4 + $0x140] sm:$0xff]
        %v4670 = vld [vmem:[#allocation4 + $0x148] sm:$0x3]
        %v4671 = vld [vmem:[#allocation4 + $0x150] sm:$0xff]
        %v4672 = vld [vmem:[#allocation4 + $0x158] sm:$0xff]
        %v4673 = vld [vmem:[#allocation4 + $0x160] sm:$0x3]
        %v4674 = vld [vmem:[#allocation4 + $0x168] sm:$0xff]
        %v4675 = vld [vmem:[#allocation4 + $0x170] sm:$0xff]
        %v4676 = vld [vmem:[#allocation4 + $0x178] sm:$0x3]
        %v4677 = vld [vmem:[#allocation4 + $0x180] sm:$0xff]
        %v4678 = vld [vmem:[#allocation4 + $0x188] sm:$0xff]
        %v4679 = vld [vmem:[#allocation4 + $0x190] sm:$0x3]
        %v4680 = vld [vmem:[#allocation4 + $0x198] sm:$0xff]
        %v4681 = vld [vmem:[#allocation4 + $0x1a0] sm:$0xff]
        %v4682 = vld [vmem:[#allocation4 + $0x1a8] sm:$0x3]
        %v4737 = vrot.slane %v4629, 1
        %v4738 = vrot.slane %v4630, 1
        %v4739 = vsel %vm1307, %v4737, %v4738
        %v4740 = vrot.slane %v4631, 1
        %v4741 = vsel %vm1307, %v4738, %v4740
        %v4742 = vrot.slane %v4632, 1
        %v4743 = vrot.slane %v4633, 1
        %v4744 = vsel %vm1307, %v4742, %v4743
        %v4745 = vrot.slane %v4634, 1
        %v4746 = vsel %vm1307, %v4743, %v4745
        %v4747 = vrot.slane %v4635, 1
        %v4748 = vrot.slane %v4636, 1
        %v4749 = vsel %vm1307, %v4747, %v4748
        %v4750 = vrot.slane %v4637, 1
        %v4751 = vsel %vm1307, %v4748, %v4750
        %v4752 = vrot.slane %v4638, 1
        %v4753 = vrot.slane %v4639, 1
        %v4754 = vsel %vm1307, %v4752, %v4753
        %v4755 = vrot.slane %v4640, 1
        %v4756 = vsel %vm1307, %v4753, %v4755
        %v4757 = vrot.slane %v4641, 1
        %v4758 = vrot.slane %v4642, 1
        %v4759 = vsel %vm1307, %v4757, %v4758
        %v4760 = vrot.slane %v4643, 1
        %v4761 = vsel %vm1307, %v4758, %v4760
        %v4762 = vrot.slane %v4644, 1
        %v4763 = vrot.slane %v4645, 1
        %v4764 = vsel %vm1307, %v4762, %v4763
        %v4765 = vrot.slane %v4646, 1
        %v4766 = vsel %vm1307, %v4763, %v4765
        %v4767 = vrot.slane %v4647, 1
        %v4768 = vrot.slane %v4648, 1
        %v4769 = vsel %vm1307, %v4767, %v4768
        %v4770 = vrot.slane %v4649, 1
        %v4771 = vsel %vm1307, %v4768, %v4770
        %v4772 = vrot.slane %v4650, 1
        %v4773 = vrot.slane %v4651, 1
        %v4774 = vsel %vm1307, %v4772, %v4773
        %v4775 = vrot.slane %v4652, 1
        %v4776 = vsel %vm1307, %v4773, %v4775
        %v4777 = vrot.slane %v4653, 1
        %v4778 = vrot.slane %v4654, 1
        %v4779 = vsel %vm1307, %v4777, %v4778
        %v4780 = vrot.slane %v4655, 1
        %v4781 = vsel %vm1307, %v4778, %v4780
        %v4782 = vrot.slane %v4656, 1
        %v4783 = vrot.slane %v4657, 1
        %v4784 = vsel %vm1307, %v4782, %v4783
        %v4785 = vrot.slane %v4658, 1
        %v4786 = vsel %vm1307, %v4783, %v4785
        %v4787 = vrot.slane %v4659, 1
        %v4788 = vrot.slane %v4660, 1
        %v4789 = vsel %vm1307, %v4787, %v4788
        %v4790 = vrot.slane %v4661, 1
        %v4791 = vsel %vm1307, %v4788, %v4790
        %v4792 = vrot.slane %v4662, 1
        %v4793 = vrot.slane %v4663, 1
        %v4794 = vsel %vm1307, %v4792, %v4793
        %v4795 = vrot.slane %v4664, 1
        %v4796 = vsel %vm1307, %v4793, %v4795
        %v4797 = vrot.slane %v4665, 1
        %v4798 = vrot.slane %v4666, 1
        %v4799 = vsel %vm1307, %v4797, %v4798
        %v4800 = vrot.slane %v4667, 1
        %v4801 = vsel %vm1307, %v4798, %v4800
        %v4802 = vrot.slane %v4668, 1
        %v4803 = vrot.slane %v4669, 1
        %v4804 = vsel %vm1307, %v4802, %v4803
        %v4805 = vrot.slane %v4670, 1
        %v4806 = vsel %vm1307, %v4803, %v4805
        %v4807 = vrot.slane %v4671, 1
        %v4808 = vrot.slane %v4672, 1
        %v4809 = vsel %vm1307, %v4807, %v4808
        %v4810 = vrot.slane %v4673, 1
        %v4811 = vsel %vm1307, %v4808, %v4810
        %v4812 = vrot.slane %v4674, 1
        %v4813 = vrot.slane %v4675, 1
        %v4814 = vsel %vm1307, %v4812, %v4813
        %v4815 = vrot.slane %v4676, 1
        %v4816 = vsel %vm1307, %v4813, %v4815
        %v4817 = vrot.slane %v4677, 1
        %v4818 = vrot.slane %v4678, 1
        %v4819 = vsel %vm1307, %v4817, %v4818
        %v4820 = vrot.slane %v4679, 1
        %v4821 = vsel %vm1307, %v4818, %v4820
        %v4822 = vrot.slane %v4680, 1
        %v4823 = vrot.slane %v4681, 1
        %v4824 = vsel %vm1307, %v4822, %v4823
        %v4825 = vrot.slane %v4682, 1
        %v4826 = vsel %vm1307, %v4823, %v4825
        %v4863 = vmax.f32 %v4629, %v4739
        %v4864 = vmax.f32 %v4630, %v4741
        %v4865 = vmax.f32 %v4632, %v4744
        %v4866 = vmax.f32 %v4633, %v4746
        %v4867 = vmax.f32 %v4635, %v4749
        %v4868 = vmax.f32 %v4636, %v4751
        %v4869 = vmax.f32 %v4638, %v4754
        %v4870 = vmax.f32 %v4639, %v4756
        %v4871 = vmax.f32 %v4641, %v4759
        %v4872 = vmax.f32 %v4642, %v4761
        %v4873 = vmax.f32 %v4644, %v4764
        %v4874 = vmax.f32 %v4645, %v4766
        %v4875 = vmax.f32 %v4647, %v4769
        %v4876 = vmax.f32 %v4648, %v4771
        %v4877 = vmax.f32 %v4650, %v4774
        %v4878 = vmax.f32 %v4651, %v4776
        %v4879 = vmax.f32 %v4653, %v4779
        %v4880 = vmax.f32 %v4654, %v4781
        %v4881 = vmax.f32 %v4656, %v4784
        %v4882 = vmax.f32 %v4657, %v4786
        %v4883 = vmax.f32 %v4659, %v4789
        %v4884 = vmax.f32 %v4660, %v4791
        %v4885 = vmax.f32 %v4662, %v4794
        %v4886 = vmax.f32 %v4663, %v4796
        %v4887 = vmax.f32 %v4665, %v4799
        %v4888 = vmax.f32 %v4666, %v4801
        %v4889 = vmax.f32 %v4668, %v4804
        %v4890 = vmax.f32 %v4669, %v4806
        %v4891 = vmax.f32 %v4671, %v4809
        %v4892 = vmax.f32 %v4672, %v4811
        %v4893 = vmax.f32 %v4674, %v4814
        %v4894 = vmax.f32 %v4675, %v4816
        %v4895 = vmax.f32 %v4677, %v4819
        %v4896 = vmax.f32 %v4678, %v4821
        %v4897 = vmax.f32 %v4680, %v4824
        %v4898 = vmax.f32 %v4681, %v4826
        %v4899 = vrot.slane %v4629, 2
        %v4900 = vrot.slane %v4630, 2
        %v4901 = vsel %vm1506, %v4899, %v4900
        %v4902 = vrot.slane %v4631, 2
        %v4903 = vsel %vm1506, %v4900, %v4902
        %v4904 = vrot.slane %v4632, 2
        %v4905 = vrot.slane %v4633, 2
        %v4906 = vsel %vm1506, %v4904, %v4905
        %v4907 = vrot.slane %v4634, 2
        %v4908 = vsel %vm1506, %v4905, %v4907
        %v4909 = vrot.slane %v4635, 2
        %v4910 = vrot.slane %v4636, 2
        %v4911 = vsel %vm1506, %v4909, %v4910
        %v4912 = vrot.slane %v4637, 2
        %v4913 = vsel %vm1506, %v4910, %v4912
        %v4914 = vrot.slane %v4638, 2
        %v4915 = vrot.slane %v4639, 2
        %v4916 = vsel %vm1506, %v4914, %v4915
        %v4917 = vrot.slane %v4640, 2
        %v4918 = vsel %vm1506, %v4915, %v4917
        %v4919 = vrot.slane %v4641, 2
        %v4920 = vrot.slane %v4642, 2
        %v4921 = vsel %vm1506, %v4919, %v4920
        %v4922 = vrot.slane %v4643, 2
        %v4923 = vsel %vm1506, %v4920, %v4922
        %v4924 = vrot.slane %v4644, 2
        %v4925 = vrot.slane %v4645, 2
        %v4926 = vsel %vm1506, %v4924, %v4925
        %v4927 = vrot.slane %v4646, 2
        %v4928 = vsel %vm1506, %v4925, %v4927
        %v4929 = vrot.slane %v4647, 2
        %v4930 = vrot.slane %v4648, 2
        %v4931 = vsel %vm1506, %v4929, %v4930
        %v4932 = vrot.slane %v4649, 2
        %v4933 = vsel %vm1506, %v4930, %v4932
        %v4934 = vrot.slane %v4650, 2
        %v4935 = vrot.slane %v4651, 2
        %v4936 = vsel %vm1506, %v4934, %v4935
        %v4937 = vrot.slane %v4652, 2
        %v4938 = vsel %vm1506, %v4935, %v4937
        %v4939 = vrot.slane %v4653, 2
        %v4940 = vrot.slane %v4654, 2
        %v4941 = vsel %vm1506, %v4939, %v4940
        %v4942 = vrot.slane %v4655, 2
        %v4943 = vsel %vm1506, %v4940, %v4942
        %v4944 = vrot.slane %v4656, 2
        %v4945 = vrot.slane %v4657, 2
        %v4946 = vsel %vm1506, %v4944, %v4945
        %v4947 = vrot.slane %v4658, 2
        %v4948 = vsel %vm1506, %v4945, %v4947
        %v4949 = vrot.slane %v4659, 2
        %v4950 = vrot.slane %v4660, 2
        %v4951 = vsel %vm1506, %v4949, %v4950
        %v4952 = vrot.slane %v4661, 2
        %v4953 = vsel %vm1506, %v4950, %v4952
        %v4954 = vrot.slane %v4662, 2
        %v4955 = vrot.slane %v4663, 2
        %v4956 = vsel %vm1506, %v4954, %v4955
        %v4957 = vrot.slane %v4664, 2
        %v4958 = vsel %vm1506, %v4955, %v4957
        %v4959 = vrot.slane %v4665, 2
        %v4960 = vrot.slane %v4666, 2
        %v4961 = vsel %vm1506, %v4959, %v4960
        %v4962 = vrot.slane %v4667, 2
        %v4963 = vsel %vm1506, %v4960, %v4962
        %v4964 = vrot.slane %v4668, 2
        %v4965 = vrot.slane %v4669, 2
        %v4966 = vsel %vm1506, %v4964, %v4965
        %v4967 = vrot.slane %v4670, 2
        %v4968 = vsel %vm1506, %v4965, %v4967
        %v4969 = vrot.slane %v4671, 2
        %v4970 = vrot.slane %v4672, 2
        %v4971 = vsel %vm1506, %v4969, %v4970
        %v4972 = vrot.slane %v4673, 2
        %v4973 = vsel %vm1506, %v4970, %v4972
        %v4974 = vrot.slane %v4674, 2
        %v4975 = vrot.slane %v4675, 2
        %v4976 = vsel %vm1506, %v4974, %v4975
        %v4977 = vrot.slane %v4676, 2
        %v4978 = vsel %vm1506, %v4975, %v4977
        %v4979 = vrot.slane %v4677, 2
        %v4980 = vrot.slane %v4678, 2
        %v4981 = vsel %vm1506, %v4979, %v4980
        %v4982 = vrot.slane %v4679, 2
        %v4983 = vsel %vm1506, %v4980, %v4982
        %v4984 = vrot.slane %v4680, 2
        %v4985 = vrot.slane %v4681, 2
        %v4986 = vsel %vm1506, %v4984, %v4985
        %v4987 = vrot.slane %v4682, 2
        %v4988 = vsel %vm1506, %v4985, %v4987
        %v5025 = vmax.f32 %v4863, %v4901
        %v5026 = vmax.f32 %v4864, %v4903
        %v5027 = vmax.f32 %v4865, %v4906
        %v5028 = vmax.f32 %v4866, %v4908
        %v5029 = vmax.f32 %v4867, %v4911
        %v5030 = vmax.f32 %v4868, %v4913
        %v5031 = vmax.f32 %v4869, %v4916
        %v5032 = vmax.f32 %v4870, %v4918
        %v5033 = vmax.f32 %v4871, %v4921
        %v5034 = vmax.f32 %v4872, %v4923
        %v5035 = vmax.f32 %v4873, %v4926
        %v5036 = vmax.f32 %v4874, %v4928
        %v5037 = vmax.f32 %v4875, %v4931
        %v5038 = vmax.f32 %v4876, %v4933
        %v5039 = vmax.f32 %v4877, %v4936
        %v5040 = vmax.f32 %v4878, %v4938
        %v5041 = vmax.f32 %v4879, %v4941
        %v5042 = vmax.f32 %v4880, %v4943
        %v5043 = vmax.f32 %v4881, %v4946
        %v5044 = vmax.f32 %v4882, %v4948
        %v5045 = vmax.f32 %v4883, %v4951
        %v5046 = vmax.f32 %v4884, %v4953
        %v5047 = vmax.f32 %v4885, %v4956
        %v5048 = vmax.f32 %v4886, %v4958
        %v5049 = vmax.f32 %v4887, %v4961
        %v5050 = vmax.f32 %v4888, %v4963
        %v5051 = vmax.f32 %v4889, %v4966
        %v5052 = vmax.f32 %v4890, %v4968
        %v5053 = vmax.f32 %v4891, %v4971
        %v5054 = vmax.f32 %v4892, %v4973
        %v5055 = vmax.f32 %v4893, %v4976
        %v5056 = vmax.f32 %v4894, %v4978
        %v5057 = vmax.f32 %v4895, %v4981
        %v5058 = vmax.f32 %v4896, %v4983
        %v5059 = vmax.f32 %v4897, %v4986
        %v5060 = vmax.f32 %v4898, %v4988
        %v5061 = vmax.f32 %v5025, %v5027
        %v5062 = vmax.f32 %v5026, %v5028
        %v5063 = vmax.f32 %v5027, %v5029
        %v5064 = vmax.f32 %v5028, %v5030
        %v5065 = vmax.f32 %v5029, %v5031
        %v5066 = vmax.f32 %v5030, %v5032
        %v5067 = vmax.f32 %v5031, %v5033
        %v5068 = vmax.f32 %v5032, %v5034
        %v5069 = vmax.f32 %v5033, %v5035
        %v5070 = vmax.f32 %v5034, %v5036
        %v5071 = vmax.f32 %v5035, %v5037
        %v5072 = vmax.f32 %v5036, %v5038
        %v5073 = vmax.f32 %v5037, %v5039
        %v5074 = vmax.f32 %v5038, %v5040
        %v5075 = vmax.f32 %v5039, %v5041
        %v5076 = vmax.f32 %v5040, %v5042
        %v5077 = vmax.f32 %v5041, %v5043
        %v5078 = vmax.f32 %v5042, %v5044
        %v5079 = vmax.f32 %v5043, %v5045
        %v5080 = vmax.f32 %v5044, %v5046
        %v5081 = vmax.f32 %v5045, %v5047
        %v5082 = vmax.f32 %v5046, %v5048
        %v5083 = vmax.f32 %v5047, %v5049
        %v5084 = vmax.f32 %v5048, %v5050
        %v5085 = vmax.f32 %v5049, %v5051
        %v5086 = vmax.f32 %v5050, %v5052
        %v5087 = vmax.f32 %v5051, %v5053
        %v5088 = vmax.f32 %v5052, %v5054
        %v5089 = vmax.f32 %v5053, %v5055
        %v5090 = vmax.f32 %v5054, %v5056
        %v5091 = vmax.f32 %v5055, %v5057
        %v5092 = vmax.f32 %v5056, %v5058
        %v5093 = vmax.f32 %v5061, %v5029
        %v5094 = vmax.f32 %v5062, %v5030
        %v5095 = vmax.f32 %v5063, %v5031
        %v5096 = vmax.f32 %v5064, %v5032
        %v5097 = vmax.f32 %v5065, %v5033
        %v5098 = vmax.f32 %v5066, %v5034
        %v5099 = vmax.f32 %v5067, %v5035
        %v5100 = vmax.f32 %v5068, %v5036
        %v5101 = vmax.f32 %v5069, %v5037
        %v5102 = vmax.f32 %v5070, %v5038
        %v5103 = vmax.f32 %v5071, %v5039
        %v5104 = vmax.f32 %v5072, %v5040
        %v5105 = vmax.f32 %v5073, %v5041
        %v5106 = vmax.f32 %v5074, %v5042
        %v5107 = vmax.f32 %v5075, %v5043
        %v5108 = vmax.f32 %v5076, %v5044
        %v5109 = vmax.f32 %v5077, %v5045
        %v5110 = vmax.f32 %v5078, %v5046
        %v5111 = vmax.f32 %v5079, %v5047
        %v5112 = vmax.f32 %v5080, %v5048
        %v5113 = vmax.f32 %v5081, %v5049
        %v5114 = vmax.f32 %v5082, %v5050
        %v5115 = vmax.f32 %v5083, %v5051
        %v5116 = vmax.f32 %v5084, %v5052
        %v5117 = vmax.f32 %v5085, %v5053
        %v5118 = vmax.f32 %v5086, %v5054
        %v5119 = vmax.f32 %v5087, %v5055
        %v5120 = vmax.f32 %v5088, %v5056
        %v5121 = vmax.f32 %v5089, %v5057
        %v5122 = vmax.f32 %v5090, %v5058
        %v5123 = vmax.f32 %v5091, %v5059
        %v5124 = vmax.f32 %v5092, %v5060
        %v5125 = vld [vmem:[%s7] sm:$0xf]
        %v5126 = vld [vmem:[%s8] sm:$0x1]
        %v5128 = vlaneseq
        %v5129 = vshrl.u32 %v5128, 7
        %v5130 = vsub.s32 0, %v5129
        %v5131 = vrot.slane %v5126, %v5130
        %v5134 = vsel %vm337, %v5093, 0
        %v5137 = vsel %vm337, %v5094, 0
        %v5140 = vsel %vm337, %v5095, 0
        %v5143 = vsel %vm337, %v5096, 0
        %v5146 = vsel %vm337, %v5097, 0
        %v5149 = vsel %vm337, %v5098, 0
        %v5152 = vsel %vm337, %v5099, 0
        %v5155 = vsel %vm337, %v5100, 0
        %v5158 = vsel %vm337, %v5101, 0
        %v5161 = vsel %vm337, %v5102, 0
        %v5164 = vsel %vm337, %v5103, 0
        %v5167 = vsel %vm337, %v5104, 0
        %v5170 = vsel %vm337, %v5105, 0
        %v5173 = vsel %vm337, %v5106, 0
        %v5176 = vsel %vm337, %v5107, 0
        %v5179 = vsel %vm337, %v5108, 0
        %v5182 = vsel %vm337, %v5109, 0
        %v5185 = vsel %vm337, %v5110, 0
        %v5188 = vsel %vm337, %v5111, 0
        %v5191 = vsel %vm337, %v5112, 0
        %v5194 = vsel %vm337, %v5113, 0
        %v5197 = vsel %vm337, %v5114, 0
        %v5200 = vsel %vm337, %v5115, 0
        %v5203 = vsel %vm337, %v5116, 0
        %v5206 = vsel %vm337, %v5117, 0
        %v5209 = vsel %vm337, %v5118, 0
        %v5212 = vsel %vm337, %v5119, 0
        %v5215 = vsel %vm337, %v5120, 0
        %v5218 = vsel %vm337, %v5121, 0
        %v5221 = vsel %vm337, %v5122, 0
        %v5224 = vsel %vm337, %v5123, 0
        %v5227 = vsel %vm337, %v5124, 0
        %v5230 = vsel %vm610, %v5125, 0
        %5232 = vmatprep.subr.mxu0 0.0
        %5233 = vmatpush1.msra.mxu0 %v5230
        %5234 = vmatprep.subr.mxu0 0.0
        %5235 = vmatpush1.msra.mxu0 0.0
        %5236 = vmatprep.subr.mxu0 0.0
        %5237 = vmatpush1.msra.mxu0 0.0
        %5238 = vmatprep.subr.mxu0 0.0
        %5239 = vmatpush1.msra.mxu0 0.0
        %5240 = vmatprep.subr.mxu0 0.0
        %5241 = vmatpush1.msra.mxu0 0.0
        %5242 = vmatprep.subr.mxu0 0.0
        %5243 = vmatpush1.msra.mxu0 0.0
        %5244 = vmatprep.subr.mxu0 0.0
        %5245 = vmatpush1.msra.mxu0 0.0
        %5246 = vmatprep.subr.mxu0 0.0
        %5247 = vmatpush1.msra.mxu0 0.0
        %5248 = vmatprep.subr.mxu0 0.0
        %5249 = vmatpush1.msra.mxu0 0.0
        %5250 = vmatprep.subr.mxu0 0.0
        %5251 = vmatpush1.msra.mxu0 0.0
        %5252 = vmatprep.subr.mxu0 0.0
        %5253 = vmatpush1.msra.mxu0 0.0
        %5254 = vmatprep.subr.mxu0 0.0
        %5255 = vmatpush1.msra.mxu0 0.0
        %5256 = vmatprep.subr.mxu0 0.0
        %5257 = vmatpush1.msra.mxu0 0.0
        %5258 = vmatprep.subr.mxu0 0.0
        %5259 = vmatpush1.msra.mxu0 0.0
        %5260 = vmatprep.subr.mxu0 0.0
        %5261 = vmatpush1.msra.mxu0 0.0
        %5262 = vmatprep.subr.mxu0 0.0
        %5263 = vmatpush1.msra.mxu0 0.0
        %5264 = vmatprep.subr.mxu0 0.0
        %5265 = vmatpush1.msra.mxu0 0.0
        %5266 = vmatprep.subr.mxu0 0.0
        %5267 = vmatpush1.msra.mxu0 0.0
        %5268 = vmatprep.subr.mxu0 0.0
        %5269 = vmatpush1.msra.mxu0 0.0
        %5270 = vmatprep.subr.mxu0 0.0
        %5271 = vmatpush1.msra.mxu0 0.0
        %5272 = vmatprep.subr.mxu0 0.0
        %5273 = vmatpush1.msra.mxu0 0.0
        %5274 = vmatprep.subr.mxu0 0.0
        %5275 = vmatpush1.msra.mxu0 0.0
        %5276 = vmatprep.subr.mxu0 0.0
        %5277 = vmatpush1.msra.mxu0 0.0
        %5278 = vmatprep.subr.mxu0 0.0
        %5279 = vmatpush1.msra.mxu0 0.0
        %5280 = vmatprep.subr.mxu0 0.0
        %5281 = vmatpush1.msra.mxu0 0.0
        %5282 = vmatprep.subr.mxu0 0.0
        %5283 = vmatpush1.msra.mxu0 0.0
        %5284 = vmatprep.subr.mxu0 0.0
        %5285 = vmatpush1.msra.mxu0 0.0
        %5286 = vmatprep.subr.mxu0 0.0
        %5287 = vmatpush1.msra.mxu0 0.0
        %5288 = vmatprep.subr.mxu0 0.0
        %5289 = vmatpush1.msra.mxu0 0.0
        %5290 = vmatprep.subr.mxu0 0.0
        %5291 = vmatpush1.msra.mxu0 0.0
        %5292 = vmatprep.subr.mxu0 0.0
        %5293 = vmatpush1.msra.mxu0 0.0
        %5294 = vmatprep.subr.mxu0 0.0
        %5295 = vmatpush1.msra.mxu0 0.0
        %5296 = vmatprep.mubr.f32.mxu0 0.0
        %5297 = vmatmul.mubr.f32.gmra.mrb[0].mxu0 %v5134
        %v5298 = vpop.f32.mrb[0].mxu0
        %v5299 = vadd.f32 %v5131, %v5298
        %v5300 = vpop.f32.mrb[0].mxu0
        %5301 = vmatprep.mubr.f32.mxu0 0.0
        %5302 = vmatmul.mubr.f32.gmra.mrb[0].mxu0 %v5137
        %v5303 = vpop.f32.mrb[0].mxu0
        %v5304 = vadd.f32 %v5131, %v5303
        %v5305 = vpop.f32.mrb[0].mxu0
        %5306 = vmatprep.mubr.f32.mxu0 0.0
        %5307 = vmatmul.mubr.f32.gmra.mrb[0].mxu0 %v5140
        %v5308 = vpop.f32.mrb[0].mxu0
        %v5309 = vadd.f32 %v5131, %v5308
        %v5310 = vpop.f32.mrb[0].mxu0
        %5311 = vmatprep.mubr.f32.mxu0 0.0
        %5312 = vmatmul.mubr.f32.gmra.mrb[0].mxu0 %v5143
        %v5313 = vpop.f32.mrb[0].mxu0
        %v5314 = vadd.f32 %v5131, %v5313
        %v5315 = vpop.f32.mrb[0].mxu0
        %5316 = vmatprep.mubr.f32.mxu0 0.0
        %5317 = vmatmul.mubr.f32.gmra.mrb[0].mxu0 %v5146
        %v5318 = vpop.f32.mrb[0].mxu0
        %v5319 = vadd.f32 %v5131, %v5318
        %v5320 = vpop.f32.mrb[0].mxu0
        %5321 = vmatprep.mubr.f32.mxu0 0.0
        %5322 = vmatmul.mubr.f32.gmra.mrb[0].mxu0 %v5149
        %v5323 = vpop.f32.mrb[0].mxu0
        %v5324 = vadd.f32 %v5131, %v5323
        %v5325 = vpop.f32.mrb[0].mxu0
        %5326 = vmatprep.mubr.f32.mxu0 0.0
        %5327 = vmatmul.mubr.f32.gmra.mrb[0].mxu0 %v5152
        %v5328 = vpop.f32.mrb[0].mxu0
        %v5329 = vadd.f32 %v5131, %v5328
        %v5330 = vpop.f32.mrb[0].mxu0
        %5331 = vmatprep.mubr.f32.mxu0 0.0
        %5332 = vmatmul.mubr.f32.gmra.mrb[0].mxu0 %v5155
        %v5333 = vpop.f32.mrb[0].mxu0
        %v5334 = vadd.f32 %v5131, %v5333
        %v5335 = vpop.f32.mrb[0].mxu0
        %5336 = vmatprep.mubr.f32.mxu0 0.0
        %5337 = vmatmul.mubr.f32.gmra.mrb[0].mxu0 %v5158
        %v5338 = vpop.f32.mrb[0].mxu0
        %v5339 = vadd.f32 %v5131, %v5338
        %v5340 = vpop.f32.mrb[0].mxu0
        %5341 = vmatprep.mubr.f32.mxu0 0.0
        %5342 = vmatmul.mubr.f32.gmra.mrb[0].mxu0 %v5161
        %v5343 = vpop.f32.mrb[0].mxu0
        %v5344 = vadd.f32 %v5131, %v5343
        %v5345 = vpop.f32.mrb[0].mxu0
        %5346 = vmatprep.mubr.f32.mxu0 0.0
        %5347 = vmatmul.mubr.f32.gmra.mrb[0].mxu0 %v5164
        %v5348 = vpop.f32.mrb[0].mxu0
        %v5349 = vadd.f32 %v5131, %v5348
        %v5350 = vpop.f32.mrb[0].mxu0
        %5351 = vmatprep.mubr.f32.mxu0 0.0
        %5352 = vmatmul.mubr.f32.gmra.mrb[0].mxu0 %v5167
        %v5353 = vpop.f32.mrb[0].mxu0
        %v5354 = vadd.f32 %v5131, %v5353
        %v5355 = vpop.f32.mrb[0].mxu0
        %5356 = vmatprep.mubr.f32.mxu0 0.0
        %5357 = vmatmul.mubr.f32.gmra.mrb[0].mxu0 %v5170
        %v5358 = vpop.f32.mrb[0].mxu0
        %v5359 = vadd.f32 %v5131, %v5358
        %v5360 = vpop.f32.mrb[0].mxu0
        %5361 = vmatprep.mubr.f32.mxu0 0.0
        %5362 = vmatmul.mubr.f32.gmra.mrb[0].mxu0 %v5173
        %v5363 = vpop.f32.mrb[0].mxu0
        %v5364 = vadd.f32 %v5131, %v5363
        %v5365 = vpop.f32.mrb[0].mxu0
        %5366 = vmatprep.mubr.f32.mxu0 0.0
        %5367 = vmatmul.mubr.f32.gmra.mrb[0].mxu0 %v5176
        %v5368 = vpop.f32.mrb[0].mxu0
        %v5369 = vadd.f32 %v5131, %v5368
        %v5370 = vpop.f32.mrb[0].mxu0
        %5371 = vmatprep.mubr.f32.mxu0 0.0
        %5372 = vmatmul.mubr.f32.gmra.mrb[0].mxu0 %v5179
        %v5373 = vpop.f32.mrb[0].mxu0
        %v5374 = vadd.f32 %v5131, %v5373
        %v5375 = vpop.f32.mrb[0].mxu0
        %5376 = vmatprep.mubr.f32.mxu0 0.0
        %5377 = vmatmul.mubr.f32.gmra.mrb[0].mxu0 %v5182
        %v5378 = vpop.f32.mrb[0].mxu0
        %v5379 = vadd.f32 %v5131, %v5378
        %v5380 = vpop.f32.mrb[0].mxu0
        %5381 = vmatprep.mubr.f32.mxu0 0.0
        %5382 = vmatmul.mubr.f32.gmra.mrb[0].mxu0 %v5185
        %v5383 = vpop.f32.mrb[0].mxu0
        %v5384 = vadd.f32 %v5131, %v5383
        %v5385 = vpop.f32.mrb[0].mxu0
        %5386 = vmatprep.mubr.f32.mxu0 0.0
        %5387 = vmatmul.mubr.f32.gmra.mrb[0].mxu0 %v5188
        %v5388 = vpop.f32.mrb[0].mxu0
        %v5389 = vadd.f32 %v5131, %v5388
        %v5390 = vpop.f32.mrb[0].mxu0
        %5391 = vmatprep.mubr.f32.mxu0 0.0
        %5392 = vmatmul.mubr.f32.gmra.mrb[0].mxu0 %v5191
        %v5393 = vpop.f32.mrb[0].mxu0
        %v5394 = vadd.f32 %v5131, %v5393
        %v5395 = vpop.f32.mrb[0].mxu0
        %5396 = vmatprep.mubr.f32.mxu0 0.0
        %5397 = vmatmul.mubr.f32.gmra.mrb[0].mxu0 %v5194
        %v5398 = vpop.f32.mrb[0].mxu0
        %v5399 = vadd.f32 %v5131, %v5398
        %v5400 = vpop.f32.mrb[0].mxu0
        %5401 = vmatprep.mubr.f32.mxu0 0.0
        %5402 = vmatmul.mubr.f32.gmra.mrb[0].mxu0 %v5197
        %v5403 = vpop.f32.mrb[0].mxu0
        %v5404 = vadd.f32 %v5131, %v5403
        %v5405 = vpop.f32.mrb[0].mxu0
        %5406 = vmatprep.mubr.f32.mxu0 0.0
        %5407 = vmatmul.mubr.f32.gmra.mrb[0].mxu0 %v5200
        %v5408 = vpop.f32.mrb[0].mxu0
        %v5409 = vadd.f32 %v5131, %v5408
        %v5410 = vpop.f32.mrb[0].mxu0
        %5411 = vmatprep.mubr.f32.mxu0 0.0
        %5412 = vmatmul.mubr.f32.gmra.mrb[0].mxu0 %v5203
        %v5413 = vpop.f32.mrb[0].mxu0
        %v5414 = vadd.f32 %v5131, %v5413
        %v5415 = vpop.f32.mrb[0].mxu0
        %5416 = vmatprep.mubr.f32.mxu0 0.0
        %5417 = vmatmul.mubr.f32.gmra.mrb[0].mxu0 %v5206
        %v5418 = vpop.f32.mrb[0].mxu0
        %v5419 = vadd.f32 %v5131, %v5418
        %v5420 = vpop.f32.mrb[0].mxu0
        %5421 = vmatprep.mubr.f32.mxu0 0.0
        %5422 = vmatmul.mubr.f32.gmra.mrb[0].mxu0 %v5209
        %v5423 = vpop.f32.mrb[0].mxu0
        %v5424 = vadd.f32 %v5131, %v5423
        %v5425 = vpop.f32.mrb[0].mxu0
        %5426 = vmatprep.mubr.f32.mxu0 0.0
        %5427 = vmatmul.mubr.f32.gmra.mrb[0].mxu0 %v5212
        %v5428 = vpop.f32.mrb[0].mxu0
        %v5429 = vadd.f32 %v5131, %v5428
        %v5430 = vpop.f32.mrb[0].mxu0
        %5431 = vmatprep.mubr.f32.mxu0 0.0
        %5432 = vmatmul.mubr.f32.gmra.mrb[0].mxu0 %v5215
        %v5433 = vpop.f32.mrb[0].mxu0
        %v5434 = vadd.f32 %v5131, %v5433
        %v5435 = vpop.f32.mrb[0].mxu0
        %5436 = vmatprep.mubr.f32.mxu0 0.0
        %5437 = vmatmul.mubr.f32.gmra.mrb[0].mxu0 %v5218
        %v5438 = vpop.f32.mrb[0].mxu0
        %v5439 = vadd.f32 %v5131, %v5438
        %v5440 = vpop.f32.mrb[0].mxu0
        %5441 = vmatprep.mubr.f32.mxu0 0.0
        %5442 = vmatmul.mubr.f32.gmra.mrb[0].mxu0 %v5221
        %v5443 = vpop.f32.mrb[0].mxu0
        %v5444 = vadd.f32 %v5131, %v5443
        %v5445 = vpop.f32.mrb[0].mxu0
        %5446 = vmatprep.mubr.f32.mxu0 0.0
        %5447 = vmatmul.mubr.f32.gmra.mrb[0].mxu0 %v5224
        %v5448 = vpop.f32.mrb[0].mxu0
        %v5449 = vadd.f32 %v5131, %v5448
        %v5450 = vpop.f32.mrb[0].mxu0
        %5451 = vmatprep.mubr.f32.mxu0 0.0
        %5452 = vmatmul.mubr.f32.gmra.mrb[0].mxu0 %v5227
        %v5453 = vpop.f32.mrb[0].mxu0
        %v5454 = vadd.f32 %v5131, %v5453
        %v5455 = vpop.f32.mrb[0].mxu0
        %5456 = vdwg.mxu0
        %v5457 = vmax.f32 %v5299, 0.0
        %v5458 = vmax.f32 %v5304, 0.0
        %v5459 = vmax.f32 %v5309, 0.0
        %v5460 = vmax.f32 %v5314, 0.0
        %v5461 = vmax.f32 %v5319, 0.0
        %v5462 = vmax.f32 %v5324, 0.0
        %v5463 = vmax.f32 %v5329, 0.0
        %v5464 = vmax.f32 %v5334, 0.0
        %v5465 = vmax.f32 %v5339, 0.0
        %v5466 = vmax.f32 %v5344, 0.0
        %v5467 = vmax.f32 %v5349, 0.0
        %v5468 = vmax.f32 %v5354, 0.0
        %v5469 = vmax.f32 %v5359, 0.0
        %v5470 = vmax.f32 %v5364, 0.0
        %v5471 = vmax.f32 %v5369, 0.0
        %v5472 = vmax.f32 %v5374, 0.0
        %v5473 = vmax.f32 %v5379, 0.0
        %v5474 = vmax.f32 %v5384, 0.0
        %v5475 = vmax.f32 %v5389, 0.0
        %v5476 = vmax.f32 %v5394, 0.0
        %v5477 = vmax.f32 %v5399, 0.0
        %v5478 = vmax.f32 %v5404, 0.0
        %v5479 = vmax.f32 %v5409, 0.0
        %v5480 = vmax.f32 %v5414, 0.0
        %v5481 = vmax.f32 %v5419, 0.0
        %v5482 = vmax.f32 %v5424, 0.0
        %v5483 = vmax.f32 %v5429, 0.0
        %v5484 = vmax.f32 %v5434, 0.0
        %v5485 = vmax.f32 %v5439, 0.0
        %v5486 = vmax.f32 %v5444, 0.0
        %v5487 = vmax.f32 %v5449, 0.0
        %v5488 = vmax.f32 %v5454, 0.0
        %5521 = vrot.lane.b32.xlu0 %v2439, 8
        %v5522 = vpop.permute.xlu0 %5521
        %5523 = vrot.lane.b32.xlu0 %v2440, 8
        %v5524 = vpop.permute.xlu0 %5523
        %5525 = vrot.lane.b32.xlu0 %v2441, 8
        %v5526 = vpop.permute.xlu0 %5525
        %5527 = vrot.lane.b32.xlu0 %v2442, 8
        %v5528 = vpop.permute.xlu0 %5527
        %5529 = vrot.lane.b32.xlu0 %v2443, 8
        %v5530 = vpop.permute.xlu0 %5529
        %5531 = vrot.lane.b32.xlu0 %v2444, 8
        %v5532 = vpop.permute.xlu0 %5531
        %5533 = vrot.lane.b32.xlu0 %v2445, 8
        %v5534 = vpop.permute.xlu0 %5533
        %5535 = vrot.lane.b32.xlu0 %v2446, 8
        %v5536 = vpop.permute.xlu0 %5535
        %5537 = vrot.lane.b32.xlu0 %v2447, 8
        %v5538 = vpop.permute.xlu0 %5537
        %5539 = vrot.lane.b32.xlu0 %v2448, 8
        %v5540 = vpop.permute.xlu0 %5539
        %5541 = vrot.lane.b32.xlu0 %v2449, 8
        %v5542 = vpop.permute.xlu0 %5541
        %5543 = vrot.lane.b32.xlu0 %v2450, 8
        %v5544 = vpop.permute.xlu0 %5543
        %5545 = vrot.lane.b32.xlu0 %v2451, 8
        %v5546 = vpop.permute.xlu0 %5545
        %5547 = vrot.lane.b32.xlu0 %v2452, 8
        %v5548 = vpop.permute.xlu0 %5547
        %5549 = vrot.lane.b32.xlu0 %v2453, 8
        %v5550 = vpop.permute.xlu0 %5549
        %5551 = vrot.lane.b32.xlu0 %v2454, 8
        %v5552 = vpop.permute.xlu0 %5551
        %5553 = vrot.lane.b32.xlu0 %v2455, 8
        %v5554 = vpop.permute.xlu0 %5553
        %5555 = vrot.lane.b32.xlu0 %v2456, 8
        %v5556 = vpop.permute.xlu0 %5555
        %5557 = vrot.lane.b32.xlu0 %v2457, 8
        %v5558 = vpop.permute.xlu0 %5557
        %5559 = vrot.lane.b32.xlu0 %v2458, 8
        %v5560 = vpop.permute.xlu0 %5559
        %5561 = vrot.lane.b32.xlu0 %v2459, 8
        %v5562 = vpop.permute.xlu0 %5561
        %5563 = vrot.lane.b32.xlu0 %v2460, 8
        %v5564 = vpop.permute.xlu0 %5563
        %5565 = vrot.lane.b32.xlu0 %v2461, 8
        %v5566 = vpop.permute.xlu0 %5565
        %5567 = vrot.lane.b32.xlu0 %v2462, 8
        %v5568 = vpop.permute.xlu0 %5567
        %5569 = vrot.lane.b32.xlu0 %v2463, 8
        %v5570 = vpop.permute.xlu0 %5569
        %5571 = vrot.lane.b32.xlu0 %v2464, 8
        %v5572 = vpop.permute.xlu0 %5571
        %5573 = vrot.lane.b32.xlu0 %v2465, 8
        %v5574 = vpop.permute.xlu0 %5573
        %5575 = vrot.lane.b32.xlu0 %v2466, 8
        %v5576 = vpop.permute.xlu0 %5575
        %5577 = vrot.lane.b32.xlu0 %v2467, 8
        %v5578 = vpop.permute.xlu0 %5577
        %5579 = vrot.lane.b32.xlu0 %v2468, 8
        %v5580 = vpop.permute.xlu0 %5579
        %5581 = vrot.lane.b32.xlu0 %v2469, 8
        %v5582 = vpop.permute.xlu0 %5581
        %5583 = vrot.lane.b32.xlu0 %v2470, 8
        %v5584 = vpop.permute.xlu0 %5583
        %5649 = vrot.lane.b32.xlu0 %v4564, 16
        %v5650 = vpop.permute.xlu0 %5649
        %5651 = vrot.lane.b32.xlu0 %v4565, 16
        %v5652 = vpop.permute.xlu0 %5651
        %5653 = vrot.lane.b32.xlu0 %v4566, 16
        %v5654 = vpop.permute.xlu0 %5653
        %5655 = vrot.lane.b32.xlu0 %v4567, 16
        %v5656 = vpop.permute.xlu0 %5655
        %5657 = vrot.lane.b32.xlu0 %v4568, 16
        %v5658 = vpop.permute.xlu0 %5657
        %5659 = vrot.lane.b32.xlu0 %v4569, 16
        %v5660 = vpop.permute.xlu0 %5659
        %5661 = vrot.lane.b32.xlu0 %v4570, 16
        %v5662 = vpop.permute.xlu0 %5661
        %5663 = vrot.lane.b32.xlu0 %v4571, 16
        %v5664 = vpop.permute.xlu0 %5663
        %5665 = vrot.lane.b32.xlu0 %v4572, 16
        %v5666 = vpop.permute.xlu0 %5665
        %5667 = vrot.lane.b32.xlu0 %v4573, 16
        %v5668 = vpop.permute.xlu0 %5667
        %5669 = vrot.lane.b32.xlu0 %v4574, 16
        %v5670 = vpop.permute.xlu0 %5669
        %5671 = vrot.lane.b32.xlu0 %v4575, 16
        %v5672 = vpop.permute.xlu0 %5671
        %5673 = vrot.lane.b32.xlu0 %v4576, 16
        %v5674 = vpop.permute.xlu0 %5673
        %5675 = vrot.lane.b32.xlu0 %v4577, 16
        %v5676 = vpop.permute.xlu0 %5675
        %5677 = vrot.lane.b32.xlu0 %v4578, 16
        %v5678 = vpop.permute.xlu0 %5677
        %5679 = vrot.lane.b32.xlu0 %v4579, 16
        %v5680 = vpop.permute.xlu0 %5679
        %5681 = vrot.lane.b32.xlu0 %v4580, 16
        %v5682 = vpop.permute.xlu0 %5681
        %5683 = vrot.lane.b32.xlu0 %v4581, 16
        %v5684 = vpop.permute.xlu0 %5683
        %5685 = vrot.lane.b32.xlu0 %v4582, 16
        %v5686 = vpop.permute.xlu0 %5685
        %5687 = vrot.lane.b32.xlu0 %v4583, 16
        %v5688 = vpop.permute.xlu0 %5687
        %5689 = vrot.lane.b32.xlu0 %v4584, 16
        %v5690 = vpop.permute.xlu0 %5689
        %5691 = vrot.lane.b32.xlu0 %v4585, 16
        %v5692 = vpop.permute.xlu0 %5691
        %5693 = vrot.lane.b32.xlu0 %v4586, 16
        %v5694 = vpop.permute.xlu0 %5693
        %5695 = vrot.lane.b32.xlu0 %v4587, 16
        %v5696 = vpop.permute.xlu0 %5695
        %5697 = vrot.lane.b32.xlu0 %v4588, 16
        %v5698 = vpop.permute.xlu0 %5697
        %5699 = vrot.lane.b32.xlu0 %v4589, 16
        %v5700 = vpop.permute.xlu0 %5699
        %5701 = vrot.lane.b32.xlu0 %v4590, 16
        %v5702 = vpop.permute.xlu0 %5701
        %5703 = vrot.lane.b32.xlu0 %v4591, 16
        %v5704 = vpop.permute.xlu0 %5703
        %5705 = vrot.lane.b32.xlu0 %v4592, 16
        %v5706 = vpop.permute.xlu0 %5705
        %5707 = vrot.lane.b32.xlu0 %v4593, 16
        %v5708 = vpop.permute.xlu0 %5707
        %5709 = vrot.lane.b32.xlu0 %v4594, 16
        %v5710 = vpop.permute.xlu0 %5709
        %5711 = vrot.lane.b32.xlu0 %v4595, 16
        %v5712 = vpop.permute.xlu0 %5711
        %5777 = vrot.lane.b32.xlu0 %v5457, 24
        %v5778 = vpop.permute.xlu0 %5777
        %5779 = vrot.lane.b32.xlu0 %v5458, 24
        %v5780 = vpop.permute.xlu0 %5779
        %5781 = vrot.lane.b32.xlu0 %v5459, 24
        %v5782 = vpop.permute.xlu0 %5781
        %5783 = vrot.lane.b32.xlu0 %v5460, 24
        %v5784 = vpop.permute.xlu0 %5783
        %5785 = vrot.lane.b32.xlu0 %v5461, 24
        %v5786 = vpop.permute.xlu0 %5785
        %5787 = vrot.lane.b32.xlu0 %v5462, 24
        %v5788 = vpop.permute.xlu0 %5787
        %5789 = vrot.lane.b32.xlu0 %v5463, 24
        %v5790 = vpop.permute.xlu0 %5789
        %5791 = vrot.lane.b32.xlu0 %v5464, 24
        %v5792 = vpop.permute.xlu0 %5791
        %5793 = vrot.lane.b32.xlu0 %v5465, 24
        %v5794 = vpop.permute.xlu0 %5793
        %5795 = vrot.lane.b32.xlu0 %v5466, 24
        %v5796 = vpop.permute.xlu0 %5795
        %5797 = vrot.lane.b32.xlu0 %v5467, 24
        %v5798 = vpop.permute.xlu0 %5797
        %5799 = vrot.lane.b32.xlu0 %v5468, 24
        %v5800 = vpop.permute.xlu0 %5799
        %5801 = vrot.lane.b32.xlu0 %v5469, 24
        %v5802 = vpop.permute.xlu0 %5801
        %5803 = vrot.lane.b32.xlu0 %v5470, 24
        %v5804 = vpop.permute.xlu0 %5803
        %5805 = vrot.lane.b32.xlu0 %v5471, 24
        %v5806 = vpop.permute.xlu0 %5805
        %5807 = vrot.lane.b32.xlu0 %v5472, 24
        %v5808 = vpop.permute.xlu0 %5807
        %5809 = vrot.lane.b32.xlu0 %v5473, 24
        %v5810 = vpop.permute.xlu0 %5809
        %5811 = vrot.lane.b32.xlu0 %v5474, 24
        %v5812 = vpop.permute.xlu0 %5811
        %5813 = vrot.lane.b32.xlu0 %v5475, 24
        %v5814 = vpop.permute.xlu0 %5813
        %5815 = vrot.lane.b32.xlu0 %v5476, 24
        %v5816 = vpop.permute.xlu0 %5815
        %5817 = vrot.lane.b32.xlu0 %v5477, 24
        %v5818 = vpop.permute.xlu0 %5817
        %5819 = vrot.lane.b32.xlu0 %v5478, 24
        %v5820 = vpop.permute.xlu0 %5819
        %5821 = vrot.lane.b32.xlu0 %v5479, 24
        %v5822 = vpop.permute.xlu0 %5821
        %5823 = vrot.lane.b32.xlu0 %v5480, 24
        %v5824 = vpop.permute.xlu0 %5823
        %5825 = vrot.lane.b32.xlu0 %v5481, 24
        %v5826 = vpop.permute.xlu0 %5825
        %5827 = vrot.lane.b32.xlu0 %v5482, 24
        %v5828 = vpop.permute.xlu0 %5827
        %5829 = vrot.lane.b32.xlu0 %v5483, 24
        %v5830 = vpop.permute.xlu0 %5829
        %5831 = vrot.lane.b32.xlu0 %v5484, 24
        %v5832 = vpop.permute.xlu0 %5831
        %5833 = vrot.lane.b32.xlu0 %v5485, 24
        %v5834 = vpop.permute.xlu0 %5833
        %5835 = vrot.lane.b32.xlu0 %v5486, 24
        %v5836 = vpop.permute.xlu0 %5835
        %5837 = vrot.lane.b32.xlu0 %v5487, 24
        %v5838 = vpop.permute.xlu0 %5837
        %5839 = vrot.lane.b32.xlu0 %v5488, 24
        %v5840 = vpop.permute.xlu0 %5839
        %v5873 = vsel %vm1741, %v877, %v5522
        %v5874 = vsel %vm1741, %v878, %v5524
        %v5875 = vsel %vm1741, %v879, %v5526
        %v5876 = vsel %vm1741, %v880, %v5528
        %v5877 = vsel %vm1741, %v881, %v5530
        %v5878 = vsel %vm1741, %v882, %v5532
        %v5879 = vsel %vm1741, %v883, %v5534
        %v5880 = vsel %vm1741, %v884, %v5536
        %v5881 = vsel %vm1741, %v885, %v5538
        %v5882 = vsel %vm1741, %v886, %v5540
        %v5883 = vsel %vm1741, %v887, %v5542
        %v5884 = vsel %vm1741, %v888, %v5544
        %v5885 = vsel %vm1741, %v889, %v5546
        %v5886 = vsel %vm1741, %v890, %v5548
        %v5887 = vsel %vm1741, %v891, %v5550
        %v5888 = vsel %vm1741, %v892, %v5552
        %v5889 = vsel %vm1741, %v893, %v5554
        %v5890 = vsel %vm1741, %v894, %v5556
        %v5891 = vsel %vm1741, %v895, %v5558
        %v5892 = vsel %vm1741, %v896, %v5560
        %v5893 = vsel %vm1741, %v897, %v5562
        %v5894 = vsel %vm1741, %v898, %v5564
        %v5895 = vsel %vm1741, %v899, %v5566
        %v5896 = vsel %vm1741, %v900, %v5568
        %v5897 = vsel %vm1741, %v901, %v5570
        %v5898 = vsel %vm1741, %v902, %v5572
        %v5899 = vsel %vm1741, %v903, %v5574
        %v5900 = vsel %vm1741, %v904, %v5576
        %v5901 = vsel %vm1741, %v905, %v5578
        %v5902 = vsel %vm1741, %v906, %v5580
        %v5903 = vsel %vm1741, %v907, %v5582
        %v5904 = vsel %vm1741, %v908, %v5584
        %v5905 = vsel %vm3592, %v5873, %v5650
        %v5906 = vsel %vm3592, %v5874, %v5652
        %v5907 = vsel %vm3592, %v5875, %v5654
        %v5908 = vsel %vm3592, %v5876, %v5656
        %v5909 = vsel %vm3592, %v5877, %v5658
        %v5910 = vsel %vm3592, %v5878, %v5660
        %v5911 = vsel %vm3592, %v5879, %v5662
        %v5912 = vsel %vm3592, %v5880, %v5664
        %v5913 = vsel %vm3592, %v5881, %v5666
        %v5914 = vsel %vm3592, %v5882, %v5668
        %v5915 = vsel %vm3592, %v5883, %v5670
        %v5916 = vsel %vm3592, %v5884, %v5672
        %v5917 = vsel %vm3592, %v5885, %v5674
        %v5918 = vsel %vm3592, %v5886, %v5676
        %v5919 = vsel %vm3592, %v5887, %v5678
        %v5920 = vsel %vm3592, %v5888, %v5680
        %v5921 = vsel %vm3592, %v5889, %v5682
        %v5922 = vsel %vm3592, %v5890, %v5684
        %v5923 = vsel %vm3592, %v5891, %v5686
        %v5924 = vsel %vm3592, %v5892, %v5688
        %v5925 = vsel %vm3592, %v5893, %v5690
        %v5926 = vsel %vm3592, %v5894, %v5692
        %v5927 = vsel %vm3592, %v5895, %v5694
        %v5928 = vsel %vm3592, %v5896, %v5696
        %v5929 = vsel %vm3592, %v5897, %v5698
        %v5930 = vsel %vm3592, %v5898, %v5700
        %v5931 = vsel %vm3592, %v5899, %v5702
        %v5932 = vsel %vm3592, %v5900, %v5704
        %v5933 = vsel %vm3592, %v5901, %v5706
        %v5934 = vsel %vm3592, %v5902, %v5708
        %v5935 = vsel %vm3592, %v5903, %v5710
        %v5936 = vsel %vm3592, %v5904, %v5712
        %v5937 = vsel %vm2037, %v5905, %v5778
        %v5938 = vsel %vm2037, %v5906, %v5780
        %v5939 = vsel %vm2037, %v5907, %v5782
        %v5940 = vsel %vm2037, %v5908, %v5784
        %v5941 = vsel %vm2037, %v5909, %v5786
        %v5942 = vsel %vm2037, %v5910, %v5788
        %v5943 = vsel %vm2037, %v5911, %v5790
        %v5944 = vsel %vm2037, %v5912, %v5792
        %v5945 = vsel %vm2037, %v5913, %v5794
        %v5946 = vsel %vm2037, %v5914, %v5796
        %v5947 = vsel %vm2037, %v5915, %v5798
        %v5948 = vsel %vm2037, %v5916, %v5800
        %v5949 = vsel %vm2037, %v5917, %v5802
        %v5950 = vsel %vm2037, %v5918, %v5804
        %v5951 = vsel %vm2037, %v5919, %v5806
        %v5952 = vsel %vm2037, %v5920, %v5808
        %v5953 = vsel %vm2037, %v5921, %v5810
        %v5954 = vsel %vm2037, %v5922, %v5812
        %v5955 = vsel %vm2037, %v5923, %v5814
        %v5956 = vsel %vm2037, %v5924, %v5816
        %v5957 = vsel %vm2037, %v5925, %v5818
        %v5958 = vsel %vm2037, %v5926, %v5820
        %v5959 = vsel %vm2037, %v5927, %v5822
        %v5960 = vsel %vm2037, %v5928, %v5824
        %v5961 = vsel %vm2037, %v5929, %v5826
        %v5962 = vsel %vm2037, %v5930, %v5828
        %v5963 = vsel %vm2037, %v5931, %v5830
        %v5964 = vsel %vm2037, %v5932, %v5832
        %v5965 = vsel %vm2037, %v5933, %v5834
        %v5966 = vsel %vm2037, %v5934, %v5836
        %v5967 = vsel %vm2037, %v5935, %v5838
        %v5968 = vsel %vm2037, %v5936, %v5840
        %vm5969 = vcmask 261120
        %5970 = vst.msk [vmem:[%s328] sm:$0xff] %vm5969, %v5937
        %5971 = vst.msk [vmem:[%s328 + $0x8] sm:$0xff] %vm5969, %v5938
        %5972 = vst.msk [vmem:[%s328 + $0x10] sm:$0xff] %vm5969, %v5939
        %5973 = vst.msk [vmem:[%s328 + $0x18] sm:$0xff] %vm5969, %v5940
        %5974 = vst.msk [vmem:[%s328 + $0x20] sm:$0xff] %vm5969, %v5941
        %5975 = vst.msk [vmem:[%s328 + $0x28] sm:$0xff] %vm5969, %v5942
        %5976 = vst.msk [vmem:[%s328 + $0x30] sm:$0xff] %vm5969, %v5943
        %5977 = vst.msk [vmem:[%s328 + $0x38] sm:$0xff] %vm5969, %v5944
        %5978 = vst.msk [vmem:[%s328 + $0x40] sm:$0xff] %vm5969, %v5945
        %5979 = vst.msk [vmem:[%s328 + $0x48] sm:$0xff] %vm5969, %v5946
        %5980 = vst.msk [vmem:[%s328 + $0x50] sm:$0xff] %vm5969, %v5947
        %5981 = vst.msk [vmem:[%s328 + $0x58] sm:$0xff] %vm5969, %v5948
        %5982 = vst.msk [vmem:[%s328 + $0x60] sm:$0xff] %vm5969, %v5949
        %5983 = vst.msk [vmem:[%s328 + $0x68] sm:$0xff] %vm5969, %v5950
        %5984 = vst.msk [vmem:[%s328 + $0x70] sm:$0xff] %vm5969, %v5951
        %5985 = vst.msk [vmem:[%s328 + $0x78] sm:$0xff] %vm5969, %v5952
        %5986 = vst.msk [vmem:[%s328 + $0x80] sm:$0xff] %vm5969, %v5953
        %5987 = vst.msk [vmem:[%s328 + $0x88] sm:$0xff] %vm5969, %v5954
        %5988 = vst.msk [vmem:[%s328 + $0x90] sm:$0xff] %vm5969, %v5955
        %5989 = vst.msk [vmem:[%s328 + $0x98] sm:$0xff] %vm5969, %v5956
        %5990 = vst.msk [vmem:[%s328 + $0xa0] sm:$0xff] %vm5969, %v5957
        %5991 = vst.msk [vmem:[%s328 + $0xa8] sm:$0xff] %vm5969, %v5958
        %5992 = vst.msk [vmem:[%s328 + $0xb0] sm:$0xff] %vm5969, %v5959
        %5993 = vst.msk [vmem:[%s328 + $0xb8] sm:$0xff] %vm5969, %v5960
        %5994 = vst.msk [vmem:[%s328 + $0xc0] sm:$0xff] %vm5969, %v5961
        %5995 = vst.msk [vmem:[%s328 + $0xc8] sm:$0xff] %vm5969, %v5962
        %5996 = vst.msk [vmem:[%s328 + $0xd0] sm:$0xff] %vm5969, %v5963
        %5997 = vst.msk [vmem:[%s328 + $0xd8] sm:$0xff] %vm5969, %v5964
        %5998 = vst.msk [vmem:[%s328 + $0xe0] sm:$0xff] %vm5969, %v5965
        %5999 = vst.msk [vmem:[%s328 + $0xe8] sm:$0xff] %vm5969, %v5966
        %6000 = vst.msk [vmem:[%s328 + $0xf0] sm:$0xff] %vm5969, %v5967
        %6001 = vst.msk [vmem:[%s328 + $0xf8] sm:$0xff] %vm5969, %v5968
        %s6002 = scalar_lea.vmem %s334, 256
        %v6003 = vld [vmem:[%s6002] sm:$0xff]
        %v6004 = vld [vmem:[%s6002 + $0x8] sm:$0xff]
        %v6005 = vld [vmem:[%s6002 + $0x10] sm:$0xff]
        %v6006 = vld [vmem:[%s6002 + $0x18] sm:$0xff]
        %v6007 = vld [vmem:[%s6002 + $0x20] sm:$0xff]
        %v6008 = vld [vmem:[%s6002 + $0x28] sm:$0xff]
        %v6009 = vld [vmem:[%s6002 + $0x30] sm:$0xff]
        %v6010 = vld [vmem:[%s6002 + $0x38] sm:$0xff]
        %v6011 = vld [vmem:[%s6002 + $0x40] sm:$0xff]
        %v6012 = vld [vmem:[%s6002 + $0x48] sm:$0xff]
        %v6013 = vld [vmem:[%s6002 + $0x50] sm:$0xff]
        %v6014 = vld [vmem:[%s6002 + $0x58] sm:$0xff]
        %v6015 = vld [vmem:[%s6002 + $0x60] sm:$0xff]
        %v6016 = vld [vmem:[%s6002 + $0x68] sm:$0xff]
        %v6017 = vld [vmem:[%s6002 + $0x70] sm:$0xff]
        %v6018 = vld [vmem:[%s6002 + $0x78] sm:$0xff]
        %v6019 = vld [vmem:[%s6002 + $0x80] sm:$0xff]
        %v6020 = vld [vmem:[%s6002 + $0x88] sm:$0xff]
        %v6021 = vld [vmem:[%s6002 + $0x90] sm:$0xff]
        %v6022 = vld [vmem:[%s6002 + $0x98] sm:$0xff]
        %v6023 = vld [vmem:[%s6002 + $0xa0] sm:$0xff]
        %v6024 = vld [vmem:[%s6002 + $0xa8] sm:$0xff]
        %v6025 = vld [vmem:[%s6002 + $0xb0] sm:$0xff]
        %v6026 = vld [vmem:[%s6002 + $0xb8] sm:$0xff]
        %v6027 = vld [vmem:[%s6002 + $0xc0] sm:$0xff]
        %v6028 = vld [vmem:[%s6002 + $0xc8] sm:$0xff]
        %v6029 = vld [vmem:[%s6002 + $0xd0] sm:$0xff]
        %v6030 = vld [vmem:[%s6002 + $0xd8] sm:$0xff]
        %v6031 = vld [vmem:[%s6002 + $0xe0] sm:$0xff]
        %v6032 = vld [vmem:[%s6002 + $0xe8] sm:$0xff]
        %v6033 = vld [vmem:[%s6002 + $0xf0] sm:$0xff]
        %v6034 = vld [vmem:[%s6002 + $0xf8] sm:$0xff]
        %v6035 = vld [vmem:[%s1] sm:$0xf]
        %v6037 = vsel %vm337, %v6003, 0
        %v6040 = vsel %vm337, %v6004, 0
        %v6043 = vsel %vm337, %v6005, 0
        %v6046 = vsel %vm337, %v6006, 0
        %v6049 = vsel %vm337, %v6007, 0
        %v6052 = vsel %vm337, %v6008, 0
        %v6055 = vsel %vm337, %v6009, 0
        %v6058 = vsel %vm337, %v6010, 0
        %v6061 = vsel %vm337, %v6011, 0
        %v6064 = vsel %vm337, %v6012, 0
        %v6067 = vsel %vm337, %v6013, 0
        %v6070 = vsel %vm337, %v6014, 0
        %v6073 = vsel %vm337, %v6015, 0
        %v6076 = vsel %vm337, %v6016, 0
        %v6079 = vsel %vm337, %v6017, 0
        %v6082 = vsel %vm337, %v6018, 0
        %v6085 = vsel %vm337, %v6019, 0
        %v6088 = vsel %vm337, %v6020, 0
        %v6091 = vsel %vm337, %v6021, 0
        %v6094 = vsel %vm337, %v6022, 0
        %v6097 = vsel %vm337, %v6023, 0
        %v6100 = vsel %vm337, %v6024, 0
        %v6103 = vsel %vm337, %v6025, 0
        %v6106 = vsel %vm337, %v6026, 0
        %v6109 = vsel %vm337, %v6027, 0
        %v6112 = vsel %vm337, %v6028, 0
        %v6115 = vsel %vm337, %v6029, 0
        %v6118 = vsel %vm337, %v6030, 0
        %v6121 = vsel %vm337, %v6031, 0
        %v6124 = vsel %vm337, %v6032, 0
        %v6127 = vsel %vm337, %v6033, 0
        %v6130 = vsel %vm337, %v6034, 0
        %v6133 = vsel %vm610, %v6035, 0
        %6135 = vmatprep.subr.mxu0 0.0
        %6136 = vmatpush1.msra.mxu0 %v6133
        %6137 = vmatprep.subr.mxu0 0.0
        %6138 = vmatpush1.msra.mxu0 0.0
        %6139 = vmatprep.subr.mxu0 0.0
        %6140 = vmatpush1.msra.mxu0 0.0
        %6141 = vmatprep.subr.mxu0 0.0
        %6142 = vmatpush1.msra.mxu0 0.0
        %6143 = vmatprep.subr.mxu0 0.0
        %6144 = vmatpush1.msra.mxu0 0.0
        %6145 = vmatprep.subr.mxu0 0.0
        %6146 = vmatpush1.msra.mxu0 0.0
        %6147 = vmatprep.subr.mxu0 0.0
        %6148 = vmatpush1.msra.mxu0 0.0
        %6149 = vmatprep.subr.mxu0 0.0
        %6150 = vmatpush1.msra.mxu0 0.0
        %6151 = vmatprep.subr.mxu0 0.0
        %6152 = vmatpush1.msra.mxu0 0.0
        %6153 = vmatprep.subr.mxu0 0.0
        %6154 = vmatpush1.msra.mxu0 0.0
        %6155 = vmatprep.subr.mxu0 0.0
        %6156 = vmatpush1.msra.mxu0 0.0
        %6157 = vmatprep.subr.mxu0 0.0
        %6158 = vmatpush1.msra.mxu0 0.0
        %6159 = vmatprep.subr.mxu0 0.0
        %6160 = vmatpush1.msra.mxu0 0.0
        %6161 = vmatprep.subr.mxu0 0.0
        %6162 = vmatpush1.msra.mxu0 0.0
        %6163 = vmatprep.subr.mxu0 0.0
        %6164 = vmatpush1.msra.mxu0 0.0
        %6165 = vmatprep.subr.mxu0 0.0
        %6166 = vmatpush1.msra.mxu0 0.0
        %6167 = vmatprep.subr.mxu0 0.0
        %6168 = vmatpush1.msra.mxu0 0.0
        %6169 = vmatprep.subr.mxu0 0.0
        %6170 = vmatpush1.msra.mxu0 0.0
        %6171 = vmatprep.subr.mxu0 0.0
        %6172 = vmatpush1.msra.mxu0 0.0
        %6173 = vmatprep.subr.mxu0 0.0
        %6174 = vmatpush1.msra.mxu0 0.0
        %6175 = vmatprep.subr.mxu0 0.0
        %6176 = vmatpush1.msra.mxu0 0.0
        %6177 = vmatprep.subr.mxu0 0.0
        %6178 = vmatpush1.msra.mxu0 0.0
        %6179 = vmatprep.subr.mxu0 0.0
        %6180 = vmatpush1.msra.mxu0 0.0
        %6181 = vmatprep.subr.mxu0 0.0
        %6182 = vmatpush1.msra.mxu0 0.0
        %6183 = vmatprep.subr.mxu0 0.0
        %6184 = vmatpush1.msra.mxu0 0.0
        %6185 = vmatprep.subr.mxu0 0.0
        %6186 = vmatpush1.msra.mxu0 0.0
        %6187 = vmatprep.subr.mxu0 0.0
        %6188 = vmatpush1.msra.mxu0 0.0
        %6189 = vmatprep.subr.mxu0 0.0
        %6190 = vmatpush1.msra.mxu0 0.0
        %6191 = vmatprep.subr.mxu0 0.0
        %6192 = vmatpush1.msra.mxu0 0.0
        %6193 = vmatprep.subr.mxu0 0.0
        %6194 = vmatpush1.msra.mxu0 0.0
        %6195 = vmatprep.subr.mxu0 0.0
        %6196 = vmatpush1.msra.mxu0 0.0
        %6197 = vmatprep.subr.mxu0 0.0
        %6198 = vmatpush1.msra.mxu0 0.0
        %6199 = vmatprep.mubr.f32.mxu0 0.0
        %6200 = vmatmul.mubr.f32.gmra.mrb[0].mxu0 %v6037
        %v6201 = vpop.f32.mrb[0].mxu0
        %v6202 = vadd.f32 0.0, %v6201
        %v6203 = vpop.f32.mrb[0].mxu0
        %6204 = vmatprep.mubr.f32.mxu0 0.0
        %6205 = vmatmul.mubr.f32.gmra.mrb[0].mxu0 %v6040
        %v6206 = vpop.f32.mrb[0].mxu0
        %v6207 = vadd.f32 0.0, %v6206
        %v6208 = vpop.f32.mrb[0].mxu0
        %6209 = vmatprep.mubr.f32.mxu0 0.0
        %6210 = vmatmul.mubr.f32.gmra.mrb[0].mxu0 %v6043
        %v6211 = vpop.f32.mrb[0].mxu0
        %v6212 = vadd.f32 0.0, %v6211
        %v6213 = vpop.f32.mrb[0].mxu0
        %6214 = vmatprep.mubr.f32.mxu0 0.0
        %6215 = vmatmul.mubr.f32.gmra.mrb[0].mxu0 %v6046
        %v6216 = vpop.f32.mrb[0].mxu0
        %v6217 = vadd.f32 0.0, %v6216
        %v6218 = vpop.f32.mrb[0].mxu0
        %6219 = vmatprep.mubr.f32.mxu0 0.0
        %6220 = vmatmul.mubr.f32.gmra.mrb[0].mxu0 %v6049
        %v6221 = vpop.f32.mrb[0].mxu0
        %v6222 = vadd.f32 0.0, %v6221
        %v6223 = vpop.f32.mrb[0].mxu0
        %6224 = vmatprep.mubr.f32.mxu0 0.0
        %6225 = vmatmul.mubr.f32.gmra.mrb[0].mxu0 %v6052
        %v6226 = vpop.f32.mrb[0].mxu0
        %v6227 = vadd.f32 0.0, %v6226
        %v6228 = vpop.f32.mrb[0].mxu0
        %6229 = vmatprep.mubr.f32.mxu0 0.0
        %6230 = vmatmul.mubr.f32.gmra.mrb[0].mxu0 %v6055
        %v6231 = vpop.f32.mrb[0].mxu0
        %v6232 = vadd.f32 0.0, %v6231
        %v6233 = vpop.f32.mrb[0].mxu0
        %6234 = vmatprep.mubr.f32.mxu0 0.0
        %6235 = vmatmul.mubr.f32.gmra.mrb[0].mxu0 %v6058
        %v6236 = vpop.f32.mrb[0].mxu0
        %v6237 = vadd.f32 0.0, %v6236
        %v6238 = vpop.f32.mrb[0].mxu0
        %6239 = vmatprep.mubr.f32.mxu0 0.0
        %6240 = vmatmul.mubr.f32.gmra.mrb[0].mxu0 %v6061
        %v6241 = vpop.f32.mrb[0].mxu0
        %v6242 = vadd.f32 0.0, %v6241
        %v6243 = vpop.f32.mrb[0].mxu0
        %6244 = vmatprep.mubr.f32.mxu0 0.0
        %6245 = vmatmul.mubr.f32.gmra.mrb[0].mxu0 %v6064
        %v6246 = vpop.f32.mrb[0].mxu0
        %v6247 = vadd.f32 0.0, %v6246
        %v6248 = vpop.f32.mrb[0].mxu0
        %6249 = vmatprep.mubr.f32.mxu0 0.0
        %6250 = vmatmul.mubr.f32.gmra.mrb[0].mxu0 %v6067
        %v6251 = vpop.f32.mrb[0].mxu0
        %v6252 = vadd.f32 0.0, %v6251
        %v6253 = vpop.f32.mrb[0].mxu0
        %6254 = vmatprep.mubr.f32.mxu0 0.0
        %6255 = vmatmul.mubr.f32.gmra.mrb[0].mxu0 %v6070
        %v6256 = vpop.f32.mrb[0].mxu0
        %v6257 = vadd.f32 0.0, %v6256
        %v6258 = vpop.f32.mrb[0].mxu0
        %6259 = vmatprep.mubr.f32.mxu0 0.0
        %6260 = vmatmul.mubr.f32.gmra.mrb[0].mxu0 %v6073
        %v6261 = vpop.f32.mrb[0].mxu0
        %v6262 = vadd.f32 0.0, %v6261
        %v6263 = vpop.f32.mrb[0].mxu0
        %6264 = vmatprep.mubr.f32.mxu0 0.0
        %6265 = vmatmul.mubr.f32.gmra.mrb[0].mxu0 %v6076
        %v6266 = vpop.f32.mrb[0].mxu0
        %v6267 = vadd.f32 0.0, %v6266
        %v6268 = vpop.f32.mrb[0].mxu0
        %6269 = vmatprep.mubr.f32.mxu0 0.0
        %6270 = vmatmul.mubr.f32.gmra.mrb[0].mxu0 %v6079
        %v6271 = vpop.f32.mrb[0].mxu0
        %v6272 = vadd.f32 0.0, %v6271
        %v6273 = vpop.f32.mrb[0].mxu0
        %6274 = vmatprep.mubr.f32.mxu0 0.0
        %6275 = vmatmul.mubr.f32.gmra.mrb[0].mxu0 %v6082
        %v6276 = vpop.f32.mrb[0].mxu0
        %v6277 = vadd.f32 0.0, %v6276
        %v6278 = vpop.f32.mrb[0].mxu0
        %6279 = vmatprep.mubr.f32.mxu0 0.0
        %6280 = vmatmul.mubr.f32.gmra.mrb[0].mxu0 %v6085
        %v6281 = vpop.f32.mrb[0].mxu0
        %v6282 = vadd.f32 0.0, %v6281
        %v6283 = vpop.f32.mrb[0].mxu0
        %6284 = vmatprep.mubr.f32.mxu0 0.0
        %6285 = vmatmul.mubr.f32.gmra.mrb[0].mxu0 %v6088
        %v6286 = vpop.f32.mrb[0].mxu0
        %v6287 = vadd.f32 0.0, %v6286
        %v6288 = vpop.f32.mrb[0].mxu0
        %6289 = vmatprep.mubr.f32.mxu0 0.0
        %6290 = vmatmul.mubr.f32.gmra.mrb[0].mxu0 %v6091
        %v6291 = vpop.f32.mrb[0].mxu0
        %v6292 = vadd.f32 0.0, %v6291
        %v6293 = vpop.f32.mrb[0].mxu0
        %6294 = vmatprep.mubr.f32.mxu0 0.0
        %6295 = vmatmul.mubr.f32.gmra.mrb[0].mxu0 %v6094
        %v6296 = vpop.f32.mrb[0].mxu0
        %v6297 = vadd.f32 0.0, %v6296
        %v6298 = vpop.f32.mrb[0].mxu0
        %6299 = vmatprep.mubr.f32.mxu0 0.0
        %6300 = vmatmul.mubr.f32.gmra.mrb[0].mxu0 %v6097
        %v6301 = vpop.f32.mrb[0].mxu0
        %v6302 = vadd.f32 0.0, %v6301
        %v6303 = vpop.f32.mrb[0].mxu0
        %6304 = vmatprep.mubr.f32.mxu0 0.0
        %6305 = vmatmul.mubr.f32.gmra.mrb[0].mxu0 %v6100
        %v6306 = vpop.f32.mrb[0].mxu0
        %v6307 = vadd.f32 0.0, %v6306
        %v6308 = vpop.f32.mrb[0].mxu0
        %6309 = vmatprep.mubr.f32.mxu0 0.0
        %6310 = vmatmul.mubr.f32.gmra.mrb[0].mxu0 %v6103
        %v6311 = vpop.f32.mrb[0].mxu0
        %v6312 = vadd.f32 0.0, %v6311
        %v6313 = vpop.f32.mrb[0].mxu0
        %6314 = vmatprep.mubr.f32.mxu0 0.0
        %6315 = vmatmul.mubr.f32.gmra.mrb[0].mxu0 %v6106
        %v6316 = vpop.f32.mrb[0].mxu0
        %v6317 = vadd.f32 0.0, %v6316
        %v6318 = vpop.f32.mrb[0].mxu0
        %6319 = vmatprep.mubr.f32.mxu0 0.0
        %6320 = vmatmul.mubr.f32.gmra.mrb[0].mxu0 %v6109
        %v6321 = vpop.f32.mrb[0].mxu0
        %v6322 = vadd.f32 0.0, %v6321
        %v6323 = vpop.f32.mrb[0].mxu0
        %6324 = vmatprep.mubr.f32.mxu0 0.0
        %6325 = vmatmul.mubr.f32.gmra.mrb[0].mxu0 %v6112
        %v6326 = vpop.f32.mrb[0].mxu0
        %v6327 = vadd.f32 0.0, %v6326
        %v6328 = vpop.f32.mrb[0].mxu0
        %6329 = vmatprep.mubr.f32.mxu0 0.0
        %6330 = vmatmul.mubr.f32.gmra.mrb[0].mxu0 %v6115
        %v6331 = vpop.f32.mrb[0].mxu0
        %v6332 = vadd.f32 0.0, %v6331
        %v6333 = vpop.f32.mrb[0].mxu0
        %6334 = vmatprep.mubr.f32.mxu0 0.0
        %6335 = vmatmul.mubr.f32.gmra.mrb[0].mxu0 %v6118
        %v6336 = vpop.f32.mrb[0].mxu0
        %v6337 = vadd.f32 0.0, %v6336
        %v6338 = vpop.f32.mrb[0].mxu0
        %6339 = vmatprep.mubr.f32.mxu0 0.0
        %6340 = vmatmul.mubr.f32.gmra.mrb[0].mxu0 %v6121
        %v6341 = vpop.f32.mrb[0].mxu0
        %v6342 = vadd.f32 0.0, %v6341
        %v6343 = vpop.f32.mrb[0].mxu0
        %6344 = vmatprep.mubr.f32.mxu0 0.0
        %6345 = vmatmul.mubr.f32.gmra.mrb[0].mxu0 %v6124
        %v6346 = vpop.f32.mrb[0].mxu0
        %v6347 = vadd.f32 0.0, %v6346
        %v6348 = vpop.f32.mrb[0].mxu0
        %6349 = vmatprep.mubr.f32.mxu0 0.0
        %6350 = vmatmul.mubr.f32.gmra.mrb[0].mxu0 %v6127
        %v6351 = vpop.f32.mrb[0].mxu0
        %v6352 = vadd.f32 0.0, %v6351
        %v6353 = vpop.f32.mrb[0].mxu0
        %6354 = vmatprep.mubr.f32.mxu0 0.0
        %6355 = vmatmul.mubr.f32.gmra.mrb[0].mxu0 %v6130
        %v6356 = vpop.f32.mrb[0].mxu0
        %v6357 = vadd.f32 0.0, %v6356
        %v6358 = vpop.f32.mrb[0].mxu0
        %6359 = vdwg.mxu0
        %v6360 = vadd.f32 %v6202, %v843
        %v6361 = vadd.f32 %v6207, %v843
        %v6362 = vadd.f32 %v6212, %v843
        %v6363 = vadd.f32 %v6217, %v843
        %v6364 = vadd.f32 %v6222, %v843
        %v6365 = vadd.f32 %v6227, %v843
        %v6366 = vadd.f32 %v6232, %v843
        %v6367 = vadd.f32 %v6237, %v843
        %v6368 = vadd.f32 %v6242, %v843
        %v6369 = vadd.f32 %v6247, %v843
        %v6370 = vadd.f32 %v6252, %v843
        %v6371 = vadd.f32 %v6257, %v843
        %v6372 = vadd.f32 %v6262, %v843
        %v6373 = vadd.f32 %v6267, %v843
        %v6374 = vadd.f32 %v6272, %v843
        %v6375 = vadd.f32 %v6277, %v843
        %v6376 = vadd.f32 %v6282, %v843
        %v6377 = vadd.f32 %v6287, %v843
        %v6378 = vadd.f32 %v6292, %v843
        %v6379 = vadd.f32 %v6297, %v843
        %v6380 = vadd.f32 %v6302, %v843
        %v6381 = vadd.f32 %v6307, %v843
        %v6382 = vadd.f32 %v6312, %v843
        %v6383 = vadd.f32 %v6317, %v843
        %v6384 = vadd.f32 %v6322, %v843
        %v6385 = vadd.f32 %v6327, %v843
        %v6386 = vadd.f32 %v6332, %v843
        %v6387 = vadd.f32 %v6337, %v843
        %v6388 = vadd.f32 %v6342, %v843
        %v6389 = vadd.f32 %v6347, %v843
        %v6390 = vadd.f32 %v6352, %v843
        %v6391 = vadd.f32 %v6357, %v843
        %v6392 = vmax.f32 %v6360, 0.0
        %v6393 = vmax.f32 %v6361, 0.0
        %v6394 = vmax.f32 %v6362, 0.0
        %v6395 = vmax.f32 %v6363, 0.0
        %v6396 = vmax.f32 %v6364, 0.0
        %v6397 = vmax.f32 %v6365, 0.0
        %v6398 = vmax.f32 %v6366, 0.0
        %v6399 = vmax.f32 %v6367, 0.0
        %v6400 = vmax.f32 %v6368, 0.0
        %v6401 = vmax.f32 %v6369, 0.0
        %v6402 = vmax.f32 %v6370, 0.0
        %v6403 = vmax.f32 %v6371, 0.0
        %v6404 = vmax.f32 %v6372, 0.0
        %v6405 = vmax.f32 %v6373, 0.0
        %v6406 = vmax.f32 %v6374, 0.0
        %v6407 = vmax.f32 %v6375, 0.0
        %v6408 = vmax.f32 %v6376, 0.0
        %v6409 = vmax.f32 %v6377, 0.0
        %v6410 = vmax.f32 %v6378, 0.0
        %v6411 = vmax.f32 %v6379, 0.0
        %v6412 = vmax.f32 %v6380, 0.0
        %v6413 = vmax.f32 %v6381, 0.0
        %v6414 = vmax.f32 %v6382, 0.0
        %v6415 = vmax.f32 %v6383, 0.0
        %v6416 = vmax.f32 %v6384, 0.0
        %v6417 = vmax.f32 %v6385, 0.0
        %v6418 = vmax.f32 %v6386, 0.0
        %v6419 = vmax.f32 %v6387, 0.0
        %v6420 = vmax.f32 %v6388, 0.0
        %v6421 = vmax.f32 %v6389, 0.0
        %v6422 = vmax.f32 %v6390, 0.0
        %v6423 = vmax.f32 %v6391, 0.0
        %6456 = vrot.lane.b32.xlu0 %v6392, 120
        %v6457 = vpop.permute.xlu0 %6456
        %6458 = vrot.lane.b32.xlu0 %v6393, 120
        %v6459 = vpop.permute.xlu0 %6458
        %6460 = vrot.lane.b32.xlu0 %v6394, 120
        %v6461 = vpop.permute.xlu0 %6460
        %6462 = vrot.lane.b32.xlu0 %v6395, 120
        %v6463 = vpop.permute.xlu0 %6462
        %6464 = vrot.lane.b32.xlu0 %v6396, 120
        %v6465 = vpop.permute.xlu0 %6464
        %6466 = vrot.lane.b32.xlu0 %v6397, 120
        %v6467 = vpop.permute.xlu0 %6466
        %6468 = vrot.lane.b32.xlu0 %v6398, 120
        %v6469 = vpop.permute.xlu0 %6468
        %6470 = vrot.lane.b32.xlu0 %v6399, 120
        %v6471 = vpop.permute.xlu0 %6470
        %6472 = vrot.lane.b32.xlu0 %v6400, 120
        %v6473 = vpop.permute.xlu0 %6472
        %6474 = vrot.lane.b32.xlu0 %v6401, 120
        %v6475 = vpop.permute.xlu0 %6474
        %6476 = vrot.lane.b32.xlu0 %v6402, 120
        %v6477 = vpop.permute.xlu0 %6476
        %6478 = vrot.lane.b32.xlu0 %v6403, 120
        %v6479 = vpop.permute.xlu0 %6478
        %6480 = vrot.lane.b32.xlu0 %v6404, 120
        %v6481 = vpop.permute.xlu0 %6480
        %6482 = vrot.lane.b32.xlu0 %v6405, 120
        %v6483 = vpop.permute.xlu0 %6482
        %6484 = vrot.lane.b32.xlu0 %v6406, 120
        %v6485 = vpop.permute.xlu0 %6484
        %6486 = vrot.lane.b32.xlu0 %v6407, 120
        %v6487 = vpop.permute.xlu0 %6486
        %6488 = vrot.lane.b32.xlu0 %v6408, 120
        %v6489 = vpop.permute.xlu0 %6488
        %6490 = vrot.lane.b32.xlu0 %v6409, 120
        %v6491 = vpop.permute.xlu0 %6490
        %6492 = vrot.lane.b32.xlu0 %v6410, 120
        %v6493 = vpop.permute.xlu0 %6492
        %6494 = vrot.lane.b32.xlu0 %v6411, 120
        %v6495 = vpop.permute.xlu0 %6494
        %6496 = vrot.lane.b32.xlu0 %v6412, 120
        %v6497 = vpop.permute.xlu0 %6496
        %6498 = vrot.lane.b32.xlu0 %v6413, 120
        %v6499 = vpop.permute.xlu0 %6498
        %6500 = vrot.lane.b32.xlu0 %v6414, 120
        %v6501 = vpop.permute.xlu0 %6500
        %6502 = vrot.lane.b32.xlu0 %v6415, 120
        %v6503 = vpop.permute.xlu0 %6502
        %6504 = vrot.lane.b32.xlu0 %v6416, 120
        %v6505 = vpop.permute.xlu0 %6504
        %6506 = vrot.lane.b32.xlu0 %v6417, 120
        %v6507 = vpop.permute.xlu0 %6506
        %6508 = vrot.lane.b32.xlu0 %v6418, 120
        %v6509 = vpop.permute.xlu0 %6508
        %6510 = vrot.lane.b32.xlu0 %v6419, 120
        %v6511 = vpop.permute.xlu0 %6510
        %6512 = vrot.lane.b32.xlu0 %v6420, 120
        %v6513 = vpop.permute.xlu0 %6512
        %6514 = vrot.lane.b32.xlu0 %v6421, 120
        %v6515 = vpop.permute.xlu0 %6514
        %6516 = vrot.lane.b32.xlu0 %v6422, 120
        %v6517 = vpop.permute.xlu0 %6516
        %6518 = vrot.lane.b32.xlu0 %v6423, 120
        %v6519 = vpop.permute.xlu0 %6518
        %6552 = vst.msk [vmem:[%s1037 + $0x1] sm:$0xff] %vm337, %v6457
        %6553 = vst.msk [vmem:[%s1037 + $0x9] sm:$0xff] %vm337, %v6459
        %6554 = vst.msk [vmem:[%s1037 + $0x19] sm:$0xff] %vm337, %v6461
        %6555 = vst.msk [vmem:[%s1037 + $0x21] sm:$0xff] %vm337, %v6463
        %6556 = vst.msk [vmem:[%s1037 + $0x31] sm:$0xff] %vm337, %v6465
        %6557 = vst.msk [vmem:[%s1037 + $0x39] sm:$0xff] %vm337, %v6467
        %6558 = vst.msk [vmem:[%s1037 + $0x49] sm:$0xff] %vm337, %v6469
        %6559 = vst.msk [vmem:[%s1037 + $0x51] sm:$0xff] %vm337, %v6471
        %6560 = vst.msk [vmem:[%s1037 + $0x61] sm:$0xff] %vm337, %v6473
        %6561 = vst.msk [vmem:[%s1037 + $0x69] sm:$0xff] %vm337, %v6475
        %6562 = vst.msk [vmem:[%s1037 + $0x79] sm:$0xff] %vm337, %v6477
        %6563 = vst.msk [vmem:[%s1037 + $0x81] sm:$0xff] %vm337, %v6479
        %6564 = vst.msk [vmem:[%s1037 + $0x91] sm:$0xff] %vm337, %v6481
        %6565 = vst.msk [vmem:[%s1037 + $0x99] sm:$0xff] %vm337, %v6483
        %6566 = vst.msk [vmem:[%s1037 + $0xa9] sm:$0xff] %vm337, %v6485
        %6567 = vst.msk [vmem:[%s1037 + $0xb1] sm:$0xff] %vm337, %v6487
        %6568 = vst.msk [vmem:[%s1037 + $0xc1] sm:$0xff] %vm337, %v6489
        %6569 = vst.msk [vmem:[%s1037 + $0xc9] sm:$0xff] %vm337, %v6491
        %6570 = vst.msk [vmem:[%s1037 + $0xd9] sm:$0xff] %vm337, %v6493
        %6571 = vst.msk [vmem:[%s1037 + $0xe1] sm:$0xff] %vm337, %v6495
        %6572 = vst.msk [vmem:[%s1037 + $0xf1] sm:$0xff] %vm337, %v6497
        %6573 = vst.msk [vmem:[%s1037 + $0xf9] sm:$0xff] %vm337, %v6499
        %6574 = vst.msk [vmem:[%s1037 + $0x109] sm:$0xff] %vm337, %v6501
        %6575 = vst.msk [vmem:[%s1037 + $0x111] sm:$0xff] %vm337, %v6503
        %6576 = vst.msk [vmem:[%s1037 + $0x121] sm:$0xff] %vm337, %v6505
        %6577 = vst.msk [vmem:[%s1037 + $0x129] sm:$0xff] %vm337, %v6507
        %6578 = vst.msk [vmem:[%s1037 + $0x139] sm:$0xff] %vm337, %v6509
        %6579 = vst.msk [vmem:[%s1037 + $0x141] sm:$0xff] %vm337, %v6511
        %6580 = vst.msk [vmem:[%s1037 + $0x151] sm:$0xff] %vm337, %v6513
        %6581 = vst.msk [vmem:[%s1037 + $0x159] sm:$0xff] %vm337, %v6515
        %6582 = vst.msk [vmem:[%s1037 + $0x169] sm:$0xff] %vm337, %v6517
        %6583 = vst.msk [vmem:[%s1037 + $0x171] sm:$0xff] %vm337, %v6519
        %6584 = vrot.lane.b32.xlu0 %v6392, 116
        %v6585 = vpop.permute.xlu0 %6584
        %6586 = vrot.lane.b32.xlu0 %v6393, 116
        %v6587 = vpop.permute.xlu0 %6586
        %6588 = vrot.lane.b32.xlu0 %v6394, 116
        %v6589 = vpop.permute.xlu0 %6588
        %6590 = vrot.lane.b32.xlu0 %v6395, 116
        %v6591 = vpop.permute.xlu0 %6590
        %6592 = vrot.lane.b32.xlu0 %v6396, 116
        %v6593 = vpop.permute.xlu0 %6592
        %6594 = vrot.lane.b32.xlu0 %v6397, 116
        %v6595 = vpop.permute.xlu0 %6594
        %6596 = vrot.lane.b32.xlu0 %v6398, 116
        %v6597 = vpop.permute.xlu0 %6596
        %6598 = vrot.lane.b32.xlu0 %v6399, 116
        %v6599 = vpop.permute.xlu0 %6598
        %6600 = vrot.lane.b32.xlu0 %v6400, 116
        %v6601 = vpop.permute.xlu0 %6600
        %6602 = vrot.lane.b32.xlu0 %v6401, 116
        %v6603 = vpop.permute.xlu0 %6602
        %6604 = vrot.lane.b32.xlu0 %v6402, 116
        %v6605 = vpop.permute.xlu0 %6604
        %6606 = vrot.lane.b32.xlu0 %v6403, 116
        %v6607 = vpop.permute.xlu0 %6606
        %6608 = vrot.lane.b32.xlu0 %v6404, 116
        %v6609 = vpop.permute.xlu0 %6608
        %6610 = vrot.lane.b32.xlu0 %v6405, 116
        %v6611 = vpop.permute.xlu0 %6610
        %6612 = vrot.lane.b32.xlu0 %v6406, 116
        %v6613 = vpop.permute.xlu0 %6612
        %6614 = vrot.lane.b32.xlu0 %v6407, 116
        %v6615 = vpop.permute.xlu0 %6614
        %6616 = vrot.lane.b32.xlu0 %v6408, 116
        %v6617 = vpop.permute.xlu0 %6616
        %6618 = vrot.lane.b32.xlu0 %v6409, 116
        %v6619 = vpop.permute.xlu0 %6618
        %6620 = vrot.lane.b32.xlu0 %v6410, 116
        %v6621 = vpop.permute.xlu0 %6620
        %6622 = vrot.lane.b32.xlu0 %v6411, 116
        %v6623 = vpop.permute.xlu0 %6622
        %6624 = vrot.lane.b32.xlu0 %v6412, 116
        %v6625 = vpop.permute.xlu0 %6624
        %6626 = vrot.lane.b32.xlu0 %v6413, 116
        %v6627 = vpop.permute.xlu0 %6626
        %6628 = vrot.lane.b32.xlu0 %v6414, 116
        %v6629 = vpop.permute.xlu0 %6628
        %6630 = vrot.lane.b32.xlu0 %v6415, 116
        %v6631 = vpop.permute.xlu0 %6630
        %6632 = vrot.lane.b32.xlu0 %v6416, 116
        %v6633 = vpop.permute.xlu0 %6632
        %6634 = vrot.lane.b32.xlu0 %v6417, 116
        %v6635 = vpop.permute.xlu0 %6634
        %6636 = vrot.lane.b32.xlu0 %v6418, 116
        %v6637 = vpop.permute.xlu0 %6636
        %6638 = vrot.lane.b32.xlu0 %v6419, 116
        %v6639 = vpop.permute.xlu0 %6638
        %6640 = vrot.lane.b32.xlu0 %v6420, 116
        %v6641 = vpop.permute.xlu0 %6640
        %6642 = vrot.lane.b32.xlu0 %v6421, 116
        %v6643 = vpop.permute.xlu0 %6642
        %6644 = vrot.lane.b32.xlu0 %v6422, 116
        %v6645 = vpop.permute.xlu0 %6644
        %6646 = vrot.lane.b32.xlu0 %v6423, 116
        %v6647 = vpop.permute.xlu0 %6646
        %6680 = vst.msk [vmem:[%s1166 + $0x2] sm:$0xff] %vm337, %v6585
        %6681 = vst.msk [vmem:[%s1166 + $0xa] sm:$0xff] %vm337, %v6587
        %6682 = vst.msk [vmem:[%s1166 + $0x1a] sm:$0xff] %vm337, %v6589
        %6683 = vst.msk [vmem:[%s1166 + $0x22] sm:$0xff] %vm337, %v6591
        %6684 = vst.msk [vmem:[%s1166 + $0x32] sm:$0xff] %vm337, %v6593
        %6685 = vst.msk [vmem:[%s1166 + $0x3a] sm:$0xff] %vm337, %v6595
        %6686 = vst.msk [vmem:[%s1166 + $0x4a] sm:$0xff] %vm337, %v6597
        %6687 = vst.msk [vmem:[%s1166 + $0x52] sm:$0xff] %vm337, %v6599
        %6688 = vst.msk [vmem:[%s1166 + $0x62] sm:$0xff] %vm337, %v6601
        %6689 = vst.msk [vmem:[%s1166 + $0x6a] sm:$0xff] %vm337, %v6603
        %6690 = vst.msk [vmem:[%s1166 + $0x7a] sm:$0xff] %vm337, %v6605
        %6691 = vst.msk [vmem:[%s1166 + $0x82] sm:$0xff] %vm337, %v6607
        %6692 = vst.msk [vmem:[%s1166 + $0x92] sm:$0xff] %vm337, %v6609
        %6693 = vst.msk [vmem:[%s1166 + $0x9a] sm:$0xff] %vm337, %v6611
        %6694 = vst.msk [vmem:[%s1166 + $0xaa] sm:$0xff] %vm337, %v6613
        %6695 = vst.msk [vmem:[%s1166 + $0xb2] sm:$0xff] %vm337, %v6615
        %6696 = vst.msk [vmem:[%s1166 + $0xc2] sm:$0xff] %vm337, %v6617
        %6697 = vst.msk [vmem:[%s1166 + $0xca] sm:$0xff] %vm337, %v6619
        %6698 = vst.msk [vmem:[%s1166 + $0xda] sm:$0xff] %vm337, %v6621
        %6699 = vst.msk [vmem:[%s1166 + $0xe2] sm:$0xff] %vm337, %v6623
        %6700 = vst.msk [vmem:[%s1166 + $0xf2] sm:$0xff] %vm337, %v6625
        %6701 = vst.msk [vmem:[%s1166 + $0xfa] sm:$0xff] %vm337, %v6627
        %6702 = vst.msk [vmem:[%s1166 + $0x10a] sm:$0xff] %vm337, %v6629
        %6703 = vst.msk [vmem:[%s1166 + $0x112] sm:$0xff] %vm337, %v6631
        %6704 = vst.msk [vmem:[%s1166 + $0x122] sm:$0xff] %vm337, %v6633
        %6705 = vst.msk [vmem:[%s1166 + $0x12a] sm:$0xff] %vm337, %v6635
        %6706 = vst.msk [vmem:[%s1166 + $0x13a] sm:$0xff] %vm337, %v6637
        %6707 = vst.msk [vmem:[%s1166 + $0x142] sm:$0xff] %vm337, %v6639
        %6708 = vst.msk [vmem:[%s1166 + $0x152] sm:$0xff] %vm337, %v6641
        %6709 = vst.msk [vmem:[%s1166 + $0x15a] sm:$0xff] %vm337, %v6643
        %6710 = vst.msk [vmem:[%s1166 + $0x16a] sm:$0xff] %vm337, %v6645
        %6711 = vst.msk [vmem:[%s1166 + $0x172] sm:$0xff] %vm337, %v6647
        %v6712 = vld [vmem:[#allocation2] sm:$0xff]
        %v6713 = vld [vmem:[#allocation2 + $0x8] sm:$0xff]
        %v6714 = vld [vmem:[#allocation2 + $0x10] sm:$0x3]
        %v6715 = vld [vmem:[#allocation2 + $0x18] sm:$0xff]
        %v6716 = vld [vmem:[#allocation2 + $0x20] sm:$0xff]
        %v6717 = vld [vmem:[#allocation2 + $0x28] sm:$0x3]
        %v6718 = vld [vmem:[#allocation2 + $0x30] sm:$0xff]
        %v6719 = vld [vmem:[#allocation2 + $0x38] sm:$0xff]
        %v6720 = vld [vmem:[#allocation2 + $0x40] sm:$0x3]
        %v6721 = vld [vmem:[#allocation2 + $0x48] sm:$0xff]
        %v6722 = vld [vmem:[#allocation2 + $0x50] sm:$0xff]
        %v6723 = vld [vmem:[#allocation2 + $0x58] sm:$0x3]
        %v6724 = vld [vmem:[#allocation2 + $0x60] sm:$0xff]
        %v6725 = vld [vmem:[#allocation2 + $0x68] sm:$0xff]
        %v6726 = vld [vmem:[#allocation2 + $0x70] sm:$0x3]
        %v6727 = vld [vmem:[#allocation2 + $0x78] sm:$0xff]
        %v6728 = vld [vmem:[#allocation2 + $0x80] sm:$0xff]
        %v6729 = vld [vmem:[#allocation2 + $0x88] sm:$0x3]
        %v6730 = vld [vmem:[#allocation2 + $0x90] sm:$0xff]
        %v6731 = vld [vmem:[#allocation2 + $0x98] sm:$0xff]
        %v6732 = vld [vmem:[#allocation2 + $0xa0] sm:$0x3]
        %v6733 = vld [vmem:[#allocation2 + $0xa8] sm:$0xff]
        %v6734 = vld [vmem:[#allocation2 + $0xb0] sm:$0xff]
        %v6735 = vld [vmem:[#allocation2 + $0xb8] sm:$0x3]
        %v6736 = vld [vmem:[#allocation2 + $0xc0] sm:$0xff]
        %v6737 = vld [vmem:[#allocation2 + $0xc8] sm:$0xff]
        %v6738 = vld [vmem:[#allocation2 + $0xd0] sm:$0x3]
        %v6739 = vld [vmem:[#allocation2 + $0xd8] sm:$0xff]
        %v6740 = vld [vmem:[#allocation2 + $0xe0] sm:$0xff]
        %v6741 = vld [vmem:[#allocation2 + $0xe8] sm:$0x3]
        %v6742 = vld [vmem:[#allocation2 + $0xf0] sm:$0xff]
        %v6743 = vld [vmem:[#allocation2 + $0xf8] sm:$0xff]
        %v6744 = vld [vmem:[#allocation2 + $0x100] sm:$0x3]
        %v6745 = vld [vmem:[#allocation2 + $0x108] sm:$0xff]
        %v6746 = vld [vmem:[#allocation2 + $0x110] sm:$0xff]
        %v6747 = vld [vmem:[#allocation2 + $0x118] sm:$0x3]
        %v6748 = vld [vmem:[#allocation2 + $0x120] sm:$0xff]
        %v6749 = vld [vmem:[#allocation2 + $0x128] sm:$0xff]
        %v6750 = vld [vmem:[#allocation2 + $0x130] sm:$0x3]
        %v6751 = vld [vmem:[#allocation2 + $0x138] sm:$0xff]
        %v6752 = vld [vmem:[#allocation2 + $0x140] sm:$0xff]
        %v6753 = vld [vmem:[#allocation2 + $0x148] sm:$0x3]
        %v6754 = vld [vmem:[#allocation2 + $0x150] sm:$0xff]
        %v6755 = vld [vmem:[#allocation2 + $0x158] sm:$0xff]
        %v6756 = vld [vmem:[#allocation2 + $0x160] sm:$0x3]
        %v6757 = vld [vmem:[#allocation2 + $0x168] sm:$0xff]
        %v6758 = vld [vmem:[#allocation2 + $0x170] sm:$0xff]
        %v6759 = vld [vmem:[#allocation2 + $0x178] sm:$0x3]
        %v6760 = vld [vmem:[#allocation2 + $0x180] sm:$0xff]
        %v6761 = vld [vmem:[#allocation2 + $0x188] sm:$0xff]
        %v6762 = vld [vmem:[#allocation2 + $0x190] sm:$0x3]
        %v6763 = vld [vmem:[#allocation2 + $0x198] sm:$0xff]
        %v6764 = vld [vmem:[#allocation2 + $0x1a0] sm:$0xff]
        %v6765 = vld [vmem:[#allocation2 + $0x1a8] sm:$0x3]
        %v6820 = vrot.slane %v6712, 1
        %v6821 = vrot.slane %v6713, 1
        %v6822 = vsel %vm1307, %v6820, %v6821
        %v6823 = vrot.slane %v6714, 1
        %v6824 = vsel %vm1307, %v6821, %v6823
        %v6825 = vrot.slane %v6715, 1
        %v6826 = vrot.slane %v6716, 1
        %v6827 = vsel %vm1307, %v6825, %v6826
        %v6828 = vrot.slane %v6717, 1
        %v6829 = vsel %vm1307, %v6826, %v6828
        %v6830 = vrot.slane %v6718, 1
        %v6831 = vrot.slane %v6719, 1
        %v6832 = vsel %vm1307, %v6830, %v6831
        %v6833 = vrot.slane %v6720, 1
        %v6834 = vsel %vm1307, %v6831, %v6833
        %v6835 = vrot.slane %v6721, 1
        %v6836 = vrot.slane %v6722, 1
        %v6837 = vsel %vm1307, %v6835, %v6836
        %v6838 = vrot.slane %v6723, 1
        %v6839 = vsel %vm1307, %v6836, %v6838
        %v6840 = vrot.slane %v6724, 1
        %v6841 = vrot.slane %v6725, 1
        %v6842 = vsel %vm1307, %v6840, %v6841
        %v6843 = vrot.slane %v6726, 1
        %v6844 = vsel %vm1307, %v6841, %v6843
        %v6845 = vrot.slane %v6727, 1
        %v6846 = vrot.slane %v6728, 1
        %v6847 = vsel %vm1307, %v6845, %v6846
        %v6848 = vrot.slane %v6729, 1
        %v6849 = vsel %vm1307, %v6846, %v6848
        %v6850 = vrot.slane %v6730, 1
        %v6851 = vrot.slane %v6731, 1
        %v6852 = vsel %vm1307, %v6850, %v6851
        %v6853 = vrot.slane %v6732, 1
        %v6854 = vsel %vm1307, %v6851, %v6853
        %v6855 = vrot.slane %v6733, 1
        %v6856 = vrot.slane %v6734, 1
        %v6857 = vsel %vm1307, %v6855, %v6856
        %v6858 = vrot.slane %v6735, 1
        %v6859 = vsel %vm1307, %v6856, %v6858
        %v6860 = vrot.slane %v6736, 1
        %v6861 = vrot.slane %v6737, 1
        %v6862 = vsel %vm1307, %v6860, %v6861
        %v6863 = vrot.slane %v6738, 1
        %v6864 = vsel %vm1307, %v6861, %v6863
        %v6865 = vrot.slane %v6739, 1
        %v6866 = vrot.slane %v6740, 1
        %v6867 = vsel %vm1307, %v6865, %v6866
        %v6868 = vrot.slane %v6741, 1
        %v6869 = vsel %vm1307, %v6866, %v6868
        %v6870 = vrot.slane %v6742, 1
        %v6871 = vrot.slane %v6743, 1
        %v6872 = vsel %vm1307, %v6870, %v6871
        %v6873 = vrot.slane %v6744, 1
        %v6874 = vsel %vm1307, %v6871, %v6873
        %v6875 = vrot.slane %v6745, 1
        %v6876 = vrot.slane %v6746, 1
        %v6877 = vsel %vm1307, %v6875, %v6876
        %v6878 = vrot.slane %v6747, 1
        %v6879 = vsel %vm1307, %v6876, %v6878
        %v6880 = vrot.slane %v6748, 1
        %v6881 = vrot.slane %v6749, 1
        %v6882 = vsel %vm1307, %v6880, %v6881
        %v6883 = vrot.slane %v6750, 1
        %v6884 = vsel %vm1307, %v6881, %v6883
        %v6885 = vrot.slane %v6751, 1
        %v6886 = vrot.slane %v6752, 1
        %v6887 = vsel %vm1307, %v6885, %v6886
        %v6888 = vrot.slane %v6753, 1
        %v6889 = vsel %vm1307, %v6886, %v6888
        %v6890 = vrot.slane %v6754, 1
        %v6891 = vrot.slane %v6755, 1
        %v6892 = vsel %vm1307, %v6890, %v6891
        %v6893 = vrot.slane %v6756, 1
        %v6894 = vsel %vm1307, %v6891, %v6893
        %v6895 = vrot.slane %v6757, 1
        %v6896 = vrot.slane %v6758, 1
        %v6897 = vsel %vm1307, %v6895, %v6896
        %v6898 = vrot.slane %v6759, 1
        %v6899 = vsel %vm1307, %v6896, %v6898
        %v6900 = vrot.slane %v6760, 1
        %v6901 = vrot.slane %v6761, 1
        %v6902 = vsel %vm1307, %v6900, %v6901
        %v6903 = vrot.slane %v6762, 1
        %v6904 = vsel %vm1307, %v6901, %v6903
        %v6905 = vrot.slane %v6763, 1
        %v6906 = vrot.slane %v6764, 1
        %v6907 = vsel %vm1307, %v6905, %v6906
        %v6908 = vrot.slane %v6765, 1
        %v6909 = vsel %vm1307, %v6906, %v6908
        %6910 = vrot.lane.b32.xlu0 %v6822, 4
        %v6911 = vpop.permute.xlu0 %6910
        %6912 = vrot.lane.b32.xlu0 %v6824, 4
        %v6913 = vpop.permute.xlu0 %6912
        %6914 = vrot.lane.b32.xlu0 %v6827, 4
        %v6915 = vpop.permute.xlu0 %6914
        %6916 = vrot.lane.b32.xlu0 %v6829, 4
        %v6917 = vpop.permute.xlu0 %6916
        %6918 = vrot.lane.b32.xlu0 %v6832, 4
        %v6919 = vpop.permute.xlu0 %6918
        %6920 = vrot.lane.b32.xlu0 %v6834, 4
        %v6921 = vpop.permute.xlu0 %6920
        %6922 = vrot.lane.b32.xlu0 %v6837, 4
        %v6923 = vpop.permute.xlu0 %6922
        %6924 = vrot.lane.b32.xlu0 %v6839, 4
        %v6925 = vpop.permute.xlu0 %6924
        %6926 = vrot.lane.b32.xlu0 %v6842, 4
        %v6927 = vpop.permute.xlu0 %6926
        %6928 = vrot.lane.b32.xlu0 %v6844, 4
        %v6929 = vpop.permute.xlu0 %6928
        %6930 = vrot.lane.b32.xlu0 %v6847, 4
        %v6931 = vpop.permute.xlu0 %6930
        %6932 = vrot.lane.b32.xlu0 %v6849, 4
        %v6933 = vpop.permute.xlu0 %6932
        %6934 = vrot.lane.b32.xlu0 %v6852, 4
        %v6935 = vpop.permute.xlu0 %6934
        %6936 = vrot.lane.b32.xlu0 %v6854, 4
        %v6937 = vpop.permute.xlu0 %6936
        %6938 = vrot.lane.b32.xlu0 %v6857, 4
        %v6939 = vpop.permute.xlu0 %6938
        %6940 = vrot.lane.b32.xlu0 %v6859, 4
        %v6941 = vpop.permute.xlu0 %6940
        %6942 = vrot.lane.b32.xlu0 %v6862, 4
        %v6943 = vpop.permute.xlu0 %6942
        %6944 = vrot.lane.b32.xlu0 %v6864, 4
        %v6945 = vpop.permute.xlu0 %6944
        %6946 = vrot.lane.b32.xlu0 %v6867, 4
        %v6947 = vpop.permute.xlu0 %6946
        %6948 = vrot.lane.b32.xlu0 %v6869, 4
        %v6949 = vpop.permute.xlu0 %6948
        %6950 = vrot.lane.b32.xlu0 %v6872, 4
        %v6951 = vpop.permute.xlu0 %6950
        %6952 = vrot.lane.b32.xlu0 %v6874, 4
        %v6953 = vpop.permute.xlu0 %6952
        %6954 = vrot.lane.b32.xlu0 %v6877, 4
        %v6955 = vpop.permute.xlu0 %6954
        %6956 = vrot.lane.b32.xlu0 %v6879, 4
        %v6957 = vpop.permute.xlu0 %6956
        %6958 = vrot.lane.b32.xlu0 %v6882, 4
        %v6959 = vpop.permute.xlu0 %6958
        %6960 = vrot.lane.b32.xlu0 %v6884, 4
        %v6961 = vpop.permute.xlu0 %6960
        %6962 = vrot.lane.b32.xlu0 %v6887, 4
        %v6963 = vpop.permute.xlu0 %6962
        %6964 = vrot.lane.b32.xlu0 %v6889, 4
        %v6965 = vpop.permute.xlu0 %6964
        %6966 = vrot.lane.b32.xlu0 %v6892, 4
        %v6967 = vpop.permute.xlu0 %6966
        %6968 = vrot.lane.b32.xlu0 %v6894, 4
        %v6969 = vpop.permute.xlu0 %6968
        %6970 = vrot.lane.b32.xlu0 %v6897, 4
        %v6971 = vpop.permute.xlu0 %6970
        %6972 = vrot.lane.b32.xlu0 %v6899, 4
        %v6973 = vpop.permute.xlu0 %6972
        %6974 = vrot.lane.b32.xlu0 %v6902, 4
        %v6975 = vpop.permute.xlu0 %6974
        %6976 = vrot.lane.b32.xlu0 %v6904, 4
        %v6977 = vpop.permute.xlu0 %6976
        %6978 = vrot.lane.b32.xlu0 %v6907, 4
        %v6979 = vpop.permute.xlu0 %6978
        %6980 = vrot.lane.b32.xlu0 %v6909, 4
        %v6981 = vpop.permute.xlu0 %6980
        %v7018 = vrot.slane %v6712, 2
        %v7019 = vrot.slane %v6713, 2
        %v7020 = vsel %vm1506, %v7018, %v7019
        %v7021 = vrot.slane %v6714, 2
        %v7022 = vsel %vm1506, %v7019, %v7021
        %v7023 = vrot.slane %v6715, 2
        %v7024 = vrot.slane %v6716, 2
        %v7025 = vsel %vm1506, %v7023, %v7024
        %v7026 = vrot.slane %v6717, 2
        %v7027 = vsel %vm1506, %v7024, %v7026
        %v7028 = vrot.slane %v6718, 2
        %v7029 = vrot.slane %v6719, 2
        %v7030 = vsel %vm1506, %v7028, %v7029
        %v7031 = vrot.slane %v6720, 2
        %v7032 = vsel %vm1506, %v7029, %v7031
        %v7033 = vrot.slane %v6721, 2
        %v7034 = vrot.slane %v6722, 2
        %v7035 = vsel %vm1506, %v7033, %v7034
        %v7036 = vrot.slane %v6723, 2
        %v7037 = vsel %vm1506, %v7034, %v7036
        %v7038 = vrot.slane %v6724, 2
        %v7039 = vrot.slane %v6725, 2
        %v7040 = vsel %vm1506, %v7038, %v7039
        %v7041 = vrot.slane %v6726, 2
        %v7042 = vsel %vm1506, %v7039, %v7041
        %v7043 = vrot.slane %v6727, 2
        %v7044 = vrot.slane %v6728, 2
        %v7045 = vsel %vm1506, %v7043, %v7044
        %v7046 = vrot.slane %v6729, 2
        %v7047 = vsel %vm1506, %v7044, %v7046
        %v7048 = vrot.slane %v6730, 2
        %v7049 = vrot.slane %v6731, 2
        %v7050 = vsel %vm1506, %v7048, %v7049
        %v7051 = vrot.slane %v6732, 2
        %v7052 = vsel %vm1506, %v7049, %v7051
        %v7053 = vrot.slane %v6733, 2
        %v7054 = vrot.slane %v6734, 2
        %v7055 = vsel %vm1506, %v7053, %v7054
        %v7056 = vrot.slane %v6735, 2
        %v7057 = vsel %vm1506, %v7054, %v7056
        %v7058 = vrot.slane %v6736, 2
        %v7059 = vrot.slane %v6737, 2
        %v7060 = vsel %vm1506, %v7058, %v7059
        %v7061 = vrot.slane %v6738, 2
        %v7062 = vsel %vm1506, %v7059, %v7061
        %v7063 = vrot.slane %v6739, 2
        %v7064 = vrot.slane %v6740, 2
        %v7065 = vsel %vm1506, %v7063, %v7064
        %v7066 = vrot.slane %v6741, 2
        %v7067 = vsel %vm1506, %v7064, %v7066
        %v7068 = vrot.slane %v6742, 2
        %v7069 = vrot.slane %v6743, 2
        %v7070 = vsel %vm1506, %v7068, %v7069
        %v7071 = vrot.slane %v6744, 2
        %v7072 = vsel %vm1506, %v7069, %v7071
        %v7073 = vrot.slane %v6745, 2
        %v7074 = vrot.slane %v6746, 2
        %v7075 = vsel %vm1506, %v7073, %v7074
        %v7076 = vrot.slane %v6747, 2
        %v7077 = vsel %vm1506, %v7074, %v7076
        %v7078 = vrot.slane %v6748, 2
        %v7079 = vrot.slane %v6749, 2
        %v7080 = vsel %vm1506, %v7078, %v7079
        %v7081 = vrot.slane %v6750, 2
        %v7082 = vsel %vm1506, %v7079, %v7081
        %v7083 = vrot.slane %v6751, 2
        %v7084 = vrot.slane %v6752, 2
        %v7085 = vsel %vm1506, %v7083, %v7084
        %v7086 = vrot.slane %v6753, 2
        %v7087 = vsel %vm1506, %v7084, %v7086
        %v7088 = vrot.slane %v6754, 2
        %v7089 = vrot.slane %v6755, 2
        %v7090 = vsel %vm1506, %v7088, %v7089
        %v7091 = vrot.slane %v6756, 2
        %v7092 = vsel %vm1506, %v7089, %v7091
        %v7093 = vrot.slane %v6757, 2
        %v7094 = vrot.slane %v6758, 2
        %v7095 = vsel %vm1506, %v7093, %v7094
        %v7096 = vrot.slane %v6759, 2
        %v7097 = vsel %vm1506, %v7094, %v7096
        %v7098 = vrot.slane %v6760, 2
        %v7099 = vrot.slane %v6761, 2
        %v7100 = vsel %vm1506, %v7098, %v7099
        %v7101 = vrot.slane %v6762, 2
        %v7102 = vsel %vm1506, %v7099, %v7101
        %v7103 = vrot.slane %v6763, 2
        %v7104 = vrot.slane %v6764, 2
        %v7105 = vsel %vm1506, %v7103, %v7104
        %v7106 = vrot.slane %v6765, 2
        %v7107 = vsel %vm1506, %v7104, %v7106
        %7108 = vrot.lane.b32.xlu0 %v7020, 8
        %v7109 = vpop.permute.xlu0 %7108
        %7110 = vrot.lane.b32.xlu0 %v7022, 8
        %v7111 = vpop.permute.xlu0 %7110
        %7112 = vrot.lane.b32.xlu0 %v7025, 8
        %v7113 = vpop.permute.xlu0 %7112
        %7114 = vrot.lane.b32.xlu0 %v7027, 8
        %v7115 = vpop.permute.xlu0 %7114
        %7116 = vrot.lane.b32.xlu0 %v7030, 8
        %v7117 = vpop.permute.xlu0 %7116
        %7118 = vrot.lane.b32.xlu0 %v7032, 8
        %v7119 = vpop.permute.xlu0 %7118
        %7120 = vrot.lane.b32.xlu0 %v7035, 8
        %v7121 = vpop.permute.xlu0 %7120
        %7122 = vrot.lane.b32.xlu0 %v7037, 8
        %v7123 = vpop.permute.xlu0 %7122
        %7124 = vrot.lane.b32.xlu0 %v7040, 8
        %v7125 = vpop.permute.xlu0 %7124
        %7126 = vrot.lane.b32.xlu0 %v7042, 8
        %v7127 = vpop.permute.xlu0 %7126
        %7128 = vrot.lane.b32.xlu0 %v7045, 8
        %v7129 = vpop.permute.xlu0 %7128
        %7130 = vrot.lane.b32.xlu0 %v7047, 8
        %v7131 = vpop.permute.xlu0 %7130
        %7132 = vrot.lane.b32.xlu0 %v7050, 8
        %v7133 = vpop.permute.xlu0 %7132
        %7134 = vrot.lane.b32.xlu0 %v7052, 8
        %v7135 = vpop.permute.xlu0 %7134
        %7136 = vrot.lane.b32.xlu0 %v7055, 8
        %v7137 = vpop.permute.xlu0 %7136
        %7138 = vrot.lane.b32.xlu0 %v7057, 8
        %v7139 = vpop.permute.xlu0 %7138
        %7140 = vrot.lane.b32.xlu0 %v7060, 8
        %v7141 = vpop.permute.xlu0 %7140
        %7142 = vrot.lane.b32.xlu0 %v7062, 8
        %v7143 = vpop.permute.xlu0 %7142
        %7144 = vrot.lane.b32.xlu0 %v7065, 8
        %v7145 = vpop.permute.xlu0 %7144
        %7146 = vrot.lane.b32.xlu0 %v7067, 8
        %v7147 = vpop.permute.xlu0 %7146
        %7148 = vrot.lane.b32.xlu0 %v7070, 8
        %v7149 = vpop.permute.xlu0 %7148
        %7150 = vrot.lane.b32.xlu0 %v7072, 8
        %v7151 = vpop.permute.xlu0 %7150
        %7152 = vrot.lane.b32.xlu0 %v7075, 8
        %v7153 = vpop.permute.xlu0 %7152
        %7154 = vrot.lane.b32.xlu0 %v7077, 8
        %v7155 = vpop.permute.xlu0 %7154
        %7156 = vrot.lane.b32.xlu0 %v7080, 8
        %v7157 = vpop.permute.xlu0 %7156
        %7158 = vrot.lane.b32.xlu0 %v7082, 8
        %v7159 = vpop.permute.xlu0 %7158
        %7160 = vrot.lane.b32.xlu0 %v7085, 8
        %v7161 = vpop.permute.xlu0 %7160
        %7162 = vrot.lane.b32.xlu0 %v7087, 8
        %v7163 = vpop.permute.xlu0 %7162
        %7164 = vrot.lane.b32.xlu0 %v7090, 8
        %v7165 = vpop.permute.xlu0 %7164
        %7166 = vrot.lane.b32.xlu0 %v7092, 8
        %v7167 = vpop.permute.xlu0 %7166
        %7168 = vrot.lane.b32.xlu0 %v7095, 8
        %v7169 = vpop.permute.xlu0 %7168
        %7170 = vrot.lane.b32.xlu0 %v7097, 8
        %v7171 = vpop.permute.xlu0 %7170
        %7172 = vrot.lane.b32.xlu0 %v7100, 8
        %v7173 = vpop.permute.xlu0 %7172
        %7174 = vrot.lane.b32.xlu0 %v7102, 8
        %v7175 = vpop.permute.xlu0 %7174
        %7176 = vrot.lane.b32.xlu0 %v7105, 8
        %v7177 = vpop.permute.xlu0 %7176
        %7178 = vrot.lane.b32.xlu0 %v7107, 8
        %v7179 = vpop.permute.xlu0 %7178
        %v7216 = vsel %vm337, %v6712, %v6911
        %v7217 = vsel %vm337, %v6713, %v6913
        %v7218 = vsel %vm337, %v6715, %v6915
        %v7219 = vsel %vm337, %v6716, %v6917
        %v7220 = vsel %vm337, %v6718, %v6919
        %v7221 = vsel %vm337, %v6719, %v6921
        %v7222 = vsel %vm337, %v6721, %v6923
        %v7223 = vsel %vm337, %v6722, %v6925
        %v7224 = vsel %vm337, %v6724, %v6927
        %v7225 = vsel %vm337, %v6725, %v6929
        %v7226 = vsel %vm337, %v6727, %v6931
        %v7227 = vsel %vm337, %v6728, %v6933
        %v7228 = vsel %vm337, %v6730, %v6935
        %v7229 = vsel %vm337, %v6731, %v6937
        %v7230 = vsel %vm337, %v6733, %v6939
        %v7231 = vsel %vm337, %v6734, %v6941
        %v7232 = vsel %vm337, %v6736, %v6943
        %v7233 = vsel %vm337, %v6737, %v6945
        %v7234 = vsel %vm337, %v6739, %v6947
        %v7235 = vsel %vm337, %v6740, %v6949
        %v7236 = vsel %vm337, %v6742, %v6951
        %v7237 = vsel %vm337, %v6743, %v6953
        %v7238 = vsel %vm337, %v6745, %v6955
        %v7239 = vsel %vm337, %v6746, %v6957
        %v7240 = vsel %vm337, %v6748, %v6959
        %v7241 = vsel %vm337, %v6749, %v6961
        %v7242 = vsel %vm337, %v6751, %v6963
        %v7243 = vsel %vm337, %v6752, %v6965
        %v7244 = vsel %vm337, %v6754, %v6967
        %v7245 = vsel %vm337, %v6755, %v6969
        %v7246 = vsel %vm337, %v6757, %v6971
        %v7247 = vsel %vm337, %v6758, %v6973
        %v7248 = vsel %vm337, %v6760, %v6975
        %v7249 = vsel %vm337, %v6761, %v6977
        %v7250 = vsel %vm337, %v6763, %v6979
        %v7251 = vsel %vm337, %v6764, %v6981
        %v7252 = vsel %vm1741, %v7216, %v7109
        %v7253 = vsel %vm1741, %v7217, %v7111
        %v7254 = vsel %vm1741, %v7218, %v7113
        %v7255 = vsel %vm1741, %v7219, %v7115
        %v7256 = vsel %vm1741, %v7220, %v7117
        %v7257 = vsel %vm1741, %v7221, %v7119
        %v7258 = vsel %vm1741, %v7222, %v7121
        %v7259 = vsel %vm1741, %v7223, %v7123
        %v7260 = vsel %vm1741, %v7224, %v7125
        %v7261 = vsel %vm1741, %v7225, %v7127
        %v7262 = vsel %vm1741, %v7226, %v7129
        %v7263 = vsel %vm1741, %v7227, %v7131
        %v7264 = vsel %vm1741, %v7228, %v7133
        %v7265 = vsel %vm1741, %v7229, %v7135
        %v7266 = vsel %vm1741, %v7230, %v7137
        %v7267 = vsel %vm1741, %v7231, %v7139
        %v7268 = vsel %vm1741, %v7232, %v7141
        %v7269 = vsel %vm1741, %v7233, %v7143
        %v7270 = vsel %vm1741, %v7234, %v7145
        %v7271 = vsel %vm1741, %v7235, %v7147
        %v7272 = vsel %vm1741, %v7236, %v7149
        %v7273 = vsel %vm1741, %v7237, %v7151
        %v7274 = vsel %vm1741, %v7238, %v7153
        %v7275 = vsel %vm1741, %v7239, %v7155
        %v7276 = vsel %vm1741, %v7240, %v7157
        %v7277 = vsel %vm1741, %v7241, %v7159
        %v7278 = vsel %vm1741, %v7242, %v7161
        %v7279 = vsel %vm1741, %v7243, %v7163
        %v7280 = vsel %vm1741, %v7244, %v7165
        %v7281 = vsel %vm1741, %v7245, %v7167
        %v7282 = vsel %vm1741, %v7246, %v7169
        %v7283 = vsel %vm1741, %v7247, %v7171
        %v7284 = vsel %vm1741, %v7248, %v7173
        %v7285 = vsel %vm1741, %v7249, %v7175
        %v7286 = vsel %vm1741, %v7250, %v7177
        %v7287 = vsel %vm1741, %v7251, %v7179
        %7320 = vrot.lane.b32.xlu0 %v7254, 12
        %v7321 = vpop.permute.xlu0 %7320
        %7322 = vrot.lane.b32.xlu0 %v7255, 12
        %v7323 = vpop.permute.xlu0 %7322
        %7324 = vrot.lane.b32.xlu0 %v7256, 12
        %v7325 = vpop.permute.xlu0 %7324
        %7326 = vrot.lane.b32.xlu0 %v7257, 12
        %v7327 = vpop.permute.xlu0 %7326
        %7328 = vrot.lane.b32.xlu0 %v7258, 12
        %v7329 = vpop.permute.xlu0 %7328
        %7330 = vrot.lane.b32.xlu0 %v7259, 12
        %v7331 = vpop.permute.xlu0 %7330
        %7332 = vrot.lane.b32.xlu0 %v7260, 12
        %v7333 = vpop.permute.xlu0 %7332
        %7334 = vrot.lane.b32.xlu0 %v7261, 12
        %v7335 = vpop.permute.xlu0 %7334
        %7336 = vrot.lane.b32.xlu0 %v7262, 12
        %v7337 = vpop.permute.xlu0 %7336
        %7338 = vrot.lane.b32.xlu0 %v7263, 12
        %v7339 = vpop.permute.xlu0 %7338
        %7340 = vrot.lane.b32.xlu0 %v7264, 12
        %v7341 = vpop.permute.xlu0 %7340
        %7342 = vrot.lane.b32.xlu0 %v7265, 12
        %v7343 = vpop.permute.xlu0 %7342
        %7344 = vrot.lane.b32.xlu0 %v7266, 12
        %v7345 = vpop.permute.xlu0 %7344
        %7346 = vrot.lane.b32.xlu0 %v7267, 12
        %v7347 = vpop.permute.xlu0 %7346
        %7348 = vrot.lane.b32.xlu0 %v7268, 12
        %v7349 = vpop.permute.xlu0 %7348
        %7350 = vrot.lane.b32.xlu0 %v7269, 12
        %v7351 = vpop.permute.xlu0 %7350
        %7352 = vrot.lane.b32.xlu0 %v7270, 12
        %v7353 = vpop.permute.xlu0 %7352
        %7354 = vrot.lane.b32.xlu0 %v7271, 12
        %v7355 = vpop.permute.xlu0 %7354
        %7356 = vrot.lane.b32.xlu0 %v7272, 12
        %v7357 = vpop.permute.xlu0 %7356
        %7358 = vrot.lane.b32.xlu0 %v7273, 12
        %v7359 = vpop.permute.xlu0 %7358
        %7360 = vrot.lane.b32.xlu0 %v7274, 12
        %v7361 = vpop.permute.xlu0 %7360
        %7362 = vrot.lane.b32.xlu0 %v7275, 12
        %v7363 = vpop.permute.xlu0 %7362
        %7364 = vrot.lane.b32.xlu0 %v7276, 12
        %v7365 = vpop.permute.xlu0 %7364
        %7366 = vrot.lane.b32.xlu0 %v7277, 12
        %v7367 = vpop.permute.xlu0 %7366
        %7368 = vrot.lane.b32.xlu0 %v7278, 12
        %v7369 = vpop.permute.xlu0 %7368
        %7370 = vrot.lane.b32.xlu0 %v7279, 12
        %v7371 = vpop.permute.xlu0 %7370
        %7372 = vrot.lane.b32.xlu0 %v7280, 12
        %v7373 = vpop.permute.xlu0 %7372
        %7374 = vrot.lane.b32.xlu0 %v7281, 12
        %v7375 = vpop.permute.xlu0 %7374
        %7376 = vrot.lane.b32.xlu0 %v7282, 12
        %v7377 = vpop.permute.xlu0 %7376
        %7378 = vrot.lane.b32.xlu0 %v7283, 12
        %v7379 = vpop.permute.xlu0 %7378
        %7380 = vrot.lane.b32.xlu0 %v7284, 12
        %v7381 = vpop.permute.xlu0 %7380
        %7382 = vrot.lane.b32.xlu0 %v7285, 12
        %v7383 = vpop.permute.xlu0 %7382
        %7418 = vrot.lane.b32.xlu0 %v7256, 24
        %v7419 = vpop.permute.xlu0 %7418
        %7420 = vrot.lane.b32.xlu0 %v7257, 24
        %v7421 = vpop.permute.xlu0 %7420
        %7422 = vrot.lane.b32.xlu0 %v7258, 24
        %v7423 = vpop.permute.xlu0 %7422
        %7424 = vrot.lane.b32.xlu0 %v7259, 24
        %v7425 = vpop.permute.xlu0 %7424
        %7426 = vrot.lane.b32.xlu0 %v7260, 24
        %v7427 = vpop.permute.xlu0 %7426
        %7428 = vrot.lane.b32.xlu0 %v7261, 24
        %v7429 = vpop.permute.xlu0 %7428
        %7430 = vrot.lane.b32.xlu0 %v7262, 24
        %v7431 = vpop.permute.xlu0 %7430
        %7432 = vrot.lane.b32.xlu0 %v7263, 24
        %v7433 = vpop.permute.xlu0 %7432
        %7434 = vrot.lane.b32.xlu0 %v7264, 24
        %v7435 = vpop.permute.xlu0 %7434
        %7436 = vrot.lane.b32.xlu0 %v7265, 24
        %v7437 = vpop.permute.xlu0 %7436
        %7438 = vrot.lane.b32.xlu0 %v7266, 24
        %v7439 = vpop.permute.xlu0 %7438
        %7440 = vrot.lane.b32.xlu0 %v7267, 24
        %v7441 = vpop.permute.xlu0 %7440
        %7442 = vrot.lane.b32.xlu0 %v7268, 24
        %v7443 = vpop.permute.xlu0 %7442
        %7444 = vrot.lane.b32.xlu0 %v7269, 24
        %v7445 = vpop.permute.xlu0 %7444
        %7446 = vrot.lane.b32.xlu0 %v7270, 24
        %v7447 = vpop.permute.xlu0 %7446
        %7448 = vrot.lane.b32.xlu0 %v7271, 24
        %v7449 = vpop.permute.xlu0 %7448
        %7450 = vrot.lane.b32.xlu0 %v7272, 24
        %v7451 = vpop.permute.xlu0 %7450
        %7452 = vrot.lane.b32.xlu0 %v7273, 24
        %v7453 = vpop.permute.xlu0 %7452
        %7454 = vrot.lane.b32.xlu0 %v7274, 24
        %v7455 = vpop.permute.xlu0 %7454
        %7456 = vrot.lane.b32.xlu0 %v7275, 24
        %v7457 = vpop.permute.xlu0 %7456
        %7458 = vrot.lane.b32.xlu0 %v7276, 24
        %v7459 = vpop.permute.xlu0 %7458
        %7460 = vrot.lane.b32.xlu0 %v7277, 24
        %v7461 = vpop.permute.xlu0 %7460
        %7462 = vrot.lane.b32.xlu0 %v7278, 24
        %v7463 = vpop.permute.xlu0 %7462
        %7464 = vrot.lane.b32.xlu0 %v7279, 24
        %v7465 = vpop.permute.xlu0 %7464
        %7466 = vrot.lane.b32.xlu0 %v7280, 24
        %v7467 = vpop.permute.xlu0 %7466
        %7468 = vrot.lane.b32.xlu0 %v7281, 24
        %v7469 = vpop.permute.xlu0 %7468
        %7470 = vrot.lane.b32.xlu0 %v7282, 24
        %v7471 = vpop.permute.xlu0 %7470
        %7472 = vrot.lane.b32.xlu0 %v7283, 24
        %v7473 = vpop.permute.xlu0 %7472
        %7474 = vrot.lane.b32.xlu0 %v7284, 24
        %v7475 = vpop.permute.xlu0 %7474
        %7476 = vrot.lane.b32.xlu0 %v7285, 24
        %v7477 = vpop.permute.xlu0 %7476
        %7478 = vrot.lane.b32.xlu0 %v7286, 24
        %v7479 = vpop.permute.xlu0 %7478
        %7480 = vrot.lane.b32.xlu0 %v7287, 24
        %v7481 = vpop.permute.xlu0 %7480
        %v7514 = vsel %vm2004, %v7252, %v7321
        %v7515 = vsel %vm2004, %v7253, %v7323
        %v7516 = vsel %vm2004, %v7254, %v7325
        %v7517 = vsel %vm2004, %v7255, %v7327
        %v7518 = vsel %vm2004, %v7256, %v7329
        %v7519 = vsel %vm2004, %v7257, %v7331
        %v7520 = vsel %vm2004, %v7258, %v7333
        %v7521 = vsel %vm2004, %v7259, %v7335
        %v7522 = vsel %vm2004, %v7260, %v7337
        %v7523 = vsel %vm2004, %v7261, %v7339
        %v7524 = vsel %vm2004, %v7262, %v7341
        %v7525 = vsel %vm2004, %v7263, %v7343
        %v7526 = vsel %vm2004, %v7264, %v7345
        %v7527 = vsel %vm2004, %v7265, %v7347
        %v7528 = vsel %vm2004, %v7266, %v7349
        %v7529 = vsel %vm2004, %v7267, %v7351
        %v7530 = vsel %vm2004, %v7268, %v7353
        %v7531 = vsel %vm2004, %v7269, %v7355
        %v7532 = vsel %vm2004, %v7270, %v7357
        %v7533 = vsel %vm2004, %v7271, %v7359
        %v7534 = vsel %vm2004, %v7272, %v7361
        %v7535 = vsel %vm2004, %v7273, %v7363
        %v7536 = vsel %vm2004, %v7274, %v7365
        %v7537 = vsel %vm2004, %v7275, %v7367
        %v7538 = vsel %vm2004, %v7276, %v7369
        %v7539 = vsel %vm2004, %v7277, %v7371
        %v7540 = vsel %vm2004, %v7278, %v7373
        %v7541 = vsel %vm2004, %v7279, %v7375
        %v7542 = vsel %vm2004, %v7280, %v7377
        %v7543 = vsel %vm2004, %v7281, %v7379
        %v7544 = vsel %vm2004, %v7282, %v7381
        %v7545 = vsel %vm2004, %v7283, %v7383
        %v7546 = vsel %vm2037, %v7514, %v7419
        %v7547 = vsel %vm2037, %v7515, %v7421
        %v7548 = vsel %vm2037, %v7516, %v7423
        %v7549 = vsel %vm2037, %v7517, %v7425
        %v7550 = vsel %vm2037, %v7518, %v7427
        %v7551 = vsel %vm2037, %v7519, %v7429
        %v7552 = vsel %vm2037, %v7520, %v7431
        %v7553 = vsel %vm2037, %v7521, %v7433
        %v7554 = vsel %vm2037, %v7522, %v7435
        %v7555 = vsel %vm2037, %v7523, %v7437
        %v7556 = vsel %vm2037, %v7524, %v7439
        %v7557 = vsel %vm2037, %v7525, %v7441
        %v7558 = vsel %vm2037, %v7526, %v7443
        %v7559 = vsel %vm2037, %v7527, %v7445
        %v7560 = vsel %vm2037, %v7528, %v7447
        %v7561 = vsel %vm2037, %v7529, %v7449
        %v7562 = vsel %vm2037, %v7530, %v7451
        %v7563 = vsel %vm2037, %v7531, %v7453
        %v7564 = vsel %vm2037, %v7532, %v7455
        %v7565 = vsel %vm2037, %v7533, %v7457
        %v7566 = vsel %vm2037, %v7534, %v7459
        %v7567 = vsel %vm2037, %v7535, %v7461
        %v7568 = vsel %vm2037, %v7536, %v7463
        %v7569 = vsel %vm2037, %v7537, %v7465
        %v7570 = vsel %vm2037, %v7538, %v7467
        %v7571 = vsel %vm2037, %v7539, %v7469
        %v7572 = vsel %vm2037, %v7540, %v7471
        %v7573 = vsel %vm2037, %v7541, %v7473
        %v7574 = vsel %vm2037, %v7542, %v7475
        %v7575 = vsel %vm2037, %v7543, %v7477
        %v7576 = vsel %vm2037, %v7544, %v7479
        %v7577 = vsel %vm2037, %v7545, %v7481
        %v7578 = vld [vmem:[%s3] sm:$0xff]
        %v7579 = vld [vmem:[%s3 + $0x8] sm:$0xff]
        %v7580 = vld [vmem:[%s3 + $0x10] sm:$0xff]
        %v7581 = vld [vmem:[%s3 + $0x18] sm:$0xff]
        %v7582 = vld [vmem:[%s3 + $0x20] sm:$0xf]
        %v7584 = vsel %vm2075, %v7546, 0
        %v7587 = vsel %vm2075, %v7547, 0
        %v7590 = vsel %vm2075, %v7548, 0
        %v7593 = vsel %vm2075, %v7549, 0
        %v7596 = vsel %vm2075, %v7550, 0
        %v7599 = vsel %vm2075, %v7551, 0
        %v7602 = vsel %vm2075, %v7552, 0
        %v7605 = vsel %vm2075, %v7553, 0
        %v7608 = vsel %vm2075, %v7554, 0
        %v7611 = vsel %vm2075, %v7555, 0
        %v7614 = vsel %vm2075, %v7556, 0
        %v7617 = vsel %vm2075, %v7557, 0
        %v7620 = vsel %vm2075, %v7558, 0
        %v7623 = vsel %vm2075, %v7559, 0
        %v7626 = vsel %vm2075, %v7560, 0
        %v7629 = vsel %vm2075, %v7561, 0
        %v7632 = vsel %vm2075, %v7562, 0
        %v7635 = vsel %vm2075, %v7563, 0
        %v7638 = vsel %vm2075, %v7564, 0
        %v7641 = vsel %vm2075, %v7565, 0
        %v7644 = vsel %vm2075, %v7566, 0
        %v7647 = vsel %vm2075, %v7567, 0
        %v7650 = vsel %vm2075, %v7568, 0
        %v7653 = vsel %vm2075, %v7569, 0
        %v7656 = vsel %vm2075, %v7570, 0
        %v7659 = vsel %vm2075, %v7571, 0
        %v7662 = vsel %vm2075, %v7572, 0
        %v7665 = vsel %vm2075, %v7573, 0
        %v7668 = vsel %vm2075, %v7574, 0
        %v7671 = vsel %vm2075, %v7575, 0
        %v7674 = vsel %vm2075, %v7576, 0
        %v7677 = vsel %vm2075, %v7577, 0
        %v7680 = vsel %vm610, %v7582, 0
        %7682 = vmatprep.subr.mxu0 0.0
        %7683 = vmatpush1.msra.mxu0 %v7578
        %7684 = vmatprep.subr.mxu0 0.0
        %7685 = vmatpush1.msra.mxu0 %v7579
        %7686 = vmatprep.subr.mxu0 0.0
        %7687 = vmatpush1.msra.mxu0 %v7580
        %7688 = vmatprep.subr.mxu0 0.0
        %7689 = vmatpush1.msra.mxu0 %v7581
        %7690 = vmatprep.subr.mxu0 0.0
        %7691 = vmatpush1.msra.mxu0 %v7680
        %7692 = vmatprep.subr.mxu0 0.0
        %7693 = vmatpush1.msra.mxu0 0.0
        %7694 = vmatprep.subr.mxu0 0.0
        %7695 = vmatpush1.msra.mxu0 0.0
        %7696 = vmatprep.subr.mxu0 0.0
        %7697 = vmatpush1.msra.mxu0 0.0
        %7698 = vmatprep.subr.mxu0 0.0
        %7699 = vmatpush1.msra.mxu0 0.0
        %7700 = vmatprep.subr.mxu0 0.0
        %7701 = vmatpush1.msra.mxu0 0.0
        %7702 = vmatprep.subr.mxu0 0.0
        %7703 = vmatpush1.msra.mxu0 0.0
        %7704 = vmatprep.subr.mxu0 0.0
        %7705 = vmatpush1.msra.mxu0 0.0
        %7706 = vmatprep.subr.mxu0 0.0
        %7707 = vmatpush1.msra.mxu0 0.0
        %7708 = vmatprep.subr.mxu0 0.0
        %7709 = vmatpush1.msra.mxu0 0.0
        %7710 = vmatprep.subr.mxu0 0.0
        %7711 = vmatpush1.msra.mxu0 0.0
        %7712 = vmatprep.subr.mxu0 0.0
        %7713 = vmatpush1.msra.mxu0 0.0
        %7714 = vmatprep.subr.mxu0 0.0
        %7715 = vmatpush1.msra.mxu0 0.0
        %7716 = vmatprep.subr.mxu0 0.0
        %7717 = vmatpush1.msra.mxu0 0.0
        %7718 = vmatprep.subr.mxu0 0.0
        %7719 = vmatpush1.msra.mxu0 0.0
        %7720 = vmatprep.subr.mxu0 0.0
        %7721 = vmatpush1.msra.mxu0 0.0
        %7722 = vmatprep.subr.mxu0 0.0
        %7723 = vmatpush1.msra.mxu0 0.0
        %7724 = vmatprep.subr.mxu0 0.0
        %7725 = vmatpush1.msra.mxu0 0.0
        %7726 = vmatprep.subr.mxu0 0.0
        %7727 = vmatpush1.msra.mxu0 0.0
        %7728 = vmatprep.subr.mxu0 0.0
        %7729 = vmatpush1.msra.mxu0 0.0
        %7730 = vmatprep.subr.mxu0 0.0
        %7731 = vmatpush1.msra.mxu0 0.0
        %7732 = vmatprep.subr.mxu0 0.0
        %7733 = vmatpush1.msra.mxu0 0.0
        %7734 = vmatprep.subr.mxu0 0.0
        %7735 = vmatpush1.msra.mxu0 0.0
        %7736 = vmatprep.subr.mxu0 0.0
        %7737 = vmatpush1.msra.mxu0 0.0
        %7738 = vmatprep.subr.mxu0 0.0
        %7739 = vmatpush1.msra.mxu0 0.0
        %7740 = vmatprep.subr.mxu0 0.0
        %7741 = vmatpush1.msra.mxu0 0.0
        %7742 = vmatprep.subr.mxu0 0.0
        %7743 = vmatpush1.msra.mxu0 0.0
        %7744 = vmatprep.subr.mxu0 0.0
        %7745 = vmatpush1.msra.mxu0 0.0
        %7746 = vmatprep.mubr.f32.mxu0 0.0
        %7747 = vmatmul.mubr.f32.gmra.mrb[0].mxu0 %v7584
        %v7748 = vpop.f32.mrb[0].mxu0
        %v7749 = vadd.f32 0.0, %v7748
        %v7750 = vpop.f32.mrb[0].mxu0
        %7751 = vmatprep.mubr.f32.mxu0 0.0
        %7752 = vmatmul.mubr.f32.gmra.mrb[0].mxu0 %v7587
        %v7753 = vpop.f32.mrb[0].mxu0
        %v7754 = vadd.f32 0.0, %v7753
        %v7755 = vpop.f32.mrb[0].mxu0
        %7756 = vmatprep.mubr.f32.mxu0 0.0
        %7757 = vmatmul.mubr.f32.gmra.mrb[0].mxu0 %v7590
        %v7758 = vpop.f32.mrb[0].mxu0
        %v7759 = vadd.f32 0.0, %v7758
        %v7760 = vpop.f32.mrb[0].mxu0
        %7761 = vmatprep.mubr.f32.mxu0 0.0
        %7762 = vmatmul.mubr.f32.gmra.mrb[0].mxu0 %v7593
        %v7763 = vpop.f32.mrb[0].mxu0
        %v7764 = vadd.f32 0.0, %v7763
        %v7765 = vpop.f32.mrb[0].mxu0
        %7766 = vmatprep.mubr.f32.mxu0 0.0
        %7767 = vmatmul.mubr.f32.gmra.mrb[0].mxu0 %v7596
        %v7768 = vpop.f32.mrb[0].mxu0
        %v7769 = vadd.f32 0.0, %v7768
        %v7770 = vpop.f32.mrb[0].mxu0
        %7771 = vmatprep.mubr.f32.mxu0 0.0
        %7772 = vmatmul.mubr.f32.gmra.mrb[0].mxu0 %v7599
        %v7773 = vpop.f32.mrb[0].mxu0
        %v7774 = vadd.f32 0.0, %v7773
        %v7775 = vpop.f32.mrb[0].mxu0
        %7776 = vmatprep.mubr.f32.mxu0 0.0
        %7777 = vmatmul.mubr.f32.gmra.mrb[0].mxu0 %v7602
        %v7778 = vpop.f32.mrb[0].mxu0
        %v7779 = vadd.f32 0.0, %v7778
        %v7780 = vpop.f32.mrb[0].mxu0
        %7781 = vmatprep.mubr.f32.mxu0 0.0
        %7782 = vmatmul.mubr.f32.gmra.mrb[0].mxu0 %v7605
        %v7783 = vpop.f32.mrb[0].mxu0
        %v7784 = vadd.f32 0.0, %v7783
        %v7785 = vpop.f32.mrb[0].mxu0
        %7786 = vmatprep.mubr.f32.mxu0 0.0
        %7787 = vmatmul.mubr.f32.gmra.mrb[0].mxu0 %v7608
        %v7788 = vpop.f32.mrb[0].mxu0
        %v7789 = vadd.f32 0.0, %v7788
        %v7790 = vpop.f32.mrb[0].mxu0
        %7791 = vmatprep.mubr.f32.mxu0 0.0
        %7792 = vmatmul.mubr.f32.gmra.mrb[0].mxu0 %v7611
        %v7793 = vpop.f32.mrb[0].mxu0
        %v7794 = vadd.f32 0.0, %v7793
        %v7795 = vpop.f32.mrb[0].mxu0
        %7796 = vmatprep.mubr.f32.mxu0 0.0
        %7797 = vmatmul.mubr.f32.gmra.mrb[0].mxu0 %v7614
        %v7798 = vpop.f32.mrb[0].mxu0
        %v7799 = vadd.f32 0.0, %v7798
        %v7800 = vpop.f32.mrb[0].mxu0
        %7801 = vmatprep.mubr.f32.mxu0 0.0
        %7802 = vmatmul.mubr.f32.gmra.mrb[0].mxu0 %v7617
        %v7803 = vpop.f32.mrb[0].mxu0
        %v7804 = vadd.f32 0.0, %v7803
        %v7805 = vpop.f32.mrb[0].mxu0
        %7806 = vmatprep.mubr.f32.mxu0 0.0
        %7807 = vmatmul.mubr.f32.gmra.mrb[0].mxu0 %v7620
        %v7808 = vpop.f32.mrb[0].mxu0
        %v7809 = vadd.f32 0.0, %v7808
        %v7810 = vpop.f32.mrb[0].mxu0
        %7811 = vmatprep.mubr.f32.mxu0 0.0
        %7812 = vmatmul.mubr.f32.gmra.mrb[0].mxu0 %v7623
        %v7813 = vpop.f32.mrb[0].mxu0
        %v7814 = vadd.f32 0.0, %v7813
        %v7815 = vpop.f32.mrb[0].mxu0
        %7816 = vmatprep.mubr.f32.mxu0 0.0
        %7817 = vmatmul.mubr.f32.gmra.mrb[0].mxu0 %v7626
        %v7818 = vpop.f32.mrb[0].mxu0
        %v7819 = vadd.f32 0.0, %v7818
        %v7820 = vpop.f32.mrb[0].mxu0
        %7821 = vmatprep.mubr.f32.mxu0 0.0
        %7822 = vmatmul.mubr.f32.gmra.mrb[0].mxu0 %v7629
        %v7823 = vpop.f32.mrb[0].mxu0
        %v7824 = vadd.f32 0.0, %v7823
        %v7825 = vpop.f32.mrb[0].mxu0
        %7826 = vmatprep.mubr.f32.mxu0 0.0
        %7827 = vmatmul.mubr.f32.gmra.mrb[0].mxu0 %v7632
        %v7828 = vpop.f32.mrb[0].mxu0
        %v7829 = vadd.f32 0.0, %v7828
        %v7830 = vpop.f32.mrb[0].mxu0
        %7831 = vmatprep.mubr.f32.mxu0 0.0
        %7832 = vmatmul.mubr.f32.gmra.mrb[0].mxu0 %v7635
        %v7833 = vpop.f32.mrb[0].mxu0
        %v7834 = vadd.f32 0.0, %v7833
        %v7835 = vpop.f32.mrb[0].mxu0
        %7836 = vmatprep.mubr.f32.mxu0 0.0
        %7837 = vmatmul.mubr.f32.gmra.mrb[0].mxu0 %v7638
        %v7838 = vpop.f32.mrb[0].mxu0
        %v7839 = vadd.f32 0.0, %v7838
        %v7840 = vpop.f32.mrb[0].mxu0
        %7841 = vmatprep.mubr.f32.mxu0 0.0
        %7842 = vmatmul.mubr.f32.gmra.mrb[0].mxu0 %v7641
        %v7843 = vpop.f32.mrb[0].mxu0
        %v7844 = vadd.f32 0.0, %v7843
        %v7845 = vpop.f32.mrb[0].mxu0
        %7846 = vmatprep.mubr.f32.mxu0 0.0
        %7847 = vmatmul.mubr.f32.gmra.mrb[0].mxu0 %v7644
        %v7848 = vpop.f32.mrb[0].mxu0
        %v7849 = vadd.f32 0.0, %v7848
        %v7850 = vpop.f32.mrb[0].mxu0
        %7851 = vmatprep.mubr.f32.mxu0 0.0
        %7852 = vmatmul.mubr.f32.gmra.mrb[0].mxu0 %v7647
        %v7853 = vpop.f32.mrb[0].mxu0
        %v7854 = vadd.f32 0.0, %v7853
        %v7855 = vpop.f32.mrb[0].mxu0
        %7856 = vmatprep.mubr.f32.mxu0 0.0
        %7857 = vmatmul.mubr.f32.gmra.mrb[0].mxu0 %v7650
        %v7858 = vpop.f32.mrb[0].mxu0
        %v7859 = vadd.f32 0.0, %v7858
        %v7860 = vpop.f32.mrb[0].mxu0
        %7861 = vmatprep.mubr.f32.mxu0 0.0
        %7862 = vmatmul.mubr.f32.gmra.mrb[0].mxu0 %v7653
        %v7863 = vpop.f32.mrb[0].mxu0
        %v7864 = vadd.f32 0.0, %v7863
        %v7865 = vpop.f32.mrb[0].mxu0
        %7866 = vmatprep.mubr.f32.mxu0 0.0
        %7867 = vmatmul.mubr.f32.gmra.mrb[0].mxu0 %v7656
        %v7868 = vpop.f32.mrb[0].mxu0
        %v7869 = vadd.f32 0.0, %v7868
        %v7870 = vpop.f32.mrb[0].mxu0
        %7871 = vmatprep.mubr.f32.mxu0 0.0
        %7872 = vmatmul.mubr.f32.gmra.mrb[0].mxu0 %v7659
        %v7873 = vpop.f32.mrb[0].mxu0
        %v7874 = vadd.f32 0.0, %v7873
        %v7875 = vpop.f32.mrb[0].mxu0
        %7876 = vmatprep.mubr.f32.mxu0 0.0
        %7877 = vmatmul.mubr.f32.gmra.mrb[0].mxu0 %v7662
        %v7878 = vpop.f32.mrb[0].mxu0
        %v7879 = vadd.f32 0.0, %v7878
        %v7880 = vpop.f32.mrb[0].mxu0
        %7881 = vmatprep.mubr.f32.mxu0 0.0
        %7882 = vmatmul.mubr.f32.gmra.mrb[0].mxu0 %v7665
        %v7883 = vpop.f32.mrb[0].mxu0
        %v7884 = vadd.f32 0.0, %v7883
        %v7885 = vpop.f32.mrb[0].mxu0
        %7886 = vmatprep.mubr.f32.mxu0 0.0
        %7887 = vmatmul.mubr.f32.gmra.mrb[0].mxu0 %v7668
        %v7888 = vpop.f32.mrb[0].mxu0
        %v7889 = vadd.f32 0.0, %v7888
        %v7890 = vpop.f32.mrb[0].mxu0
        %7891 = vmatprep.mubr.f32.mxu0 0.0
        %7892 = vmatmul.mubr.f32.gmra.mrb[0].mxu0 %v7671
        %v7893 = vpop.f32.mrb[0].mxu0
        %v7894 = vadd.f32 0.0, %v7893
        %v7895 = vpop.f32.mrb[0].mxu0
        %7896 = vmatprep.mubr.f32.mxu0 0.0
        %7897 = vmatmul.mubr.f32.gmra.mrb[0].mxu0 %v7674
        %v7898 = vpop.f32.mrb[0].mxu0
        %v7899 = vadd.f32 0.0, %v7898
        %v7900 = vpop.f32.mrb[0].mxu0
        %7901 = vmatprep.mubr.f32.mxu0 0.0
        %7902 = vmatmul.mubr.f32.gmra.mrb[0].mxu0 %v7677
        %v7903 = vpop.f32.mrb[0].mxu0
        %v7904 = vadd.f32 0.0, %v7903
        %v7905 = vpop.f32.mrb[0].mxu0
        %7906 = vdwg.mxu0
        %v7907 = vld [vmem:[%s4] sm:$0x1]
        %v7909 = vlaneseq
        %v7910 = vshrl.u32 %v7909, 7
        %v7911 = vsub.s32 0, %v7910
        %v7912 = vrot.slane %v7907, %v7911
        %v7914 = vadd.f32 %v7749, %v7912
        %v7915 = vadd.f32 %v7754, %v7912
        %v7916 = vadd.f32 %v7759, %v7912
        %v7917 = vadd.f32 %v7764, %v7912
        %v7918 = vadd.f32 %v7769, %v7912
        %v7919 = vadd.f32 %v7774, %v7912
        %v7920 = vadd.f32 %v7779, %v7912
        %v7921 = vadd.f32 %v7784, %v7912
        %v7922 = vadd.f32 %v7789, %v7912
        %v7923 = vadd.f32 %v7794, %v7912
        %v7924 = vadd.f32 %v7799, %v7912
        %v7925 = vadd.f32 %v7804, %v7912
        %v7926 = vadd.f32 %v7809, %v7912
        %v7927 = vadd.f32 %v7814, %v7912
        %v7928 = vadd.f32 %v7819, %v7912
        %v7929 = vadd.f32 %v7824, %v7912
        %v7930 = vadd.f32 %v7829, %v7912
        %v7931 = vadd.f32 %v7834, %v7912
        %v7932 = vadd.f32 %v7839, %v7912
        %v7933 = vadd.f32 %v7844, %v7912
        %v7934 = vadd.f32 %v7849, %v7912
        %v7935 = vadd.f32 %v7854, %v7912
        %v7936 = vadd.f32 %v7859, %v7912
        %v7937 = vadd.f32 %v7864, %v7912
        %v7938 = vadd.f32 %v7869, %v7912
        %v7939 = vadd.f32 %v7874, %v7912
        %v7940 = vadd.f32 %v7879, %v7912
        %v7941 = vadd.f32 %v7884, %v7912
        %v7942 = vadd.f32 %v7889, %v7912
        %v7943 = vadd.f32 %v7894, %v7912
        %v7944 = vadd.f32 %v7899, %v7912
        %v7945 = vadd.f32 %v7904, %v7912
        %v7946 = vmax.f32 %v7914, 0.0
        %v7947 = vmax.f32 %v7915, 0.0
        %v7948 = vmax.f32 %v7916, 0.0
        %v7949 = vmax.f32 %v7917, 0.0
        %v7950 = vmax.f32 %v7918, 0.0
        %v7951 = vmax.f32 %v7919, 0.0
        %v7952 = vmax.f32 %v7920, 0.0
        %v7953 = vmax.f32 %v7921, 0.0
        %v7954 = vmax.f32 %v7922, 0.0
        %v7955 = vmax.f32 %v7923, 0.0
        %v7956 = vmax.f32 %v7924, 0.0
        %v7957 = vmax.f32 %v7925, 0.0
        %v7958 = vmax.f32 %v7926, 0.0
        %v7959 = vmax.f32 %v7927, 0.0
        %v7960 = vmax.f32 %v7928, 0.0
        %v7961 = vmax.f32 %v7929, 0.0
        %v7962 = vmax.f32 %v7930, 0.0
        %v7963 = vmax.f32 %v7931, 0.0
        %v7964 = vmax.f32 %v7932, 0.0
        %v7965 = vmax.f32 %v7933, 0.0
        %v7966 = vmax.f32 %v7934, 0.0
        %v7967 = vmax.f32 %v7935, 0.0
        %v7968 = vmax.f32 %v7936, 0.0
        %v7969 = vmax.f32 %v7937, 0.0
        %v7970 = vmax.f32 %v7938, 0.0
        %v7971 = vmax.f32 %v7939, 0.0
        %v7972 = vmax.f32 %v7940, 0.0
        %v7973 = vmax.f32 %v7941, 0.0
        %v7974 = vmax.f32 %v7942, 0.0
        %v7975 = vmax.f32 %v7943, 0.0
        %v7976 = vmax.f32 %v7944, 0.0
        %v7977 = vmax.f32 %v7945, 0.0
        %v7978 = vld [vmem:[#allocation3] sm:$0xff]
        %v7979 = vld [vmem:[#allocation3 + $0x8] sm:$0xff]
        %v7980 = vld [vmem:[#allocation3 + $0x10] sm:$0xf]
        %v7981 = vld [vmem:[#allocation3 + $0x18] sm:$0xff]
        %v7982 = vld [vmem:[#allocation3 + $0x20] sm:$0xff]
        %v7983 = vld [vmem:[#allocation3 + $0x28] sm:$0xf]
        %v7984 = vld [vmem:[#allocation3 + $0x30] sm:$0xff]
        %v7985 = vld [vmem:[#allocation3 + $0x38] sm:$0xff]
        %v7986 = vld [vmem:[#allocation3 + $0x40] sm:$0xf]
        %v7987 = vld [vmem:[#allocation3 + $0x48] sm:$0xff]
        %v7988 = vld [vmem:[#allocation3 + $0x50] sm:$0xff]
        %v7989 = vld [vmem:[#allocation3 + $0x58] sm:$0xf]
        %v7990 = vld [vmem:[#allocation3 + $0x60] sm:$0xff]
        %v7991 = vld [vmem:[#allocation3 + $0x68] sm:$0xff]
        %v7992 = vld [vmem:[#allocation3 + $0x70] sm:$0xf]
        %v7993 = vld [vmem:[#allocation3 + $0x78] sm:$0xff]
        %v7994 = vld [vmem:[#allocation3 + $0x80] sm:$0xff]
        %v7995 = vld [vmem:[#allocation3 + $0x88] sm:$0xf]
        %v7996 = vld [vmem:[#allocation3 + $0x90] sm:$0xff]
        %v7997 = vld [vmem:[#allocation3 + $0x98] sm:$0xff]
        %v7998 = vld [vmem:[#allocation3 + $0xa0] sm:$0xf]
        %v7999 = vld [vmem:[#allocation3 + $0xa8] sm:$0xff]
        %v8000 = vld [vmem:[#allocation3 + $0xb0] sm:$0xff]
        %v8001 = vld [vmem:[#allocation3 + $0xb8] sm:$0xf]
        %v8002 = vld [vmem:[#allocation3 + $0xc0] sm:$0xff]
        %v8003 = vld [vmem:[#allocation3 + $0xc8] sm:$0xff]
        %v8004 = vld [vmem:[#allocation3 + $0xd0] sm:$0xf]
        %v8005 = vld [vmem:[#allocation3 + $0xd8] sm:$0xff]
        %v8006 = vld [vmem:[#allocation3 + $0xe0] sm:$0xff]
        %v8007 = vld [vmem:[#allocation3 + $0xe8] sm:$0xf]
        %v8008 = vld [vmem:[#allocation3 + $0xf0] sm:$0xff]
        %v8009 = vld [vmem:[#allocation3 + $0xf8] sm:$0xff]
        %v8010 = vld [vmem:[#allocation3 + $0x100] sm:$0xf]
        %v8011 = vld [vmem:[#allocation3 + $0x108] sm:$0xff]
        %v8012 = vld [vmem:[#allocation3 + $0x110] sm:$0xff]
        %v8013 = vld [vmem:[#allocation3 + $0x118] sm:$0xf]
        %v8014 = vld [vmem:[#allocation3 + $0x120] sm:$0xff]
        %v8015 = vld [vmem:[#allocation3 + $0x128] sm:$0xff]
        %v8016 = vld [vmem:[#allocation3 + $0x130] sm:$0xf]
        %v8017 = vld [vmem:[#allocation3 + $0x138] sm:$0xff]
        %v8018 = vld [vmem:[#allocation3 + $0x140] sm:$0xff]
        %v8019 = vld [vmem:[#allocation3 + $0x148] sm:$0xf]
        %v8020 = vld [vmem:[#allocation3 + $0x150] sm:$0xff]
        %v8021 = vld [vmem:[#allocation3 + $0x158] sm:$0xff]
        %v8022 = vld [vmem:[#allocation3 + $0x160] sm:$0xf]
        %v8023 = vld [vmem:[#allocation3 + $0x168] sm:$0xff]
        %v8024 = vld [vmem:[#allocation3 + $0x170] sm:$0xff]
        %v8025 = vld [vmem:[#allocation3 + $0x178] sm:$0xf]
        %v8026 = vld [vmem:[#allocation3 + $0x180] sm:$0xff]
        %v8027 = vld [vmem:[#allocation3 + $0x188] sm:$0xff]
        %v8028 = vld [vmem:[#allocation3 + $0x190] sm:$0xf]
        %v8029 = vld [vmem:[#allocation3 + $0x198] sm:$0xff]
        %v8030 = vld [vmem:[#allocation3 + $0x1a0] sm:$0xff]
        %v8031 = vld [vmem:[#allocation3 + $0x1a8] sm:$0xf]
        %v8032 = vld [vmem:[#allocation3 + $0x1b0] sm:$0xff]
        %v8033 = vld [vmem:[#allocation3 + $0x1b8] sm:$0xff]
        %v8034 = vld [vmem:[#allocation3 + $0x1c0] sm:$0xf]
        %v8035 = vld [vmem:[#allocation3 + $0x1c8] sm:$0xff]
        %v8036 = vld [vmem:[#allocation3 + $0x1d0] sm:$0xff]
        %v8037 = vld [vmem:[#allocation3 + $0x1d8] sm:$0xf]
        %v8098 = vrot.slane %v7978, 1
        %v8099 = vrot.slane %v7979, 1
        %v8100 = vsel %vm1307, %v8098, %v8099
        %v8101 = vrot.slane %v7980, 1
        %v8102 = vsel %vm1307, %v8099, %v8101
        %v8103 = vrot.slane %v7981, 1
        %v8104 = vrot.slane %v7982, 1
        %v8105 = vsel %vm1307, %v8103, %v8104
        %v8106 = vrot.slane %v7983, 1
        %v8107 = vsel %vm1307, %v8104, %v8106
        %v8108 = vrot.slane %v7984, 1
        %v8109 = vrot.slane %v7985, 1
        %v8110 = vsel %vm1307, %v8108, %v8109
        %v8111 = vrot.slane %v7986, 1
        %v8112 = vsel %vm1307, %v8109, %v8111
        %v8113 = vrot.slane %v7987, 1
        %v8114 = vrot.slane %v7988, 1
        %v8115 = vsel %vm1307, %v8113, %v8114
        %v8116 = vrot.slane %v7989, 1
        %v8117 = vsel %vm1307, %v8114, %v8116
        %v8118 = vrot.slane %v7990, 1
        %v8119 = vrot.slane %v7991, 1
        %v8120 = vsel %vm1307, %v8118, %v8119
        %v8121 = vrot.slane %v7992, 1
        %v8122 = vsel %vm1307, %v8119, %v8121
        %v8123 = vrot.slane %v7993, 1
        %v8124 = vrot.slane %v7994, 1
        %v8125 = vsel %vm1307, %v8123, %v8124
        %v8126 = vrot.slane %v7995, 1
        %v8127 = vsel %vm1307, %v8124, %v8126
        %v8128 = vrot.slane %v7996, 1
        %v8129 = vrot.slane %v7997, 1
        %v8130 = vsel %vm1307, %v8128, %v8129
        %v8131 = vrot.slane %v7998, 1
        %v8132 = vsel %vm1307, %v8129, %v8131
        %v8133 = vrot.slane %v7999, 1
        %v8134 = vrot.slane %v8000, 1
        %v8135 = vsel %vm1307, %v8133, %v8134
        %v8136 = vrot.slane %v8001, 1
        %v8137 = vsel %vm1307, %v8134, %v8136
        %v8138 = vrot.slane %v8002, 1
        %v8139 = vrot.slane %v8003, 1
        %v8140 = vsel %vm1307, %v8138, %v8139
        %v8141 = vrot.slane %v8004, 1
        %v8142 = vsel %vm1307, %v8139, %v8141
        %v8143 = vrot.slane %v8005, 1
        %v8144 = vrot.slane %v8006, 1
        %v8145 = vsel %vm1307, %v8143, %v8144
        %v8146 = vrot.slane %v8007, 1
        %v8147 = vsel %vm1307, %v8144, %v8146
        %v8148 = vrot.slane %v8008, 1
        %v8149 = vrot.slane %v8009, 1
        %v8150 = vsel %vm1307, %v8148, %v8149
        %v8151 = vrot.slane %v8010, 1
        %v8152 = vsel %vm1307, %v8149, %v8151
        %v8153 = vrot.slane %v8011, 1
        %v8154 = vrot.slane %v8012, 1
        %v8155 = vsel %vm1307, %v8153, %v8154
        %v8156 = vrot.slane %v8013, 1
        %v8157 = vsel %vm1307, %v8154, %v8156
        %v8158 = vrot.slane %v8014, 1
        %v8159 = vrot.slane %v8015, 1
        %v8160 = vsel %vm1307, %v8158, %v8159
        %v8161 = vrot.slane %v8016, 1
        %v8162 = vsel %vm1307, %v8159, %v8161
        %v8163 = vrot.slane %v8017, 1
        %v8164 = vrot.slane %v8018, 1
        %v8165 = vsel %vm1307, %v8163, %v8164
        %v8166 = vrot.slane %v8019, 1
        %v8167 = vsel %vm1307, %v8164, %v8166
        %v8168 = vrot.slane %v8020, 1
        %v8169 = vrot.slane %v8021, 1
        %v8170 = vsel %vm1307, %v8168, %v8169
        %v8171 = vrot.slane %v8022, 1
        %v8172 = vsel %vm1307, %v8169, %v8171
        %v8173 = vrot.slane %v8023, 1
        %v8174 = vrot.slane %v8024, 1
        %v8175 = vsel %vm1307, %v8173, %v8174
        %v8176 = vrot.slane %v8025, 1
        %v8177 = vsel %vm1307, %v8174, %v8176
        %v8178 = vrot.slane %v8026, 1
        %v8179 = vrot.slane %v8027, 1
        %v8180 = vsel %vm1307, %v8178, %v8179
        %v8181 = vrot.slane %v8028, 1
        %v8182 = vsel %vm1307, %v8179, %v8181
        %v8183 = vrot.slane %v8029, 1
        %v8184 = vrot.slane %v8030, 1
        %v8185 = vsel %vm1307, %v8183, %v8184
        %v8186 = vrot.slane %v8031, 1
        %v8187 = vsel %vm1307, %v8184, %v8186
        %v8188 = vrot.slane %v8032, 1
        %v8189 = vrot.slane %v8033, 1
        %v8190 = vsel %vm1307, %v8188, %v8189
        %v8191 = vrot.slane %v8034, 1
        %v8192 = vsel %vm1307, %v8189, %v8191
        %v8193 = vrot.slane %v8035, 1
        %v8194 = vrot.slane %v8036, 1
        %v8195 = vsel %vm1307, %v8193, %v8194
        %v8196 = vrot.slane %v8037, 1
        %v8197 = vsel %vm1307, %v8194, %v8196
        %8198 = vrot.lane.b32.xlu0 %v8100, 4
        %v8199 = vpop.permute.xlu0 %8198
        %8200 = vrot.lane.b32.xlu0 %v8102, 4
        %v8201 = vpop.permute.xlu0 %8200
        %8202 = vrot.lane.b32.xlu0 %v8105, 4
        %v8203 = vpop.permute.xlu0 %8202
        %8204 = vrot.lane.b32.xlu0 %v8107, 4
        %v8205 = vpop.permute.xlu0 %8204
        %8206 = vrot.lane.b32.xlu0 %v8110, 4
        %v8207 = vpop.permute.xlu0 %8206
        %8208 = vrot.lane.b32.xlu0 %v8112, 4
        %v8209 = vpop.permute.xlu0 %8208
        %8210 = vrot.lane.b32.xlu0 %v8115, 4
        %v8211 = vpop.permute.xlu0 %8210
        %8212 = vrot.lane.b32.xlu0 %v8117, 4
        %v8213 = vpop.permute.xlu0 %8212
        %8214 = vrot.lane.b32.xlu0 %v8120, 4
        %v8215 = vpop.permute.xlu0 %8214
        %8216 = vrot.lane.b32.xlu0 %v8122, 4
        %v8217 = vpop.permute.xlu0 %8216
        %8218 = vrot.lane.b32.xlu0 %v8125, 4
        %v8219 = vpop.permute.xlu0 %8218
        %8220 = vrot.lane.b32.xlu0 %v8127, 4
        %v8221 = vpop.permute.xlu0 %8220
        %8222 = vrot.lane.b32.xlu0 %v8130, 4
        %v8223 = vpop.permute.xlu0 %8222
        %8224 = vrot.lane.b32.xlu0 %v8132, 4
        %v8225 = vpop.permute.xlu0 %8224
        %8226 = vrot.lane.b32.xlu0 %v8135, 4
        %v8227 = vpop.permute.xlu0 %8226
        %8228 = vrot.lane.b32.xlu0 %v8137, 4
        %v8229 = vpop.permute.xlu0 %8228
        %8230 = vrot.lane.b32.xlu0 %v8140, 4
        %v8231 = vpop.permute.xlu0 %8230
        %8232 = vrot.lane.b32.xlu0 %v8142, 4
        %v8233 = vpop.permute.xlu0 %8232
        %8234 = vrot.lane.b32.xlu0 %v8145, 4
        %v8235 = vpop.permute.xlu0 %8234
        %8236 = vrot.lane.b32.xlu0 %v8147, 4
        %v8237 = vpop.permute.xlu0 %8236
        %8238 = vrot.lane.b32.xlu0 %v8150, 4
        %v8239 = vpop.permute.xlu0 %8238
        %8240 = vrot.lane.b32.xlu0 %v8152, 4
        %v8241 = vpop.permute.xlu0 %8240
        %8242 = vrot.lane.b32.xlu0 %v8155, 4
        %v8243 = vpop.permute.xlu0 %8242
        %8244 = vrot.lane.b32.xlu0 %v8157, 4
        %v8245 = vpop.permute.xlu0 %8244
        %8246 = vrot.lane.b32.xlu0 %v8160, 4
        %v8247 = vpop.permute.xlu0 %8246
        %8248 = vrot.lane.b32.xlu0 %v8162, 4
        %v8249 = vpop.permute.xlu0 %8248
        %8250 = vrot.lane.b32.xlu0 %v8165, 4
        %v8251 = vpop.permute.xlu0 %8250
        %8252 = vrot.lane.b32.xlu0 %v8167, 4
        %v8253 = vpop.permute.xlu0 %8252
        %8254 = vrot.lane.b32.xlu0 %v8170, 4
        %v8255 = vpop.permute.xlu0 %8254
        %8256 = vrot.lane.b32.xlu0 %v8172, 4
        %v8257 = vpop.permute.xlu0 %8256
        %8258 = vrot.lane.b32.xlu0 %v8175, 4
        %v8259 = vpop.permute.xlu0 %8258
        %8260 = vrot.lane.b32.xlu0 %v8177, 4
        %v8261 = vpop.permute.xlu0 %8260
        %8262 = vrot.lane.b32.xlu0 %v8180, 4
        %v8263 = vpop.permute.xlu0 %8262
        %8264 = vrot.lane.b32.xlu0 %v8182, 4
        %v8265 = vpop.permute.xlu0 %8264
        %8266 = vrot.lane.b32.xlu0 %v8185, 4
        %v8267 = vpop.permute.xlu0 %8266
        %8268 = vrot.lane.b32.xlu0 %v8187, 4
        %v8269 = vpop.permute.xlu0 %8268
        %8270 = vrot.lane.b32.xlu0 %v8190, 4
        %v8271 = vpop.permute.xlu0 %8270
        %8272 = vrot.lane.b32.xlu0 %v8192, 4
        %v8273 = vpop.permute.xlu0 %8272
        %8274 = vrot.lane.b32.xlu0 %v8195, 4
        %v8275 = vpop.permute.xlu0 %8274
        %8276 = vrot.lane.b32.xlu0 %v8197, 4
        %v8277 = vpop.permute.xlu0 %8276
        %v8318 = vrot.slane %v7978, 2
        %v8319 = vrot.slane %v7979, 2
        %v8320 = vsel %vm1506, %v8318, %v8319
        %v8321 = vrot.slane %v7980, 2
        %v8322 = vsel %vm1506, %v8319, %v8321
        %v8323 = vrot.slane %v7981, 2
        %v8324 = vrot.slane %v7982, 2
        %v8325 = vsel %vm1506, %v8323, %v8324
        %v8326 = vrot.slane %v7983, 2
        %v8327 = vsel %vm1506, %v8324, %v8326
        %v8328 = vrot.slane %v7984, 2
        %v8329 = vrot.slane %v7985, 2
        %v8330 = vsel %vm1506, %v8328, %v8329
        %v8331 = vrot.slane %v7986, 2
        %v8332 = vsel %vm1506, %v8329, %v8331
        %v8333 = vrot.slane %v7987, 2
        %v8334 = vrot.slane %v7988, 2
        %v8335 = vsel %vm1506, %v8333, %v8334
        %v8336 = vrot.slane %v7989, 2
        %v8337 = vsel %vm1506, %v8334, %v8336
        %v8338 = vrot.slane %v7990, 2
        %v8339 = vrot.slane %v7991, 2
        %v8340 = vsel %vm1506, %v8338, %v8339
        %v8341 = vrot.slane %v7992, 2
        %v8342 = vsel %vm1506, %v8339, %v8341
        %v8343 = vrot.slane %v7993, 2
        %v8344 = vrot.slane %v7994, 2
        %v8345 = vsel %vm1506, %v8343, %v8344
        %v8346 = vrot.slane %v7995, 2
        %v8347 = vsel %vm1506, %v8344, %v8346
        %v8348 = vrot.slane %v7996, 2
        %v8349 = vrot.slane %v7997, 2
        %v8350 = vsel %vm1506, %v8348, %v8349
        %v8351 = vrot.slane %v7998, 2
        %v8352 = vsel %vm1506, %v8349, %v8351
        %v8353 = vrot.slane %v7999, 2
        %v8354 = vrot.slane %v8000, 2
        %v8355 = vsel %vm1506, %v8353, %v8354
        %v8356 = vrot.slane %v8001, 2
        %v8357 = vsel %vm1506, %v8354, %v8356
        %v8358 = vrot.slane %v8002, 2
        %v8359 = vrot.slane %v8003, 2
        %v8360 = vsel %vm1506, %v8358, %v8359
        %v8361 = vrot.slane %v8004, 2
        %v8362 = vsel %vm1506, %v8359, %v8361
        %v8363 = vrot.slane %v8005, 2
        %v8364 = vrot.slane %v8006, 2
        %v8365 = vsel %vm1506, %v8363, %v8364
        %v8366 = vrot.slane %v8007, 2
        %v8367 = vsel %vm1506, %v8364, %v8366
        %v8368 = vrot.slane %v8008, 2
        %v8369 = vrot.slane %v8009, 2
        %v8370 = vsel %vm1506, %v8368, %v8369
        %v8371 = vrot.slane %v8010, 2
        %v8372 = vsel %vm1506, %v8369, %v8371
        %v8373 = vrot.slane %v8011, 2
        %v8374 = vrot.slane %v8012, 2
        %v8375 = vsel %vm1506, %v8373, %v8374
        %v8376 = vrot.slane %v8013, 2
        %v8377 = vsel %vm1506, %v8374, %v8376
        %v8378 = vrot.slane %v8014, 2
        %v8379 = vrot.slane %v8015, 2
        %v8380 = vsel %vm1506, %v8378, %v8379
        %v8381 = vrot.slane %v8016, 2
        %v8382 = vsel %vm1506, %v8379, %v8381
        %v8383 = vrot.slane %v8017, 2
        %v8384 = vrot.slane %v8018, 2
        %v8385 = vsel %vm1506, %v8383, %v8384
        %v8386 = vrot.slane %v8019, 2
        %v8387 = vsel %vm1506, %v8384, %v8386
        %v8388 = vrot.slane %v8020, 2
        %v8389 = vrot.slane %v8021, 2
        %v8390 = vsel %vm1506, %v8388, %v8389
        %v8391 = vrot.slane %v8022, 2
        %v8392 = vsel %vm1506, %v8389, %v8391
        %v8393 = vrot.slane %v8023, 2
        %v8394 = vrot.slane %v8024, 2
        %v8395 = vsel %vm1506, %v8393, %v8394
        %v8396 = vrot.slane %v8025, 2
        %v8397 = vsel %vm1506, %v8394, %v8396
        %v8398 = vrot.slane %v8026, 2
        %v8399 = vrot.slane %v8027, 2
        %v8400 = vsel %vm1506, %v8398, %v8399
        %v8401 = vrot.slane %v8028, 2
        %v8402 = vsel %vm1506, %v8399, %v8401
        %v8403 = vrot.slane %v8029, 2
        %v8404 = vrot.slane %v8030, 2
        %v8405 = vsel %vm1506, %v8403, %v8404
        %v8406 = vrot.slane %v8031, 2
        %v8407 = vsel %vm1506, %v8404, %v8406
        %v8408 = vrot.slane %v8032, 2
        %v8409 = vrot.slane %v8033, 2
        %v8410 = vsel %vm1506, %v8408, %v8409
        %v8411 = vrot.slane %v8034, 2
        %v8412 = vsel %vm1506, %v8409, %v8411
        %v8413 = vrot.slane %v8035, 2
        %v8414 = vrot.slane %v8036, 2
        %v8415 = vsel %vm1506, %v8413, %v8414
        %v8416 = vrot.slane %v8037, 2
        %v8417 = vsel %vm1506, %v8414, %v8416
        %8418 = vrot.lane.b32.xlu0 %v8320, 8
        %v8419 = vpop.permute.xlu0 %8418
        %8420 = vrot.lane.b32.xlu0 %v8322, 8
        %v8421 = vpop.permute.xlu0 %8420
        %8422 = vrot.lane.b32.xlu0 %v8325, 8
        %v8423 = vpop.permute.xlu0 %8422
        %8424 = vrot.lane.b32.xlu0 %v8327, 8
        %v8425 = vpop.permute.xlu0 %8424
        %8426 = vrot.lane.b32.xlu0 %v8330, 8
        %v8427 = vpop.permute.xlu0 %8426
        %8428 = vrot.lane.b32.xlu0 %v8332, 8
        %v8429 = vpop.permute.xlu0 %8428
        %8430 = vrot.lane.b32.xlu0 %v8335, 8
        %v8431 = vpop.permute.xlu0 %8430
        %8432 = vrot.lane.b32.xlu0 %v8337, 8
        %v8433 = vpop.permute.xlu0 %8432
        %8434 = vrot.lane.b32.xlu0 %v8340, 8
        %v8435 = vpop.permute.xlu0 %8434
        %8436 = vrot.lane.b32.xlu0 %v8342, 8
        %v8437 = vpop.permute.xlu0 %8436
        %8438 = vrot.lane.b32.xlu0 %v8345, 8
        %v8439 = vpop.permute.xlu0 %8438
        %8440 = vrot.lane.b32.xlu0 %v8347, 8
        %v8441 = vpop.permute.xlu0 %8440
        %8442 = vrot.lane.b32.xlu0 %v8350, 8
        %v8443 = vpop.permute.xlu0 %8442
        %8444 = vrot.lane.b32.xlu0 %v8352, 8
        %v8445 = vpop.permute.xlu0 %8444
        %8446 = vrot.lane.b32.xlu0 %v8355, 8
        %v8447 = vpop.permute.xlu0 %8446
        %8448 = vrot.lane.b32.xlu0 %v8357, 8
        %v8449 = vpop.permute.xlu0 %8448
        %8450 = vrot.lane.b32.xlu0 %v8360, 8
        %v8451 = vpop.permute.xlu0 %8450
        %8452 = vrot.lane.b32.xlu0 %v8362, 8
        %v8453 = vpop.permute.xlu0 %8452
        %8454 = vrot.lane.b32.xlu0 %v8365, 8
        %v8455 = vpop.permute.xlu0 %8454
        %8456 = vrot.lane.b32.xlu0 %v8367, 8
        %v8457 = vpop.permute.xlu0 %8456
        %8458 = vrot.lane.b32.xlu0 %v8370, 8
        %v8459 = vpop.permute.xlu0 %8458
        %8460 = vrot.lane.b32.xlu0 %v8372, 8
        %v8461 = vpop.permute.xlu0 %8460
        %8462 = vrot.lane.b32.xlu0 %v8375, 8
        %v8463 = vpop.permute.xlu0 %8462
        %8464 = vrot.lane.b32.xlu0 %v8377, 8
        %v8465 = vpop.permute.xlu0 %8464
        %8466 = vrot.lane.b32.xlu0 %v8380, 8
        %v8467 = vpop.permute.xlu0 %8466
        %8468 = vrot.lane.b32.xlu0 %v8382, 8
        %v8469 = vpop.permute.xlu0 %8468
        %8470 = vrot.lane.b32.xlu0 %v8385, 8
        %v8471 = vpop.permute.xlu0 %8470
        %8472 = vrot.lane.b32.xlu0 %v8387, 8
        %v8473 = vpop.permute.xlu0 %8472
        %8474 = vrot.lane.b32.xlu0 %v8390, 8
        %v8475 = vpop.permute.xlu0 %8474
        %8476 = vrot.lane.b32.xlu0 %v8392, 8
        %v8477 = vpop.permute.xlu0 %8476
        %8478 = vrot.lane.b32.xlu0 %v8395, 8
        %v8479 = vpop.permute.xlu0 %8478
        %8480 = vrot.lane.b32.xlu0 %v8397, 8
        %v8481 = vpop.permute.xlu0 %8480
        %8482 = vrot.lane.b32.xlu0 %v8400, 8
        %v8483 = vpop.permute.xlu0 %8482
        %8484 = vrot.lane.b32.xlu0 %v8402, 8
        %v8485 = vpop.permute.xlu0 %8484
        %8486 = vrot.lane.b32.xlu0 %v8405, 8
        %v8487 = vpop.permute.xlu0 %8486
        %8488 = vrot.lane.b32.xlu0 %v8407, 8
        %v8489 = vpop.permute.xlu0 %8488
        %8490 = vrot.lane.b32.xlu0 %v8410, 8
        %v8491 = vpop.permute.xlu0 %8490
        %8492 = vrot.lane.b32.xlu0 %v8412, 8
        %v8493 = vpop.permute.xlu0 %8492
        %8494 = vrot.lane.b32.xlu0 %v8415, 8
        %v8495 = vpop.permute.xlu0 %8494
        %8496 = vrot.lane.b32.xlu0 %v8417, 8
        %v8497 = vpop.permute.xlu0 %8496
        %v8538 = vrot.slane %v7978, 3
        %v8539 = vrot.slane %v7979, 3
        %v8540 = vsel %vm3031, %v8538, %v8539
        %v8541 = vrot.slane %v7980, 3
        %v8542 = vsel %vm3031, %v8539, %v8541
        %v8543 = vrot.slane %v7981, 3
        %v8544 = vrot.slane %v7982, 3
        %v8545 = vsel %vm3031, %v8543, %v8544
        %v8546 = vrot.slane %v7983, 3
        %v8547 = vsel %vm3031, %v8544, %v8546
        %v8548 = vrot.slane %v7984, 3
        %v8549 = vrot.slane %v7985, 3
        %v8550 = vsel %vm3031, %v8548, %v8549
        %v8551 = vrot.slane %v7986, 3
        %v8552 = vsel %vm3031, %v8549, %v8551
        %v8553 = vrot.slane %v7987, 3
        %v8554 = vrot.slane %v7988, 3
        %v8555 = vsel %vm3031, %v8553, %v8554
        %v8556 = vrot.slane %v7989, 3
        %v8557 = vsel %vm3031, %v8554, %v8556
        %v8558 = vrot.slane %v7990, 3
        %v8559 = vrot.slane %v7991, 3
        %v8560 = vsel %vm3031, %v8558, %v8559
        %v8561 = vrot.slane %v7992, 3
        %v8562 = vsel %vm3031, %v8559, %v8561
        %v8563 = vrot.slane %v7993, 3
        %v8564 = vrot.slane %v7994, 3
        %v8565 = vsel %vm3031, %v8563, %v8564
        %v8566 = vrot.slane %v7995, 3
        %v8567 = vsel %vm3031, %v8564, %v8566
        %v8568 = vrot.slane %v7996, 3
        %v8569 = vrot.slane %v7997, 3
        %v8570 = vsel %vm3031, %v8568, %v8569
        %v8571 = vrot.slane %v7998, 3
        %v8572 = vsel %vm3031, %v8569, %v8571
        %v8573 = vrot.slane %v7999, 3
        %v8574 = vrot.slane %v8000, 3
        %v8575 = vsel %vm3031, %v8573, %v8574
        %v8576 = vrot.slane %v8001, 3
        %v8577 = vsel %vm3031, %v8574, %v8576
        %v8578 = vrot.slane %v8002, 3
        %v8579 = vrot.slane %v8003, 3
        %v8580 = vsel %vm3031, %v8578, %v8579
        %v8581 = vrot.slane %v8004, 3
        %v8582 = vsel %vm3031, %v8579, %v8581
        %v8583 = vrot.slane %v8005, 3
        %v8584 = vrot.slane %v8006, 3
        %v8585 = vsel %vm3031, %v8583, %v8584
        %v8586 = vrot.slane %v8007, 3
        %v8587 = vsel %vm3031, %v8584, %v8586
        %v8588 = vrot.slane %v8008, 3
        %v8589 = vrot.slane %v8009, 3
        %v8590 = vsel %vm3031, %v8588, %v8589
        %v8591 = vrot.slane %v8010, 3
        %v8592 = vsel %vm3031, %v8589, %v8591
        %v8593 = vrot.slane %v8011, 3
        %v8594 = vrot.slane %v8012, 3
        %v8595 = vsel %vm3031, %v8593, %v8594
        %v8596 = vrot.slane %v8013, 3
        %v8597 = vsel %vm3031, %v8594, %v8596
        %v8598 = vrot.slane %v8014, 3
        %v8599 = vrot.slane %v8015, 3
        %v8600 = vsel %vm3031, %v8598, %v8599
        %v8601 = vrot.slane %v8016, 3
        %v8602 = vsel %vm3031, %v8599, %v8601
        %v8603 = vrot.slane %v8017, 3
        %v8604 = vrot.slane %v8018, 3
        %v8605 = vsel %vm3031, %v8603, %v8604
        %v8606 = vrot.slane %v8019, 3
        %v8607 = vsel %vm3031, %v8604, %v8606
        %v8608 = vrot.slane %v8020, 3
        %v8609 = vrot.slane %v8021, 3
        %v8610 = vsel %vm3031, %v8608, %v8609
        %v8611 = vrot.slane %v8022, 3
        %v8612 = vsel %vm3031, %v8609, %v8611
        %v8613 = vrot.slane %v8023, 3
        %v8614 = vrot.slane %v8024, 3
        %v8615 = vsel %vm3031, %v8613, %v8614
        %v8616 = vrot.slane %v8025, 3
        %v8617 = vsel %vm3031, %v8614, %v8616
        %v8618 = vrot.slane %v8026, 3
        %v8619 = vrot.slane %v8027, 3
        %v8620 = vsel %vm3031, %v8618, %v8619
        %v8621 = vrot.slane %v8028, 3
        %v8622 = vsel %vm3031, %v8619, %v8621
        %v8623 = vrot.slane %v8029, 3
        %v8624 = vrot.slane %v8030, 3
        %v8625 = vsel %vm3031, %v8623, %v8624
        %v8626 = vrot.slane %v8031, 3
        %v8627 = vsel %vm3031, %v8624, %v8626
        %v8628 = vrot.slane %v8032, 3
        %v8629 = vrot.slane %v8033, 3
        %v8630 = vsel %vm3031, %v8628, %v8629
        %v8631 = vrot.slane %v8034, 3
        %v8632 = vsel %vm3031, %v8629, %v8631
        %v8633 = vrot.slane %v8035, 3
        %v8634 = vrot.slane %v8036, 3
        %v8635 = vsel %vm3031, %v8633, %v8634
        %v8636 = vrot.slane %v8037, 3
        %v8637 = vsel %vm3031, %v8634, %v8636
        %8638 = vrot.lane.b32.xlu0 %v8540, 12
        %v8639 = vpop.permute.xlu0 %8638
        %8640 = vrot.lane.b32.xlu0 %v8542, 12
        %v8641 = vpop.permute.xlu0 %8640
        %8642 = vrot.lane.b32.xlu0 %v8545, 12
        %v8643 = vpop.permute.xlu0 %8642
        %8644 = vrot.lane.b32.xlu0 %v8547, 12
        %v8645 = vpop.permute.xlu0 %8644
        %8646 = vrot.lane.b32.xlu0 %v8550, 12
        %v8647 = vpop.permute.xlu0 %8646
        %8648 = vrot.lane.b32.xlu0 %v8552, 12
        %v8649 = vpop.permute.xlu0 %8648
        %8650 = vrot.lane.b32.xlu0 %v8555, 12
        %v8651 = vpop.permute.xlu0 %8650
        %8652 = vrot.lane.b32.xlu0 %v8557, 12
        %v8653 = vpop.permute.xlu0 %8652
        %8654 = vrot.lane.b32.xlu0 %v8560, 12
        %v8655 = vpop.permute.xlu0 %8654
        %8656 = vrot.lane.b32.xlu0 %v8562, 12
        %v8657 = vpop.permute.xlu0 %8656
        %8658 = vrot.lane.b32.xlu0 %v8565, 12
        %v8659 = vpop.permute.xlu0 %8658
        %8660 = vrot.lane.b32.xlu0 %v8567, 12
        %v8661 = vpop.permute.xlu0 %8660
        %8662 = vrot.lane.b32.xlu0 %v8570, 12
        %v8663 = vpop.permute.xlu0 %8662
        %8664 = vrot.lane.b32.xlu0 %v8572, 12
        %v8665 = vpop.permute.xlu0 %8664
        %8666 = vrot.lane.b32.xlu0 %v8575, 12
        %v8667 = vpop.permute.xlu0 %8666
        %8668 = vrot.lane.b32.xlu0 %v8577, 12
        %v8669 = vpop.permute.xlu0 %8668
        %8670 = vrot.lane.b32.xlu0 %v8580, 12
        %v8671 = vpop.permute.xlu0 %8670
        %8672 = vrot.lane.b32.xlu0 %v8582, 12
        %v8673 = vpop.permute.xlu0 %8672
        %8674 = vrot.lane.b32.xlu0 %v8585, 12
        %v8675 = vpop.permute.xlu0 %8674
        %8676 = vrot.lane.b32.xlu0 %v8587, 12
        %v8677 = vpop.permute.xlu0 %8676
        %8678 = vrot.lane.b32.xlu0 %v8590, 12
        %v8679 = vpop.permute.xlu0 %8678
        %8680 = vrot.lane.b32.xlu0 %v8592, 12
        %v8681 = vpop.permute.xlu0 %8680
        %8682 = vrot.lane.b32.xlu0 %v8595, 12
        %v8683 = vpop.permute.xlu0 %8682
        %8684 = vrot.lane.b32.xlu0 %v8597, 12
        %v8685 = vpop.permute.xlu0 %8684
        %8686 = vrot.lane.b32.xlu0 %v8600, 12
        %v8687 = vpop.permute.xlu0 %8686
        %8688 = vrot.lane.b32.xlu0 %v8602, 12
        %v8689 = vpop.permute.xlu0 %8688
        %8690 = vrot.lane.b32.xlu0 %v8605, 12
        %v8691 = vpop.permute.xlu0 %8690
        %8692 = vrot.lane.b32.xlu0 %v8607, 12
        %v8693 = vpop.permute.xlu0 %8692
        %8694 = vrot.lane.b32.xlu0 %v8610, 12
        %v8695 = vpop.permute.xlu0 %8694
        %8696 = vrot.lane.b32.xlu0 %v8612, 12
        %v8697 = vpop.permute.xlu0 %8696
        %8698 = vrot.lane.b32.xlu0 %v8615, 12
        %v8699 = vpop.permute.xlu0 %8698
        %8700 = vrot.lane.b32.xlu0 %v8617, 12
        %v8701 = vpop.permute.xlu0 %8700
        %8702 = vrot.lane.b32.xlu0 %v8620, 12
        %v8703 = vpop.permute.xlu0 %8702
        %8704 = vrot.lane.b32.xlu0 %v8622, 12
        %v8705 = vpop.permute.xlu0 %8704
        %8706 = vrot.lane.b32.xlu0 %v8625, 12
        %v8707 = vpop.permute.xlu0 %8706
        %8708 = vrot.lane.b32.xlu0 %v8627, 12
        %v8709 = vpop.permute.xlu0 %8708
        %8710 = vrot.lane.b32.xlu0 %v8630, 12
        %v8711 = vpop.permute.xlu0 %8710
        %8712 = vrot.lane.b32.xlu0 %v8632, 12
        %v8713 = vpop.permute.xlu0 %8712
        %8714 = vrot.lane.b32.xlu0 %v8635, 12
        %v8715 = vpop.permute.xlu0 %8714
        %8716 = vrot.lane.b32.xlu0 %v8637, 12
        %v8717 = vpop.permute.xlu0 %8716
        %v8758 = vrot.slane %v7978, 4
        %v8759 = vrot.slane %v7979, 4
        %v8760 = vsel %vm610, %v8758, %v8759
        %v8761 = vrot.slane %v7980, 4
        %v8762 = vsel %vm610, %v8759, %v8761
        %v8763 = vrot.slane %v7981, 4
        %v8764 = vrot.slane %v7982, 4
        %v8765 = vsel %vm610, %v8763, %v8764
        %v8766 = vrot.slane %v7983, 4
        %v8767 = vsel %vm610, %v8764, %v8766
        %v8768 = vrot.slane %v7984, 4
        %v8769 = vrot.slane %v7985, 4
        %v8770 = vsel %vm610, %v8768, %v8769
        %v8771 = vrot.slane %v7986, 4
        %v8772 = vsel %vm610, %v8769, %v8771
        %v8773 = vrot.slane %v7987, 4
        %v8774 = vrot.slane %v7988, 4
        %v8775 = vsel %vm610, %v8773, %v8774
        %v8776 = vrot.slane %v7989, 4
        %v8777 = vsel %vm610, %v8774, %v8776
        %v8778 = vrot.slane %v7990, 4
        %v8779 = vrot.slane %v7991, 4
        %v8780 = vsel %vm610, %v8778, %v8779
        %v8781 = vrot.slane %v7992, 4
        %v8782 = vsel %vm610, %v8779, %v8781
        %v8783 = vrot.slane %v7993, 4
        %v8784 = vrot.slane %v7994, 4
        %v8785 = vsel %vm610, %v8783, %v8784
        %v8786 = vrot.slane %v7995, 4
        %v8787 = vsel %vm610, %v8784, %v8786
        %v8788 = vrot.slane %v7996, 4
        %v8789 = vrot.slane %v7997, 4
        %v8790 = vsel %vm610, %v8788, %v8789
        %v8791 = vrot.slane %v7998, 4
        %v8792 = vsel %vm610, %v8789, %v8791
        %v8793 = vrot.slane %v7999, 4
        %v8794 = vrot.slane %v8000, 4
        %v8795 = vsel %vm610, %v8793, %v8794
        %v8796 = vrot.slane %v8001, 4
        %v8797 = vsel %vm610, %v8794, %v8796
        %v8798 = vrot.slane %v8002, 4
        %v8799 = vrot.slane %v8003, 4
        %v8800 = vsel %vm610, %v8798, %v8799
        %v8801 = vrot.slane %v8004, 4
        %v8802 = vsel %vm610, %v8799, %v8801
        %v8803 = vrot.slane %v8005, 4
        %v8804 = vrot.slane %v8006, 4
        %v8805 = vsel %vm610, %v8803, %v8804
        %v8806 = vrot.slane %v8007, 4
        %v8807 = vsel %vm610, %v8804, %v8806
        %v8808 = vrot.slane %v8008, 4
        %v8809 = vrot.slane %v8009, 4
        %v8810 = vsel %vm610, %v8808, %v8809
        %v8811 = vrot.slane %v8010, 4
        %v8812 = vsel %vm610, %v8809, %v8811
        %v8813 = vrot.slane %v8011, 4
        %v8814 = vrot.slane %v8012, 4
        %v8815 = vsel %vm610, %v8813, %v8814
        %v8816 = vrot.slane %v8013, 4
        %v8817 = vsel %vm610, %v8814, %v8816
        %v8818 = vrot.slane %v8014, 4
        %v8819 = vrot.slane %v8015, 4
        %v8820 = vsel %vm610, %v8818, %v8819
        %v8821 = vrot.slane %v8016, 4
        %v8822 = vsel %vm610, %v8819, %v8821
        %v8823 = vrot.slane %v8017, 4
        %v8824 = vrot.slane %v8018, 4
        %v8825 = vsel %vm610, %v8823, %v8824
        %v8826 = vrot.slane %v8019, 4
        %v8827 = vsel %vm610, %v8824, %v8826
        %v8828 = vrot.slane %v8020, 4
        %v8829 = vrot.slane %v8021, 4
        %v8830 = vsel %vm610, %v8828, %v8829
        %v8831 = vrot.slane %v8022, 4
        %v8832 = vsel %vm610, %v8829, %v8831
        %v8833 = vrot.slane %v8023, 4
        %v8834 = vrot.slane %v8024, 4
        %v8835 = vsel %vm610, %v8833, %v8834
        %v8836 = vrot.slane %v8025, 4
        %v8837 = vsel %vm610, %v8834, %v8836
        %v8838 = vrot.slane %v8026, 4
        %v8839 = vrot.slane %v8027, 4
        %v8840 = vsel %vm610, %v8838, %v8839
        %v8841 = vrot.slane %v8028, 4
        %v8842 = vsel %vm610, %v8839, %v8841
        %v8843 = vrot.slane %v8029, 4
        %v8844 = vrot.slane %v8030, 4
        %v8845 = vsel %vm610, %v8843, %v8844
        %v8846 = vrot.slane %v8031, 4
        %v8847 = vsel %vm610, %v8844, %v8846
        %v8848 = vrot.slane %v8032, 4
        %v8849 = vrot.slane %v8033, 4
        %v8850 = vsel %vm610, %v8848, %v8849
        %v8851 = vrot.slane %v8034, 4
        %v8852 = vsel %vm610, %v8849, %v8851
        %v8853 = vrot.slane %v8035, 4
        %v8854 = vrot.slane %v8036, 4
        %v8855 = vsel %vm610, %v8853, %v8854
        %v8856 = vrot.slane %v8037, 4
        %v8857 = vsel %vm610, %v8854, %v8856
        %8858 = vrot.lane.b32.xlu0 %v8760, 16
        %v8859 = vpop.permute.xlu0 %8858
        %8860 = vrot.lane.b32.xlu0 %v8762, 16
        %v8861 = vpop.permute.xlu0 %8860
        %8862 = vrot.lane.b32.xlu0 %v8765, 16
        %v8863 = vpop.permute.xlu0 %8862
        %8864 = vrot.lane.b32.xlu0 %v8767, 16
        %v8865 = vpop.permute.xlu0 %8864
        %8866 = vrot.lane.b32.xlu0 %v8770, 16
        %v8867 = vpop.permute.xlu0 %8866
        %8868 = vrot.lane.b32.xlu0 %v8772, 16
        %v8869 = vpop.permute.xlu0 %8868
        %8870 = vrot.lane.b32.xlu0 %v8775, 16
        %v8871 = vpop.permute.xlu0 %8870
        %8872 = vrot.lane.b32.xlu0 %v8777, 16
        %v8873 = vpop.permute.xlu0 %8872
        %8874 = vrot.lane.b32.xlu0 %v8780, 16
        %v8875 = vpop.permute.xlu0 %8874
        %8876 = vrot.lane.b32.xlu0 %v8782, 16
        %v8877 = vpop.permute.xlu0 %8876
        %8878 = vrot.lane.b32.xlu0 %v8785, 16
        %v8879 = vpop.permute.xlu0 %8878
        %8880 = vrot.lane.b32.xlu0 %v8787, 16
        %v8881 = vpop.permute.xlu0 %8880
        %8882 = vrot.lane.b32.xlu0 %v8790, 16
        %v8883 = vpop.permute.xlu0 %8882
        %8884 = vrot.lane.b32.xlu0 %v8792, 16
        %v8885 = vpop.permute.xlu0 %8884
        %8886 = vrot.lane.b32.xlu0 %v8795, 16
        %v8887 = vpop.permute.xlu0 %8886
        %8888 = vrot.lane.b32.xlu0 %v8797, 16
        %v8889 = vpop.permute.xlu0 %8888
        %8890 = vrot.lane.b32.xlu0 %v8800, 16
        %v8891 = vpop.permute.xlu0 %8890
        %8892 = vrot.lane.b32.xlu0 %v8802, 16
        %v8893 = vpop.permute.xlu0 %8892
        %8894 = vrot.lane.b32.xlu0 %v8805, 16
        %v8895 = vpop.permute.xlu0 %8894
        %8896 = vrot.lane.b32.xlu0 %v8807, 16
        %v8897 = vpop.permute.xlu0 %8896
        %8898 = vrot.lane.b32.xlu0 %v8810, 16
        %v8899 = vpop.permute.xlu0 %8898
        %8900 = vrot.lane.b32.xlu0 %v8812, 16
        %v8901 = vpop.permute.xlu0 %8900
        %8902 = vrot.lane.b32.xlu0 %v8815, 16
        %v8903 = vpop.permute.xlu0 %8902
        %8904 = vrot.lane.b32.xlu0 %v8817, 16
        %v8905 = vpop.permute.xlu0 %8904
        %8906 = vrot.lane.b32.xlu0 %v8820, 16
        %v8907 = vpop.permute.xlu0 %8906
        %8908 = vrot.lane.b32.xlu0 %v8822, 16
        %v8909 = vpop.permute.xlu0 %8908
        %8910 = vrot.lane.b32.xlu0 %v8825, 16
        %v8911 = vpop.permute.xlu0 %8910
        %8912 = vrot.lane.b32.xlu0 %v8827, 16
        %v8913 = vpop.permute.xlu0 %8912
        %8914 = vrot.lane.b32.xlu0 %v8830, 16
        %v8915 = vpop.permute.xlu0 %8914
        %8916 = vrot.lane.b32.xlu0 %v8832, 16
        %v8917 = vpop.permute.xlu0 %8916
        %8918 = vrot.lane.b32.xlu0 %v8835, 16
        %v8919 = vpop.permute.xlu0 %8918
        %8920 = vrot.lane.b32.xlu0 %v8837, 16
        %v8921 = vpop.permute.xlu0 %8920
        %8922 = vrot.lane.b32.xlu0 %v8840, 16
        %v8923 = vpop.permute.xlu0 %8922
        %8924 = vrot.lane.b32.xlu0 %v8842, 16
        %v8925 = vpop.permute.xlu0 %8924
        %8926 = vrot.lane.b32.xlu0 %v8845, 16
        %v8927 = vpop.permute.xlu0 %8926
        %8928 = vrot.lane.b32.xlu0 %v8847, 16
        %v8929 = vpop.permute.xlu0 %8928
        %8930 = vrot.lane.b32.xlu0 %v8850, 16
        %v8931 = vpop.permute.xlu0 %8930
        %8932 = vrot.lane.b32.xlu0 %v8852, 16
        %v8933 = vpop.permute.xlu0 %8932
        %8934 = vrot.lane.b32.xlu0 %v8855, 16
        %v8935 = vpop.permute.xlu0 %8934
        %8936 = vrot.lane.b32.xlu0 %v8857, 16
        %v8937 = vpop.permute.xlu0 %8936
        %v8978 = vsel %vm337, %v7978, %v8199
        %v8979 = vsel %vm337, %v7979, %v8201
        %v8980 = vsel %vm337, %v7981, %v8203
        %v8981 = vsel %vm337, %v7982, %v8205
        %v8982 = vsel %vm337, %v7984, %v8207
        %v8983 = vsel %vm337, %v7985, %v8209
        %v8984 = vsel %vm337, %v7987, %v8211
        %v8985 = vsel %vm337, %v7988, %v8213
        %v8986 = vsel %vm337, %v7990, %v8215
        %v8987 = vsel %vm337, %v7991, %v8217
        %v8988 = vsel %vm337, %v7993, %v8219
        %v8989 = vsel %vm337, %v7994, %v8221
        %v8990 = vsel %vm337, %v7996, %v8223
        %v8991 = vsel %vm337, %v7997, %v8225
        %v8992 = vsel %vm337, %v7999, %v8227
        %v8993 = vsel %vm337, %v8000, %v8229
        %v8994 = vsel %vm337, %v8002, %v8231
        %v8995 = vsel %vm337, %v8003, %v8233
        %v8996 = vsel %vm337, %v8005, %v8235
        %v8997 = vsel %vm337, %v8006, %v8237
        %v8998 = vsel %vm337, %v8008, %v8239
        %v8999 = vsel %vm337, %v8009, %v8241
        %v9000 = vsel %vm337, %v8011, %v8243
        %v9001 = vsel %vm337, %v8012, %v8245
        %v9002 = vsel %vm337, %v8014, %v8247
        %v9003 = vsel %vm337, %v8015, %v8249
        %v9004 = vsel %vm337, %v8017, %v8251
        %v9005 = vsel %vm337, %v8018, %v8253
        %v9006 = vsel %vm337, %v8020, %v8255
        %v9007 = vsel %vm337, %v8021, %v8257
        %v9008 = vsel %vm337, %v8023, %v8259
        %v9009 = vsel %vm337, %v8024, %v8261
        %v9010 = vsel %vm337, %v8026, %v8263
        %v9011 = vsel %vm337, %v8027, %v8265
        %v9012 = vsel %vm337, %v8029, %v8267
        %v9013 = vsel %vm337, %v8030, %v8269
        %v9014 = vsel %vm337, %v8032, %v8271
        %v9015 = vsel %vm337, %v8033, %v8273
        %v9016 = vsel %vm337, %v8035, %v8275
        %v9017 = vsel %vm337, %v8036, %v8277
        %v9018 = vsel %vm1741, %v8978, %v8419
        %v9019 = vsel %vm1741, %v8979, %v8421
        %v9020 = vsel %vm1741, %v8980, %v8423
        %v9021 = vsel %vm1741, %v8981, %v8425
        %v9022 = vsel %vm1741, %v8982, %v8427
        %v9023 = vsel %vm1741, %v8983, %v8429
        %v9024 = vsel %vm1741, %v8984, %v8431
        %v9025 = vsel %vm1741, %v8985, %v8433
        %v9026 = vsel %vm1741, %v8986, %v8435
        %v9027 = vsel %vm1741, %v8987, %v8437
        %v9028 = vsel %vm1741, %v8988, %v8439
        %v9029 = vsel %vm1741, %v8989, %v8441
        %v9030 = vsel %vm1741, %v8990, %v8443
        %v9031 = vsel %vm1741, %v8991, %v8445
        %v9032 = vsel %vm1741, %v8992, %v8447
        %v9033 = vsel %vm1741, %v8993, %v8449
        %v9034 = vsel %vm1741, %v8994, %v8451
        %v9035 = vsel %vm1741, %v8995, %v8453
        %v9036 = vsel %vm1741, %v8996, %v8455
        %v9037 = vsel %vm1741, %v8997, %v8457
        %v9038 = vsel %vm1741, %v8998, %v8459
        %v9039 = vsel %vm1741, %v8999, %v8461
        %v9040 = vsel %vm1741, %v9000, %v8463
        %v9041 = vsel %vm1741, %v9001, %v8465
        %v9042 = vsel %vm1741, %v9002, %v8467
        %v9043 = vsel %vm1741, %v9003, %v8469
        %v9044 = vsel %vm1741, %v9004, %v8471
        %v9045 = vsel %vm1741, %v9005, %v8473
        %v9046 = vsel %vm1741, %v9006, %v8475
        %v9047 = vsel %vm1741, %v9007, %v8477
        %v9048 = vsel %vm1741, %v9008, %v8479
        %v9049 = vsel %vm1741, %v9009, %v8481
        %v9050 = vsel %vm1741, %v9010, %v8483
        %v9051 = vsel %vm1741, %v9011, %v8485
        %v9052 = vsel %vm1741, %v9012, %v8487
        %v9053 = vsel %vm1741, %v9013, %v8489
        %v9054 = vsel %vm1741, %v9014, %v8491
        %v9055 = vsel %vm1741, %v9015, %v8493
        %v9056 = vsel %vm1741, %v9016, %v8495
        %v9057 = vsel %vm1741, %v9017, %v8497
        %v9058 = vsel %vm2004, %v9018, %v8639
        %v9059 = vsel %vm2004, %v9019, %v8641
        %v9060 = vsel %vm2004, %v9020, %v8643
        %v9061 = vsel %vm2004, %v9021, %v8645
        %v9062 = vsel %vm2004, %v9022, %v8647
        %v9063 = vsel %vm2004, %v9023, %v8649
        %v9064 = vsel %vm2004, %v9024, %v8651
        %v9065 = vsel %vm2004, %v9025, %v8653
        %v9066 = vsel %vm2004, %v9026, %v8655
        %v9067 = vsel %vm2004, %v9027, %v8657
        %v9068 = vsel %vm2004, %v9028, %v8659
        %v9069 = vsel %vm2004, %v9029, %v8661
        %v9070 = vsel %vm2004, %v9030, %v8663
        %v9071 = vsel %vm2004, %v9031, %v8665
        %v9072 = vsel %vm2004, %v9032, %v8667
        %v9073 = vsel %vm2004, %v9033, %v8669
        %v9074 = vsel %vm2004, %v9034, %v8671
        %v9075 = vsel %vm2004, %v9035, %v8673
        %v9076 = vsel %vm2004, %v9036, %v8675
        %v9077 = vsel %vm2004, %v9037, %v8677
        %v9078 = vsel %vm2004, %v9038, %v8679
        %v9079 = vsel %vm2004, %v9039, %v8681
        %v9080 = vsel %vm2004, %v9040, %v8683
        %v9081 = vsel %vm2004, %v9041, %v8685
        %v9082 = vsel %vm2004, %v9042, %v8687
        %v9083 = vsel %vm2004, %v9043, %v8689
        %v9084 = vsel %vm2004, %v9044, %v8691
        %v9085 = vsel %vm2004, %v9045, %v8693
        %v9086 = vsel %vm2004, %v9046, %v8695
        %v9087 = vsel %vm2004, %v9047, %v8697
        %v9088 = vsel %vm2004, %v9048, %v8699
        %v9089 = vsel %vm2004, %v9049, %v8701
        %v9090 = vsel %vm2004, %v9050, %v8703
        %v9091 = vsel %vm2004, %v9051, %v8705
        %v9092 = vsel %vm2004, %v9052, %v8707
        %v9093 = vsel %vm2004, %v9053, %v8709
        %v9094 = vsel %vm2004, %v9054, %v8711
        %v9095 = vsel %vm2004, %v9055, %v8713
        %v9096 = vsel %vm2004, %v9056, %v8715
        %v9097 = vsel %vm2004, %v9057, %v8717
        %v9098 = vsel %vm3592, %v9058, %v8859
        %v9099 = vsel %vm3592, %v9059, %v8861
        %v9100 = vsel %vm3592, %v9060, %v8863
        %v9101 = vsel %vm3592, %v9061, %v8865
        %v9102 = vsel %vm3592, %v9062, %v8867
        %v9103 = vsel %vm3592, %v9063, %v8869
        %v9104 = vsel %vm3592, %v9064, %v8871
        %v9105 = vsel %vm3592, %v9065, %v8873
        %v9106 = vsel %vm3592, %v9066, %v8875
        %v9107 = vsel %vm3592, %v9067, %v8877
        %v9108 = vsel %vm3592, %v9068, %v8879
        %v9109 = vsel %vm3592, %v9069, %v8881
        %v9110 = vsel %vm3592, %v9070, %v8883
        %v9111 = vsel %vm3592, %v9071, %v8885
        %v9112 = vsel %vm3592, %v9072, %v8887
        %v9113 = vsel %vm3592, %v9073, %v8889
        %v9114 = vsel %vm3592, %v9074, %v8891
        %v9115 = vsel %vm3592, %v9075, %v8893
        %v9116 = vsel %vm3592, %v9076, %v8895
        %v9117 = vsel %vm3592, %v9077, %v8897
        %v9118 = vsel %vm3592, %v9078, %v8899
        %v9119 = vsel %vm3592, %v9079, %v8901
        %v9120 = vsel %vm3592, %v9080, %v8903
        %v9121 = vsel %vm3592, %v9081, %v8905
        %v9122 = vsel %vm3592, %v9082, %v8907
        %v9123 = vsel %vm3592, %v9083, %v8909
        %v9124 = vsel %vm3592, %v9084, %v8911
        %v9125 = vsel %vm3592, %v9085, %v8913
        %v9126 = vsel %vm3592, %v9086, %v8915
        %v9127 = vsel %vm3592, %v9087, %v8917
        %v9128 = vsel %vm3592, %v9088, %v8919
        %v9129 = vsel %vm3592, %v9089, %v8921
        %v9130 = vsel %vm3592, %v9090, %v8923
        %v9131 = vsel %vm3592, %v9091, %v8925
        %v9132 = vsel %vm3592, %v9092, %v8927
        %v9133 = vsel %vm3592, %v9093, %v8929
        %v9134 = vsel %vm3592, %v9094, %v8931
        %v9135 = vsel %vm3592, %v9095, %v8933
        %v9136 = vsel %vm3592, %v9096, %v8935
        %v9137 = vsel %vm3592, %v9097, %v8937
        %9170 = vrot.lane.b32.xlu0 %v9100, 20
        %v9171 = vpop.permute.xlu0 %9170
        %9172 = vrot.lane.b32.xlu0 %v9101, 20
        %v9173 = vpop.permute.xlu0 %9172
        %9174 = vrot.lane.b32.xlu0 %v9102, 20
        %v9175 = vpop.permute.xlu0 %9174
        %9176 = vrot.lane.b32.xlu0 %v9103, 20
        %v9177 = vpop.permute.xlu0 %9176
        %9178 = vrot.lane.b32.xlu0 %v9104, 20
        %v9179 = vpop.permute.xlu0 %9178
        %9180 = vrot.lane.b32.xlu0 %v9105, 20
        %v9181 = vpop.permute.xlu0 %9180
        %9182 = vrot.lane.b32.xlu0 %v9106, 20
        %v9183 = vpop.permute.xlu0 %9182
        %9184 = vrot.lane.b32.xlu0 %v9107, 20
        %v9185 = vpop.permute.xlu0 %9184
        %9186 = vrot.lane.b32.xlu0 %v9108, 20
        %v9187 = vpop.permute.xlu0 %9186
        %9188 = vrot.lane.b32.xlu0 %v9109, 20
        %v9189 = vpop.permute.xlu0 %9188
        %9190 = vrot.lane.b32.xlu0 %v9110, 20
        %v9191 = vpop.permute.xlu0 %9190
        %9192 = vrot.lane.b32.xlu0 %v9111, 20
        %v9193 = vpop.permute.xlu0 %9192
        %9194 = vrot.lane.b32.xlu0 %v9112, 20
        %v9195 = vpop.permute.xlu0 %9194
        %9196 = vrot.lane.b32.xlu0 %v9113, 20
        %v9197 = vpop.permute.xlu0 %9196
        %9198 = vrot.lane.b32.xlu0 %v9114, 20
        %v9199 = vpop.permute.xlu0 %9198
        %9200 = vrot.lane.b32.xlu0 %v9115, 20
        %v9201 = vpop.permute.xlu0 %9200
        %9202 = vrot.lane.b32.xlu0 %v9116, 20
        %v9203 = vpop.permute.xlu0 %9202
        %9204 = vrot.lane.b32.xlu0 %v9117, 20
        %v9205 = vpop.permute.xlu0 %9204
        %9206 = vrot.lane.b32.xlu0 %v9118, 20
        %v9207 = vpop.permute.xlu0 %9206
        %9208 = vrot.lane.b32.xlu0 %v9119, 20
        %v9209 = vpop.permute.xlu0 %9208
        %9210 = vrot.lane.b32.xlu0 %v9120, 20
        %v9211 = vpop.permute.xlu0 %9210
        %9212 = vrot.lane.b32.xlu0 %v9121, 20
        %v9213 = vpop.permute.xlu0 %9212
        %9214 = vrot.lane.b32.xlu0 %v9122, 20
        %v9215 = vpop.permute.xlu0 %9214
        %9216 = vrot.lane.b32.xlu0 %v9123, 20
        %v9217 = vpop.permute.xlu0 %9216
        %9218 = vrot.lane.b32.xlu0 %v9124, 20
        %v9219 = vpop.permute.xlu0 %9218
        %9220 = vrot.lane.b32.xlu0 %v9125, 20
        %v9221 = vpop.permute.xlu0 %9220
        %9222 = vrot.lane.b32.xlu0 %v9126, 20
        %v9223 = vpop.permute.xlu0 %9222
        %9224 = vrot.lane.b32.xlu0 %v9127, 20
        %v9225 = vpop.permute.xlu0 %9224
        %9226 = vrot.lane.b32.xlu0 %v9128, 20
        %v9227 = vpop.permute.xlu0 %9226
        %9228 = vrot.lane.b32.xlu0 %v9129, 20
        %v9229 = vpop.permute.xlu0 %9228
        %9230 = vrot.lane.b32.xlu0 %v9130, 20
        %v9231 = vpop.permute.xlu0 %9230
        %9232 = vrot.lane.b32.xlu0 %v9131, 20
        %v9233 = vpop.permute.xlu0 %9232
        %9268 = vrot.lane.b32.xlu0 %v9102, 40
        %v9269 = vpop.permute.xlu0 %9268
        %9270 = vrot.lane.b32.xlu0 %v9103, 40
        %v9271 = vpop.permute.xlu0 %9270
        %9272 = vrot.lane.b32.xlu0 %v9104, 40
        %v9273 = vpop.permute.xlu0 %9272
        %9274 = vrot.lane.b32.xlu0 %v9105, 40
        %v9275 = vpop.permute.xlu0 %9274
        %9276 = vrot.lane.b32.xlu0 %v9106, 40
        %v9277 = vpop.permute.xlu0 %9276
        %9278 = vrot.lane.b32.xlu0 %v9107, 40
        %v9279 = vpop.permute.xlu0 %9278
        %9280 = vrot.lane.b32.xlu0 %v9108, 40
        %v9281 = vpop.permute.xlu0 %9280
        %9282 = vrot.lane.b32.xlu0 %v9109, 40
        %v9283 = vpop.permute.xlu0 %9282
        %9284 = vrot.lane.b32.xlu0 %v9110, 40
        %v9285 = vpop.permute.xlu0 %9284
        %9286 = vrot.lane.b32.xlu0 %v9111, 40
        %v9287 = vpop.permute.xlu0 %9286
        %9288 = vrot.lane.b32.xlu0 %v9112, 40
        %v9289 = vpop.permute.xlu0 %9288
        %9290 = vrot.lane.b32.xlu0 %v9113, 40
        %v9291 = vpop.permute.xlu0 %9290
        %9292 = vrot.lane.b32.xlu0 %v9114, 40
        %v9293 = vpop.permute.xlu0 %9292
        %9294 = vrot.lane.b32.xlu0 %v9115, 40
        %v9295 = vpop.permute.xlu0 %9294
        %9296 = vrot.lane.b32.xlu0 %v9116, 40
        %v9297 = vpop.permute.xlu0 %9296
        %9298 = vrot.lane.b32.xlu0 %v9117, 40
        %v9299 = vpop.permute.xlu0 %9298
        %9300 = vrot.lane.b32.xlu0 %v9118, 40
        %v9301 = vpop.permute.xlu0 %9300
        %9302 = vrot.lane.b32.xlu0 %v9119, 40
        %v9303 = vpop.permute.xlu0 %9302
        %9304 = vrot.lane.b32.xlu0 %v9120, 40
        %v9305 = vpop.permute.xlu0 %9304
        %9306 = vrot.lane.b32.xlu0 %v9121, 40
        %v9307 = vpop.permute.xlu0 %9306
        %9308 = vrot.lane.b32.xlu0 %v9122, 40
        %v9309 = vpop.permute.xlu0 %9308
        %9310 = vrot.lane.b32.xlu0 %v9123, 40
        %v9311 = vpop.permute.xlu0 %9310
        %9312 = vrot.lane.b32.xlu0 %v9124, 40
        %v9313 = vpop.permute.xlu0 %9312
        %9314 = vrot.lane.b32.xlu0 %v9125, 40
        %v9315 = vpop.permute.xlu0 %9314
        %9316 = vrot.lane.b32.xlu0 %v9126, 40
        %v9317 = vpop.permute.xlu0 %9316
        %9318 = vrot.lane.b32.xlu0 %v9127, 40
        %v9319 = vpop.permute.xlu0 %9318
        %9320 = vrot.lane.b32.xlu0 %v9128, 40
        %v9321 = vpop.permute.xlu0 %9320
        %9322 = vrot.lane.b32.xlu0 %v9129, 40
        %v9323 = vpop.permute.xlu0 %9322
        %9324 = vrot.lane.b32.xlu0 %v9130, 40
        %v9325 = vpop.permute.xlu0 %9324
        %9326 = vrot.lane.b32.xlu0 %v9131, 40
        %v9327 = vpop.permute.xlu0 %9326
        %9328 = vrot.lane.b32.xlu0 %v9132, 40
        %v9329 = vpop.permute.xlu0 %9328
        %9330 = vrot.lane.b32.xlu0 %v9133, 40
        %v9331 = vpop.permute.xlu0 %9330
        %9366 = vrot.lane.b32.xlu0 %v9104, 60
        %v9367 = vpop.permute.xlu0 %9366
        %9368 = vrot.lane.b32.xlu0 %v9105, 60
        %v9369 = vpop.permute.xlu0 %9368
        %9370 = vrot.lane.b32.xlu0 %v9106, 60
        %v9371 = vpop.permute.xlu0 %9370
        %9372 = vrot.lane.b32.xlu0 %v9107, 60
        %v9373 = vpop.permute.xlu0 %9372
        %9374 = vrot.lane.b32.xlu0 %v9108, 60
        %v9375 = vpop.permute.xlu0 %9374
        %9376 = vrot.lane.b32.xlu0 %v9109, 60
        %v9377 = vpop.permute.xlu0 %9376
        %9378 = vrot.lane.b32.xlu0 %v9110, 60
        %v9379 = vpop.permute.xlu0 %9378
        %9380 = vrot.lane.b32.xlu0 %v9111, 60
        %v9381 = vpop.permute.xlu0 %9380
        %9382 = vrot.lane.b32.xlu0 %v9112, 60
        %v9383 = vpop.permute.xlu0 %9382
        %9384 = vrot.lane.b32.xlu0 %v9113, 60
        %v9385 = vpop.permute.xlu0 %9384
        %9386 = vrot.lane.b32.xlu0 %v9114, 60
        %v9387 = vpop.permute.xlu0 %9386
        %9388 = vrot.lane.b32.xlu0 %v9115, 60
        %v9389 = vpop.permute.xlu0 %9388
        %9390 = vrot.lane.b32.xlu0 %v9116, 60
        %v9391 = vpop.permute.xlu0 %9390
        %9392 = vrot.lane.b32.xlu0 %v9117, 60
        %v9393 = vpop.permute.xlu0 %9392
        %9394 = vrot.lane.b32.xlu0 %v9118, 60
        %v9395 = vpop.permute.xlu0 %9394
        %9396 = vrot.lane.b32.xlu0 %v9119, 60
        %v9397 = vpop.permute.xlu0 %9396
        %9398 = vrot.lane.b32.xlu0 %v9120, 60
        %v9399 = vpop.permute.xlu0 %9398
        %9400 = vrot.lane.b32.xlu0 %v9121, 60
        %v9401 = vpop.permute.xlu0 %9400
        %9402 = vrot.lane.b32.xlu0 %v9122, 60
        %v9403 = vpop.permute.xlu0 %9402
        %9404 = vrot.lane.b32.xlu0 %v9123, 60
        %v9405 = vpop.permute.xlu0 %9404
        %9406 = vrot.lane.b32.xlu0 %v9124, 60
        %v9407 = vpop.permute.xlu0 %9406
        %9408 = vrot.lane.b32.xlu0 %v9125, 60
        %v9409 = vpop.permute.xlu0 %9408
        %9410 = vrot.lane.b32.xlu0 %v9126, 60
        %v9411 = vpop.permute.xlu0 %9410
        %9412 = vrot.lane.b32.xlu0 %v9127, 60
        %v9413 = vpop.permute.xlu0 %9412
        %9414 = vrot.lane.b32.xlu0 %v9128, 60
        %v9415 = vpop.permute.xlu0 %9414
        %9416 = vrot.lane.b32.xlu0 %v9129, 60
        %v9417 = vpop.permute.xlu0 %9416
        %9418 = vrot.lane.b32.xlu0 %v9130, 60
        %v9419 = vpop.permute.xlu0 %9418
        %9420 = vrot.lane.b32.xlu0 %v9131, 60
        %v9421 = vpop.permute.xlu0 %9420
        %9422 = vrot.lane.b32.xlu0 %v9132, 60
        %v9423 = vpop.permute.xlu0 %9422
        %9424 = vrot.lane.b32.xlu0 %v9133, 60
        %v9425 = vpop.permute.xlu0 %9424
        %9426 = vrot.lane.b32.xlu0 %v9134, 60
        %v9427 = vpop.permute.xlu0 %9426
        %9428 = vrot.lane.b32.xlu0 %v9135, 60
        %v9429 = vpop.permute.xlu0 %9428
        %9464 = vrot.lane.b32.xlu0 %v9106, 80
        %v9465 = vpop.permute.xlu0 %9464
        %9466 = vrot.lane.b32.xlu0 %v9107, 80
        %v9467 = vpop.permute.xlu0 %9466
        %9468 = vrot.lane.b32.xlu0 %v9108, 80
        %v9469 = vpop.permute.xlu0 %9468
        %9470 = vrot.lane.b32.xlu0 %v9109, 80
        %v9471 = vpop.permute.xlu0 %9470
        %9472 = vrot.lane.b32.xlu0 %v9110, 80
        %v9473 = vpop.permute.xlu0 %9472
        %9474 = vrot.lane.b32.xlu0 %v9111, 80
        %v9475 = vpop.permute.xlu0 %9474
        %9476 = vrot.lane.b32.xlu0 %v9112, 80
        %v9477 = vpop.permute.xlu0 %9476
        %9478 = vrot.lane.b32.xlu0 %v9113, 80
        %v9479 = vpop.permute.xlu0 %9478
        %9480 = vrot.lane.b32.xlu0 %v9114, 80
        %v9481 = vpop.permute.xlu0 %9480
        %9482 = vrot.lane.b32.xlu0 %v9115, 80
        %v9483 = vpop.permute.xlu0 %9482
        %9484 = vrot.lane.b32.xlu0 %v9116, 80
        %v9485 = vpop.permute.xlu0 %9484
        %9486 = vrot.lane.b32.xlu0 %v9117, 80
        %v9487 = vpop.permute.xlu0 %9486
        %9488 = vrot.lane.b32.xlu0 %v9118, 80
        %v9489 = vpop.permute.xlu0 %9488
        %9490 = vrot.lane.b32.xlu0 %v9119, 80
        %v9491 = vpop.permute.xlu0 %9490
        %9492 = vrot.lane.b32.xlu0 %v9120, 80
        %v9493 = vpop.permute.xlu0 %9492
        %9494 = vrot.lane.b32.xlu0 %v9121, 80
        %v9495 = vpop.permute.xlu0 %9494
        %9496 = vrot.lane.b32.xlu0 %v9122, 80
        %v9497 = vpop.permute.xlu0 %9496
        %9498 = vrot.lane.b32.xlu0 %v9123, 80
        %v9499 = vpop.permute.xlu0 %9498
        %9500 = vrot.lane.b32.xlu0 %v9124, 80
        %v9501 = vpop.permute.xlu0 %9500
        %9502 = vrot.lane.b32.xlu0 %v9125, 80
        %v9503 = vpop.permute.xlu0 %9502
        %9504 = vrot.lane.b32.xlu0 %v9126, 80
        %v9505 = vpop.permute.xlu0 %9504
        %9506 = vrot.lane.b32.xlu0 %v9127, 80
        %v9507 = vpop.permute.xlu0 %9506
        %9508 = vrot.lane.b32.xlu0 %v9128, 80
        %v9509 = vpop.permute.xlu0 %9508
        %9510 = vrot.lane.b32.xlu0 %v9129, 80
        %v9511 = vpop.permute.xlu0 %9510
        %9512 = vrot.lane.b32.xlu0 %v9130, 80
        %v9513 = vpop.permute.xlu0 %9512
        %9514 = vrot.lane.b32.xlu0 %v9131, 80
        %v9515 = vpop.permute.xlu0 %9514
        %9516 = vrot.lane.b32.xlu0 %v9132, 80
        %v9517 = vpop.permute.xlu0 %9516
        %9518 = vrot.lane.b32.xlu0 %v9133, 80
        %v9519 = vpop.permute.xlu0 %9518
        %9520 = vrot.lane.b32.xlu0 %v9134, 80
        %v9521 = vpop.permute.xlu0 %9520
        %9522 = vrot.lane.b32.xlu0 %v9135, 80
        %v9523 = vpop.permute.xlu0 %9522
        %9524 = vrot.lane.b32.xlu0 %v9136, 80
        %v9525 = vpop.permute.xlu0 %9524
        %9526 = vrot.lane.b32.xlu0 %v9137, 80
        %v9527 = vpop.permute.xlu0 %9526
        %v9560 = vsel %vm4055, %v9098, %v9171
        %v9561 = vsel %vm4055, %v9099, %v9173
        %v9562 = vsel %vm4055, %v9100, %v9175
        %v9563 = vsel %vm4055, %v9101, %v9177
        %v9564 = vsel %vm4055, %v9102, %v9179
        %v9565 = vsel %vm4055, %v9103, %v9181
        %v9566 = vsel %vm4055, %v9104, %v9183
        %v9567 = vsel %vm4055, %v9105, %v9185
        %v9568 = vsel %vm4055, %v9106, %v9187
        %v9569 = vsel %vm4055, %v9107, %v9189
        %v9570 = vsel %vm4055, %v9108, %v9191
        %v9571 = vsel %vm4055, %v9109, %v9193
        %v9572 = vsel %vm4055, %v9110, %v9195
        %v9573 = vsel %vm4055, %v9111, %v9197
        %v9574 = vsel %vm4055, %v9112, %v9199
        %v9575 = vsel %vm4055, %v9113, %v9201
        %v9576 = vsel %vm4055, %v9114, %v9203
        %v9577 = vsel %vm4055, %v9115, %v9205
        %v9578 = vsel %vm4055, %v9116, %v9207
        %v9579 = vsel %vm4055, %v9117, %v9209
        %v9580 = vsel %vm4055, %v9118, %v9211
        %v9581 = vsel %vm4055, %v9119, %v9213
        %v9582 = vsel %vm4055, %v9120, %v9215
        %v9583 = vsel %vm4055, %v9121, %v9217
        %v9584 = vsel %vm4055, %v9122, %v9219
        %v9585 = vsel %vm4055, %v9123, %v9221
        %v9586 = vsel %vm4055, %v9124, %v9223
        %v9587 = vsel %vm4055, %v9125, %v9225
        %v9588 = vsel %vm4055, %v9126, %v9227
        %v9589 = vsel %vm4055, %v9127, %v9229
        %v9590 = vsel %vm4055, %v9128, %v9231
        %v9591 = vsel %vm4055, %v9129, %v9233
        %v9592 = vsel %vm4088, %v9560, %v9269
        %v9593 = vsel %vm4088, %v9561, %v9271
        %v9594 = vsel %vm4088, %v9562, %v9273
        %v9595 = vsel %vm4088, %v9563, %v9275
        %v9596 = vsel %vm4088, %v9564, %v9277
        %v9597 = vsel %vm4088, %v9565, %v9279
        %v9598 = vsel %vm4088, %v9566, %v9281
        %v9599 = vsel %vm4088, %v9567, %v9283
        %v9600 = vsel %vm4088, %v9568, %v9285
        %v9601 = vsel %vm4088, %v9569, %v9287
        %v9602 = vsel %vm4088, %v9570, %v9289
        %v9603 = vsel %vm4088, %v9571, %v9291
        %v9604 = vsel %vm4088, %v9572, %v9293
        %v9605 = vsel %vm4088, %v9573, %v9295
        %v9606 = vsel %vm4088, %v9574, %v9297
        %v9607 = vsel %vm4088, %v9575, %v9299
        %v9608 = vsel %vm4088, %v9576, %v9301
        %v9609 = vsel %vm4088, %v9577, %v9303
        %v9610 = vsel %vm4088, %v9578, %v9305
        %v9611 = vsel %vm4088, %v9579, %v9307
        %v9612 = vsel %vm4088, %v9580, %v9309
        %v9613 = vsel %vm4088, %v9581, %v9311
        %v9614 = vsel %vm4088, %v9582, %v9313
        %v9615 = vsel %vm4088, %v9583, %v9315
        %v9616 = vsel %vm4088, %v9584, %v9317
        %v9617 = vsel %vm4088, %v9585, %v9319
        %v9618 = vsel %vm4088, %v9586, %v9321
        %v9619 = vsel %vm4088, %v9587, %v9323
        %v9620 = vsel %vm4088, %v9588, %v9325
        %v9621 = vsel %vm4088, %v9589, %v9327
        %v9622 = vsel %vm4088, %v9590, %v9329
        %v9623 = vsel %vm4088, %v9591, %v9331
        %v9624 = vsel %vm4121, %v9592, %v9367
        %v9625 = vsel %vm4121, %v9593, %v9369
        %v9626 = vsel %vm4121, %v9594, %v9371
        %v9627 = vsel %vm4121, %v9595, %v9373
        %v9628 = vsel %vm4121, %v9596, %v9375
        %v9629 = vsel %vm4121, %v9597, %v9377
        %v9630 = vsel %vm4121, %v9598, %v9379
        %v9631 = vsel %vm4121, %v9599, %v9381
        %v9632 = vsel %vm4121, %v9600, %v9383
        %v9633 = vsel %vm4121, %v9601, %v9385
        %v9634 = vsel %vm4121, %v9602, %v9387
        %v9635 = vsel %vm4121, %v9603, %v9389
        %v9636 = vsel %vm4121, %v9604, %v9391
        %v9637 = vsel %vm4121, %v9605, %v9393
        %v9638 = vsel %vm4121, %v9606, %v9395
        %v9639 = vsel %vm4121, %v9607, %v9397
        %v9640 = vsel %vm4121, %v9608, %v9399
        %v9641 = vsel %vm4121, %v9609, %v9401
        %v9642 = vsel %vm4121, %v9610, %v9403
        %v9643 = vsel %vm4121, %v9611, %v9405
        %v9644 = vsel %vm4121, %v9612, %v9407
        %v9645 = vsel %vm4121, %v9613, %v9409
        %v9646 = vsel %vm4121, %v9614, %v9411
        %v9647 = vsel %vm4121, %v9615, %v9413
        %v9648 = vsel %vm4121, %v9616, %v9415
        %v9649 = vsel %vm4121, %v9617, %v9417
        %v9650 = vsel %vm4121, %v9618, %v9419
        %v9651 = vsel %vm4121, %v9619, %v9421
        %v9652 = vsel %vm4121, %v9620, %v9423
        %v9653 = vsel %vm4121, %v9621, %v9425
        %v9654 = vsel %vm4121, %v9622, %v9427
        %v9655 = vsel %vm4121, %v9623, %v9429
        %v9656 = vsel %vm4154, %v9624, %v9465
        %v9657 = vsel %vm4154, %v9625, %v9467
        %v9658 = vsel %vm4154, %v9626, %v9469
        %v9659 = vsel %vm4154, %v9627, %v9471
        %v9660 = vsel %vm4154, %v9628, %v9473
        %v9661 = vsel %vm4154, %v9629, %v9475
        %v9662 = vsel %vm4154, %v9630, %v9477
        %v9663 = vsel %vm4154, %v9631, %v9479
        %v9664 = vsel %vm4154, %v9632, %v9481
        %v9665 = vsel %vm4154, %v9633, %v9483
        %v9666 = vsel %vm4154, %v9634, %v9485
        %v9667 = vsel %vm4154, %v9635, %v9487
        %v9668 = vsel %vm4154, %v9636, %v9489
        %v9669 = vsel %vm4154, %v9637, %v9491
        %v9670 = vsel %vm4154, %v9638, %v9493
        %v9671 = vsel %vm4154, %v9639, %v9495
        %v9672 = vsel %vm4154, %v9640, %v9497
        %v9673 = vsel %vm4154, %v9641, %v9499
        %v9674 = vsel %vm4154, %v9642, %v9501
        %v9675 = vsel %vm4154, %v9643, %v9503
        %v9676 = vsel %vm4154, %v9644, %v9505
        %v9677 = vsel %vm4154, %v9645, %v9507
        %v9678 = vsel %vm4154, %v9646, %v9509
        %v9679 = vsel %vm4154, %v9647, %v9511
        %v9680 = vsel %vm4154, %v9648, %v9513
        %v9681 = vsel %vm4154, %v9649, %v9515
        %v9682 = vsel %vm4154, %v9650, %v9517
        %v9683 = vsel %vm4154, %v9651, %v9519
        %v9684 = vsel %vm4154, %v9652, %v9521
        %v9685 = vsel %vm4154, %v9653, %v9523
        %v9686 = vsel %vm4154, %v9654, %v9525
        %v9687 = vsel %vm4154, %v9655, %v9527
        %v9688 = vld [vmem:[%s5] sm:$0xff]
        %v9689 = vld [vmem:[%s5 + $0x8] sm:$0xff]
        %v9690 = vld [vmem:[%s5 + $0x10] sm:$0xff]
        %v9691 = vld [vmem:[%s5 + $0x18] sm:$0xff]
        %v9692 = vld [vmem:[%s5 + $0x20] sm:$0xff]
        %v9693 = vld [vmem:[%s5 + $0x28] sm:$0xff]
        %v9694 = vld [vmem:[%s5 + $0x30] sm:$0xff]
        %v9695 = vld [vmem:[%s5 + $0x38] sm:$0xff]
        %v9696 = vld [vmem:[%s5 + $0x40] sm:$0xff]
        %v9697 = vld [vmem:[%s5 + $0x48] sm:$0xff]
        %v9698 = vld [vmem:[%s5 + $0x50] sm:$0xff]
        %v9699 = vld [vmem:[%s5 + $0x58] sm:$0xff]
        %v9700 = vld [vmem:[%s5 + $0x60] sm:$0xf]
        %v9702 = vsel %vm4200, %v9656, 0
        %v9705 = vsel %vm4200, %v9657, 0
        %v9708 = vsel %vm4200, %v9658, 0
        %v9711 = vsel %vm4200, %v9659, 0
        %v9714 = vsel %vm4200, %v9660, 0
        %v9717 = vsel %vm4200, %v9661, 0
        %v9720 = vsel %vm4200, %v9662, 0
        %v9723 = vsel %vm4200, %v9663, 0
        %v9726 = vsel %vm4200, %v9664, 0
        %v9729 = vsel %vm4200, %v9665, 0
        %v9732 = vsel %vm4200, %v9666, 0
        %v9735 = vsel %vm4200, %v9667, 0
        %v9738 = vsel %vm4200, %v9668, 0
        %v9741 = vsel %vm4200, %v9669, 0
        %v9744 = vsel %vm4200, %v9670, 0
        %v9747 = vsel %vm4200, %v9671, 0
        %v9750 = vsel %vm4200, %v9672, 0
        %v9753 = vsel %vm4200, %v9673, 0
        %v9756 = vsel %vm4200, %v9674, 0
        %v9759 = vsel %vm4200, %v9675, 0
        %v9762 = vsel %vm4200, %v9676, 0
        %v9765 = vsel %vm4200, %v9677, 0
        %v9768 = vsel %vm4200, %v9678, 0
        %v9771 = vsel %vm4200, %v9679, 0
        %v9774 = vsel %vm4200, %v9680, 0
        %v9777 = vsel %vm4200, %v9681, 0
        %v9780 = vsel %vm4200, %v9682, 0
        %v9783 = vsel %vm4200, %v9683, 0
        %v9786 = vsel %vm4200, %v9684, 0
        %v9789 = vsel %vm4200, %v9685, 0
        %v9792 = vsel %vm4200, %v9686, 0
        %v9795 = vsel %vm4200, %v9687, 0
        %v9798 = vsel %vm610, %v9700, 0
        %9800 = vmatprep.subr.mxu0 0.0
        %9801 = vmatpush1.msra.mxu0 %v9688
        %9802 = vmatprep.subr.mxu0 0.0
        %9803 = vmatpush1.msra.mxu0 %v9689
        %9804 = vmatprep.subr.mxu0 0.0
        %9805 = vmatpush1.msra.mxu0 %v9690
        %9806 = vmatprep.subr.mxu0 0.0
        %9807 = vmatpush1.msra.mxu0 %v9691
        %9808 = vmatprep.subr.mxu0 0.0
        %9809 = vmatpush1.msra.mxu0 %v9692
        %9810 = vmatprep.subr.mxu0 0.0
        %9811 = vmatpush1.msra.mxu0 %v9693
        %9812 = vmatprep.subr.mxu0 0.0
        %9813 = vmatpush1.msra.mxu0 %v9694
        %9814 = vmatprep.subr.mxu0 0.0
        %9815 = vmatpush1.msra.mxu0 %v9695
        %9816 = vmatprep.subr.mxu0 0.0
        %9817 = vmatpush1.msra.mxu0 %v9696
        %9818 = vmatprep.subr.mxu0 0.0
        %9819 = vmatpush1.msra.mxu0 %v9697
        %9820 = vmatprep.subr.mxu0 0.0
        %9821 = vmatpush1.msra.mxu0 %v9698
        %9822 = vmatprep.subr.mxu0 0.0
        %9823 = vmatpush1.msra.mxu0 %v9699
        %9824 = vmatprep.subr.mxu0 0.0
        %9825 = vmatpush1.msra.mxu0 %v9798
        %9826 = vmatprep.subr.mxu0 0.0
        %9827 = vmatpush1.msra.mxu0 0.0
        %9828 = vmatprep.subr.mxu0 0.0
        %9829 = vmatpush1.msra.mxu0 0.0
        %9830 = vmatprep.subr.mxu0 0.0
        %9831 = vmatpush1.msra.mxu0 0.0
        %9832 = vmatprep.subr.mxu0 0.0
        %9833 = vmatpush1.msra.mxu0 0.0
        %9834 = vmatprep.subr.mxu0 0.0
        %9835 = vmatpush1.msra.mxu0 0.0
        %9836 = vmatprep.subr.mxu0 0.0
        %9837 = vmatpush1.msra.mxu0 0.0
        %9838 = vmatprep.subr.mxu0 0.0
        %9839 = vmatpush1.msra.mxu0 0.0
        %9840 = vmatprep.subr.mxu0 0.0
        %9841 = vmatpush1.msra.mxu0 0.0
        %9842 = vmatprep.subr.mxu0 0.0
        %9843 = vmatpush1.msra.mxu0 0.0
        %9844 = vmatprep.subr.mxu0 0.0
        %9845 = vmatpush1.msra.mxu0 0.0
        %9846 = vmatprep.subr.mxu0 0.0
        %9847 = vmatpush1.msra.mxu0 0.0
        %9848 = vmatprep.subr.mxu0 0.0
        %9849 = vmatpush1.msra.mxu0 0.0
        %9850 = vmatprep.subr.mxu0 0.0
        %9851 = vmatpush1.msra.mxu0 0.0
        %9852 = vmatprep.subr.mxu0 0.0
        %9853 = vmatpush1.msra.mxu0 0.0
        %9854 = vmatprep.subr.mxu0 0.0
        %9855 = vmatpush1.msra.mxu0 0.0
        %9856 = vmatprep.subr.mxu0 0.0
        %9857 = vmatpush1.msra.mxu0 0.0
        %9858 = vmatprep.subr.mxu0 0.0
        %9859 = vmatpush1.msra.mxu0 0.0
        %9860 = vmatprep.subr.mxu0 0.0
        %9861 = vmatpush1.msra.mxu0 0.0
        %9862 = vmatprep.subr.mxu0 0.0
        %9863 = vmatpush1.msra.mxu0 0.0
        %9864 = vmatprep.mubr.f32.mxu0 0.0
        %9865 = vmatmul.mubr.f32.gmra.mrb[0].mxu0 %v9702
        %v9866 = vpop.f32.mrb[0].mxu0
        %v9867 = vadd.f32 0.0, %v9866
        %v9868 = vpop.f32.mrb[0].mxu0
        %9869 = vmatprep.mubr.f32.mxu0 0.0
        %9870 = vmatmul.mubr.f32.gmra.mrb[0].mxu0 %v9705
        %v9871 = vpop.f32.mrb[0].mxu0
        %v9872 = vadd.f32 0.0, %v9871
        %v9873 = vpop.f32.mrb[0].mxu0
        %9874 = vmatprep.mubr.f32.mxu0 0.0
        %9875 = vmatmul.mubr.f32.gmra.mrb[0].mxu0 %v9708
        %v9876 = vpop.f32.mrb[0].mxu0
        %v9877 = vadd.f32 0.0, %v9876
        %v9878 = vpop.f32.mrb[0].mxu0
        %9879 = vmatprep.mubr.f32.mxu0 0.0
        %9880 = vmatmul.mubr.f32.gmra.mrb[0].mxu0 %v9711
        %v9881 = vpop.f32.mrb[0].mxu0
        %v9882 = vadd.f32 0.0, %v9881
        %v9883 = vpop.f32.mrb[0].mxu0
        %9884 = vmatprep.mubr.f32.mxu0 0.0
        %9885 = vmatmul.mubr.f32.gmra.mrb[0].mxu0 %v9714
        %v9886 = vpop.f32.mrb[0].mxu0
        %v9887 = vadd.f32 0.0, %v9886
        %v9888 = vpop.f32.mrb[0].mxu0
        %9889 = vmatprep.mubr.f32.mxu0 0.0
        %9890 = vmatmul.mubr.f32.gmra.mrb[0].mxu0 %v9717
        %v9891 = vpop.f32.mrb[0].mxu0
        %v9892 = vadd.f32 0.0, %v9891
        %v9893 = vpop.f32.mrb[0].mxu0
        %9894 = vmatprep.mubr.f32.mxu0 0.0
        %9895 = vmatmul.mubr.f32.gmra.mrb[0].mxu0 %v9720
        %v9896 = vpop.f32.mrb[0].mxu0
        %v9897 = vadd.f32 0.0, %v9896
        %v9898 = vpop.f32.mrb[0].mxu0
        %9899 = vmatprep.mubr.f32.mxu0 0.0
        %9900 = vmatmul.mubr.f32.gmra.mrb[0].mxu0 %v9723
        %v9901 = vpop.f32.mrb[0].mxu0
        %v9902 = vadd.f32 0.0, %v9901
        %v9903 = vpop.f32.mrb[0].mxu0
        %9904 = vmatprep.mubr.f32.mxu0 0.0
        %9905 = vmatmul.mubr.f32.gmra.mrb[0].mxu0 %v9726
        %v9906 = vpop.f32.mrb[0].mxu0
        %v9907 = vadd.f32 0.0, %v9906
        %v9908 = vpop.f32.mrb[0].mxu0
        %9909 = vmatprep.mubr.f32.mxu0 0.0
        %9910 = vmatmul.mubr.f32.gmra.mrb[0].mxu0 %v9729
        %v9911 = vpop.f32.mrb[0].mxu0
        %v9912 = vadd.f32 0.0, %v9911
        %v9913 = vpop.f32.mrb[0].mxu0
        %9914 = vmatprep.mubr.f32.mxu0 0.0
        %9915 = vmatmul.mubr.f32.gmra.mrb[0].mxu0 %v9732
        %v9916 = vpop.f32.mrb[0].mxu0
        %v9917 = vadd.f32 0.0, %v9916
        %v9918 = vpop.f32.mrb[0].mxu0
        %9919 = vmatprep.mubr.f32.mxu0 0.0
        %9920 = vmatmul.mubr.f32.gmra.mrb[0].mxu0 %v9735
        %v9921 = vpop.f32.mrb[0].mxu0
        %v9922 = vadd.f32 0.0, %v9921
        %v9923 = vpop.f32.mrb[0].mxu0
        %9924 = vmatprep.mubr.f32.mxu0 0.0
        %9925 = vmatmul.mubr.f32.gmra.mrb[0].mxu0 %v9738
        %v9926 = vpop.f32.mrb[0].mxu0
        %v9927 = vadd.f32 0.0, %v9926
        %v9928 = vpop.f32.mrb[0].mxu0
        %9929 = vmatprep.mubr.f32.mxu0 0.0
        %9930 = vmatmul.mubr.f32.gmra.mrb[0].mxu0 %v9741
        %v9931 = vpop.f32.mrb[0].mxu0
        %v9932 = vadd.f32 0.0, %v9931
        %v9933 = vpop.f32.mrb[0].mxu0
        %9934 = vmatprep.mubr.f32.mxu0 0.0
        %9935 = vmatmul.mubr.f32.gmra.mrb[0].mxu0 %v9744
        %v9936 = vpop.f32.mrb[0].mxu0
        %v9937 = vadd.f32 0.0, %v9936
        %v9938 = vpop.f32.mrb[0].mxu0
        %9939 = vmatprep.mubr.f32.mxu0 0.0
        %9940 = vmatmul.mubr.f32.gmra.mrb[0].mxu0 %v9747
        %v9941 = vpop.f32.mrb[0].mxu0
        %v9942 = vadd.f32 0.0, %v9941
        %v9943 = vpop.f32.mrb[0].mxu0
        %9944 = vmatprep.mubr.f32.mxu0 0.0
        %9945 = vmatmul.mubr.f32.gmra.mrb[0].mxu0 %v9750
        %v9946 = vpop.f32.mrb[0].mxu0
        %v9947 = vadd.f32 0.0, %v9946
        %v9948 = vpop.f32.mrb[0].mxu0
        %9949 = vmatprep.mubr.f32.mxu0 0.0
        %9950 = vmatmul.mubr.f32.gmra.mrb[0].mxu0 %v9753
        %v9951 = vpop.f32.mrb[0].mxu0
        %v9952 = vadd.f32 0.0, %v9951
        %v9953 = vpop.f32.mrb[0].mxu0
        %9954 = vmatprep.mubr.f32.mxu0 0.0
        %9955 = vmatmul.mubr.f32.gmra.mrb[0].mxu0 %v9756
        %v9956 = vpop.f32.mrb[0].mxu0
        %v9957 = vadd.f32 0.0, %v9956
        %v9958 = vpop.f32.mrb[0].mxu0
        %9959 = vmatprep.mubr.f32.mxu0 0.0
        %9960 = vmatmul.mubr.f32.gmra.mrb[0].mxu0 %v9759
        %v9961 = vpop.f32.mrb[0].mxu0
        %v9962 = vadd.f32 0.0, %v9961
        %v9963 = vpop.f32.mrb[0].mxu0
        %9964 = vmatprep.mubr.f32.mxu0 0.0
        %9965 = vmatmul.mubr.f32.gmra.mrb[0].mxu0 %v9762
        %v9966 = vpop.f32.mrb[0].mxu0
        %v9967 = vadd.f32 0.0, %v9966
        %v9968 = vpop.f32.mrb[0].mxu0
        %9969 = vmatprep.mubr.f32.mxu0 0.0
        %9970 = vmatmul.mubr.f32.gmra.mrb[0].mxu0 %v9765
        %v9971 = vpop.f32.mrb[0].mxu0
        %v9972 = vadd.f32 0.0, %v9971
        %v9973 = vpop.f32.mrb[0].mxu0
        %9974 = vmatprep.mubr.f32.mxu0 0.0
        %9975 = vmatmul.mubr.f32.gmra.mrb[0].mxu0 %v9768
        %v9976 = vpop.f32.mrb[0].mxu0
        %v9977 = vadd.f32 0.0, %v9976
        %v9978 = vpop.f32.mrb[0].mxu0
        %9979 = vmatprep.mubr.f32.mxu0 0.0
        %9980 = vmatmul.mubr.f32.gmra.mrb[0].mxu0 %v9771
        %v9981 = vpop.f32.mrb[0].mxu0
        %v9982 = vadd.f32 0.0, %v9981
        %v9983 = vpop.f32.mrb[0].mxu0
        %9984 = vmatprep.mubr.f32.mxu0 0.0
        %9985 = vmatmul.mubr.f32.gmra.mrb[0].mxu0 %v9774
        %v9986 = vpop.f32.mrb[0].mxu0
        %v9987 = vadd.f32 0.0, %v9986
        %v9988 = vpop.f32.mrb[0].mxu0
        %9989 = vmatprep.mubr.f32.mxu0 0.0
        %9990 = vmatmul.mubr.f32.gmra.mrb[0].mxu0 %v9777
        %v9991 = vpop.f32.mrb[0].mxu0
        %v9992 = vadd.f32 0.0, %v9991
        %v9993 = vpop.f32.mrb[0].mxu0
        %9994 = vmatprep.mubr.f32.mxu0 0.0
        %9995 = vmatmul.mubr.f32.gmra.mrb[0].mxu0 %v9780
        %v9996 = vpop.f32.mrb[0].mxu0
        %v9997 = vadd.f32 0.0, %v9996
        %v9998 = vpop.f32.mrb[0].mxu0
        %9999 = vmatprep.mubr.f32.mxu0 0.0
        %10000 = vmatmul.mubr.f32.gmra.mrb[0].mxu0 %v9783
        %v10001 = vpop.f32.mrb[0].mxu0
        %v10002 = vadd.f32 0.0, %v10001
        %v10003 = vpop.f32.mrb[0].mxu0
        %10004 = vmatprep.mubr.f32.mxu0 0.0
        %10005 = vmatmul.mubr.f32.gmra.mrb[0].mxu0 %v9786
        %v10006 = vpop.f32.mrb[0].mxu0
        %v10007 = vadd.f32 0.0, %v10006
        %v10008 = vpop.f32.mrb[0].mxu0
        %10009 = vmatprep.mubr.f32.mxu0 0.0
        %10010 = vmatmul.mubr.f32.gmra.mrb[0].mxu0 %v9789
        %v10011 = vpop.f32.mrb[0].mxu0
        %v10012 = vadd.f32 0.0, %v10011
        %v10013 = vpop.f32.mrb[0].mxu0
        %10014 = vmatprep.mubr.f32.mxu0 0.0
        %10015 = vmatmul.mubr.f32.gmra.mrb[0].mxu0 %v9792
        %v10016 = vpop.f32.mrb[0].mxu0
        %v10017 = vadd.f32 0.0, %v10016
        %v10018 = vpop.f32.mrb[0].mxu0
        %10019 = vmatprep.mubr.f32.mxu0 0.0
        %10020 = vmatmul.mubr.f32.gmra.mrb[0].mxu0 %v9795
        %v10021 = vpop.f32.mrb[0].mxu0
        %v10022 = vadd.f32 0.0, %v10021
        %v10023 = vpop.f32.mrb[0].mxu0
        %10024 = vdwg.mxu0
        %v10025 = vld [vmem:[%s6] sm:$0x1]
        %v10027 = vlaneseq
        %v10028 = vshrl.u32 %v10027, 7
        %v10029 = vsub.s32 0, %v10028
        %v10030 = vrot.slane %v10025, %v10029
        %v10032 = vadd.f32 %v9867, %v10030
        %v10033 = vadd.f32 %v9872, %v10030
        %v10034 = vadd.f32 %v9877, %v10030
        %v10035 = vadd.f32 %v9882, %v10030
        %v10036 = vadd.f32 %v9887, %v10030
        %v10037 = vadd.f32 %v9892, %v10030
        %v10038 = vadd.f32 %v9897, %v10030
        %v10039 = vadd.f32 %v9902, %v10030
        %v10040 = vadd.f32 %v9907, %v10030
        %v10041 = vadd.f32 %v9912, %v10030
        %v10042 = vadd.f32 %v9917, %v10030
        %v10043 = vadd.f32 %v9922, %v10030
        %v10044 = vadd.f32 %v9927, %v10030
        %v10045 = vadd.f32 %v9932, %v10030
        %v10046 = vadd.f32 %v9937, %v10030
        %v10047 = vadd.f32 %v9942, %v10030
        %v10048 = vadd.f32 %v9947, %v10030
        %v10049 = vadd.f32 %v9952, %v10030
        %v10050 = vadd.f32 %v9957, %v10030
        %v10051 = vadd.f32 %v9962, %v10030
        %v10052 = vadd.f32 %v9967, %v10030
        %v10053 = vadd.f32 %v9972, %v10030
        %v10054 = vadd.f32 %v9977, %v10030
        %v10055 = vadd.f32 %v9982, %v10030
        %v10056 = vadd.f32 %v9987, %v10030
        %v10057 = vadd.f32 %v9992, %v10030
        %v10058 = vadd.f32 %v9997, %v10030
        %v10059 = vadd.f32 %v10002, %v10030
        %v10060 = vadd.f32 %v10007, %v10030
        %v10061 = vadd.f32 %v10012, %v10030
        %v10062 = vadd.f32 %v10017, %v10030
        %v10063 = vadd.f32 %v10022, %v10030
        %v10064 = vmax.f32 %v10032, 0.0
        %v10065 = vmax.f32 %v10033, 0.0
        %v10066 = vmax.f32 %v10034, 0.0
        %v10067 = vmax.f32 %v10035, 0.0
        %v10068 = vmax.f32 %v10036, 0.0
        %v10069 = vmax.f32 %v10037, 0.0
        %v10070 = vmax.f32 %v10038, 0.0
        %v10071 = vmax.f32 %v10039, 0.0
        %v10072 = vmax.f32 %v10040, 0.0
        %v10073 = vmax.f32 %v10041, 0.0
        %v10074 = vmax.f32 %v10042, 0.0
        %v10075 = vmax.f32 %v10043, 0.0
        %v10076 = vmax.f32 %v10044, 0.0
        %v10077 = vmax.f32 %v10045, 0.0
        %v10078 = vmax.f32 %v10046, 0.0
        %v10079 = vmax.f32 %v10047, 0.0
        %v10080 = vmax.f32 %v10048, 0.0
        %v10081 = vmax.f32 %v10049, 0.0
        %v10082 = vmax.f32 %v10050, 0.0
        %v10083 = vmax.f32 %v10051, 0.0
        %v10084 = vmax.f32 %v10052, 0.0
        %v10085 = vmax.f32 %v10053, 0.0
        %v10086 = vmax.f32 %v10054, 0.0
        %v10087 = vmax.f32 %v10055, 0.0
        %v10088 = vmax.f32 %v10056, 0.0
        %v10089 = vmax.f32 %v10057, 0.0
        %v10090 = vmax.f32 %v10058, 0.0
        %v10091 = vmax.f32 %v10059, 0.0
        %v10092 = vmax.f32 %v10060, 0.0
        %v10093 = vmax.f32 %v10061, 0.0
        %v10094 = vmax.f32 %v10062, 0.0
        %v10095 = vmax.f32 %v10063, 0.0
        %10096 = vst.msk [vmem:[%s4596 + $0x1] sm:$0xff] %vm337, %v6003
        %10097 = vst.msk [vmem:[%s4596 + $0x9] sm:$0xff] %vm337, %v6004
        %10098 = vst.msk [vmem:[%s4596 + $0x19] sm:$0xff] %vm337, %v6005
        %10099 = vst.msk [vmem:[%s4596 + $0x21] sm:$0xff] %vm337, %v6006
        %10100 = vst.msk [vmem:[%s4596 + $0x31] sm:$0xff] %vm337, %v6007
        %10101 = vst.msk [vmem:[%s4596 + $0x39] sm:$0xff] %vm337, %v6008
        %10102 = vst.msk [vmem:[%s4596 + $0x49] sm:$0xff] %vm337, %v6009
        %10103 = vst.msk [vmem:[%s4596 + $0x51] sm:$0xff] %vm337, %v6010
        %10104 = vst.msk [vmem:[%s4596 + $0x61] sm:$0xff] %vm337, %v6011
        %10105 = vst.msk [vmem:[%s4596 + $0x69] sm:$0xff] %vm337, %v6012
        %10106 = vst.msk [vmem:[%s4596 + $0x79] sm:$0xff] %vm337, %v6013
        %10107 = vst.msk [vmem:[%s4596 + $0x81] sm:$0xff] %vm337, %v6014
        %10108 = vst.msk [vmem:[%s4596 + $0x91] sm:$0xff] %vm337, %v6015
        %10109 = vst.msk [vmem:[%s4596 + $0x99] sm:$0xff] %vm337, %v6016
        %10110 = vst.msk [vmem:[%s4596 + $0xa9] sm:$0xff] %vm337, %v6017
        %10111 = vst.msk [vmem:[%s4596 + $0xb1] sm:$0xff] %vm337, %v6018
        %10112 = vst.msk [vmem:[%s4596 + $0xc1] sm:$0xff] %vm337, %v6019
        %10113 = vst.msk [vmem:[%s4596 + $0xc9] sm:$0xff] %vm337, %v6020
        %10114 = vst.msk [vmem:[%s4596 + $0xd9] sm:$0xff] %vm337, %v6021
        %10115 = vst.msk [vmem:[%s4596 + $0xe1] sm:$0xff] %vm337, %v6022
        %10116 = vst.msk [vmem:[%s4596 + $0xf1] sm:$0xff] %vm337, %v6023
        %10117 = vst.msk [vmem:[%s4596 + $0xf9] sm:$0xff] %vm337, %v6024
        %10118 = vst.msk [vmem:[%s4596 + $0x109] sm:$0xff] %vm337, %v6025
        %10119 = vst.msk [vmem:[%s4596 + $0x111] sm:$0xff] %vm337, %v6026
        %10120 = vst.msk [vmem:[%s4596 + $0x121] sm:$0xff] %vm337, %v6027
        %10121 = vst.msk [vmem:[%s4596 + $0x129] sm:$0xff] %vm337, %v6028
        %10122 = vst.msk [vmem:[%s4596 + $0x139] sm:$0xff] %vm337, %v6029
        %10123 = vst.msk [vmem:[%s4596 + $0x141] sm:$0xff] %vm337, %v6030
        %10124 = vst.msk [vmem:[%s4596 + $0x151] sm:$0xff] %vm337, %v6031
        %10125 = vst.msk [vmem:[%s4596 + $0x159] sm:$0xff] %vm337, %v6032
        %10126 = vst.msk [vmem:[%s4596 + $0x169] sm:$0xff] %vm337, %v6033
        %10127 = vst.msk [vmem:[%s4596 + $0x171] sm:$0xff] %vm337, %v6034
        %v10128 = vld [vmem:[#allocation4] sm:$0xff]
        %v10129 = vld [vmem:[#allocation4 + $0x8] sm:$0xff]
        %v10130 = vld [vmem:[#allocation4 + $0x10] sm:$0x3]
        %v10131 = vld [vmem:[#allocation4 + $0x18] sm:$0xff]
        %v10132 = vld [vmem:[#allocation4 + $0x20] sm:$0xff]
        %v10133 = vld [vmem:[#allocation4 + $0x28] sm:$0x3]
        %v10134 = vld [vmem:[#allocation4 + $0x30] sm:$0xff]
        %v10135 = vld [vmem:[#allocation4 + $0x38] sm:$0xff]
        %v10136 = vld [vmem:[#allocation4 + $0x40] sm:$0x3]
        %v10137 = vld [vmem:[#allocation4 + $0x48] sm:$0xff]
        %v10138 = vld [vmem:[#allocation4 + $0x50] sm:$0xff]
        %v10139 = vld [vmem:[#allocation4 + $0x58] sm:$0x3]
        %v10140 = vld [vmem:[#allocation4 + $0x60] sm:$0xff]
        %v10141 = vld [vmem:[#allocation4 + $0x68] sm:$0xff]
        %v10142 = vld [vmem:[#allocation4 + $0x70] sm:$0x3]
        %v10143 = vld [vmem:[#allocation4 + $0x78] sm:$0xff]
        %v10144 = vld [vmem:[#allocation4 + $0x80] sm:$0xff]
        %v10145 = vld [vmem:[#allocation4 + $0x88] sm:$0x3]
        %v10146 = vld [vmem:[#allocation4 + $0x90] sm:$0xff]
        %v10147 = vld [vmem:[#allocation4 + $0x98] sm:$0xff]
        %v10148 = vld [vmem:[#allocation4 + $0xa0] sm:$0x3]
        %v10149 = vld [vmem:[#allocation4 + $0xa8] sm:$0xff]
        %v10150 = vld [vmem:[#allocation4 + $0xb0] sm:$0xff]
        %v10151 = vld [vmem:[#allocation4 + $0xb8] sm:$0x3]
        %v10152 = vld [vmem:[#allocation4 + $0xc0] sm:$0xff]
        %v10153 = vld [vmem:[#allocation4 + $0xc8] sm:$0xff]
        %v10154 = vld [vmem:[#allocation4 + $0xd0] sm:$0x3]
        %v10155 = vld [vmem:[#allocation4 + $0xd8] sm:$0xff]
        %v10156 = vld [vmem:[#allocation4 + $0xe0] sm:$0xff]
        %v10157 = vld [vmem:[#allocation4 + $0xe8] sm:$0x3]
        %v10158 = vld [vmem:[#allocation4 + $0xf0] sm:$0xff]
        %v10159 = vld [vmem:[#allocation4 + $0xf8] sm:$0xff]
        %v10160 = vld [vmem:[#allocation4 + $0x100] sm:$0x3]
        %v10161 = vld [vmem:[#allocation4 + $0x108] sm:$0xff]
        %v10162 = vld [vmem:[#allocation4 + $0x110] sm:$0xff]
        %v10163 = vld [vmem:[#allocation4 + $0x118] sm:$0x3]
        %v10164 = vld [vmem:[#allocation4 + $0x120] sm:$0xff]
        %v10165 = vld [vmem:[#allocation4 + $0x128] sm:$0xff]
        %v10166 = vld [vmem:[#allocation4 + $0x130] sm:$0x3]
        %v10167 = vld [vmem:[#allocation4 + $0x138] sm:$0xff]
        %v10168 = vld [vmem:[#allocation4 + $0x140] sm:$0xff]
        %v10169 = vld [vmem:[#allocation4 + $0x148] sm:$0x3]
        %v10170 = vld [vmem:[#allocation4 + $0x150] sm:$0xff]
        %v10171 = vld [vmem:[#allocation4 + $0x158] sm:$0xff]
        %v10172 = vld [vmem:[#allocation4 + $0x160] sm:$0x3]
        %v10173 = vld [vmem:[#allocation4 + $0x168] sm:$0xff]
        %v10174 = vld [vmem:[#allocation4 + $0x170] sm:$0xff]
        %v10175 = vld [vmem:[#allocation4 + $0x178] sm:$0x3]
        %v10176 = vld [vmem:[#allocation4 + $0x180] sm:$0xff]
        %v10177 = vld [vmem:[#allocation4 + $0x188] sm:$0xff]
        %v10178 = vld [vmem:[#allocation4 + $0x190] sm:$0x3]
        %v10179 = vld [vmem:[#allocation4 + $0x198] sm:$0xff]
        %v10180 = vld [vmem:[#allocation4 + $0x1a0] sm:$0xff]
        %v10181 = vld [vmem:[#allocation4 + $0x1a8] sm:$0x3]
        %v10236 = vrot.slane %v10128, 1
        %v10237 = vrot.slane %v10129, 1
        %v10238 = vsel %vm1307, %v10236, %v10237
        %v10239 = vrot.slane %v10130, 1
        %v10240 = vsel %vm1307, %v10237, %v10239
        %v10241 = vrot.slane %v10131, 1
        %v10242 = vrot.slane %v10132, 1
        %v10243 = vsel %vm1307, %v10241, %v10242
        %v10244 = vrot.slane %v10133, 1
        %v10245 = vsel %vm1307, %v10242, %v10244
        %v10246 = vrot.slane %v10134, 1
        %v10247 = vrot.slane %v10135, 1
        %v10248 = vsel %vm1307, %v10246, %v10247
        %v10249 = vrot.slane %v10136, 1
        %v10250 = vsel %vm1307, %v10247, %v10249
        %v10251 = vrot.slane %v10137, 1
        %v10252 = vrot.slane %v10138, 1
        %v10253 = vsel %vm1307, %v10251, %v10252
        %v10254 = vrot.slane %v10139, 1
        %v10255 = vsel %vm1307, %v10252, %v10254
        %v10256 = vrot.slane %v10140, 1
        %v10257 = vrot.slane %v10141, 1
        %v10258 = vsel %vm1307, %v10256, %v10257
        %v10259 = vrot.slane %v10142, 1
        %v10260 = vsel %vm1307, %v10257, %v10259
        %v10261 = vrot.slane %v10143, 1
        %v10262 = vrot.slane %v10144, 1
        %v10263 = vsel %vm1307, %v10261, %v10262
        %v10264 = vrot.slane %v10145, 1
        %v10265 = vsel %vm1307, %v10262, %v10264
        %v10266 = vrot.slane %v10146, 1
        %v10267 = vrot.slane %v10147, 1
        %v10268 = vsel %vm1307, %v10266, %v10267
        %v10269 = vrot.slane %v10148, 1
        %v10270 = vsel %vm1307, %v10267, %v10269
        %v10271 = vrot.slane %v10149, 1
        %v10272 = vrot.slane %v10150, 1
        %v10273 = vsel %vm1307, %v10271, %v10272
        %v10274 = vrot.slane %v10151, 1
        %v10275 = vsel %vm1307, %v10272, %v10274
        %v10276 = vrot.slane %v10152, 1
        %v10277 = vrot.slane %v10153, 1
        %v10278 = vsel %vm1307, %v10276, %v10277
        %v10279 = vrot.slane %v10154, 1
        %v10280 = vsel %vm1307, %v10277, %v10279
        %v10281 = vrot.slane %v10155, 1
        %v10282 = vrot.slane %v10156, 1
        %v10283 = vsel %vm1307, %v10281, %v10282
        %v10284 = vrot.slane %v10157, 1
        %v10285 = vsel %vm1307, %v10282, %v10284
        %v10286 = vrot.slane %v10158, 1
        %v10287 = vrot.slane %v10159, 1
        %v10288 = vsel %vm1307, %v10286, %v10287
        %v10289 = vrot.slane %v10160, 1
        %v10290 = vsel %vm1307, %v10287, %v10289
        %v10291 = vrot.slane %v10161, 1
        %v10292 = vrot.slane %v10162, 1
        %v10293 = vsel %vm1307, %v10291, %v10292
        %v10294 = vrot.slane %v10163, 1
        %v10295 = vsel %vm1307, %v10292, %v10294
        %v10296 = vrot.slane %v10164, 1
        %v10297 = vrot.slane %v10165, 1
        %v10298 = vsel %vm1307, %v10296, %v10297
        %v10299 = vrot.slane %v10166, 1
        %v10300 = vsel %vm1307, %v10297, %v10299
        %v10301 = vrot.slane %v10167, 1
        %v10302 = vrot.slane %v10168, 1
        %v10303 = vsel %vm1307, %v10301, %v10302
        %v10304 = vrot.slane %v10169, 1
        %v10305 = vsel %vm1307, %v10302, %v10304
        %v10306 = vrot.slane %v10170, 1
        %v10307 = vrot.slane %v10171, 1
        %v10308 = vsel %vm1307, %v10306, %v10307
        %v10309 = vrot.slane %v10172, 1
        %v10310 = vsel %vm1307, %v10307, %v10309
        %v10311 = vrot.slane %v10173, 1
        %v10312 = vrot.slane %v10174, 1
        %v10313 = vsel %vm1307, %v10311, %v10312
        %v10314 = vrot.slane %v10175, 1
        %v10315 = vsel %vm1307, %v10312, %v10314
        %v10316 = vrot.slane %v10176, 1
        %v10317 = vrot.slane %v10177, 1
        %v10318 = vsel %vm1307, %v10316, %v10317
        %v10319 = vrot.slane %v10178, 1
        %v10320 = vsel %vm1307, %v10317, %v10319
        %v10321 = vrot.slane %v10179, 1
        %v10322 = vrot.slane %v10180, 1
        %v10323 = vsel %vm1307, %v10321, %v10322
        %v10324 = vrot.slane %v10181, 1
        %v10325 = vsel %vm1307, %v10322, %v10324
        %v10362 = vmax.f32 %v10128, %v10238
        %v10363 = vmax.f32 %v10129, %v10240
        %v10364 = vmax.f32 %v10131, %v10243
        %v10365 = vmax.f32 %v10132, %v10245
        %v10366 = vmax.f32 %v10134, %v10248
        %v10367 = vmax.f32 %v10135, %v10250
        %v10368 = vmax.f32 %v10137, %v10253
        %v10369 = vmax.f32 %v10138, %v10255
        %v10370 = vmax.f32 %v10140, %v10258
        %v10371 = vmax.f32 %v10141, %v10260
        %v10372 = vmax.f32 %v10143, %v10263
        %v10373 = vmax.f32 %v10144, %v10265
        %v10374 = vmax.f32 %v10146, %v10268
        %v10375 = vmax.f32 %v10147, %v10270
        %v10376 = vmax.f32 %v10149, %v10273
        %v10377 = vmax.f32 %v10150, %v10275
        %v10378 = vmax.f32 %v10152, %v10278
        %v10379 = vmax.f32 %v10153, %v10280
        %v10380 = vmax.f32 %v10155, %v10283
        %v10381 = vmax.f32 %v10156, %v10285
        %v10382 = vmax.f32 %v10158, %v10288
        %v10383 = vmax.f32 %v10159, %v10290
        %v10384 = vmax.f32 %v10161, %v10293
        %v10385 = vmax.f32 %v10162, %v10295
        %v10386 = vmax.f32 %v10164, %v10298
        %v10387 = vmax.f32 %v10165, %v10300
        %v10388 = vmax.f32 %v10167, %v10303
        %v10389 = vmax.f32 %v10168, %v10305
        %v10390 = vmax.f32 %v10170, %v10308
        %v10391 = vmax.f32 %v10171, %v10310
        %v10392 = vmax.f32 %v10173, %v10313
        %v10393 = vmax.f32 %v10174, %v10315
        %v10394 = vmax.f32 %v10176, %v10318
        %v10395 = vmax.f32 %v10177, %v10320
        %v10396 = vmax.f32 %v10179, %v10323
        %v10397 = vmax.f32 %v10180, %v10325
        %v10398 = vrot.slane %v10128, 2
        %v10399 = vrot.slane %v10129, 2
        %v10400 = vsel %vm1506, %v10398, %v10399
        %v10401 = vrot.slane %v10130, 2
        %v10402 = vsel %vm1506, %v10399, %v10401
        %v10403 = vrot.slane %v10131, 2
        %v10404 = vrot.slane %v10132, 2
        %v10405 = vsel %vm1506, %v10403, %v10404
        %v10406 = vrot.slane %v10133, 2
        %v10407 = vsel %vm1506, %v10404, %v10406
        %v10408 = vrot.slane %v10134, 2
        %v10409 = vrot.slane %v10135, 2
        %v10410 = vsel %vm1506, %v10408, %v10409
        %v10411 = vrot.slane %v10136, 2
        %v10412 = vsel %vm1506, %v10409, %v10411
        %v10413 = vrot.slane %v10137, 2
        %v10414 = vrot.slane %v10138, 2
        %v10415 = vsel %vm1506, %v10413, %v10414
        %v10416 = vrot.slane %v10139, 2
        %v10417 = vsel %vm1506, %v10414, %v10416
        %v10418 = vrot.slane %v10140, 2
        %v10419 = vrot.slane %v10141, 2
        %v10420 = vsel %vm1506, %v10418, %v10419
        %v10421 = vrot.slane %v10142, 2
        %v10422 = vsel %vm1506, %v10419, %v10421
        %v10423 = vrot.slane %v10143, 2
        %v10424 = vrot.slane %v10144, 2
        %v10425 = vsel %vm1506, %v10423, %v10424
        %v10426 = vrot.slane %v10145, 2
        %v10427 = vsel %vm1506, %v10424, %v10426
        %v10428 = vrot.slane %v10146, 2
        %v10429 = vrot.slane %v10147, 2
        %v10430 = vsel %vm1506, %v10428, %v10429
        %v10431 = vrot.slane %v10148, 2
        %v10432 = vsel %vm1506, %v10429, %v10431
        %v10433 = vrot.slane %v10149, 2
        %v10434 = vrot.slane %v10150, 2
        %v10435 = vsel %vm1506, %v10433, %v10434
        %v10436 = vrot.slane %v10151, 2
        %v10437 = vsel %vm1506, %v10434, %v10436
        %v10438 = vrot.slane %v10152, 2
        %v10439 = vrot.slane %v10153, 2
        %v10440 = vsel %vm1506, %v10438, %v10439
        %v10441 = vrot.slane %v10154, 2
        %v10442 = vsel %vm1506, %v10439, %v10441
        %v10443 = vrot.slane %v10155, 2
        %v10444 = vrot.slane %v10156, 2
        %v10445 = vsel %vm1506, %v10443, %v10444
        %v10446 = vrot.slane %v10157, 2
        %v10447 = vsel %vm1506, %v10444, %v10446
        %v10448 = vrot.slane %v10158, 2
        %v10449 = vrot.slane %v10159, 2
        %v10450 = vsel %vm1506, %v10448, %v10449
        %v10451 = vrot.slane %v10160, 2
        %v10452 = vsel %vm1506, %v10449, %v10451
        %v10453 = vrot.slane %v10161, 2
        %v10454 = vrot.slane %v10162, 2
        %v10455 = vsel %vm1506, %v10453, %v10454
        %v10456 = vrot.slane %v10163, 2
        %v10457 = vsel %vm1506, %v10454, %v10456
        %v10458 = vrot.slane %v10164, 2
        %v10459 = vrot.slane %v10165, 2
        %v10460 = vsel %vm1506, %v10458, %v10459
        %v10461 = vrot.slane %v10166, 2
        %v10462 = vsel %vm1506, %v10459, %v10461
        %v10463 = vrot.slane %v10167, 2
        %v10464 = vrot.slane %v10168, 2
        %v10465 = vsel %vm1506, %v10463, %v10464
        %v10466 = vrot.slane %v10169, 2
        %v10467 = vsel %vm1506, %v10464, %v10466
        %v10468 = vrot.slane %v10170, 2
        %v10469 = vrot.slane %v10171, 2
        %v10470 = vsel %vm1506, %v10468, %v10469
        %v10471 = vrot.slane %v10172, 2
        %v10472 = vsel %vm1506, %v10469, %v10471
        %v10473 = vrot.slane %v10173, 2
        %v10474 = vrot.slane %v10174, 2
        %v10475 = vsel %vm1506, %v10473, %v10474
        %v10476 = vrot.slane %v10175, 2
        %v10477 = vsel %vm1506, %v10474, %v10476
        %v10478 = vrot.slane %v10176, 2
        %v10479 = vrot.slane %v10177, 2
        %v10480 = vsel %vm1506, %v10478, %v10479
        %v10481 = vrot.slane %v10178, 2
        %v10482 = vsel %vm1506, %v10479, %v10481
        %v10483 = vrot.slane %v10179, 2
        %v10484 = vrot.slane %v10180, 2
        %v10485 = vsel %vm1506, %v10483, %v10484
        %v10486 = vrot.slane %v10181, 2
        %v10487 = vsel %vm1506, %v10484, %v10486
        %v10524 = vmax.f32 %v10362, %v10400
        %v10525 = vmax.f32 %v10363, %v10402
        %v10526 = vmax.f32 %v10364, %v10405
        %v10527 = vmax.f32 %v10365, %v10407
        %v10528 = vmax.f32 %v10366, %v10410
        %v10529 = vmax.f32 %v10367, %v10412
        %v10530 = vmax.f32 %v10368, %v10415
        %v10531 = vmax.f32 %v10369, %v10417
        %v10532 = vmax.f32 %v10370, %v10420
        %v10533 = vmax.f32 %v10371, %v10422
        %v10534 = vmax.f32 %v10372, %v10425
        %v10535 = vmax.f32 %v10373, %v10427
        %v10536 = vmax.f32 %v10374, %v10430
        %v10537 = vmax.f32 %v10375, %v10432
        %v10538 = vmax.f32 %v10376, %v10435
        %v10539 = vmax.f32 %v10377, %v10437
        %v10540 = vmax.f32 %v10378, %v10440
        %v10541 = vmax.f32 %v10379, %v10442
        %v10542 = vmax.f32 %v10380, %v10445
        %v10543 = vmax.f32 %v10381, %v10447
        %v10544 = vmax.f32 %v10382, %v10450
        %v10545 = vmax.f32 %v10383, %v10452
        %v10546 = vmax.f32 %v10384, %v10455
        %v10547 = vmax.f32 %v10385, %v10457
        %v10548 = vmax.f32 %v10386, %v10460
        %v10549 = vmax.f32 %v10387, %v10462
        %v10550 = vmax.f32 %v10388, %v10465
        %v10551 = vmax.f32 %v10389, %v10467
        %v10552 = vmax.f32 %v10390, %v10470
        %v10553 = vmax.f32 %v10391, %v10472
        %v10554 = vmax.f32 %v10392, %v10475
        %v10555 = vmax.f32 %v10393, %v10477
        %v10556 = vmax.f32 %v10394, %v10480
        %v10557 = vmax.f32 %v10395, %v10482
        %v10558 = vmax.f32 %v10396, %v10485
        %v10559 = vmax.f32 %v10397, %v10487
        %v10560 = vmax.f32 %v10524, %v10526
        %v10561 = vmax.f32 %v10525, %v10527
        %v10562 = vmax.f32 %v10526, %v10528
        %v10563 = vmax.f32 %v10527, %v10529
        %v10564 = vmax.f32 %v10528, %v10530
        %v10565 = vmax.f32 %v10529, %v10531
        %v10566 = vmax.f32 %v10530, %v10532
        %v10567 = vmax.f32 %v10531, %v10533
        %v10568 = vmax.f32 %v10532, %v10534
        %v10569 = vmax.f32 %v10533, %v10535
        %v10570 = vmax.f32 %v10534, %v10536
        %v10571 = vmax.f32 %v10535, %v10537
        %v10572 = vmax.f32 %v10536, %v10538
        %v10573 = vmax.f32 %v10537, %v10539
        %v10574 = vmax.f32 %v10538, %v10540
        %v10575 = vmax.f32 %v10539, %v10541
        %v10576 = vmax.f32 %v10540, %v10542
        %v10577 = vmax.f32 %v10541, %v10543
        %v10578 = vmax.f32 %v10542, %v10544
        %v10579 = vmax.f32 %v10543, %v10545
        %v10580 = vmax.f32 %v10544, %v10546
        %v10581 = vmax.f32 %v10545, %v10547
        %v10582 = vmax.f32 %v10546, %v10548
        %v10583 = vmax.f32 %v10547, %v10549
        %v10584 = vmax.f32 %v10548, %v10550
        %v10585 = vmax.f32 %v10549, %v10551
        %v10586 = vmax.f32 %v10550, %v10552
        %v10587 = vmax.f32 %v10551, %v10553
        %v10588 = vmax.f32 %v10552, %v10554
        %v10589 = vmax.f32 %v10553, %v10555
        %v10590 = vmax.f32 %v10554, %v10556
        %v10591 = vmax.f32 %v10555, %v10557
        %v10592 = vmax.f32 %v10560, %v10528
        %v10593 = vmax.f32 %v10561, %v10529
        %v10594 = vmax.f32 %v10562, %v10530
        %v10595 = vmax.f32 %v10563, %v10531
        %v10596 = vmax.f32 %v10564, %v10532
        %v10597 = vmax.f32 %v10565, %v10533
        %v10598 = vmax.f32 %v10566, %v10534
        %v10599 = vmax.f32 %v10567, %v10535
        %v10600 = vmax.f32 %v10568, %v10536
        %v10601 = vmax.f32 %v10569, %v10537
        %v10602 = vmax.f32 %v10570, %v10538
        %v10603 = vmax.f32 %v10571, %v10539
        %v10604 = vmax.f32 %v10572, %v10540
        %v10605 = vmax.f32 %v10573, %v10541
        %v10606 = vmax.f32 %v10574, %v10542
        %v10607 = vmax.f32 %v10575, %v10543
        %v10608 = vmax.f32 %v10576, %v10544
        %v10609 = vmax.f32 %v10577, %v10545
        %v10610 = vmax.f32 %v10578, %v10546
        %v10611 = vmax.f32 %v10579, %v10547
        %v10612 = vmax.f32 %v10580, %v10548
        %v10613 = vmax.f32 %v10581, %v10549
        %v10614 = vmax.f32 %v10582, %v10550
        %v10615 = vmax.f32 %v10583, %v10551
        %v10616 = vmax.f32 %v10584, %v10552
        %v10617 = vmax.f32 %v10585, %v10553
        %v10618 = vmax.f32 %v10586, %v10554
        %v10619 = vmax.f32 %v10587, %v10555
        %v10620 = vmax.f32 %v10588, %v10556
        %v10621 = vmax.f32 %v10589, %v10557
        %v10622 = vmax.f32 %v10590, %v10558
        %v10623 = vmax.f32 %v10591, %v10559
        %v10624 = vld [vmem:[%s7] sm:$0xf]
        %v10625 = vld [vmem:[%s8] sm:$0x1]
        %v10627 = vlaneseq
        %v10628 = vshrl.u32 %v10627, 7
        %v10629 = vsub.s32 0, %v10628
        %v10630 = vrot.slane %v10625, %v10629
        %v10633 = vsel %vm337, %v10592, 0
        %v10636 = vsel %vm337, %v10593, 0
        %v10639 = vsel %vm337, %v10594, 0
        %v10642 = vsel %vm337, %v10595, 0
        %v10645 = vsel %vm337, %v10596, 0
        %v10648 = vsel %vm337, %v10597, 0
        %v10651 = vsel %vm337, %v10598, 0
        %v10654 = vsel %vm337, %v10599, 0
        %v10657 = vsel %vm337, %v10600, 0
        %v10660 = vsel %vm337, %v10601, 0
        %v10663 = vsel %vm337, %v10602, 0
        %v10666 = vsel %vm337, %v10603, 0
        %v10669 = vsel %vm337, %v10604, 0
        %v10672 = vsel %vm337, %v10605, 0
        %v10675 = vsel %vm337, %v10606, 0
        %v10678 = vsel %vm337, %v10607, 0
        %v10681 = vsel %vm337, %v10608, 0
        %v10684 = vsel %vm337, %v10609, 0
        %v10687 = vsel %vm337, %v10610, 0
        %v10690 = vsel %vm337, %v10611, 0
        %v10693 = vsel %vm337, %v10612, 0
        %v10696 = vsel %vm337, %v10613, 0
        %v10699 = vsel %vm337, %v10614, 0
        %v10702 = vsel %vm337, %v10615, 0
        %v10705 = vsel %vm337, %v10616, 0
        %v10708 = vsel %vm337, %v10617, 0
        %v10711 = vsel %vm337, %v10618, 0
        %v10714 = vsel %vm337, %v10619, 0
        %v10717 = vsel %vm337, %v10620, 0
        %v10720 = vsel %vm337, %v10621, 0
        %v10723 = vsel %vm337, %v10622, 0
        %v10726 = vsel %vm337, %v10623, 0
        %v10729 = vsel %vm610, %v10624, 0
        %10731 = vmatprep.subr.mxu0 0.0
        %10732 = vmatpush1.msra.mxu0 %v10729
        %10733 = vmatprep.subr.mxu0 0.0
        %10734 = vmatpush1.msra.mxu0 0.0
        %10735 = vmatprep.subr.mxu0 0.0
        %10736 = vmatpush1.msra.mxu0 0.0
        %10737 = vmatprep.subr.mxu0 0.0
        %10738 = vmatpush1.msra.mxu0 0.0
        %10739 = vmatprep.subr.mxu0 0.0
        %10740 = vmatpush1.msra.mxu0 0.0
        %10741 = vmatprep.subr.mxu0 0.0
        %10742 = vmatpush1.msra.mxu0 0.0
        %10743 = vmatprep.subr.mxu0 0.0
        %10744 = vmatpush1.msra.mxu0 0.0
        %10745 = vmatprep.subr.mxu0 0.0
        %10746 = vmatpush1.msra.mxu0 0.0
        %10747 = vmatprep.subr.mxu0 0.0
        %10748 = vmatpush1.msra.mxu0 0.0
        %10749 = vmatprep.subr.mxu0 0.0
        %10750 = vmatpush1.msra.mxu0 0.0
        %10751 = vmatprep.subr.mxu0 0.0
        %10752 = vmatpush1.msra.mxu0 0.0
        %10753 = vmatprep.subr.mxu0 0.0
        %10754 = vmatpush1.msra.mxu0 0.0
        %10755 = vmatprep.subr.mxu0 0.0
        %10756 = vmatpush1.msra.mxu0 0.0
        %10757 = vmatprep.subr.mxu0 0.0
        %10758 = vmatpush1.msra.mxu0 0.0
        %10759 = vmatprep.subr.mxu0 0.0
        %10760 = vmatpush1.msra.mxu0 0.0
        %10761 = vmatprep.subr.mxu0 0.0
        %10762 = vmatpush1.msra.mxu0 0.0
        %10763 = vmatprep.subr.mxu0 0.0
        %10764 = vmatpush1.msra.mxu0 0.0
        %10765 = vmatprep.subr.mxu0 0.0
        %10766 = vmatpush1.msra.mxu0 0.0
        %10767 = vmatprep.subr.mxu0 0.0
        %10768 = vmatpush1.msra.mxu0 0.0
        %10769 = vmatprep.subr.mxu0 0.0
        %10770 = vmatpush1.msra.mxu0 0.0
        %10771 = vmatprep.subr.mxu0 0.0
        %10772 = vmatpush1.msra.mxu0 0.0
        %10773 = vmatprep.subr.mxu0 0.0
        %10774 = vmatpush1.msra.mxu0 0.0
        %10775 = vmatprep.subr.mxu0 0.0
        %10776 = vmatpush1.msra.mxu0 0.0
        %10777 = vmatprep.subr.mxu0 0.0
        %10778 = vmatpush1.msra.mxu0 0.0
        %10779 = vmatprep.subr.mxu0 0.0
        %10780 = vmatpush1.msra.mxu0 0.0
        %10781 = vmatprep.subr.mxu0 0.0
        %10782 = vmatpush1.msra.mxu0 0.0
        %10783 = vmatprep.subr.mxu0 0.0
        %10784 = vmatpush1.msra.mxu0 0.0
        %10785 = vmatprep.subr.mxu0 0.0
        %10786 = vmatpush1.msra.mxu0 0.0
        %10787 = vmatprep.subr.mxu0 0.0
        %10788 = vmatpush1.msra.mxu0 0.0
        %10789 = vmatprep.subr.mxu0 0.0
        %10790 = vmatpush1.msra.mxu0 0.0
        %10791 = vmatprep.subr.mxu0 0.0
        %10792 = vmatpush1.msra.mxu0 0.0
        %10793 = vmatprep.subr.mxu0 0.0
        %10794 = vmatpush1.msra.mxu0 0.0
        %10795 = vmatprep.mubr.f32.mxu0 0.0
        %10796 = vmatmul.mubr.f32.gmra.mrb[0].mxu0 %v10633
        %v10797 = vpop.f32.mrb[0].mxu0
        %v10798 = vadd.f32 %v10630, %v10797
        %v10799 = vpop.f32.mrb[0].mxu0
        %10800 = vmatprep.mubr.f32.mxu0 0.0
        %10801 = vmatmul.mubr.f32.gmra.mrb[0].mxu0 %v10636
        %v10802 = vpop.f32.mrb[0].mxu0
        %v10803 = vadd.f32 %v10630, %v10802
        %v10804 = vpop.f32.mrb[0].mxu0
        %10805 = vmatprep.mubr.f32.mxu0 0.0
        %10806 = vmatmul.mubr.f32.gmra.mrb[0].mxu0 %v10639
        %v10807 = vpop.f32.mrb[0].mxu0
        %v10808 = vadd.f32 %v10630, %v10807
        %v10809 = vpop.f32.mrb[0].mxu0
        %10810 = vmatprep.mubr.f32.mxu0 0.0
        %10811 = vmatmul.mubr.f32.gmra.mrb[0].mxu0 %v10642
        %v10812 = vpop.f32.mrb[0].mxu0
        %v10813 = vadd.f32 %v10630, %v10812
        %v10814 = vpop.f32.mrb[0].mxu0
        %10815 = vmatprep.mubr.f32.mxu0 0.0
        %10816 = vmatmul.mubr.f32.gmra.mrb[0].mxu0 %v10645
        %v10817 = vpop.f32.mrb[0].mxu0
        %v10818 = vadd.f32 %v10630, %v10817
        %v10819 = vpop.f32.mrb[0].mxu0
        %10820 = vmatprep.mubr.f32.mxu0 0.0
        %10821 = vmatmul.mubr.f32.gmra.mrb[0].mxu0 %v10648
        %v10822 = vpop.f32.mrb[0].mxu0
        %v10823 = vadd.f32 %v10630, %v10822
        %v10824 = vpop.f32.mrb[0].mxu0
        %10825 = vmatprep.mubr.f32.mxu0 0.0
        %10826 = vmatmul.mubr.f32.gmra.mrb[0].mxu0 %v10651
        %v10827 = vpop.f32.mrb[0].mxu0
        %v10828 = vadd.f32 %v10630, %v10827
        %v10829 = vpop.f32.mrb[0].mxu0
        %10830 = vmatprep.mubr.f32.mxu0 0.0
        %10831 = vmatmul.mubr.f32.gmra.mrb[0].mxu0 %v10654
        %v10832 = vpop.f32.mrb[0].mxu0
        %v10833 = vadd.f32 %v10630, %v10832
        %v10834 = vpop.f32.mrb[0].mxu0
        %10835 = vmatprep.mubr.f32.mxu0 0.0
        %10836 = vmatmul.mubr.f32.gmra.mrb[0].mxu0 %v10657
        %v10837 = vpop.f32.mrb[0].mxu0
        %v10838 = vadd.f32 %v10630, %v10837
        %v10839 = vpop.f32.mrb[0].mxu0
        %10840 = vmatprep.mubr.f32.mxu0 0.0
        %10841 = vmatmul.mubr.f32.gmra.mrb[0].mxu0 %v10660
        %v10842 = vpop.f32.mrb[0].mxu0
        %v10843 = vadd.f32 %v10630, %v10842
        %v10844 = vpop.f32.mrb[0].mxu0
        %10845 = vmatprep.mubr.f32.mxu0 0.0
        %10846 = vmatmul.mubr.f32.gmra.mrb[0].mxu0 %v10663
        %v10847 = vpop.f32.mrb[0].mxu0
        %v10848 = vadd.f32 %v10630, %v10847
        %v10849 = vpop.f32.mrb[0].mxu0
        %10850 = vmatprep.mubr.f32.mxu0 0.0
        %10851 = vmatmul.mubr.f32.gmra.mrb[0].mxu0 %v10666
        %v10852 = vpop.f32.mrb[0].mxu0
        %v10853 = vadd.f32 %v10630, %v10852
        %v10854 = vpop.f32.mrb[0].mxu0
        %10855 = vmatprep.mubr.f32.mxu0 0.0
        %10856 = vmatmul.mubr.f32.gmra.mrb[0].mxu0 %v10669
        %v10857 = vpop.f32.mrb[0].mxu0
        %v10858 = vadd.f32 %v10630, %v10857
        %v10859 = vpop.f32.mrb[0].mxu0
        %10860 = vmatprep.mubr.f32.mxu0 0.0
        %10861 = vmatmul.mubr.f32.gmra.mrb[0].mxu0 %v10672
        %v10862 = vpop.f32.mrb[0].mxu0
        %v10863 = vadd.f32 %v10630, %v10862
        %v10864 = vpop.f32.mrb[0].mxu0
        %10865 = vmatprep.mubr.f32.mxu0 0.0
        %10866 = vmatmul.mubr.f32.gmra.mrb[0].mxu0 %v10675
        %v10867 = vpop.f32.mrb[0].mxu0
        %v10868 = vadd.f32 %v10630, %v10867
        %v10869 = vpop.f32.mrb[0].mxu0
        %10870 = vmatprep.mubr.f32.mxu0 0.0
        %10871 = vmatmul.mubr.f32.gmra.mrb[0].mxu0 %v10678
        %v10872 = vpop.f32.mrb[0].mxu0
        %v10873 = vadd.f32 %v10630, %v10872
        %v10874 = vpop.f32.mrb[0].mxu0
        %10875 = vmatprep.mubr.f32.mxu0 0.0
        %10876 = vmatmul.mubr.f32.gmra.mrb[0].mxu0 %v10681
        %v10877 = vpop.f32.mrb[0].mxu0
        %v10878 = vadd.f32 %v10630, %v10877
        %v10879 = vpop.f32.mrb[0].mxu0
        %10880 = vmatprep.mubr.f32.mxu0 0.0
        %10881 = vmatmul.mubr.f32.gmra.mrb[0].mxu0 %v10684
        %v10882 = vpop.f32.mrb[0].mxu0
        %v10883 = vadd.f32 %v10630, %v10882
        %v10884 = vpop.f32.mrb[0].mxu0
        %10885 = vmatprep.mubr.f32.mxu0 0.0
        %10886 = vmatmul.mubr.f32.gmra.mrb[0].mxu0 %v10687
        %v10887 = vpop.f32.mrb[0].mxu0
        %v10888 = vadd.f32 %v10630, %v10887
        %v10889 = vpop.f32.mrb[0].mxu0
        %10890 = vmatprep.mubr.f32.mxu0 0.0
        %10891 = vmatmul.mubr.f32.gmra.mrb[0].mxu0 %v10690
        %v10892 = vpop.f32.mrb[0].mxu0
        %v10893 = vadd.f32 %v10630, %v10892
        %v10894 = vpop.f32.mrb[0].mxu0
        %10895 = vmatprep.mubr.f32.mxu0 0.0
        %10896 = vmatmul.mubr.f32.gmra.mrb[0].mxu0 %v10693
        %v10897 = vpop.f32.mrb[0].mxu0
        %v10898 = vadd.f32 %v10630, %v10897
        %v10899 = vpop.f32.mrb[0].mxu0
        %10900 = vmatprep.mubr.f32.mxu0 0.0
        %10901 = vmatmul.mubr.f32.gmra.mrb[0].mxu0 %v10696
        %v10902 = vpop.f32.mrb[0].mxu0
        %v10903 = vadd.f32 %v10630, %v10902
        %v10904 = vpop.f32.mrb[0].mxu0
        %10905 = vmatprep.mubr.f32.mxu0 0.0
        %10906 = vmatmul.mubr.f32.gmra.mrb[0].mxu0 %v10699
        %v10907 = vpop.f32.mrb[0].mxu0
        %v10908 = vadd.f32 %v10630, %v10907
        %v10909 = vpop.f32.mrb[0].mxu0
        %10910 = vmatprep.mubr.f32.mxu0 0.0
        %10911 = vmatmul.mubr.f32.gmra.mrb[0].mxu0 %v10702
        %v10912 = vpop.f32.mrb[0].mxu0
        %v10913 = vadd.f32 %v10630, %v10912
        %v10914 = vpop.f32.mrb[0].mxu0
        %10915 = vmatprep.mubr.f32.mxu0 0.0
        %10916 = vmatmul.mubr.f32.gmra.mrb[0].mxu0 %v10705
        %v10917 = vpop.f32.mrb[0].mxu0
        %v10918 = vadd.f32 %v10630, %v10917
        %v10919 = vpop.f32.mrb[0].mxu0
        %10920 = vmatprep.mubr.f32.mxu0 0.0
        %10921 = vmatmul.mubr.f32.gmra.mrb[0].mxu0 %v10708
        %v10922 = vpop.f32.mrb[0].mxu0
        %v10923 = vadd.f32 %v10630, %v10922
        %v10924 = vpop.f32.mrb[0].mxu0
        %10925 = vmatprep.mubr.f32.mxu0 0.0
        %10926 = vmatmul.mubr.f32.gmra.mrb[0].mxu0 %v10711
        %v10927 = vpop.f32.mrb[0].mxu0
        %v10928 = vadd.f32 %v10630, %v10927
        %v10929 = vpop.f32.mrb[0].mxu0
        %10930 = vmatprep.mubr.f32.mxu0 0.0
        %10931 = vmatmul.mubr.f32.gmra.mrb[0].mxu0 %v10714
        %v10932 = vpop.f32.mrb[0].mxu0
        %v10933 = vadd.f32 %v10630, %v10932
        %v10934 = vpop.f32.mrb[0].mxu0
        %10935 = vmatprep.mubr.f32.mxu0 0.0
        %10936 = vmatmul.mubr.f32.gmra.mrb[0].mxu0 %v10717
        %v10937 = vpop.f32.mrb[0].mxu0
        %v10938 = vadd.f32 %v10630, %v10937
        %v10939 = vpop.f32.mrb[0].mxu0
        %10940 = vmatprep.mubr.f32.mxu0 0.0
        %10941 = vmatmul.mubr.f32.gmra.mrb[0].mxu0 %v10720
        %v10942 = vpop.f32.mrb[0].mxu0
        %v10943 = vadd.f32 %v10630, %v10942
        %v10944 = vpop.f32.mrb[0].mxu0
        %10945 = vmatprep.mubr.f32.mxu0 0.0
        %10946 = vmatmul.mubr.f32.gmra.mrb[0].mxu0 %v10723
        %v10947 = vpop.f32.mrb[0].mxu0
        %v10948 = vadd.f32 %v10630, %v10947
        %v10949 = vpop.f32.mrb[0].mxu0
        %10950 = vmatprep.mubr.f32.mxu0 0.0
        %10951 = vmatmul.mubr.f32.gmra.mrb[0].mxu0 %v10726
        %v10952 = vpop.f32.mrb[0].mxu0
        %v10953 = vadd.f32 %v10630, %v10952
        %v10954 = vpop.f32.mrb[0].mxu0
        %10955 = vdwg.mxu0
        %v10956 = vmax.f32 %v10798, 0.0
        %v10957 = vmax.f32 %v10803, 0.0
        %v10958 = vmax.f32 %v10808, 0.0
        %v10959 = vmax.f32 %v10813, 0.0
        %v10960 = vmax.f32 %v10818, 0.0
        %v10961 = vmax.f32 %v10823, 0.0
        %v10962 = vmax.f32 %v10828, 0.0
        %v10963 = vmax.f32 %v10833, 0.0
        %v10964 = vmax.f32 %v10838, 0.0
        %v10965 = vmax.f32 %v10843, 0.0
        %v10966 = vmax.f32 %v10848, 0.0
        %v10967 = vmax.f32 %v10853, 0.0
        %v10968 = vmax.f32 %v10858, 0.0
        %v10969 = vmax.f32 %v10863, 0.0
        %v10970 = vmax.f32 %v10868, 0.0
        %v10971 = vmax.f32 %v10873, 0.0
        %v10972 = vmax.f32 %v10878, 0.0
        %v10973 = vmax.f32 %v10883, 0.0
        %v10974 = vmax.f32 %v10888, 0.0
        %v10975 = vmax.f32 %v10893, 0.0
        %v10976 = vmax.f32 %v10898, 0.0
        %v10977 = vmax.f32 %v10903, 0.0
        %v10978 = vmax.f32 %v10908, 0.0
        %v10979 = vmax.f32 %v10913, 0.0
        %v10980 = vmax.f32 %v10918, 0.0
        %v10981 = vmax.f32 %v10923, 0.0
        %v10982 = vmax.f32 %v10928, 0.0
        %v10983 = vmax.f32 %v10933, 0.0
        %v10984 = vmax.f32 %v10938, 0.0
        %v10985 = vmax.f32 %v10943, 0.0
        %v10986 = vmax.f32 %v10948, 0.0
        %v10987 = vmax.f32 %v10953, 0.0
        %11020 = vrot.lane.b32.xlu0 %v7946, 8
        %v11021 = vpop.permute.xlu0 %11020
        %11022 = vrot.lane.b32.xlu0 %v7947, 8
        %v11023 = vpop.permute.xlu0 %11022
        %11024 = vrot.lane.b32.xlu0 %v7948, 8
        %v11025 = vpop.permute.xlu0 %11024
        %11026 = vrot.lane.b32.xlu0 %v7949, 8
        %v11027 = vpop.permute.xlu0 %11026
        %11028 = vrot.lane.b32.xlu0 %v7950, 8
        %v11029 = vpop.permute.xlu0 %11028
        %11030 = vrot.lane.b32.xlu0 %v7951, 8
        %v11031 = vpop.permute.xlu0 %11030
        %11032 = vrot.lane.b32.xlu0 %v7952, 8
        %v11033 = vpop.permute.xlu0 %11032
        %11034 = vrot.lane.b32.xlu0 %v7953, 8
        %v11035 = vpop.permute.xlu0 %11034
        %11036 = vrot.lane.b32.xlu0 %v7954, 8
        %v11037 = vpop.permute.xlu0 %11036
        %11038 = vrot.lane.b32.xlu0 %v7955, 8
        %v11039 = vpop.permute.xlu0 %11038
        %11040 = vrot.lane.b32.xlu0 %v7956, 8
        %v11041 = vpop.permute.xlu0 %11040
        %11042 = vrot.lane.b32.xlu0 %v7957, 8
        %v11043 = vpop.permute.xlu0 %11042
        %11044 = vrot.lane.b32.xlu0 %v7958, 8
        %v11045 = vpop.permute.xlu0 %11044
        %11046 = vrot.lane.b32.xlu0 %v7959, 8
        %v11047 = vpop.permute.xlu0 %11046
        %11048 = vrot.lane.b32.xlu0 %v7960, 8
        %v11049 = vpop.permute.xlu0 %11048
        %11050 = vrot.lane.b32.xlu0 %v7961, 8
        %v11051 = vpop.permute.xlu0 %11050
        %11052 = vrot.lane.b32.xlu0 %v7962, 8
        %v11053 = vpop.permute.xlu0 %11052
        %11054 = vrot.lane.b32.xlu0 %v7963, 8
        %v11055 = vpop.permute.xlu0 %11054
        %11056 = vrot.lane.b32.xlu0 %v7964, 8
        %v11057 = vpop.permute.xlu0 %11056
        %11058 = vrot.lane.b32.xlu0 %v7965, 8
        %v11059 = vpop.permute.xlu0 %11058
        %11060 = vrot.lane.b32.xlu0 %v7966, 8
        %v11061 = vpop.permute.xlu0 %11060
        %11062 = vrot.lane.b32.xlu0 %v7967, 8
        %v11063 = vpop.permute.xlu0 %11062
        %11064 = vrot.lane.b32.xlu0 %v7968, 8
        %v11065 = vpop.permute.xlu0 %11064
        %11066 = vrot.lane.b32.xlu0 %v7969, 8
        %v11067 = vpop.permute.xlu0 %11066
        %11068 = vrot.lane.b32.xlu0 %v7970, 8
        %v11069 = vpop.permute.xlu0 %11068
        %11070 = vrot.lane.b32.xlu0 %v7971, 8
        %v11071 = vpop.permute.xlu0 %11070
        %11072 = vrot.lane.b32.xlu0 %v7972, 8
        %v11073 = vpop.permute.xlu0 %11072
        %11074 = vrot.lane.b32.xlu0 %v7973, 8
        %v11075 = vpop.permute.xlu0 %11074
        %11076 = vrot.lane.b32.xlu0 %v7974, 8
        %v11077 = vpop.permute.xlu0 %11076
        %11078 = vrot.lane.b32.xlu0 %v7975, 8
        %v11079 = vpop.permute.xlu0 %11078
        %11080 = vrot.lane.b32.xlu0 %v7976, 8
        %v11081 = vpop.permute.xlu0 %11080
        %11082 = vrot.lane.b32.xlu0 %v7977, 8
        %v11083 = vpop.permute.xlu0 %11082
        %11148 = vrot.lane.b32.xlu0 %v10064, 16
        %v11149 = vpop.permute.xlu0 %11148
        %11150 = vrot.lane.b32.xlu0 %v10065, 16
        %v11151 = vpop.permute.xlu0 %11150
        %11152 = vrot.lane.b32.xlu0 %v10066, 16
        %v11153 = vpop.permute.xlu0 %11152
        %11154 = vrot.lane.b32.xlu0 %v10067, 16
        %v11155 = vpop.permute.xlu0 %11154
        %11156 = vrot.lane.b32.xlu0 %v10068, 16
        %v11157 = vpop.permute.xlu0 %11156
        %11158 = vrot.lane.b32.xlu0 %v10069, 16
        %v11159 = vpop.permute.xlu0 %11158
        %11160 = vrot.lane.b32.xlu0 %v10070, 16
        %v11161 = vpop.permute.xlu0 %11160
        %11162 = vrot.lane.b32.xlu0 %v10071, 16
        %v11163 = vpop.permute.xlu0 %11162
        %11164 = vrot.lane.b32.xlu0 %v10072, 16
        %v11165 = vpop.permute.xlu0 %11164
        %11166 = vrot.lane.b32.xlu0 %v10073, 16
        %v11167 = vpop.permute.xlu0 %11166
        %11168 = vrot.lane.b32.xlu0 %v10074, 16
        %v11169 = vpop.permute.xlu0 %11168
        %11170 = vrot.lane.b32.xlu0 %v10075, 16
        %v11171 = vpop.permute.xlu0 %11170
        %11172 = vrot.lane.b32.xlu0 %v10076, 16
        %v11173 = vpop.permute.xlu0 %11172
        %11174 = vrot.lane.b32.xlu0 %v10077, 16
        %v11175 = vpop.permute.xlu0 %11174
        %11176 = vrot.lane.b32.xlu0 %v10078, 16
        %v11177 = vpop.permute.xlu0 %11176
        %11178 = vrot.lane.b32.xlu0 %v10079, 16
        %v11179 = vpop.permute.xlu0 %11178
        %11180 = vrot.lane.b32.xlu0 %v10080, 16
        %v11181 = vpop.permute.xlu0 %11180
        %11182 = vrot.lane.b32.xlu0 %v10081, 16
        %v11183 = vpop.permute.xlu0 %11182
        %11184 = vrot.lane.b32.xlu0 %v10082, 16
        %v11185 = vpop.permute.xlu0 %11184
        %11186 = vrot.lane.b32.xlu0 %v10083, 16
        %v11187 = vpop.permute.xlu0 %11186
        %11188 = vrot.lane.b32.xlu0 %v10084, 16
        %v11189 = vpop.permute.xlu0 %11188
        %11190 = vrot.lane.b32.xlu0 %v10085, 16
        %v11191 = vpop.permute.xlu0 %11190
        %11192 = vrot.lane.b32.xlu0 %v10086, 16
        %v11193 = vpop.permute.xlu0 %11192
        %11194 = vrot.lane.b32.xlu0 %v10087, 16
        %v11195 = vpop.permute.xlu0 %11194
        %11196 = vrot.lane.b32.xlu0 %v10088, 16
        %v11197 = vpop.permute.xlu0 %11196
        %11198 = vrot.lane.b32.xlu0 %v10089, 16
        %v11199 = vpop.permute.xlu0 %11198
        %11200 = vrot.lane.b32.xlu0 %v10090, 16
        %v11201 = vpop.permute.xlu0 %11200
        %11202 = vrot.lane.b32.xlu0 %v10091, 16
        %v11203 = vpop.permute.xlu0 %11202
        %11204 = vrot.lane.b32.xlu0 %v10092, 16
        %v11205 = vpop.permute.xlu0 %11204
        %11206 = vrot.lane.b32.xlu0 %v10093, 16
        %v11207 = vpop.permute.xlu0 %11206
        %11208 = vrot.lane.b32.xlu0 %v10094, 16
        %v11209 = vpop.permute.xlu0 %11208
        %11210 = vrot.lane.b32.xlu0 %v10095, 16
        %v11211 = vpop.permute.xlu0 %11210
        %11276 = vrot.lane.b32.xlu0 %v10956, 24
        %v11277 = vpop.permute.xlu0 %11276
        %11278 = vrot.lane.b32.xlu0 %v10957, 24
        %v11279 = vpop.permute.xlu0 %11278
        %11280 = vrot.lane.b32.xlu0 %v10958, 24
        %v11281 = vpop.permute.xlu0 %11280
        %11282 = vrot.lane.b32.xlu0 %v10959, 24
        %v11283 = vpop.permute.xlu0 %11282
        %11284 = vrot.lane.b32.xlu0 %v10960, 24
        %v11285 = vpop.permute.xlu0 %11284
        %11286 = vrot.lane.b32.xlu0 %v10961, 24
        %v11287 = vpop.permute.xlu0 %11286
        %11288 = vrot.lane.b32.xlu0 %v10962, 24
        %v11289 = vpop.permute.xlu0 %11288
        %11290 = vrot.lane.b32.xlu0 %v10963, 24
        %v11291 = vpop.permute.xlu0 %11290
        %11292 = vrot.lane.b32.xlu0 %v10964, 24
        %v11293 = vpop.permute.xlu0 %11292
        %11294 = vrot.lane.b32.xlu0 %v10965, 24
        %v11295 = vpop.permute.xlu0 %11294
        %11296 = vrot.lane.b32.xlu0 %v10966, 24
        %v11297 = vpop.permute.xlu0 %11296
        %11298 = vrot.lane.b32.xlu0 %v10967, 24
        %v11299 = vpop.permute.xlu0 %11298
        %11300 = vrot.lane.b32.xlu0 %v10968, 24
        %v11301 = vpop.permute.xlu0 %11300
        %11302 = vrot.lane.b32.xlu0 %v10969, 24
        %v11303 = vpop.permute.xlu0 %11302
        %11304 = vrot.lane.b32.xlu0 %v10970, 24
        %v11305 = vpop.permute.xlu0 %11304
        %11306 = vrot.lane.b32.xlu0 %v10971, 24
        %v11307 = vpop.permute.xlu0 %11306
        %11308 = vrot.lane.b32.xlu0 %v10972, 24
        %v11309 = vpop.permute.xlu0 %11308
        %11310 = vrot.lane.b32.xlu0 %v10973, 24
        %v11311 = vpop.permute.xlu0 %11310
        %11312 = vrot.lane.b32.xlu0 %v10974, 24
        %v11313 = vpop.permute.xlu0 %11312
        %11314 = vrot.lane.b32.xlu0 %v10975, 24
        %v11315 = vpop.permute.xlu0 %11314
        %11316 = vrot.lane.b32.xlu0 %v10976, 24
        %v11317 = vpop.permute.xlu0 %11316
        %11318 = vrot.lane.b32.xlu0 %v10977, 24
        %v11319 = vpop.permute.xlu0 %11318
        %11320 = vrot.lane.b32.xlu0 %v10978, 24
        %v11321 = vpop.permute.xlu0 %11320
        %11322 = vrot.lane.b32.xlu0 %v10979, 24
        %v11323 = vpop.permute.xlu0 %11322
        %11324 = vrot.lane.b32.xlu0 %v10980, 24
        %v11325 = vpop.permute.xlu0 %11324
        %11326 = vrot.lane.b32.xlu0 %v10981, 24
        %v11327 = vpop.permute.xlu0 %11326
        %11328 = vrot.lane.b32.xlu0 %v10982, 24
        %v11329 = vpop.permute.xlu0 %11328
        %11330 = vrot.lane.b32.xlu0 %v10983, 24
        %v11331 = vpop.permute.xlu0 %11330
        %11332 = vrot.lane.b32.xlu0 %v10984, 24
        %v11333 = vpop.permute.xlu0 %11332
        %11334 = vrot.lane.b32.xlu0 %v10985, 24
        %v11335 = vpop.permute.xlu0 %11334
        %11336 = vrot.lane.b32.xlu0 %v10986, 24
        %v11337 = vpop.permute.xlu0 %11336
        %11338 = vrot.lane.b32.xlu0 %v10987, 24
        %v11339 = vpop.permute.xlu0 %11338
        %v11372 = vsel %vm1741, %v6392, %v11021
        %v11373 = vsel %vm1741, %v6393, %v11023
        %v11374 = vsel %vm1741, %v6394, %v11025
        %v11375 = vsel %vm1741, %v6395, %v11027
        %v11376 = vsel %vm1741, %v6396, %v11029
        %v11377 = vsel %vm1741, %v6397, %v11031
        %v11378 = vsel %vm1741, %v6398, %v11033
        %v11379 = vsel %vm1741, %v6399, %v11035
        %v11380 = vsel %vm1741, %v6400, %v11037
        %v11381 = vsel %vm1741, %v6401, %v11039
        %v11382 = vsel %vm1741, %v6402, %v11041
        %v11383 = vsel %vm1741, %v6403, %v11043
        %v11384 = vsel %vm1741, %v6404, %v11045
        %v11385 = vsel %vm1741, %v6405, %v11047
        %v11386 = vsel %vm1741, %v6406, %v11049
        %v11387 = vsel %vm1741, %v6407, %v11051
        %v11388 = vsel %vm1741, %v6408, %v11053
        %v11389 = vsel %vm1741, %v6409, %v11055
        %v11390 = vsel %vm1741, %v6410, %v11057
        %v11391 = vsel %vm1741, %v6411, %v11059
        %v11392 = vsel %vm1741, %v6412, %v11061
        %v11393 = vsel %vm1741, %v6413, %v11063
        %v11394 = vsel %vm1741, %v6414, %v11065
        %v11395 = vsel %vm1741, %v6415, %v11067
        %v11396 = vsel %vm1741, %v6416, %v11069
        %v11397 = vsel %vm1741, %v6417, %v11071
        %v11398 = vsel %vm1741, %v6418, %v11073
        %v11399 = vsel %vm1741, %v6419, %v11075
        %v11400 = vsel %vm1741, %v6420, %v11077
        %v11401 = vsel %vm1741, %v6421, %v11079
        %v11402 = vsel %vm1741, %v6422, %v11081
        %v11403 = vsel %vm1741, %v6423, %v11083
        %v11404 = vsel %vm3592, %v11372, %v11149
        %v11405 = vsel %vm3592, %v11373, %v11151
        %v11406 = vsel %vm3592, %v11374, %v11153
        %v11407 = vsel %vm3592, %v11375, %v11155
        %v11408 = vsel %vm3592, %v11376, %v11157
        %v11409 = vsel %vm3592, %v11377, %v11159
        %v11410 = vsel %vm3592, %v11378, %v11161
        %v11411 = vsel %vm3592, %v11379, %v11163
        %v11412 = vsel %vm3592, %v11380, %v11165
        %v11413 = vsel %vm3592, %v11381, %v11167
        %v11414 = vsel %vm3592, %v11382, %v11169
        %v11415 = vsel %vm3592, %v11383, %v11171
        %v11416 = vsel %vm3592, %v11384, %v11173
        %v11417 = vsel %vm3592, %v11385, %v11175
        %v11418 = vsel %vm3592, %v11386, %v11177
        %v11419 = vsel %vm3592, %v11387, %v11179
        %v11420 = vsel %vm3592, %v11388, %v11181
        %v11421 = vsel %vm3592, %v11389, %v11183
        %v11422 = vsel %vm3592, %v11390, %v11185
        %v11423 = vsel %vm3592, %v11391, %v11187
        %v11424 = vsel %vm3592, %v11392, %v11189
        %v11425 = vsel %vm3592, %v11393, %v11191
        %v11426 = vsel %vm3592, %v11394, %v11193
        %v11427 = vsel %vm3592, %v11395, %v11195
        %v11428 = vsel %vm3592, %v11396, %v11197
        %v11429 = vsel %vm3592, %v11397, %v11199
        %v11430 = vsel %vm3592, %v11398, %v11201
        %v11431 = vsel %vm3592, %v11399, %v11203
        %v11432 = vsel %vm3592, %v11400, %v11205
        %v11433 = vsel %vm3592, %v11401, %v11207
        %v11434 = vsel %vm3592, %v11402, %v11209
        %v11435 = vsel %vm3592, %v11403, %v11211
        %v11436 = vsel %vm2037, %v11404, %v11277
        %v11437 = vsel %vm2037, %v11405, %v11279
        %v11438 = vsel %vm2037, %v11406, %v11281
        %v11439 = vsel %vm2037, %v11407, %v11283
        %v11440 = vsel %vm2037, %v11408, %v11285
        %v11441 = vsel %vm2037, %v11409, %v11287
        %v11442 = vsel %vm2037, %v11410, %v11289
        %v11443 = vsel %vm2037, %v11411, %v11291
        %v11444 = vsel %vm2037, %v11412, %v11293
        %v11445 = vsel %vm2037, %v11413, %v11295
        %v11446 = vsel %vm2037, %v11414, %v11297
        %v11447 = vsel %vm2037, %v11415, %v11299
        %v11448 = vsel %vm2037, %v11416, %v11301
        %v11449 = vsel %vm2037, %v11417, %v11303
        %v11450 = vsel %vm2037, %v11418, %v11305
        %v11451 = vsel %vm2037, %v11419, %v11307
        %v11452 = vsel %vm2037, %v11420, %v11309
        %v11453 = vsel %vm2037, %v11421, %v11311
        %v11454 = vsel %vm2037, %v11422, %v11313
        %v11455 = vsel %vm2037, %v11423, %v11315
        %v11456 = vsel %vm2037, %v11424, %v11317
        %v11457 = vsel %vm2037, %v11425, %v11319
        %v11458 = vsel %vm2037, %v11426, %v11321
        %v11459 = vsel %vm2037, %v11427, %v11323
        %v11460 = vsel %vm2037, %v11428, %v11325
        %v11461 = vsel %vm2037, %v11429, %v11327
        %v11462 = vsel %vm2037, %v11430, %v11329
        %v11463 = vsel %vm2037, %v11431, %v11331
        %v11464 = vsel %vm2037, %v11432, %v11333
        %v11465 = vsel %vm2037, %v11433, %v11335
        %v11466 = vsel %vm2037, %v11434, %v11337
        %v11467 = vsel %vm2037, %v11435, %v11339
        %s11468 = scalar_lea.vmem %s328, 256 [#allocation5]
        %11469 = vst.msk [vmem:[%s11468] sm:$0xff] %vm5969, %v11436
        %11470 = vst.msk [vmem:[%s11468 + $0x8] sm:$0xff] %vm5969, %v11437
        %11471 = vst.msk [vmem:[%s11468 + $0x10] sm:$0xff] %vm5969, %v11438
        %11472 = vst.msk [vmem:[%s11468 + $0x18] sm:$0xff] %vm5969, %v11439
        %11473 = vst.msk [vmem:[%s11468 + $0x20] sm:$0xff] %vm5969, %v11440
        %11474 = vst.msk [vmem:[%s11468 + $0x28] sm:$0xff] %vm5969, %v11441
        %11475 = vst.msk [vmem:[%s11468 + $0x30] sm:$0xff] %vm5969, %v11442
        %11476 = vst.msk [vmem:[%s11468 + $0x38] sm:$0xff] %vm5969, %v11443
        %11477 = vst.msk [vmem:[%s11468 + $0x40] sm:$0xff] %vm5969, %v11444
        %11478 = vst.msk [vmem:[%s11468 + $0x48] sm:$0xff] %vm5969, %v11445
        %11479 = vst.msk [vmem:[%s11468 + $0x50] sm:$0xff] %vm5969, %v11446
        %11480 = vst.msk [vmem:[%s11468 + $0x58] sm:$0xff] %vm5969, %v11447
        %11481 = vst.msk [vmem:[%s11468 + $0x60] sm:$0xff] %vm5969, %v11448
        %11482 = vst.msk [vmem:[%s11468 + $0x68] sm:$0xff] %vm5969, %v11449
        %11483 = vst.msk [vmem:[%s11468 + $0x70] sm:$0xff] %vm5969, %v11450
        %11484 = vst.msk [vmem:[%s11468 + $0x78] sm:$0xff] %vm5969, %v11451
        %11485 = vst.msk [vmem:[%s11468 + $0x80] sm:$0xff] %vm5969, %v11452
        %11486 = vst.msk [vmem:[%s11468 + $0x88] sm:$0xff] %vm5969, %v11453
        %11487 = vst.msk [vmem:[%s11468 + $0x90] sm:$0xff] %vm5969, %v11454
        %11488 = vst.msk [vmem:[%s11468 + $0x98] sm:$0xff] %vm5969, %v11455
        %11489 = vst.msk [vmem:[%s11468 + $0xa0] sm:$0xff] %vm5969, %v11456
        %11490 = vst.msk [vmem:[%s11468 + $0xa8] sm:$0xff] %vm5969, %v11457
        %11491 = vst.msk [vmem:[%s11468 + $0xb0] sm:$0xff] %vm5969, %v11458
        %11492 = vst.msk [vmem:[%s11468 + $0xb8] sm:$0xff] %vm5969, %v11459
        %11493 = vst.msk [vmem:[%s11468 + $0xc0] sm:$0xff] %vm5969, %v11460
        %11494 = vst.msk [vmem:[%s11468 + $0xc8] sm:$0xff] %vm5969, %v11461
        %11495 = vst.msk [vmem:[%s11468 + $0xd0] sm:$0xff] %vm5969, %v11462
        %11496 = vst.msk [vmem:[%s11468 + $0xd8] sm:$0xff] %vm5969, %v11463
        %11497 = vst.msk [vmem:[%s11468 + $0xe0] sm:$0xff] %vm5969, %v11464
        %11498 = vst.msk [vmem:[%s11468 + $0xe8] sm:$0xff] %vm5969, %v11465
        %11499 = vst.msk [vmem:[%s11468 + $0xf0] sm:$0xff] %vm5969, %v11466
        %11500 = vst.msk [vmem:[%s11468 + $0xf8] sm:$0xff] %vm5969, %v11467
        %s11501 = sand.u32 %s225, 1
        %s11502 = scalar_lea.sflag [#allocation6], %s11501
        %s11503 = sand.u32 %s225, 1
        %s11504 = smul.addr %s11503, 512
        %s11505 = scalar_lea.vmem [#allocation5], %s11504
        // Predicated region
        $region57: #{inception_v1_forward.1} parent=55 // pred_check
          %p11506 = pneg %p235
        $region58: #{inception_v1_forward.1} parent=55 // pred_check_branch
          %11508 = sbr.rel (%p11506) target = $region60
        $region59: #{inception_v1_forward.1} parent=55 // pred_region
          %s11509 = smul.u32 2, %s23
          %s11511 = ssub.s32 8192, 8192
          %11512 = vsyncadd %s11502, %s11511
          %s11513 = smul.addr %s11509, 32
          %s11514 = smul.addr %s11513, 128
          %s11515 = scalar_lea.hbm %s9, %s11514
          %s11516 = sshll.u32 %s11505, 4
          %s11517 = int_to_ptr.vmem [resolvable:$true] %s11516
          %11522 = dma.vmem_to_hbm [thread:$0]  %s11517, 8192, %s11515, %s11502, 128, 128, 8
        $region60: #{inception_v1_forward.1} parent=55 // pred_fallthru
          _
      $region56: #{inception_v1_forward.1} parent=5 // pred_fallthru
        _
      %p11523 = scmp.le.s32.totalorder 2, %s18
      // Predicated region
      $region61: #{inception_v1_forward.1} parent=5 // pred_check
        %p11524 = pneg %p11523
      $region62: #{inception_v1_forward.1} parent=5 // pred_check_branch
        %11526 = sbr.rel (%p11524) target = $region64
      $region63: #{inception_v1_forward.1} parent=5 // pred_region
        %s11527 = ssub.s32 %s18, 2
        // Predicated region
        $region65: #{inception_v1_forward.1} parent=63 // pred_check
          %p11528 = pneg %p241
        $region66: #{inception_v1_forward.1} parent=63 // pred_check_branch
          %11530 = sbr.rel (%p11528) target = $region68
        $region67: #{inception_v1_forward.1} parent=63 // pred_region
          %s11531 = sand.u32 %s226, 1
          %s11532 = scalar_lea.sflag [#allocation6], %s11531
          %s11533 = sand.u32 %s226, 1
          %s11534 = smul.addr %s11533, 512
          %s11535 = scalar_lea.vmem [#allocation5], %s11534
          %11536 = dma.done %s11532, 8192
        $region68: #{inception_v1_forward.1} parent=63 // pred_fallthru
          _
      $region64: #{inception_v1_forward.1} parent=5 // pred_fallthru
        _
    $region6: #{inception_v1_forward.1} parent=1 // loop_footer
      %s22 = sadd.s32 1, %s18
    $region7: #{inception_v1_forward.1} parent=1 // loop_footer_branch
      %17 = sbr.rel target = $region3
    $region8: #{inception_v1_forward.1} parent=1 // loop_exit
      _
    %11537 = vsyncpa [#allocation6], 1
    %s11538 = scalar_lea.sflag [#allocation6], 1
    %11539 = vsyncpa %s11538, 1

</llo_original>
